<compile_context>
chip_gen: v7x
topology: tpu7x:2x2x1
jax: 0.10.0
libtpu: 0.0.40
codegen_flags: <defaults>
</compile_context>

<pallas_src>
import functools

import jax
import jax.numpy as jnp
from jax import lax
from jax.experimental import pallas as pl
from jax.experimental.pallas import tpu as pltpu  # noqa: F401  (TPU backend)

CONV_SIZE = 32
K, S, P = 4, 2, 1          # kernel, stride, padding of every conv
EPS = 1e-5                 # BatchNorm2d default eps
NEG_SLOPE = 0.2            # LeakyReLU slope
CIN = 3
CIN_PAD = 8                # pad input channels so layer-1 contraction = 8*16 = 128


# ----------------------------- in-kernel helpers -----------------------------

def _leaky(y):
    return jnp.where(y > 0, y, NEG_SLOPE * y)


def _conv_bn_lrelu(xs, w_ref, g_ref, b_ref, h_in, w_in):
    """Conv2d(k=4, s=2, p=1, bias=False) + BatchNorm(batch stats) + LeakyReLU.

    xs    : list (one per image) of activations in transposed layout
            (Cin, h_in*w_in) -- channels on sublanes, positions on lanes.
    w_ref : (Cout, K*K*Cin) weight, column index = (ki*K + kj)*Cin + cin.
    Returns a list of per-image outputs (Cout, ho*wo).
    """
    n = len(xs)
    cin = xs[0].shape[0]
    ho, wo = h_in // 2, w_in // 2
    p_in, p_out = h_in * w_in, ho * wo
    wo_bits = wo.bit_length() - 1          # spatial extents are powers of two
    w_in_bits = w_in.bit_length() - 1

    # Batch the per-tap gather matmul over images along the M (sublane) dim.
    xt_stack = jnp.concatenate(xs, axis=0)                      # (n*cin, p_in)

    # output-position / input-position index vectors (built once per layer)
    pcol = lax.broadcasted_iota(jnp.int32, (1, p_out), 1)
    i_idx = pcol >> wo_bits
    j_idx = pcol & (wo - 1)
    qrow = lax.broadcasted_iota(jnp.int32, (p_in, 1), 0)

    # one (p_in, p_out) 0/1 selection matrix per tap (exact in f32), shared by
    # all images; zero padding falls out for free (invalid taps select nothing)
    g_taps = []
    for ki in range(K):
        for kj in range(K):
            src_h = (i_idx << 1) + (ki - P)
            src_w = (j_idx << 1) + (kj - P)
            valid = ((src_h >= 0) & (src_h < h_in) &
                     (src_w >= 0) & (src_w < w_in))
            tgt = jnp.where(valid, (src_h << w_in_bits) + src_w, -1)
            sel = jnp.where(qrow == tgt, 1.0, 0.0)               # (p_in, p_out)
            g_taps.append(jnp.dot(xt_stack, sel,
                                  preferred_element_type=jnp.float32))

    # Per image: aligned sublane concat of the 16 taps -> full patch block,
    # then ONE weight matmul with K = K*K*Cin (512 / 1024).
    w_mat = w_ref[...]
    ys = []
    for m in range(n):
        patch = jnp.concatenate(
            [g[m * cin:(m + 1) * cin, :] for g in g_taps], axis=0)  # (16*cin, p_out)
        ys.append(jnp.dot(w_mat, patch, preferred_element_type=jnp.float32))

    # BatchNorm: training-mode stats over all (image, position), biased var.
    count = n * p_out
    mean = sum(jnp.sum(y, axis=1, keepdims=True) for y in ys) / count
    var = sum(jnp.sum(jnp.square(y - mean), axis=1, keepdims=True)
              for y in ys) / count
    scale = lax.rsqrt(var + EPS) * g_ref[...]
    shift = b_ref[...]
    return [_leaky((y - mean) * scale + shift) for y in ys]


# ------------------------------- fused kernel --------------------------------

def discriminator_kernel(a1t_ref, w1_ref, w2_ref, w3_ref,
                         g2_ref, b2_ref, g3_ref, b3_ref,
                         wfc_ref, bfc_ref,
                         out_ref, feat_ref):
    n = out_ref.shape[0]

    # ---- layer 1: (host-im2col'd, transposed) input, K dim = 128 -----------
    #   x1T = LeakyReLU(W1 (32,128) @ A1T (128, n*256))
    x1t = _leaky(jnp.dot(w1_ref[...], a1t_ref[...],
                         preferred_element_type=jnp.float32))     # (32, n*256)
    x1 = [x1t[:, m * 256:(m + 1) * 256] for m in range(n)]        # 128-aligned lane slices

    # ---- layer 2 / layer 3: conv + BN + LeakyReLU ---------------------------
    x2 = _conv_bn_lrelu(x1, w2_ref, g2_ref, b2_ref, 16, 16)       # n x (64, 64)
    x3 = _conv_bn_lrelu(x2, w3_ref, g3_ref, b3_ref, 8, 8)         # n x (128, 16)

    feat_ref[...] = jnp.concatenate(x3, axis=0)                   # (n*128, 16)

    # ---- fc + sigmoid: elementwise multiply with wfc + per-image reduction --
    z = jnp.concatenate([xm * wfc_ref[...] for xm in x3], axis=0)  # (n*128, 16)
    rows = n * 128
    img = lax.broadcasted_iota(jnp.int32, (n, 1), 0)
    rr = lax.broadcasted_iota(jnp.int32, (1, rows), 1)
    group = jnp.where((rr >> 7) == img, 1.0, 0.0)                  # 128 rows / image
    logits = jnp.sum(jnp.dot(group, z, preferred_element_type=jnp.float32),
                     axis=1, keepdims=True) + bfc_ref[...]
    out_ref[...] = 1.0 / (1.0 + jnp.exp(-logits))


# ------------------------------ JAX-side glue ---------------------------------

def _full_spec(shape):
    # whole array as a single VMEM block (everything here is tiny)
    return pl.BlockSpec(shape, lambda: (0,) * len(shape))


def _im2col_input_t(x):
    """Layer-1 im2col of the raw NCHW input, emitted transposed:
    (K*K*CIN_PAD, N*16*16) with rows ordered ((ki*K + kj) * 8 + c)."""
    n, c, h, w = x.shape
    ho, wo = h // 2, w // 2
    xt = jnp.transpose(x, (0, 2, 3, 1))                              # NHWC
    xp = jnp.pad(xt, ((0, 0), (P, P), (P, P), (0, CIN_PAD - c)))
    cols = [xp[:, ki:ki + S * ho:S, kj:kj + S * wo:S, :]
            for ki in range(K) for kj in range(K)]
    a = jnp.stack(cols, axis=3)                                      # (N,Ho,Wo,16,8)
    return a.reshape(n * ho * wo, K * K * CIN_PAD).T                 # (128, N*256)


@functools.partial(jax.jit, static_argnames=("feature",))
def discriminator_forward(x, prep, feature=False):
    n, c, h, w = x.shape
    # the fc layer (conv_size*4 * 4 * 4 inputs) implies a 3x32x32 input; the
    # in-kernel index bit-tricks also require power-of-two spatial extents
    assert (c, h, w) == (CIN, CONV_SIZE, CONV_SIZE), (c, h, w)
    a1t = _im2col_input_t(x)                                         # (128, n*256)
    out, feat = pl.pallas_call(
        discriminator_kernel,
        out_shape=(jax.ShapeDtypeStruct((n, 1), jnp.float32),
                   jax.ShapeDtypeStruct((n * 4 * CONV_SIZE, 16), jnp.float32)),
        in_specs=[_full_spec(a1t.shape),
                  _full_spec(prep["w1"].shape),
                  _full_spec(prep["w2"].shape),
                  _full_spec(prep["w3"].shape),
                  _full_spec(prep["g2"].shape),
                  _full_spec(prep["b2"].shape),
                  _full_spec(prep["g3"].shape),
                  _full_spec(prep["b3"].shape),
                  _full_spec(prep["wfc"].shape),
                  _full_spec(prep["bfc"].shape)],
        out_specs=(_full_spec((n, 1)),
                   _full_spec((n * 4 * CONV_SIZE, 16))),
    )(a1t, prep["w1"], prep["w2"], prep["w3"],
      prep["g2"], prep["b2"], prep["g3"], prep["b3"],
      prep["wfc"], prep["bfc"])
    if feature:
        # feat rows are (image, channel), cols are (i*4+j) -> flat order equals
        # torch's NCHW flatten, so x.view(-1, 64) is a plain reshape here.
        return feat.reshape(-1, 64), out
    return out


# --------------------------- params & reference -------------------------------

def init_params(key):
    ks = jax.random.split(key, 4)
    return dict(
        w1=jax.random.normal(ks[0], (CONV_SIZE, 3, K, K), jnp.float32) * 0.02,
        w2=jax.random.normal(ks[1], (CONV_SIZE * 2, CONV_SIZE, K, K), jnp.float32) * 0.02,
        g2=jnp.ones((CONV_SIZE * 2,), jnp.float32),
        b2=jnp.zeros((CONV_SIZE * 2,), jnp.float32),
        w3=jax.random.normal(ks[2], (CONV_SIZE * 4, CONV_SIZE * 2, K, K), jnp.float32) * 0.02,
        g3=jnp.ones((CONV_SIZE * 4,), jnp.float32),
        b3=jnp.zeros((CONV_SIZE * 4,), jnp.float32),
        wfc=jax.random.normal(ks[3], (1, CONV_SIZE * 4 * 4 * 4), jnp.float32) * 0.02,
        bfc=jnp.zeros((1,), jnp.float32),
    )


def prepare_params(p):
    """Hoist every weight reshape/transpose out of the per-forward path."""
    w1 = jnp.pad(p["w1"].transpose(0, 2, 3, 1),                 # (Cout, K, K, Cin)
                 ((0, 0), (0, 0), (0, 0), (0, CIN_PAD - CIN)))
    w1 = w1.reshape(CONV_SIZE, K * K * CIN_PAD)                 # (32, 128)
    w2 = p["w2"].transpose(0, 2, 3, 1).reshape(2 * CONV_SIZE, K * K * CONV_SIZE)      # (64, 512)
    w3 = p["w3"].transpose(0, 2, 3, 1).reshape(4 * CONV_SIZE, K * K * 2 * CONV_SIZE)  # (128, 1024)
    wfc = p["wfc"].reshape(4 * CONV_SIZE, 16)                   # (128, 16): rows=channel, cols=i*4+j
    return dict(
        w1=w1, w2=w2, w3=w3,
        g2=p["g2"].reshape(-1, 1), b2=p["b2"].reshape(-1, 1),
        g3=p["g3"].reshape(-1, 1), b3=p["b3"].reshape(-1, 1),
        wfc=wfc, bfc=p["bfc"].reshape(1, 1))


def reference_forward(x, p):
    def conv(x, w):
        return lax.conv_general_dilated(
            x, w, (S, S), [(P, P), (P, P)],
            dimension_numbers=("NCHW", "OIHW", "NCHW"))

    def bn(x, g, b):
        mean = jnp.mean(x, axis=(0, 2, 3), keepdims=True)
        var = jnp.mean(jnp.square(x - mean), axis=(0, 2, 3), keepdims=True)
        return ((x - mean) * lax.rsqrt(var + EPS)
                * g.reshape(1, -1, 1, 1) + b.reshape(1, -1, 1, 1))

    lrelu = lambda y: jnp.where(y > 0, y, NEG_SLOPE * y)
    x = lrelu(conv(x, p["w1"]))
    x = lrelu(bn(conv(x, p["w2"]), p["g2"], p["b2"]))
    x = lrelu(bn(conv(x, p["w3"]), p["g3"], p["b3"]))
    features = x.reshape(-1, 64)
    flat = x.reshape(x.shape[0], -1)
    out = jax.nn.sigmoid(flat @ p["wfc"].T + p["bfc"])
    return out, features


# ---------------------------------- main ---------------------------------------

if __name__ == "__main__":
    key = jax.random.PRNGKey(0)
    kx, kp = jax.random.split(key)
    x = jax.random.normal(kx, (2, 3, 32, 32), jnp.float32)
    params = init_params(kp)
    prep = prepare_params(params)          # one-time weight layout prep

    out = jax.block_until_ready(discriminator_forward(x, prep))
    feats, out2 = discriminator_forward(x, prep, feature=True)
    feats = jax.block_until_ready(feats)

    ref_out, ref_feats = reference_forward(x, params)
    ref_out = jax.block_until_ready(ref_out)

    assert out.shape == (2, 1), out.shape
    assert feats.shape == (64, 64), feats.shape
    err = float(jnp.max(jnp.abs(out - ref_out)))
    assert err < 1e-3, (err, out, ref_out)
    err_f = float(jnp.max(jnp.abs(feats - ref_feats)))
    assert err_f < 1e-3, err_f

    print("KERNEL_OK")
</pallas_src>

<mosaic_0001>
module attributes {stable_mosaic.version = 11 : i64} {
  func.func @discriminator_kernel(%arg0: memref<128x512xf32, #tpu.memory_space<vmem>>, %arg1: memref<32x128xf32, #tpu.memory_space<vmem>>, %arg2: memref<64x512xf32, #tpu.memory_space<vmem>>, %arg3: memref<128x1024xf32, #tpu.memory_space<vmem>>, %arg4: memref<64x1xf32, #tpu.memory_space<vmem>>, %arg5: memref<64x1xf32, #tpu.memory_space<vmem>>, %arg6: memref<128x1xf32, #tpu.memory_space<vmem>>, %arg7: memref<128x1xf32, #tpu.memory_space<vmem>>, %arg8: memref<128x16xf32, #tpu.memory_space<vmem>>, %arg9: memref<1x1xf32, #tpu.memory_space<vmem>>, %arg10: memref<2x1xf32, #tpu.memory_space<vmem>>, %arg11: memref<256x16xf32, #tpu.memory_space<vmem>>) attributes {dimension_semantics = [], scalar_prefetch = 0 : i64, scratch_operands = 0 : i64, tpu.core_type = #tpu.core_type<tc>} {
    %c0 = arith.constant 0 : index
    %c0_0 = arith.constant 0 : index
    %0 = vector.load %arg1[%c0, %c0_0] : memref<32x128xf32, #tpu.memory_space<vmem>>, vector<32x128xf32>
    %c0_1 = arith.constant 0 : index
    %c0_2 = arith.constant 0 : index
    %1 = vector.load %arg0[%c0_1, %c0_2] : memref<128x512xf32, #tpu.memory_space<vmem>>, vector<128x512xf32>
    %cst = arith.constant dense<0.000000e+00> : vector<32x512xf32>
    %2 = tpu.matmul %0, %1, %cst {dimension_numbers = #tpu.dot_dimension_numbers<[1], [0], [0], [1], [0, 0, 1, 1], [], []>} : vector<32x128xf32>, vector<128x512xf32>, vector<32x512xf32> -> vector<32x512xf32>
    %cst_3 = arith.constant 0.000000e+00 : f32
    %3 = vector.broadcast %cst_3 : f32 to vector<32x512xf32>
    %4 = arith.cmpf ogt, %2, %3 : vector<32x512xf32>
    %cst_4 = arith.constant 2.000000e-01 : f32
    %5 = vector.broadcast %cst_4 : f32 to vector<32x512xf32>
    %6 = arith.mulf %5, %2 : vector<32x512xf32>
    %7 = arith.select %4, %2, %6 : vector<32x512xi1>, vector<32x512xf32>
    %8 = vector.extract_strided_slice %7 {offsets = [0, 0], sizes = [32, 256], strides = [1, 1]} : vector<32x512xf32> to vector<32x256xf32>
    %9 = vector.extract_strided_slice %7 {offsets = [0, 256], sizes = [32, 256], strides = [1, 1]} : vector<32x512xf32> to vector<32x256xf32>
    %10 = tpu.concatenate %8, %9 in 0 : vector<32x256xf32>, vector<32x256xf32> -> vector<64x256xf32>
    %11 = tpu.iota {dimensions = array<i32: 1>} : vector<1x64xi32>
    %c3_i32 = arith.constant 3 : i32
    %12 = vector.broadcast %c3_i32 : i32 to vector<1x64xi32>
    %13 = arith.shrsi %11, %12 : vector<1x64xi32>
    %c7_i32 = arith.constant 7 : i32
    %14 = vector.broadcast %c7_i32 : i32 to vector<1x64xi32>
    %15 = arith.andi %11, %14 : vector<1x64xi32>
    %16 = tpu.iota {dimensions = array<i32: 0>} : vector<256x1xi32>
    %c1_i32 = arith.constant 1 : i32
    %17 = vector.broadcast %c1_i32 : i32 to vector<1x64xi32>
    %18 = arith.shli %13, %17 : vector<1x64xi32>
    %c-1_i32 = arith.constant -1 : i32
    %19 = vector.broadcast %c-1_i32 : i32 to vector<1x64xi32>
    %20 = arith.addi %18, %19 : vector<1x64xi32>
    %c1_i32_5 = arith.constant 1 : i32
    %21 = vector.broadcast %c1_i32_5 : i32 to vector<1x64xi32>
    %22 = arith.shli %15, %21 : vector<1x64xi32>
    %c-1_i32_6 = arith.constant -1 : i32
    %23 = vector.broadcast %c-1_i32_6 : i32 to vector<1x64xi32>
    %24 = arith.addi %22, %23 : vector<1x64xi32>
    %c0_i32 = arith.constant 0 : i32
    %25 = vector.broadcast %c0_i32 : i32 to vector<1x64xi32>
    %26 = arith.cmpi sge, %20, %25 : vector<1x64xi32>
    %c16_i32 = arith.constant 16 : i32
    %27 = vector.broadcast %c16_i32 : i32 to vector<1x64xi32>
    %28 = arith.cmpi slt, %20, %27 : vector<1x64xi32>
    %29 = arith.andi %26, %28 : vector<1x64xi1>
    %c0_i32_7 = arith.constant 0 : i32
    %30 = vector.broadcast %c0_i32_7 : i32 to vector<1x64xi32>
    %31 = arith.cmpi sge, %24, %30 : vector<1x64xi32>
    %32 = arith.andi %29, %31 : vector<1x64xi1>
    %c16_i32_8 = arith.constant 16 : i32
    %33 = vector.broadcast %c16_i32_8 : i32 to vector<1x64xi32>
    %34 = arith.cmpi slt, %24, %33 : vector<1x64xi32>
    %35 = arith.andi %32, %34 : vector<1x64xi1>
    %c4_i32 = arith.constant 4 : i32
    %36 = vector.broadcast %c4_i32 : i32 to vector<1x64xi32>
    %37 = arith.shli %20, %36 : vector<1x64xi32>
    %38 = arith.addi %37, %24 : vector<1x64xi32>
    %c-1_i32_9 = arith.constant -1 : i32
    %39 = vector.broadcast %c-1_i32_9 : i32 to vector<1x64xi32>
    %40 = arith.select %35, %38, %39 : vector<1x64xi1>, vector<1x64xi32>
    %41 = vector.broadcast %16 : vector<256x1xi32> to vector<256x64xi32>
    %42 = vector.broadcast %40 : vector<1x64xi32> to vector<256x64xi32>
    %43 = arith.cmpi eq, %41, %42 : vector<256x64xi32>
    %cst_10 = arith.constant 1.000000e+00 : f32
    %cst_11 = arith.constant 0.000000e+00 : f32
    %44 = vector.broadcast %cst_10 : f32 to vector<256x64xf32>
    %45 = vector.broadcast %cst_11 : f32 to vector<256x64xf32>
    %46 = arith.select %43, %44, %45 : vector<256x64xi1>, vector<256x64xf32>
    %cst_12 = arith.constant dense<0.000000e+00> : vector<64x64xf32>
    %47 = tpu.matmul %10, %46, %cst_12 {dimension_numbers = #tpu.dot_dimension_numbers<[1], [0], [0], [1], [0, 0, 1, 1], [], []>} : vector<64x256xf32>, vector<256x64xf32>, vector<64x64xf32> -> vector<64x64xf32>
    %c1_i32_13 = arith.constant 1 : i32
    %48 = vector.broadcast %c1_i32_13 : i32 to vector<1x64xi32>
    %49 = arith.shli %13, %48 : vector<1x64xi32>
    %c-1_i32_14 = arith.constant -1 : i32
    %50 = vector.broadcast %c-1_i32_14 : i32 to vector<1x64xi32>
    %51 = arith.addi %49, %50 : vector<1x64xi32>
    %c1_i32_15 = arith.constant 1 : i32
    %52 = vector.broadcast %c1_i32_15 : i32 to vector<1x64xi32>
    %53 = arith.shli %15, %52 : vector<1x64xi32>
    %c0_i32_16 = arith.constant 0 : i32
    %54 = vector.broadcast %c0_i32_16 : i32 to vector<1x64xi32>
    %55 = arith.addi %53, %54 : vector<1x64xi32>
    %c0_i32_17 = arith.constant 0 : i32
    %56 = vector.broadcast %c0_i32_17 : i32 to vector<1x64xi32>
    %57 = arith.cmpi sge, %51, %56 : vector<1x64xi32>
    %c16_i32_18 = arith.constant 16 : i32
    %58 = vector.broadcast %c16_i32_18 : i32 to vector<1x64xi32>
    %59 = arith.cmpi slt, %51, %58 : vector<1x64xi32>
    %60 = arith.andi %57, %59 : vector<1x64xi1>
    %c0_i32_19 = arith.constant 0 : i32
    %61 = vector.broadcast %c0_i32_19 : i32 to vector<1x64xi32>
    %62 = arith.cmpi sge, %55, %61 : vector<1x64xi32>
    %63 = arith.andi %60, %62 : vector<1x64xi1>
    %c16_i32_20 = arith.constant 16 : i32
    %64 = vector.broadcast %c16_i32_20 : i32 to vector<1x64xi32>
    %65 = arith.cmpi slt, %55, %64 : vector<1x64xi32>
    %66 = arith.andi %63, %65 : vector<1x64xi1>
    %c4_i32_21 = arith.constant 4 : i32
    %67 = vector.broadcast %c4_i32_21 : i32 to vector<1x64xi32>
    %68 = arith.shli %51, %67 : vector<1x64xi32>
    %69 = arith.addi %68, %55 : vector<1x64xi32>
    %c-1_i32_22 = arith.constant -1 : i32
    %70 = vector.broadcast %c-1_i32_22 : i32 to vector<1x64xi32>
    %71 = arith.select %66, %69, %70 : vector<1x64xi1>, vector<1x64xi32>
    %72 = vector.broadcast %16 : vector<256x1xi32> to vector<256x64xi32>
    %73 = vector.broadcast %71 : vector<1x64xi32> to vector<256x64xi32>
    %74 = arith.cmpi eq, %72, %73 : vector<256x64xi32>
    %cst_23 = arith.constant 1.000000e+00 : f32
    %cst_24 = arith.constant 0.000000e+00 : f32
    %75 = vector.broadcast %cst_23 : f32 to vector<256x64xf32>
    %76 = vector.broadcast %cst_24 : f32 to vector<256x64xf32>
    %77 = arith.select %74, %75, %76 : vector<256x64xi1>, vector<256x64xf32>
    %cst_25 = arith.constant dense<0.000000e+00> : vector<64x64xf32>
    %78 = tpu.matmul %10, %77, %cst_25 {dimension_numbers = #tpu.dot_dimension_numbers<[1], [0], [0], [1], [0, 0, 1, 1], [], []>} : vector<64x256xf32>, vector<256x64xf32>, vector<64x64xf32> -> vector<64x64xf32>
    %c1_i32_26 = arith.constant 1 : i32
    %79 = vector.broadcast %c1_i32_26 : i32 to vector<1x64xi32>
    %80 = arith.shli %13, %79 : vector<1x64xi32>
    %c-1_i32_27 = arith.constant -1 : i32
    %81 = vector.broadcast %c-1_i32_27 : i32 to vector<1x64xi32>
    %82 = arith.addi %80, %81 : vector<1x64xi32>
    %c1_i32_28 = arith.constant 1 : i32
    %83 = vector.broadcast %c1_i32_28 : i32 to vector<1x64xi32>
    %84 = arith.shli %15, %83 : vector<1x64xi32>
    %c1_i32_29 = arith.constant 1 : i32
    %85 = vector.broadcast %c1_i32_29 : i32 to vector<1x64xi32>
    %86 = arith.addi %84, %85 : vector<1x64xi32>
    %c0_i32_30 = arith.constant 0 : i32
    %87 = vector.broadcast %c0_i32_30 : i32 to vector<1x64xi32>
    %88 = arith.cmpi sge, %82, %87 : vector<1x64xi32>
    %c16_i32_31 = arith.constant 16 : i32
    %89 = vector.broadcast %c16_i32_31 : i32 to vector<1x64xi32>
    %90 = arith.cmpi slt, %82, %89 : vector<1x64xi32>
    %91 = arith.andi %88, %90 : vector<1x64xi1>
    %c0_i32_32 = arith.constant 0 : i32
    %92 = vector.broadcast %c0_i32_32 : i32 to vector<1x64xi32>
    %93 = arith.cmpi sge, %86, %92 : vector<1x64xi32>
    %94 = arith.andi %91, %93 : vector<1x64xi1>
    %c16_i32_33 = arith.constant 16 : i32
    %95 = vector.broadcast %c16_i32_33 : i32 to vector<1x64xi32>
    %96 = arith.cmpi slt, %86, %95 : vector<1x64xi32>
    %97 = arith.andi %94, %96 : vector<1x64xi1>
    %c4_i32_34 = arith.constant 4 : i32
    %98 = vector.broadcast %c4_i32_34 : i32 to vector<1x64xi32>
    %99 = arith.shli %82, %98 : vector<1x64xi32>
    %100 = arith.addi %99, %86 : vector<1x64xi32>
    %c-1_i32_35 = arith.constant -1 : i32
    %101 = vector.broadcast %c-1_i32_35 : i32 to vector<1x64xi32>
    %102 = arith.select %97, %100, %101 : vector<1x64xi1>, vector<1x64xi32>
    %103 = vector.broadcast %16 : vector<256x1xi32> to vector<256x64xi32>
    %104 = vector.broadcast %102 : vector<1x64xi32> to vector<256x64xi32>
    %105 = arith.cmpi eq, %103, %104 : vector<256x64xi32>
    %cst_36 = arith.constant 1.000000e+00 : f32
    %cst_37 = arith.constant 0.000000e+00 : f32
    %106 = vector.broadcast %cst_36 : f32 to vector<256x64xf32>
    %107 = vector.broadcast %cst_37 : f32 to vector<256x64xf32>
    %108 = arith.select %105, %106, %107 : vector<256x64xi1>, vector<256x64xf32>
    %cst_38 = arith.constant dense<0.000000e+00> : vector<64x64xf32>
    %109 = tpu.matmul %10, %108, %cst_38 {dimension_numbers = #tpu.dot_dimension_numbers<[1], [0], [0], [1], [0, 0, 1, 1], [], []>} : vector<64x256xf32>, vector<256x64xf32>, vector<64x64xf32> -> vector<64x64xf32>
    %c1_i32_39 = arith.constant 1 : i32
    %110 = vector.broadcast %c1_i32_39 : i32 to vector<1x64xi32>
    %111 = arith.shli %13, %110 : vector<1x64xi32>
    %c-1_i32_40 = arith.constant -1 : i32
    %112 = vector.broadcast %c-1_i32_40 : i32 to vector<1x64xi32>
    %113 = arith.addi %111, %112 : vector<1x64xi32>
    %c1_i32_41 = arith.constant 1 : i32
    %114 = vector.broadcast %c1_i32_41 : i32 to vector<1x64xi32>
    %115 = arith.shli %15, %114 : vector<1x64xi32>
    %c2_i32 = arith.constant 2 : i32
    %116 = vector.broadcast %c2_i32 : i32 to vector<1x64xi32>
    %117 = arith.addi %115, %116 : vector<1x64xi32>
    %c0_i32_42 = arith.constant 0 : i32
    %118 = vector.broadcast %c0_i32_42 : i32 to vector<1x64xi32>
    %119 = arith.cmpi sge, %113, %118 : vector<1x64xi32>
    %c16_i32_43 = arith.constant 16 : i32
    %120 = vector.broadcast %c16_i32_43 : i32 to vector<1x64xi32>
    %121 = arith.cmpi slt, %113, %120 : vector<1x64xi32>
    %122 = arith.andi %119, %121 : vector<1x64xi1>
    %c0_i32_44 = arith.constant 0 : i32
    %123 = vector.broadcast %c0_i32_44 : i32 to vector<1x64xi32>
    %124 = arith.cmpi sge, %117, %123 : vector<1x64xi32>
    %125 = arith.andi %122, %124 : vector<1x64xi1>
    %c16_i32_45 = arith.constant 16 : i32
    %126 = vector.broadcast %c16_i32_45 : i32 to vector<1x64xi32>
    %127 = arith.cmpi slt, %117, %126 : vector<1x64xi32>
    %128 = arith.andi %125, %127 : vector<1x64xi1>
    %c4_i32_46 = arith.constant 4 : i32
    %129 = vector.broadcast %c4_i32_46 : i32 to vector<1x64xi32>
    %130 = arith.shli %113, %129 : vector<1x64xi32>
    %131 = arith.addi %130, %117 : vector<1x64xi32>
    %c-1_i32_47 = arith.constant -1 : i32
    %132 = vector.broadcast %c-1_i32_47 : i32 to vector<1x64xi32>
    %133 = arith.select %128, %131, %132 : vector<1x64xi1>, vector<1x64xi32>
    %134 = vector.broadcast %16 : vector<256x1xi32> to vector<256x64xi32>
    %135 = vector.broadcast %133 : vector<1x64xi32> to vector<256x64xi32>
    %136 = arith.cmpi eq, %134, %135 : vector<256x64xi32>
    %cst_48 = arith.constant 1.000000e+00 : f32
    %cst_49 = arith.constant 0.000000e+00 : f32
    %137 = vector.broadcast %cst_48 : f32 to vector<256x64xf32>
    %138 = vector.broadcast %cst_49 : f32 to vector<256x64xf32>
    %139 = arith.select %136, %137, %138 : vector<256x64xi1>, vector<256x64xf32>
    %cst_50 = arith.constant dense<0.000000e+00> : vector<64x64xf32>
    %140 = tpu.matmul %10, %139, %cst_50 {dimension_numbers = #tpu.dot_dimension_numbers<[1], [0], [0], [1], [0, 0, 1, 1], [], []>} : vector<64x256xf32>, vector<256x64xf32>, vector<64x64xf32> -> vector<64x64xf32>
    %c1_i32_51 = arith.constant 1 : i32
    %141 = vector.broadcast %c1_i32_51 : i32 to vector<1x64xi32>
    %142 = arith.shli %13, %141 : vector<1x64xi32>
    %c0_i32_52 = arith.constant 0 : i32
    %143 = vector.broadcast %c0_i32_52 : i32 to vector<1x64xi32>
    %144 = arith.addi %142, %143 : vector<1x64xi32>
    %c1_i32_53 = arith.constant 1 : i32
    %145 = vector.broadcast %c1_i32_53 : i32 to vector<1x64xi32>
    %146 = arith.shli %15, %145 : vector<1x64xi32>
    %c-1_i32_54 = arith.constant -1 : i32
    %147 = vector.broadcast %c-1_i32_54 : i32 to vector<1x64xi32>
    %148 = arith.addi %146, %147 : vector<1x64xi32>
    %c0_i32_55 = arith.constant 0 : i32
    %149 = vector.broadcast %c0_i32_55 : i32 to vector<1x64xi32>
    %150 = arith.cmpi sge, %144, %149 : vector<1x64xi32>
    %c16_i32_56 = arith.constant 16 : i32
    %151 = vector.broadcast %c16_i32_56 : i32 to vector<1x64xi32>
    %152 = arith.cmpi slt, %144, %151 : vector<1x64xi32>
    %153 = arith.andi %150, %152 : vector<1x64xi1>
    %c0_i32_57 = arith.constant 0 : i32
    %154 = vector.broadcast %c0_i32_57 : i32 to vector<1x64xi32>
    %155 = arith.cmpi sge, %148, %154 : vector<1x64xi32>
    %156 = arith.andi %153, %155 : vector<1x64xi1>
    %c16_i32_58 = arith.constant 16 : i32
    %157 = vector.broadcast %c16_i32_58 : i32 to vector<1x64xi32>
    %158 = arith.cmpi slt, %148, %157 : vector<1x64xi32>
    %159 = arith.andi %156, %158 : vector<1x64xi1>
    %c4_i32_59 = arith.constant 4 : i32
    %160 = vector.broadcast %c4_i32_59 : i32 to vector<1x64xi32>
    %161 = arith.shli %144, %160 : vector<1x64xi32>
    %162 = arith.addi %161, %148 : vector<1x64xi32>
    %c-1_i32_60 = arith.constant -1 : i32
    %163 = vector.broadcast %c-1_i32_60 : i32 to vector<1x64xi32>
    %164 = arith.select %159, %162, %163 : vector<1x64xi1>, vector<1x64xi32>
    %165 = vector.broadcast %16 : vector<256x1xi32> to vector<256x64xi32>
    %166 = vector.broadcast %164 : vector<1x64xi32> to vector<256x64xi32>
    %167 = arith.cmpi eq, %165, %166 : vector<256x64xi32>
    %cst_61 = arith.constant 1.000000e+00 : f32
    %cst_62 = arith.constant 0.000000e+00 : f32
    %168 = vector.broadcast %cst_61 : f32 to vector<256x64xf32>
    %169 = vector.broadcast %cst_62 : f32 to vector<256x64xf32>
    %170 = arith.select %167, %168, %169 : vector<256x64xi1>, vector<256x64xf32>
    %cst_63 = arith.constant dense<0.000000e+00> : vector<64x64xf32>
    %171 = tpu.matmul %10, %170, %cst_63 {dimension_numbers = #tpu.dot_dimension_numbers<[1], [0], [0], [1], [0, 0, 1, 1], [], []>} : vector<64x256xf32>, vector<256x64xf32>, vector<64x64xf32> -> vector<64x64xf32>
    %c1_i32_64 = arith.constant 1 : i32
    %172 = vector.broadcast %c1_i32_64 : i32 to vector<1x64xi32>
    %173 = arith.shli %13, %172 : vector<1x64xi32>
    %c0_i32_65 = arith.constant 0 : i32
    %174 = vector.broadcast %c0_i32_65 : i32 to vector<1x64xi32>
    %175 = arith.addi %173, %174 : vector<1x64xi32>
    %c1_i32_66 = arith.constant 1 : i32
    %176 = vector.broadcast %c1_i32_66 : i32 to vector<1x64xi32>
    %177 = arith.shli %15, %176 : vector<1x64xi32>
    %c0_i32_67 = arith.constant 0 : i32
    %178 = vector.broadcast %c0_i32_67 : i32 to vector<1x64xi32>
    %179 = arith.addi %177, %178 : vector<1x64xi32>
    %c0_i32_68 = arith.constant 0 : i32
    %180 = vector.broadcast %c0_i32_68 : i32 to vector<1x64xi32>
    %181 = arith.cmpi sge, %175, %180 : vector<1x64xi32>
    %c16_i32_69 = arith.constant 16 : i32
    %182 = vector.broadcast %c16_i32_69 : i32 to vector<1x64xi32>
    %183 = arith.cmpi slt, %175, %182 : vector<1x64xi32>
    %184 = arith.andi %181, %183 : vector<1x64xi1>
    %c0_i32_70 = arith.constant 0 : i32
    %185 = vector.broadcast %c0_i32_70 : i32 to vector<1x64xi32>
    %186 = arith.cmpi sge, %179, %185 : vector<1x64xi32>
    %187 = arith.andi %184, %186 : vector<1x64xi1>
    %c16_i32_71 = arith.constant 16 : i32
    %188 = vector.broadcast %c16_i32_71 : i32 to vector<1x64xi32>
    %189 = arith.cmpi slt, %179, %188 : vector<1x64xi32>
    %190 = arith.andi %187, %189 : vector<1x64xi1>
    %c4_i32_72 = arith.constant 4 : i32
    %191 = vector.broadcast %c4_i32_72 : i32 to vector<1x64xi32>
    %192 = arith.shli %175, %191 : vector<1x64xi32>
    %193 = arith.addi %192, %179 : vector<1x64xi32>
    %c-1_i32_73 = arith.constant -1 : i32
    %194 = vector.broadcast %c-1_i32_73 : i32 to vector<1x64xi32>
    %195 = arith.select %190, %193, %194 : vector<1x64xi1>, vector<1x64xi32>
    %196 = vector.broadcast %16 : vector<256x1xi32> to vector<256x64xi32>
    %197 = vector.broadcast %195 : vector<1x64xi32> to vector<256x64xi32>
    %198 = arith.cmpi eq, %196, %197 : vector<256x64xi32>
    %cst_74 = arith.constant 1.000000e+00 : f32
    %cst_75 = arith.constant 0.000000e+00 : f32
    %199 = vector.broadcast %cst_74 : f32 to vector<256x64xf32>
    %200 = vector.broadcast %cst_75 : f32 to vector<256x64xf32>
    %201 = arith.select %198, %199, %200 : vector<256x64xi1>, vector<256x64xf32>
    %cst_76 = arith.constant dense<0.000000e+00> : vector<64x64xf32>
    %202 = tpu.matmul %10, %201, %cst_76 {dimension_numbers = #tpu.dot_dimension_numbers<[1], [0], [0], [1], [0, 0, 1, 1], [], []>} : vector<64x256xf32>, vector<256x64xf32>, vector<64x64xf32> -> vector<64x64xf32>
    %c1_i32_77 = arith.constant 1 : i32
    %203 = vector.broadcast %c1_i32_77 : i32 to vector<1x64xi32>
    %204 = arith.shli %13, %203 : vector<1x64xi32>
    %c0_i32_78 = arith.constant 0 : i32
    %205 = vector.broadcast %c0_i32_78 : i32 to vector<1x64xi32>
    %206 = arith.addi %204, %205 : vector<1x64xi32>
    %c1_i32_79 = arith.constant 1 : i32
    %207 = vector.broadcast %c1_i32_79 : i32 to vector<1x64xi32>
    %208 = arith.shli %15, %207 : vector<1x64xi32>
    %c1_i32_80 = arith.constant 1 : i32
    %209 = vector.broadcast %c1_i32_80 : i32 to vector<1x64xi32>
    %210 = arith.addi %208, %209 : vector<1x64xi32>
    %c0_i32_81 = arith.constant 0 : i32
    %211 = vector.broadcast %c0_i32_81 : i32 to vector<1x64xi32>
    %212 = arith.cmpi sge, %206, %211 : vector<1x64xi32>
    %c16_i32_82 = arith.constant 16 : i32
    %213 = vector.broadcast %c16_i32_82 : i32 to vector<1x64xi32>
    %214 = arith.cmpi slt, %206, %213 : vector<1x64xi32>
    %215 = arith.andi %212, %214 : vector<1x64xi1>
    %c0_i32_83 = arith.constant 0 : i32
    %216 = vector.broadcast %c0_i32_83 : i32 to vector<1x64xi32>
    %217 = arith.cmpi sge, %210, %216 : vector<1x64xi32>
    %218 = arith.andi %215, %217 : vector<1x64xi1>
    %c16_i32_84 = arith.constant 16 : i32
    %219 = vector.broadcast %c16_i32_84 : i32 to vector<1x64xi32>
    %220 = arith.cmpi slt, %210, %219 : vector<1x64xi32>
    %221 = arith.andi %218, %220 : vector<1x64xi1>
    %c4_i32_85 = arith.constant 4 : i32
    %222 = vector.broadcast %c4_i32_85 : i32 to vector<1x64xi32>
    %223 = arith.shli %206, %222 : vector<1x64xi32>
    %224 = arith.addi %223, %210 : vector<1x64xi32>
    %c-1_i32_86 = arith.constant -1 : i32
    %225 = vector.broadcast %c-1_i32_86 : i32 to vector<1x64xi32>
    %226 = arith.select %221, %224, %225 : vector<1x64xi1>, vector<1x64xi32>
    %227 = vector.broadcast %16 : vector<256x1xi32> to vector<256x64xi32>
    %228 = vector.broadcast %226 : vector<1x64xi32> to vector<256x64xi32>
    %229 = arith.cmpi eq, %227, %228 : vector<256x64xi32>
    %cst_87 = arith.constant 1.000000e+00 : f32
    %cst_88 = arith.constant 0.000000e+00 : f32
    %230 = vector.broadcast %cst_87 : f32 to vector<256x64xf32>
    %231 = vector.broadcast %cst_88 : f32 to vector<256x64xf32>
    %232 = arith.select %229, %230, %231 : vector<256x64xi1>, vector<256x64xf32>
    %cst_89 = arith.constant dense<0.000000e+00> : vector<64x64xf32>
    %233 = tpu.matmul %10, %232, %cst_89 {dimension_numbers = #tpu.dot_dimension_numbers<[1], [0], [0], [1], [0, 0, 1, 1], [], []>} : vector<64x256xf32>, vector<256x64xf32>, vector<64x64xf32> -> vector<64x64xf32>
    %c1_i32_90 = arith.constant 1 : i32
    %234 = vector.broadcast %c1_i32_90 : i32 to vector<1x64xi32>
    %235 = arith.shli %13, %234 : vector<1x64xi32>
    %c0_i32_91 = arith.constant 0 : i32
    %236 = vector.broadcast %c0_i32_91 : i32 to vector<1x64xi32>
    %237 = arith.addi %235, %236 : vector<1x64xi32>
    %c1_i32_92 = arith.constant 1 : i32
    %238 = vector.broadcast %c1_i32_92 : i32 to vector<1x64xi32>
    %239 = arith.shli %15, %238 : vector<1x64xi32>
    %c2_i32_93 = arith.constant 2 : i32
    %240 = vector.broadcast %c2_i32_93 : i32 to vector<1x64xi32>
    %241 = arith.addi %239, %240 : vector<1x64xi32>
    %c0_i32_94 = arith.constant 0 : i32
    %242 = vector.broadcast %c0_i32_94 : i32 to vector<1x64xi32>
    %243 = arith.cmpi sge, %237, %242 : vector<1x64xi32>
    %c16_i32_95 = arith.constant 16 : i32
    %244 = vector.broadcast %c16_i32_95 : i32 to vector<1x64xi32>
    %245 = arith.cmpi slt, %237, %244 : vector<1x64xi32>
    %246 = arith.andi %243, %245 : vector<1x64xi1>
    %c0_i32_96 = arith.constant 0 : i32
    %247 = vector.broadcast %c0_i32_96 : i32 to vector<1x64xi32>
    %248 = arith.cmpi sge, %241, %247 : vector<1x64xi32>
    %249 = arith.andi %246, %248 : vector<1x64xi1>
    %c16_i32_97 = arith.constant 16 : i32
    %250 = vector.broadcast %c16_i32_97 : i32 to vector<1x64xi32>
    %251 = arith.cmpi slt, %241, %250 : vector<1x64xi32>
    %252 = arith.andi %249, %251 : vector<1x64xi1>
    %c4_i32_98 = arith.constant 4 : i32
    %253 = vector.broadcast %c4_i32_98 : i32 to vector<1x64xi32>
    %254 = arith.shli %237, %253 : vector<1x64xi32>
    %255 = arith.addi %254, %241 : vector<1x64xi32>
    %c-1_i32_99 = arith.constant -1 : i32
    %256 = vector.broadcast %c-1_i32_99 : i32 to vector<1x64xi32>
    %257 = arith.select %252, %255, %256 : vector<1x64xi1>, vector<1x64xi32>
    %258 = vector.broadcast %16 : vector<256x1xi32> to vector<256x64xi32>
    %259 = vector.broadcast %257 : vector<1x64xi32> to vector<256x64xi32>
    %260 = arith.cmpi eq, %258, %259 : vector<256x64xi32>
    %cst_100 = arith.constant 1.000000e+00 : f32
    %cst_101 = arith.constant 0.000000e+00 : f32
    %261 = vector.broadcast %cst_100 : f32 to vector<256x64xf32>
    %262 = vector.broadcast %cst_101 : f32 to vector<256x64xf32>
    %263 = arith.select %260, %261, %262 : vector<256x64xi1>, vector<256x64xf32>
    %cst_102 = arith.constant dense<0.000000e+00> : vector<64x64xf32>
    %264 = tpu.matmul %10, %263, %cst_102 {dimension_numbers = #tpu.dot_dimension_numbers<[1], [0], [0], [1], [0, 0, 1, 1], [], []>} : vector<64x256xf32>, vector<256x64xf32>, vector<64x64xf32> -> vector<64x64xf32>
    %c1_i32_103 = arith.constant 1 : i32
    %265 = vector.broadcast %c1_i32_103 : i32 to vector<1x64xi32>
    %266 = arith.shli %13, %265 : vector<1x64xi32>
    %c1_i32_104 = arith.constant 1 : i32
    %267 = vector.broadcast %c1_i32_104 : i32 to vector<1x64xi32>
    %268 = arith.addi %266, %267 : vector<1x64xi32>
    %c1_i32_105 = arith.constant 1 : i32
    %269 = vector.broadcast %c1_i32_105 : i32 to vector<1x64xi32>
    %270 = arith.shli %15, %269 : vector<1x64xi32>
    %c-1_i32_106 = arith.constant -1 : i32
    %271 = vector.broadcast %c-1_i32_106 : i32 to vector<1x64xi32>
    %272 = arith.addi %270, %271 : vector<1x64xi32>
    %c0_i32_107 = arith.constant 0 : i32
    %273 = vector.broadcast %c0_i32_107 : i32 to vector<1x64xi32>
    %274 = arith.cmpi sge, %268, %273 : vector<1x64xi32>
    %c16_i32_108 = arith.constant 16 : i32
    %275 = vector.broadcast %c16_i32_108 : i32 to vector<1x64xi32>
    %276 = arith.cmpi slt, %268, %275 : vector<1x64xi32>
    %277 = arith.andi %274, %276 : vector<1x64xi1>
    %c0_i32_109 = arith.constant 0 : i32
    %278 = vector.broadcast %c0_i32_109 : i32 to vector<1x64xi32>
    %279 = arith.cmpi sge, %272, %278 : vector<1x64xi32>
    %280 = arith.andi %277, %279 : vector<1x64xi1>
    %c16_i32_110 = arith.constant 16 : i32
    %281 = vector.broadcast %c16_i32_110 : i32 to vector<1x64xi32>
    %282 = arith.cmpi slt, %272, %281 : vector<1x64xi32>
    %283 = arith.andi %280, %282 : vector<1x64xi1>
    %c4_i32_111 = arith.constant 4 : i32
    %284 = vector.broadcast %c4_i32_111 : i32 to vector<1x64xi32>
    %285 = arith.shli %268, %284 : vector<1x64xi32>
    %286 = arith.addi %285, %272 : vector<1x64xi32>
    %c-1_i32_112 = arith.constant -1 : i32
    %287 = vector.broadcast %c-1_i32_112 : i32 to vector<1x64xi32>
    %288 = arith.select %283, %286, %287 : vector<1x64xi1>, vector<1x64xi32>
    %289 = vector.broadcast %16 : vector<256x1xi32> to vector<256x64xi32>
    %290 = vector.broadcast %288 : vector<1x64xi32> to vector<256x64xi32>
    %291 = arith.cmpi eq, %289, %290 : vector<256x64xi32>
    %cst_113 = arith.constant 1.000000e+00 : f32
    %cst_114 = arith.constant 0.000000e+00 : f32
    %292 = vector.broadcast %cst_113 : f32 to vector<256x64xf32>
    %293 = vector.broadcast %cst_114 : f32 to vector<256x64xf32>
    %294 = arith.select %291, %292, %293 : vector<256x64xi1>, vector<256x64xf32>
    %cst_115 = arith.constant dense<0.000000e+00> : vector<64x64xf32>
    %295 = tpu.matmul %10, %294, %cst_115 {dimension_numbers = #tpu.dot_dimension_numbers<[1], [0], [0], [1], [0, 0, 1, 1], [], []>} : vector<64x256xf32>, vector<256x64xf32>, vector<64x64xf32> -> vector<64x64xf32>
    %c1_i32_116 = arith.constant 1 : i32
    %296 = vector.broadcast %c1_i32_116 : i32 to vector<1x64xi32>
    %297 = arith.shli %13, %296 : vector<1x64xi32>
    %c1_i32_117 = arith.constant 1 : i32
    %298 = vector.broadcast %c1_i32_117 : i32 to vector<1x64xi32>
    %299 = arith.addi %297, %298 : vector<1x64xi32>
    %c1_i32_118 = arith.constant 1 : i32
    %300 = vector.broadcast %c1_i32_118 : i32 to vector<1x64xi32>
    %301 = arith.shli %15, %300 : vector<1x64xi32>
    %c0_i32_119 = arith.constant 0 : i32
    %302 = vector.broadcast %c0_i32_119 : i32 to vector<1x64xi32>
    %303 = arith.addi %301, %302 : vector<1x64xi32>
    %c0_i32_120 = arith.constant 0 : i32
    %304 = vector.broadcast %c0_i32_120 : i32 to vector<1x64xi32>
    %305 = arith.cmpi sge, %299, %304 : vector<1x64xi32>
    %c16_i32_121 = arith.constant 16 : i32
    %306 = vector.broadcast %c16_i32_121 : i32 to vector<1x64xi32>
    %307 = arith.cmpi slt, %299, %306 : vector<1x64xi32>
    %308 = arith.andi %305, %307 : vector<1x64xi1>
    %c0_i32_122 = arith.constant 0 : i32
    %309 = vector.broadcast %c0_i32_122 : i32 to vector<1x64xi32>
    %310 = arith.cmpi sge, %303, %309 : vector<1x64xi32>
    %311 = arith.andi %308, %310 : vector<1x64xi1>
    %c16_i32_123 = arith.constant 16 : i32
    %312 = vector.broadcast %c16_i32_123 : i32 to vector<1x64xi32>
    %313 = arith.cmpi slt, %303, %312 : vector<1x64xi32>
    %314 = arith.andi %311, %313 : vector<1x64xi1>
    %c4_i32_124 = arith.constant 4 : i32
    %315 = vector.broadcast %c4_i32_124 : i32 to vector<1x64xi32>
    %316 = arith.shli %299, %315 : vector<1x64xi32>
    %317 = arith.addi %316, %303 : vector<1x64xi32>
    %c-1_i32_125 = arith.constant -1 : i32
    %318 = vector.broadcast %c-1_i32_125 : i32 to vector<1x64xi32>
    %319 = arith.select %314, %317, %318 : vector<1x64xi1>, vector<1x64xi32>
    %320 = vector.broadcast %16 : vector<256x1xi32> to vector<256x64xi32>
    %321 = vector.broadcast %319 : vector<1x64xi32> to vector<256x64xi32>
    %322 = arith.cmpi eq, %320, %321 : vector<256x64xi32>
    %cst_126 = arith.constant 1.000000e+00 : f32
    %cst_127 = arith.constant 0.000000e+00 : f32
    %323 = vector.broadcast %cst_126 : f32 to vector<256x64xf32>
    %324 = vector.broadcast %cst_127 : f32 to vector<256x64xf32>
    %325 = arith.select %322, %323, %324 : vector<256x64xi1>, vector<256x64xf32>
    %cst_128 = arith.constant dense<0.000000e+00> : vector<64x64xf32>
    %326 = tpu.matmul %10, %325, %cst_128 {dimension_numbers = #tpu.dot_dimension_numbers<[1], [0], [0], [1], [0, 0, 1, 1], [], []>} : vector<64x256xf32>, vector<256x64xf32>, vector<64x64xf32> -> vector<64x64xf32>
    %c1_i32_129 = arith.constant 1 : i32
    %327 = vector.broadcast %c1_i32_129 : i32 to vector<1x64xi32>
    %328 = arith.shli %13, %327 : vector<1x64xi32>
    %c1_i32_130 = arith.constant 1 : i32
    %329 = vector.broadcast %c1_i32_130 : i32 to vector<1x64xi32>
    %330 = arith.addi %328, %329 : vector<1x64xi32>
    %c1_i32_131 = arith.constant 1 : i32
    %331 = vector.broadcast %c1_i32_131 : i32 to vector<1x64xi32>
    %332 = arith.shli %15, %331 : vector<1x64xi32>
    %c1_i32_132 = arith.constant 1 : i32
    %333 = vector.broadcast %c1_i32_132 : i32 to vector<1x64xi32>
    %334 = arith.addi %332, %333 : vector<1x64xi32>
    %c0_i32_133 = arith.constant 0 : i32
    %335 = vector.broadcast %c0_i32_133 : i32 to vector<1x64xi32>
    %336 = arith.cmpi sge, %330, %335 : vector<1x64xi32>
    %c16_i32_134 = arith.constant 16 : i32
    %337 = vector.broadcast %c16_i32_134 : i32 to vector<1x64xi32>
    %338 = arith.cmpi slt, %330, %337 : vector<1x64xi32>
    %339 = arith.andi %336, %338 : vector<1x64xi1>
    %c0_i32_135 = arith.constant 0 : i32
    %340 = vector.broadcast %c0_i32_135 : i32 to vector<1x64xi32>
    %341 = arith.cmpi sge, %334, %340 : vector<1x64xi32>
    %342 = arith.andi %339, %341 : vector<1x64xi1>
    %c16_i32_136 = arith.constant 16 : i32
    %343 = vector.broadcast %c16_i32_136 : i32 to vector<1x64xi32>
    %344 = arith.cmpi slt, %334, %343 : vector<1x64xi32>
    %345 = arith.andi %342, %344 : vector<1x64xi1>
    %c4_i32_137 = arith.constant 4 : i32
    %346 = vector.broadcast %c4_i32_137 : i32 to vector<1x64xi32>
    %347 = arith.shli %330, %346 : vector<1x64xi32>
    %348 = arith.addi %347, %334 : vector<1x64xi32>
    %c-1_i32_138 = arith.constant -1 : i32
    %349 = vector.broadcast %c-1_i32_138 : i32 to vector<1x64xi32>
    %350 = arith.select %345, %348, %349 : vector<1x64xi1>, vector<1x64xi32>
    %351 = vector.broadcast %16 : vector<256x1xi32> to vector<256x64xi32>
    %352 = vector.broadcast %350 : vector<1x64xi32> to vector<256x64xi32>
    %353 = arith.cmpi eq, %351, %352 : vector<256x64xi32>
    %cst_139 = arith.constant 1.000000e+00 : f32
    %cst_140 = arith.constant 0.000000e+00 : f32
    %354 = vector.broadcast %cst_139 : f32 to vector<256x64xf32>
    %355 = vector.broadcast %cst_140 : f32 to vector<256x64xf32>
    %356 = arith.select %353, %354, %355 : vector<256x64xi1>, vector<256x64xf32>
    %cst_141 = arith.constant dense<0.000000e+00> : vector<64x64xf32>
    %357 = tpu.matmul %10, %356, %cst_141 {dimension_numbers = #tpu.dot_dimension_numbers<[1], [0], [0], [1], [0, 0, 1, 1], [], []>} : vector<64x256xf32>, vector<256x64xf32>, vector<64x64xf32> -> vector<64x64xf32>
    %c1_i32_142 = arith.constant 1 : i32
    %358 = vector.broadcast %c1_i32_142 : i32 to vector<1x64xi32>
    %359 = arith.shli %13, %358 : vector<1x64xi32>
    %c1_i32_143 = arith.constant 1 : i32
    %360 = vector.broadcast %c1_i32_143 : i32 to vector<1x64xi32>
    %361 = arith.addi %359, %360 : vector<1x64xi32>
    %c1_i32_144 = arith.constant 1 : i32
    %362 = vector.broadcast %c1_i32_144 : i32 to vector<1x64xi32>
    %363 = arith.shli %15, %362 : vector<1x64xi32>
    %c2_i32_145 = arith.constant 2 : i32
    %364 = vector.broadcast %c2_i32_145 : i32 to vector<1x64xi32>
    %365 = arith.addi %363, %364 : vector<1x64xi32>
    %c0_i32_146 = arith.constant 0 : i32
    %366 = vector.broadcast %c0_i32_146 : i32 to vector<1x64xi32>
    %367 = arith.cmpi sge, %361, %366 : vector<1x64xi32>
    %c16_i32_147 = arith.constant 16 : i32
    %368 = vector.broadcast %c16_i32_147 : i32 to vector<1x64xi32>
    %369 = arith.cmpi slt, %361, %368 : vector<1x64xi32>
    %370 = arith.andi %367, %369 : vector<1x64xi1>
    %c0_i32_148 = arith.constant 0 : i32
    %371 = vector.broadcast %c0_i32_148 : i32 to vector<1x64xi32>
    %372 = arith.cmpi sge, %365, %371 : vector<1x64xi32>
    %373 = arith.andi %370, %372 : vector<1x64xi1>
    %c16_i32_149 = arith.constant 16 : i32
    %374 = vector.broadcast %c16_i32_149 : i32 to vector<1x64xi32>
    %375 = arith.cmpi slt, %365, %374 : vector<1x64xi32>
    %376 = arith.andi %373, %375 : vector<1x64xi1>
    %c4_i32_150 = arith.constant 4 : i32
    %377 = vector.broadcast %c4_i32_150 : i32 to vector<1x64xi32>
    %378 = arith.shli %361, %377 : vector<1x64xi32>
    %379 = arith.addi %378, %365 : vector<1x64xi32>
    %c-1_i32_151 = arith.constant -1 : i32
    %380 = vector.broadcast %c-1_i32_151 : i32 to vector<1x64xi32>
    %381 = arith.select %376, %379, %380 : vector<1x64xi1>, vector<1x64xi32>
    %382 = vector.broadcast %16 : vector<256x1xi32> to vector<256x64xi32>
    %383 = vector.broadcast %381 : vector<1x64xi32> to vector<256x64xi32>
    %384 = arith.cmpi eq, %382, %383 : vector<256x64xi32>
    %cst_152 = arith.constant 1.000000e+00 : f32
    %cst_153 = arith.constant 0.000000e+00 : f32
    %385 = vector.broadcast %cst_152 : f32 to vector<256x64xf32>
    %386 = vector.broadcast %cst_153 : f32 to vector<256x64xf32>
    %387 = arith.select %384, %385, %386 : vector<256x64xi1>, vector<256x64xf32>
    %cst_154 = arith.constant dense<0.000000e+00> : vector<64x64xf32>
    %388 = tpu.matmul %10, %387, %cst_154 {dimension_numbers = #tpu.dot_dimension_numbers<[1], [0], [0], [1], [0, 0, 1, 1], [], []>} : vector<64x256xf32>, vector<256x64xf32>, vector<64x64xf32> -> vector<64x64xf32>
    %c1_i32_155 = arith.constant 1 : i32
    %389 = vector.broadcast %c1_i32_155 : i32 to vector<1x64xi32>
    %390 = arith.shli %13, %389 : vector<1x64xi32>
    %c2_i32_156 = arith.constant 2 : i32
    %391 = vector.broadcast %c2_i32_156 : i32 to vector<1x64xi32>
    %392 = arith.addi %390, %391 : vector<1x64xi32>
    %c1_i32_157 = arith.constant 1 : i32
    %393 = vector.broadcast %c1_i32_157 : i32 to vector<1x64xi32>
    %394 = arith.shli %15, %393 : vector<1x64xi32>
    %c-1_i32_158 = arith.constant -1 : i32
    %395 = vector.broadcast %c-1_i32_158 : i32 to vector<1x64xi32>
    %396 = arith.addi %394, %395 : vector<1x64xi32>
    %c0_i32_159 = arith.constant 0 : i32
    %397 = vector.broadcast %c0_i32_159 : i32 to vector<1x64xi32>
    %398 = arith.cmpi sge, %392, %397 : vector<1x64xi32>
    %c16_i32_160 = arith.constant 16 : i32
    %399 = vector.broadcast %c16_i32_160 : i32 to vector<1x64xi32>
    %400 = arith.cmpi slt, %392, %399 : vector<1x64xi32>
    %401 = arith.andi %398, %400 : vector<1x64xi1>
    %c0_i32_161 = arith.constant 0 : i32
    %402 = vector.broadcast %c0_i32_161 : i32 to vector<1x64xi32>
    %403 = arith.cmpi sge, %396, %402 : vector<1x64xi32>
    %404 = arith.andi %401, %403 : vector<1x64xi1>
    %c16_i32_162 = arith.constant 16 : i32
    %405 = vector.broadcast %c16_i32_162 : i32 to vector<1x64xi32>
    %406 = arith.cmpi slt, %396, %405 : vector<1x64xi32>
    %407 = arith.andi %404, %406 : vector<1x64xi1>
    %c4_i32_163 = arith.constant 4 : i32
    %408 = vector.broadcast %c4_i32_163 : i32 to vector<1x64xi32>
    %409 = arith.shli %392, %408 : vector<1x64xi32>
    %410 = arith.addi %409, %396 : vector<1x64xi32>
    %c-1_i32_164 = arith.constant -1 : i32
    %411 = vector.broadcast %c-1_i32_164 : i32 to vector<1x64xi32>
    %412 = arith.select %407, %410, %411 : vector<1x64xi1>, vector<1x64xi32>
    %413 = vector.broadcast %16 : vector<256x1xi32> to vector<256x64xi32>
    %414 = vector.broadcast %412 : vector<1x64xi32> to vector<256x64xi32>
    %415 = arith.cmpi eq, %413, %414 : vector<256x64xi32>
    %cst_165 = arith.constant 1.000000e+00 : f32
    %cst_166 = arith.constant 0.000000e+00 : f32
    %416 = vector.broadcast %cst_165 : f32 to vector<256x64xf32>
    %417 = vector.broadcast %cst_166 : f32 to vector<256x64xf32>
    %418 = arith.select %415, %416, %417 : vector<256x64xi1>, vector<256x64xf32>
    %cst_167 = arith.constant dense<0.000000e+00> : vector<64x64xf32>
    %419 = tpu.matmul %10, %418, %cst_167 {dimension_numbers = #tpu.dot_dimension_numbers<[1], [0], [0], [1], [0, 0, 1, 1], [], []>} : vector<64x256xf32>, vector<256x64xf32>, vector<64x64xf32> -> vector<64x64xf32>
    %c1_i32_168 = arith.constant 1 : i32
    %420 = vector.broadcast %c1_i32_168 : i32 to vector<1x64xi32>
    %421 = arith.shli %13, %420 : vector<1x64xi32>
    %c2_i32_169 = arith.constant 2 : i32
    %422 = vector.broadcast %c2_i32_169 : i32 to vector<1x64xi32>
    %423 = arith.addi %421, %422 : vector<1x64xi32>
    %c1_i32_170 = arith.constant 1 : i32
    %424 = vector.broadcast %c1_i32_170 : i32 to vector<1x64xi32>
    %425 = arith.shli %15, %424 : vector<1x64xi32>
    %c0_i32_171 = arith.constant 0 : i32
    %426 = vector.broadcast %c0_i32_171 : i32 to vector<1x64xi32>
    %427 = arith.addi %425, %426 : vector<1x64xi32>
    %c0_i32_172 = arith.constant 0 : i32
    %428 = vector.broadcast %c0_i32_172 : i32 to vector<1x64xi32>
    %429 = arith.cmpi sge, %423, %428 : vector<1x64xi32>
    %c16_i32_173 = arith.constant 16 : i32
    %430 = vector.broadcast %c16_i32_173 : i32 to vector<1x64xi32>
    %431 = arith.cmpi slt, %423, %430 : vector<1x64xi32>
    %432 = arith.andi %429, %431 : vector<1x64xi1>
    %c0_i32_174 = arith.constant 0 : i32
    %433 = vector.broadcast %c0_i32_174 : i32 to vector<1x64xi32>
    %434 = arith.cmpi sge, %427, %433 : vector<1x64xi32>
    %435 = arith.andi %432, %434 : vector<1x64xi1>
    %c16_i32_175 = arith.constant 16 : i32
    %436 = vector.broadcast %c16_i32_175 : i32 to vector<1x64xi32>
    %437 = arith.cmpi slt, %427, %436 : vector<1x64xi32>
    %438 = arith.andi %435, %437 : vector<1x64xi1>
    %c4_i32_176 = arith.constant 4 : i32
    %439 = vector.broadcast %c4_i32_176 : i32 to vector<1x64xi32>
    %440 = arith.shli %423, %439 : vector<1x64xi32>
    %441 = arith.addi %440, %427 : vector<1x64xi32>
    %c-1_i32_177 = arith.constant -1 : i32
    %442 = vector.broadcast %c-1_i32_177 : i32 to vector<1x64xi32>
    %443 = arith.select %438, %441, %442 : vector<1x64xi1>, vector<1x64xi32>
    %444 = vector.broadcast %16 : vector<256x1xi32> to vector<256x64xi32>
    %445 = vector.broadcast %443 : vector<1x64xi32> to vector<256x64xi32>
    %446 = arith.cmpi eq, %444, %445 : vector<256x64xi32>
    %cst_178 = arith.constant 1.000000e+00 : f32
    %cst_179 = arith.constant 0.000000e+00 : f32
    %447 = vector.broadcast %cst_178 : f32 to vector<256x64xf32>
    %448 = vector.broadcast %cst_179 : f32 to vector<256x64xf32>
    %449 = arith.select %446, %447, %448 : vector<256x64xi1>, vector<256x64xf32>
    %cst_180 = arith.constant dense<0.000000e+00> : vector<64x64xf32>
    %450 = tpu.matmul %10, %449, %cst_180 {dimension_numbers = #tpu.dot_dimension_numbers<[1], [0], [0], [1], [0, 0, 1, 1], [], []>} : vector<64x256xf32>, vector<256x64xf32>, vector<64x64xf32> -> vector<64x64xf32>
    %c1_i32_181 = arith.constant 1 : i32
    %451 = vector.broadcast %c1_i32_181 : i32 to vector<1x64xi32>
    %452 = arith.shli %13, %451 : vector<1x64xi32>
    %c2_i32_182 = arith.constant 2 : i32
    %453 = vector.broadcast %c2_i32_182 : i32 to vector<1x64xi32>
    %454 = arith.addi %452, %453 : vector<1x64xi32>
    %c1_i32_183 = arith.constant 1 : i32
    %455 = vector.broadcast %c1_i32_183 : i32 to vector<1x64xi32>
    %456 = arith.shli %15, %455 : vector<1x64xi32>
    %c1_i32_184 = arith.constant 1 : i32
    %457 = vector.broadcast %c1_i32_184 : i32 to vector<1x64xi32>
    %458 = arith.addi %456, %457 : vector<1x64xi32>
    %c0_i32_185 = arith.constant 0 : i32
    %459 = vector.broadcast %c0_i32_185 : i32 to vector<1x64xi32>
    %460 = arith.cmpi sge, %454, %459 : vector<1x64xi32>
    %c16_i32_186 = arith.constant 16 : i32
    %461 = vector.broadcast %c16_i32_186 : i32 to vector<1x64xi32>
    %462 = arith.cmpi slt, %454, %461 : vector<1x64xi32>
    %463 = arith.andi %460, %462 : vector<1x64xi1>
    %c0_i32_187 = arith.constant 0 : i32
    %464 = vector.broadcast %c0_i32_187 : i32 to vector<1x64xi32>
    %465 = arith.cmpi sge, %458, %464 : vector<1x64xi32>
    %466 = arith.andi %463, %465 : vector<1x64xi1>
    %c16_i32_188 = arith.constant 16 : i32
    %467 = vector.broadcast %c16_i32_188 : i32 to vector<1x64xi32>
    %468 = arith.cmpi slt, %458, %467 : vector<1x64xi32>
    %469 = arith.andi %466, %468 : vector<1x64xi1>
    %c4_i32_189 = arith.constant 4 : i32
    %470 = vector.broadcast %c4_i32_189 : i32 to vector<1x64xi32>
    %471 = arith.shli %454, %470 : vector<1x64xi32>
    %472 = arith.addi %471, %458 : vector<1x64xi32>
    %c-1_i32_190 = arith.constant -1 : i32
    %473 = vector.broadcast %c-1_i32_190 : i32 to vector<1x64xi32>
    %474 = arith.select %469, %472, %473 : vector<1x64xi1>, vector<1x64xi32>
    %475 = vector.broadcast %16 : vector<256x1xi32> to vector<256x64xi32>
    %476 = vector.broadcast %474 : vector<1x64xi32> to vector<256x64xi32>
    %477 = arith.cmpi eq, %475, %476 : vector<256x64xi32>
    %cst_191 = arith.constant 1.000000e+00 : f32
    %cst_192 = arith.constant 0.000000e+00 : f32
    %478 = vector.broadcast %cst_191 : f32 to vector<256x64xf32>
    %479 = vector.broadcast %cst_192 : f32 to vector<256x64xf32>
    %480 = arith.select %477, %478, %479 : vector<256x64xi1>, vector<256x64xf32>
    %cst_193 = arith.constant dense<0.000000e+00> : vector<64x64xf32>
    %481 = tpu.matmul %10, %480, %cst_193 {dimension_numbers = #tpu.dot_dimension_numbers<[1], [0], [0], [1], [0, 0, 1, 1], [], []>} : vector<64x256xf32>, vector<256x64xf32>, vector<64x64xf32> -> vector<64x64xf32>
    %c1_i32_194 = arith.constant 1 : i32
    %482 = vector.broadcast %c1_i32_194 : i32 to vector<1x64xi32>
    %483 = arith.shli %13, %482 : vector<1x64xi32>
    %c2_i32_195 = arith.constant 2 : i32
    %484 = vector.broadcast %c2_i32_195 : i32 to vector<1x64xi32>
    %485 = arith.addi %483, %484 : vector<1x64xi32>
    %c1_i32_196 = arith.constant 1 : i32
    %486 = vector.broadcast %c1_i32_196 : i32 to vector<1x64xi32>
    %487 = arith.shli %15, %486 : vector<1x64xi32>
    %c2_i32_197 = arith.constant 2 : i32
    %488 = vector.broadcast %c2_i32_197 : i32 to vector<1x64xi32>
    %489 = arith.addi %487, %488 : vector<1x64xi32>
    %c0_i32_198 = arith.constant 0 : i32
    %490 = vector.broadcast %c0_i32_198 : i32 to vector<1x64xi32>
    %491 = arith.cmpi sge, %485, %490 : vector<1x64xi32>
    %c16_i32_199 = arith.constant 16 : i32
    %492 = vector.broadcast %c16_i32_199 : i32 to vector<1x64xi32>
    %493 = arith.cmpi slt, %485, %492 : vector<1x64xi32>
    %494 = arith.andi %491, %493 : vector<1x64xi1>
    %c0_i32_200 = arith.constant 0 : i32
    %495 = vector.broadcast %c0_i32_200 : i32 to vector<1x64xi32>
    %496 = arith.cmpi sge, %489, %495 : vector<1x64xi32>
    %497 = arith.andi %494, %496 : vector<1x64xi1>
    %c16_i32_201 = arith.constant 16 : i32
    %498 = vector.broadcast %c16_i32_201 : i32 to vector<1x64xi32>
    %499 = arith.cmpi slt, %489, %498 : vector<1x64xi32>
    %500 = arith.andi %497, %499 : vector<1x64xi1>
    %c4_i32_202 = arith.constant 4 : i32
    %501 = vector.broadcast %c4_i32_202 : i32 to vector<1x64xi32>
    %502 = arith.shli %485, %501 : vector<1x64xi32>
    %503 = arith.addi %502, %489 : vector<1x64xi32>
    %c-1_i32_203 = arith.constant -1 : i32
    %504 = vector.broadcast %c-1_i32_203 : i32 to vector<1x64xi32>
    %505 = arith.select %500, %503, %504 : vector<1x64xi1>, vector<1x64xi32>
    %506 = vector.broadcast %16 : vector<256x1xi32> to vector<256x64xi32>
    %507 = vector.broadcast %505 : vector<1x64xi32> to vector<256x64xi32>
    %508 = arith.cmpi eq, %506, %507 : vector<256x64xi32>
    %cst_204 = arith.constant 1.000000e+00 : f32
    %cst_205 = arith.constant 0.000000e+00 : f32
    %509 = vector.broadcast %cst_204 : f32 to vector<256x64xf32>
    %510 = vector.broadcast %cst_205 : f32 to vector<256x64xf32>
    %511 = arith.select %508, %509, %510 : vector<256x64xi1>, vector<256x64xf32>
    %cst_206 = arith.constant dense<0.000000e+00> : vector<64x64xf32>
    %512 = tpu.matmul %10, %511, %cst_206 {dimension_numbers = #tpu.dot_dimension_numbers<[1], [0], [0], [1], [0, 0, 1, 1], [], []>} : vector<64x256xf32>, vector<256x64xf32>, vector<64x64xf32> -> vector<64x64xf32>
    %c0_207 = arith.constant 0 : index
    %c0_208 = arith.constant 0 : index
    %513 = vector.load %arg2[%c0_207, %c0_208] : memref<64x512xf32, #tpu.memory_space<vmem>>, vector<64x512xf32>
    %514 = vector.extract_strided_slice %47 {offsets = [0, 0], sizes = [32, 64], strides = [1, 1]} : vector<64x64xf32> to vector<32x64xf32>
    %515 = vector.extract_strided_slice %78 {offsets = [0, 0], sizes = [32, 64], strides = [1, 1]} : vector<64x64xf32> to vector<32x64xf32>
    %516 = vector.extract_strided_slice %109 {offsets = [0, 0], sizes = [32, 64], strides = [1, 1]} : vector<64x64xf32> to vector<32x64xf32>
    %517 = vector.extract_strided_slice %140 {offsets = [0, 0], sizes = [32, 64], strides = [1, 1]} : vector<64x64xf32> to vector<32x64xf32>
    %518 = vector.extract_strided_slice %171 {offsets = [0, 0], sizes = [32, 64], strides = [1, 1]} : vector<64x64xf32> to vector<32x64xf32>
    %519 = vector.extract_strided_slice %202 {offsets = [0, 0], sizes = [32, 64], strides = [1, 1]} : vector<64x64xf32> to vector<32x64xf32>
    %520 = vector.extract_strided_slice %233 {offsets = [0, 0], sizes = [32, 64], strides = [1, 1]} : vector<64x64xf32> to vector<32x64xf32>
    %521 = vector.extract_strided_slice %264 {offsets = [0, 0], sizes = [32, 64], strides = [1, 1]} : vector<64x64xf32> to vector<32x64xf32>
    %522 = vector.extract_strided_slice %295 {offsets = [0, 0], sizes = [32, 64], strides = [1, 1]} : vector<64x64xf32> to vector<32x64xf32>
    %523 = vector.extract_strided_slice %326 {offsets = [0, 0], sizes = [32, 64], strides = [1, 1]} : vector<64x64xf32> to vector<32x64xf32>
    %524 = vector.extract_strided_slice %357 {offsets = [0, 0], sizes = [32, 64], strides = [1, 1]} : vector<64x64xf32> to vector<32x64xf32>
    %525 = vector.extract_strided_slice %388 {offsets = [0, 0], sizes = [32, 64], strides = [1, 1]} : vector<64x64xf32> to vector<32x64xf32>
    %526 = vector.extract_strided_slice %419 {offsets = [0, 0], sizes = [32, 64], strides = [1, 1]} : vector<64x64xf32> to vector<32x64xf32>
    %527 = vector.extract_strided_slice %450 {offsets = [0, 0], sizes = [32, 64], strides = [1, 1]} : vector<64x64xf32> to vector<32x64xf32>
    %528 = vector.extract_strided_slice %481 {offsets = [0, 0], sizes = [32, 64], strides = [1, 1]} : vector<64x64xf32> to vector<32x64xf32>
    %529 = vector.extract_strided_slice %512 {offsets = [0, 0], sizes = [32, 64], strides = [1, 1]} : vector<64x64xf32> to vector<32x64xf32>
    %530 = tpu.concatenate %514, %515, %516, %517, %518, %519, %520, %521, %522, %523, %524, %525, %526, %527, %528, %529 in 0 : vector<32x64xf32>, vector<32x64xf32>, vector<32x64xf32>, vector<32x64xf32>, vector<32x64xf32>, vector<32x64xf32>, vector<32x64xf32>, vector<32x64xf32>, vector<32x64xf32>, vector<32x64xf32>, vector<32x64xf32>, vector<32x64xf32>, vector<32x64xf32>, vector<32x64xf32>, vector<32x64xf32>, vector<32x64xf32> -> vector<512x64xf32>
    %cst_209 = arith.constant dense<0.000000e+00> : vector<64x64xf32>
    %531 = tpu.matmul %513, %530, %cst_209 {dimension_numbers = #tpu.dot_dimension_numbers<[1], [0], [0], [1], [0, 0, 1, 1], [], []>} : vector<64x512xf32>, vector<512x64xf32>, vector<64x64xf32> -> vector<64x64xf32>
    %532 = vector.extract_strided_slice %47 {offsets = [32, 0], sizes = [32, 64], strides = [1, 1]} : vector<64x64xf32> to vector<32x64xf32>
    %533 = vector.extract_strided_slice %78 {offsets = [32, 0], sizes = [32, 64], strides = [1, 1]} : vector<64x64xf32> to vector<32x64xf32>
    %534 = vector.extract_strided_slice %109 {offsets = [32, 0], sizes = [32, 64], strides = [1, 1]} : vector<64x64xf32> to vector<32x64xf32>
    %535 = vector.extract_strided_slice %140 {offsets = [32, 0], sizes = [32, 64], strides = [1, 1]} : vector<64x64xf32> to vector<32x64xf32>
    %536 = vector.extract_strided_slice %171 {offsets = [32, 0], sizes = [32, 64], strides = [1, 1]} : vector<64x64xf32> to vector<32x64xf32>
    %537 = vector.extract_strided_slice %202 {offsets = [32, 0], sizes = [32, 64], strides = [1, 1]} : vector<64x64xf32> to vector<32x64xf32>
    %538 = vector.extract_strided_slice %233 {offsets = [32, 0], sizes = [32, 64], strides = [1, 1]} : vector<64x64xf32> to vector<32x64xf32>
    %539 = vector.extract_strided_slice %264 {offsets = [32, 0], sizes = [32, 64], strides = [1, 1]} : vector<64x64xf32> to vector<32x64xf32>
    %540 = vector.extract_strided_slice %295 {offsets = [32, 0], sizes = [32, 64], strides = [1, 1]} : vector<64x64xf32> to vector<32x64xf32>
    %541 = vector.extract_strided_slice %326 {offsets = [32, 0], sizes = [32, 64], strides = [1, 1]} : vector<64x64xf32> to vector<32x64xf32>
    %542 = vector.extract_strided_slice %357 {offsets = [32, 0], sizes = [32, 64], strides = [1, 1]} : vector<64x64xf32> to vector<32x64xf32>
    %543 = vector.extract_strided_slice %388 {offsets = [32, 0], sizes = [32, 64], strides = [1, 1]} : vector<64x64xf32> to vector<32x64xf32>
    %544 = vector.extract_strided_slice %419 {offsets = [32, 0], sizes = [32, 64], strides = [1, 1]} : vector<64x64xf32> to vector<32x64xf32>
    %545 = vector.extract_strided_slice %450 {offsets = [32, 0], sizes = [32, 64], strides = [1, 1]} : vector<64x64xf32> to vector<32x64xf32>
    %546 = vector.extract_strided_slice %481 {offsets = [32, 0], sizes = [32, 64], strides = [1, 1]} : vector<64x64xf32> to vector<32x64xf32>
    %547 = vector.extract_strided_slice %512 {offsets = [32, 0], sizes = [32, 64], strides = [1, 1]} : vector<64x64xf32> to vector<32x64xf32>
    %548 = tpu.concatenate %532, %533, %534, %535, %536, %537, %538, %539, %540, %541, %542, %543, %544, %545, %546, %547 in 0 : vector<32x64xf32>, vector<32x64xf32>, vector<32x64xf32>, vector<32x64xf32>, vector<32x64xf32>, vector<32x64xf32>, vector<32x64xf32>, vector<32x64xf32>, vector<32x64xf32>, vector<32x64xf32>, vector<32x64xf32>, vector<32x64xf32>, vector<32x64xf32>, vector<32x64xf32>, vector<32x64xf32>, vector<32x64xf32> -> vector<512x64xf32>
    %cst_210 = arith.constant dense<0.000000e+00> : vector<64x64xf32>
    %549 = tpu.matmul %513, %548, %cst_210 {dimension_numbers = #tpu.dot_dimension_numbers<[1], [0], [0], [1], [0, 0, 1, 1], [], []>} : vector<64x512xf32>, vector<512x64xf32>, vector<64x64xf32> -> vector<64x64xf32>
    %cst_211 = arith.constant dense<0.000000e+00> : vector<64xf32>
    %550 = vector.multi_reduction <add>, %531, %cst_211 [1] : vector<64x64xf32> to vector<64xf32>
    %551 = vector.shape_cast %550 : vector<64xf32> to vector<64x1xf32>
    %cst_212 = arith.constant 0.000000e+00 : f32
    %552 = vector.broadcast %cst_212 : f32 to vector<64x1xf32>
    %553 = arith.addf %552, %551 : vector<64x1xf32>
    %cst_213 = arith.constant dense<0.000000e+00> : vector<64xf32>
    %554 = vector.multi_reduction <add>, %549, %cst_213 [1] : vector<64x64xf32> to vector<64xf32>
    %555 = vector.shape_cast %554 : vector<64xf32> to vector<64x1xf32>
    %556 = arith.addf %553, %555 : vector<64x1xf32>
    %cst_214 = arith.constant 1.280000e+02 : f32
    %557 = vector.broadcast %cst_214 : f32 to vector<64x1xf32>
    %558 = arith.divf %556, %557 : vector<64x1xf32>
    %559 = vector.broadcast %558 : vector<64x1xf32> to vector<64x64xf32>
    %560 = arith.subf %531, %559 : vector<64x64xf32>
    %561 = arith.mulf %560, %560 : vector<64x64xf32>
    %cst_215 = arith.constant dense<0.000000e+00> : vector<64xf32>
    %562 = vector.multi_reduction <add>, %561, %cst_215 [1] : vector<64x64xf32> to vector<64xf32>
    %563 = vector.shape_cast %562 : vector<64xf32> to vector<64x1xf32>
    %cst_216 = arith.constant 0.000000e+00 : f32
    %564 = vector.broadcast %cst_216 : f32 to vector<64x1xf32>
    %565 = arith.addf %564, %563 : vector<64x1xf32>
    %566 = vector.broadcast %558 : vector<64x1xf32> to vector<64x64xf32>
    %567 = arith.subf %549, %566 : vector<64x64xf32>
    %568 = arith.mulf %567, %567 : vector<64x64xf32>
    %cst_217 = arith.constant dense<0.000000e+00> : vector<64xf32>
    %569 = vector.multi_reduction <add>, %568, %cst_217 [1] : vector<64x64xf32> to vector<64xf32>
    %570 = vector.shape_cast %569 : vector<64xf32> to vector<64x1xf32>
    %571 = arith.addf %565, %570 : vector<64x1xf32>
    %cst_218 = arith.constant 1.280000e+02 : f32
    %572 = vector.broadcast %cst_218 : f32 to vector<64x1xf32>
    %573 = arith.divf %571, %572 : vector<64x1xf32>
    %cst_219 = arith.constant 9.99999974E-6 : f32
    %574 = vector.broadcast %cst_219 : f32 to vector<64x1xf32>
    %575 = arith.addf %573, %574 : vector<64x1xf32>
    %576 = math.rsqrt %575 : vector<64x1xf32>
    %c0_220 = arith.constant 0 : index
    %c0_221 = arith.constant 0 : index
    %577 = vector.load %arg4[%c0_220, %c0_221] : memref<64x1xf32, #tpu.memory_space<vmem>>, vector<64x1xf32>
    %578 = arith.mulf %576, %577 : vector<64x1xf32>
    %c0_222 = arith.constant 0 : index
    %c0_223 = arith.constant 0 : index
    %579 = vector.load %arg5[%c0_222, %c0_223] : memref<64x1xf32, #tpu.memory_space<vmem>>, vector<64x1xf32>
    %580 = vector.broadcast %558 : vector<64x1xf32> to vector<64x64xf32>
    %581 = arith.subf %531, %580 : vector<64x64xf32>
    %582 = vector.broadcast %578 : vector<64x1xf32> to vector<64x64xf32>
    %583 = arith.mulf %581, %582 : vector<64x64xf32>
    %584 = vector.broadcast %579 : vector<64x1xf32> to vector<64x64xf32>
    %585 = arith.addf %583, %584 : vector<64x64xf32>
    %cst_224 = arith.constant 0.000000e+00 : f32
    %586 = vector.broadcast %cst_224 : f32 to vector<64x64xf32>
    %587 = arith.cmpf ogt, %585, %586 : vector<64x64xf32>
    %cst_225 = arith.constant 2.000000e-01 : f32
    %588 = vector.broadcast %cst_225 : f32 to vector<64x64xf32>
    %589 = arith.mulf %588, %585 : vector<64x64xf32>
    %590 = arith.select %587, %585, %589 : vector<64x64xi1>, vector<64x64xf32>
    %591 = vector.broadcast %558 : vector<64x1xf32> to vector<64x64xf32>
    %592 = arith.subf %549, %591 : vector<64x64xf32>
    %593 = vector.broadcast %578 : vector<64x1xf32> to vector<64x64xf32>
    %594 = arith.mulf %592, %593 : vector<64x64xf32>
    %595 = vector.broadcast %579 : vector<64x1xf32> to vector<64x64xf32>
    %596 = arith.addf %594, %595 : vector<64x64xf32>
    %cst_226 = arith.constant 0.000000e+00 : f32
    %597 = vector.broadcast %cst_226 : f32 to vector<64x64xf32>
    %598 = arith.cmpf ogt, %596, %597 : vector<64x64xf32>
    %cst_227 = arith.constant 2.000000e-01 : f32
    %599 = vector.broadcast %cst_227 : f32 to vector<64x64xf32>
    %600 = arith.mulf %599, %596 : vector<64x64xf32>
    %601 = arith.select %598, %596, %600 : vector<64x64xi1>, vector<64x64xf32>
    %602 = tpu.concatenate %590, %601 in 0 : vector<64x64xf32>, vector<64x64xf32> -> vector<128x64xf32>
    %603 = tpu.iota {dimensions = array<i32: 1>} : vector<1x16xi32>
    %c2_i32_228 = arith.constant 2 : i32
    %604 = vector.broadcast %c2_i32_228 : i32 to vector<1x16xi32>
    %605 = arith.shrsi %603, %604 : vector<1x16xi32>
    %c3_i32_229 = arith.constant 3 : i32
    %606 = vector.broadcast %c3_i32_229 : i32 to vector<1x16xi32>
    %607 = arith.andi %603, %606 : vector<1x16xi32>
    %608 = tpu.iota {dimensions = array<i32: 0>} : vector<64x1xi32>
    %c1_i32_230 = arith.constant 1 : i32
    %609 = vector.broadcast %c1_i32_230 : i32 to vector<1x16xi32>
    %610 = arith.shli %605, %609 : vector<1x16xi32>
    %c-1_i32_231 = arith.constant -1 : i32
    %611 = vector.broadcast %c-1_i32_231 : i32 to vector<1x16xi32>
    %612 = arith.addi %610, %611 : vector<1x16xi32>
    %c1_i32_232 = arith.constant 1 : i32
    %613 = vector.broadcast %c1_i32_232 : i32 to vector<1x16xi32>
    %614 = arith.shli %607, %613 : vector<1x16xi32>
    %c-1_i32_233 = arith.constant -1 : i32
    %615 = vector.broadcast %c-1_i32_233 : i32 to vector<1x16xi32>
    %616 = arith.addi %614, %615 : vector<1x16xi32>
    %c0_i32_234 = arith.constant 0 : i32
    %617 = vector.broadcast %c0_i32_234 : i32 to vector<1x16xi32>
    %618 = arith.cmpi sge, %612, %617 : vector<1x16xi32>
    %c8_i32 = arith.constant 8 : i32
    %619 = vector.broadcast %c8_i32 : i32 to vector<1x16xi32>
    %620 = arith.cmpi slt, %612, %619 : vector<1x16xi32>
    %621 = arith.andi %618, %620 : vector<1x16xi1>
    %c0_i32_235 = arith.constant 0 : i32
    %622 = vector.broadcast %c0_i32_235 : i32 to vector<1x16xi32>
    %623 = arith.cmpi sge, %616, %622 : vector<1x16xi32>
    %624 = arith.andi %621, %623 : vector<1x16xi1>
    %c8_i32_236 = arith.constant 8 : i32
    %625 = vector.broadcast %c8_i32_236 : i32 to vector<1x16xi32>
    %626 = arith.cmpi slt, %616, %625 : vector<1x16xi32>
    %627 = arith.andi %624, %626 : vector<1x16xi1>
    %c3_i32_237 = arith.constant 3 : i32
    %628 = vector.broadcast %c3_i32_237 : i32 to vector<1x16xi32>
    %629 = arith.shli %612, %628 : vector<1x16xi32>
    %630 = arith.addi %629, %616 : vector<1x16xi32>
    %c-1_i32_238 = arith.constant -1 : i32
    %631 = vector.broadcast %c-1_i32_238 : i32 to vector<1x16xi32>
    %632 = arith.select %627, %630, %631 : vector<1x16xi1>, vector<1x16xi32>
    %633 = vector.broadcast %608 : vector<64x1xi32> to vector<64x16xi32>
    %634 = vector.broadcast %632 : vector<1x16xi32> to vector<64x16xi32>
    %635 = arith.cmpi eq, %633, %634 : vector<64x16xi32>
    %cst_239 = arith.constant 1.000000e+00 : f32
    %cst_240 = arith.constant 0.000000e+00 : f32
    %636 = vector.broadcast %cst_239 : f32 to vector<64x16xf32>
    %637 = vector.broadcast %cst_240 : f32 to vector<64x16xf32>
    %638 = arith.select %635, %636, %637 : vector<64x16xi1>, vector<64x16xf32>
    %cst_241 = arith.constant dense<0.000000e+00> : vector<128x16xf32>
    %639 = tpu.matmul %602, %638, %cst_241 {dimension_numbers = #tpu.dot_dimension_numbers<[1], [0], [0], [1], [0, 0, 1, 1], [], []>} : vector<128x64xf32>, vector<64x16xf32>, vector<128x16xf32> -> vector<128x16xf32>
    %c1_i32_242 = arith.constant 1 : i32
    %640 = vector.broadcast %c1_i32_242 : i32 to vector<1x16xi32>
    %641 = arith.shli %605, %640 : vector<1x16xi32>
    %c-1_i32_243 = arith.constant -1 : i32
    %642 = vector.broadcast %c-1_i32_243 : i32 to vector<1x16xi32>
    %643 = arith.addi %641, %642 : vector<1x16xi32>
    %c1_i32_244 = arith.constant 1 : i32
    %644 = vector.broadcast %c1_i32_244 : i32 to vector<1x16xi32>
    %645 = arith.shli %607, %644 : vector<1x16xi32>
    %c0_i32_245 = arith.constant 0 : i32
    %646 = vector.broadcast %c0_i32_245 : i32 to vector<1x16xi32>
    %647 = arith.addi %645, %646 : vector<1x16xi32>
    %c0_i32_246 = arith.constant 0 : i32
    %648 = vector.broadcast %c0_i32_246 : i32 to vector<1x16xi32>
    %649 = arith.cmpi sge, %643, %648 : vector<1x16xi32>
    %c8_i32_247 = arith.constant 8 : i32
    %650 = vector.broadcast %c8_i32_247 : i32 to vector<1x16xi32>
    %651 = arith.cmpi slt, %643, %650 : vector<1x16xi32>
    %652 = arith.andi %649, %651 : vector<1x16xi1>
    %c0_i32_248 = arith.constant 0 : i32
    %653 = vector.broadcast %c0_i32_248 : i32 to vector<1x16xi32>
    %654 = arith.cmpi sge, %647, %653 : vector<1x16xi32>
    %655 = arith.andi %652, %654 : vector<1x16xi1>
    %c8_i32_249 = arith.constant 8 : i32
    %656 = vector.broadcast %c8_i32_249 : i32 to vector<1x16xi32>
    %657 = arith.cmpi slt, %647, %656 : vector<1x16xi32>
    %658 = arith.andi %655, %657 : vector<1x16xi1>
    %c3_i32_250 = arith.constant 3 : i32
    %659 = vector.broadcast %c3_i32_250 : i32 to vector<1x16xi32>
    %660 = arith.shli %643, %659 : vector<1x16xi32>
    %661 = arith.addi %660, %647 : vector<1x16xi32>
    %c-1_i32_251 = arith.constant -1 : i32
    %662 = vector.broadcast %c-1_i32_251 : i32 to vector<1x16xi32>
    %663 = arith.select %658, %661, %662 : vector<1x16xi1>, vector<1x16xi32>
    %664 = vector.broadcast %608 : vector<64x1xi32> to vector<64x16xi32>
    %665 = vector.broadcast %663 : vector<1x16xi32> to vector<64x16xi32>
    %666 = arith.cmpi eq, %664, %665 : vector<64x16xi32>
    %cst_252 = arith.constant 1.000000e+00 : f32
    %cst_253 = arith.constant 0.000000e+00 : f32
    %667 = vector.broadcast %cst_252 : f32 to vector<64x16xf32>
    %668 = vector.broadcast %cst_253 : f32 to vector<64x16xf32>
    %669 = arith.select %666, %667, %668 : vector<64x16xi1>, vector<64x16xf32>
    %cst_254 = arith.constant dense<0.000000e+00> : vector<128x16xf32>
    %670 = tpu.matmul %602, %669, %cst_254 {dimension_numbers = #tpu.dot_dimension_numbers<[1], [0], [0], [1], [0, 0, 1, 1], [], []>} : vector<128x64xf32>, vector<64x16xf32>, vector<128x16xf32> -> vector<128x16xf32>
    %c1_i32_255 = arith.constant 1 : i32
    %671 = vector.broadcast %c1_i32_255 : i32 to vector<1x16xi32>
    %672 = arith.shli %605, %671 : vector<1x16xi32>
    %c-1_i32_256 = arith.constant -1 : i32
    %673 = vector.broadcast %c-1_i32_256 : i32 to vector<1x16xi32>
    %674 = arith.addi %672, %673 : vector<1x16xi32>
    %c1_i32_257 = arith.constant 1 : i32
    %675 = vector.broadcast %c1_i32_257 : i32 to vector<1x16xi32>
    %676 = arith.shli %607, %675 : vector<1x16xi32>
    %c1_i32_258 = arith.constant 1 : i32
    %677 = vector.broadcast %c1_i32_258 : i32 to vector<1x16xi32>
    %678 = arith.addi %676, %677 : vector<1x16xi32>
    %c0_i32_259 = arith.constant 0 : i32
    %679 = vector.broadcast %c0_i32_259 : i32 to vector<1x16xi32>
    %680 = arith.cmpi sge, %674, %679 : vector<1x16xi32>
    %c8_i32_260 = arith.constant 8 : i32
    %681 = vector.broadcast %c8_i32_260 : i32 to vector<1x16xi32>
    %682 = arith.cmpi slt, %674, %681 : vector<1x16xi32>
    %683 = arith.andi %680, %682 : vector<1x16xi1>
    %c0_i32_261 = arith.constant 0 : i32
    %684 = vector.broadcast %c0_i32_261 : i32 to vector<1x16xi32>
    %685 = arith.cmpi sge, %678, %684 : vector<1x16xi32>
    %686 = arith.andi %683, %685 : vector<1x16xi1>
    %c8_i32_262 = arith.constant 8 : i32
    %687 = vector.broadcast %c8_i32_262 : i32 to vector<1x16xi32>
    %688 = arith.cmpi slt, %678, %687 : vector<1x16xi32>
    %689 = arith.andi %686, %688 : vector<1x16xi1>
    %c3_i32_263 = arith.constant 3 : i32
    %690 = vector.broadcast %c3_i32_263 : i32 to vector<1x16xi32>
    %691 = arith.shli %674, %690 : vector<1x16xi32>
    %692 = arith.addi %691, %678 : vector<1x16xi32>
    %c-1_i32_264 = arith.constant -1 : i32
    %693 = vector.broadcast %c-1_i32_264 : i32 to vector<1x16xi32>
    %694 = arith.select %689, %692, %693 : vector<1x16xi1>, vector<1x16xi32>
    %695 = vector.broadcast %608 : vector<64x1xi32> to vector<64x16xi32>
    %696 = vector.broadcast %694 : vector<1x16xi32> to vector<64x16xi32>
    %697 = arith.cmpi eq, %695, %696 : vector<64x16xi32>
    %cst_265 = arith.constant 1.000000e+00 : f32
    %cst_266 = arith.constant 0.000000e+00 : f32
    %698 = vector.broadcast %cst_265 : f32 to vector<64x16xf32>
    %699 = vector.broadcast %cst_266 : f32 to vector<64x16xf32>
    %700 = arith.select %697, %698, %699 : vector<64x16xi1>, vector<64x16xf32>
    %cst_267 = arith.constant dense<0.000000e+00> : vector<128x16xf32>
    %701 = tpu.matmul %602, %700, %cst_267 {dimension_numbers = #tpu.dot_dimension_numbers<[1], [0], [0], [1], [0, 0, 1, 1], [], []>} : vector<128x64xf32>, vector<64x16xf32>, vector<128x16xf32> -> vector<128x16xf32>
    %c1_i32_268 = arith.constant 1 : i32
    %702 = vector.broadcast %c1_i32_268 : i32 to vector<1x16xi32>
    %703 = arith.shli %605, %702 : vector<1x16xi32>
    %c-1_i32_269 = arith.constant -1 : i32
    %704 = vector.broadcast %c-1_i32_269 : i32 to vector<1x16xi32>
    %705 = arith.addi %703, %704 : vector<1x16xi32>
    %c1_i32_270 = arith.constant 1 : i32
    %706 = vector.broadcast %c1_i32_270 : i32 to vector<1x16xi32>
    %707 = arith.shli %607, %706 : vector<1x16xi32>
    %c2_i32_271 = arith.constant 2 : i32
    %708 = vector.broadcast %c2_i32_271 : i32 to vector<1x16xi32>
    %709 = arith.addi %707, %708 : vector<1x16xi32>
    %c0_i32_272 = arith.constant 0 : i32
    %710 = vector.broadcast %c0_i32_272 : i32 to vector<1x16xi32>
    %711 = arith.cmpi sge, %705, %710 : vector<1x16xi32>
    %c8_i32_273 = arith.constant 8 : i32
    %712 = vector.broadcast %c8_i32_273 : i32 to vector<1x16xi32>
    %713 = arith.cmpi slt, %705, %712 : vector<1x16xi32>
    %714 = arith.andi %711, %713 : vector<1x16xi1>
    %c0_i32_274 = arith.constant 0 : i32
    %715 = vector.broadcast %c0_i32_274 : i32 to vector<1x16xi32>
    %716 = arith.cmpi sge, %709, %715 : vector<1x16xi32>
    %717 = arith.andi %714, %716 : vector<1x16xi1>
    %c8_i32_275 = arith.constant 8 : i32
    %718 = vector.broadcast %c8_i32_275 : i32 to vector<1x16xi32>
    %719 = arith.cmpi slt, %709, %718 : vector<1x16xi32>
    %720 = arith.andi %717, %719 : vector<1x16xi1>
    %c3_i32_276 = arith.constant 3 : i32
    %721 = vector.broadcast %c3_i32_276 : i32 to vector<1x16xi32>
    %722 = arith.shli %705, %721 : vector<1x16xi32>
    %723 = arith.addi %722, %709 : vector<1x16xi32>
    %c-1_i32_277 = arith.constant -1 : i32
    %724 = vector.broadcast %c-1_i32_277 : i32 to vector<1x16xi32>
    %725 = arith.select %720, %723, %724 : vector<1x16xi1>, vector<1x16xi32>
    %726 = vector.broadcast %608 : vector<64x1xi32> to vector<64x16xi32>
    %727 = vector.broadcast %725 : vector<1x16xi32> to vector<64x16xi32>
    %728 = arith.cmpi eq, %726, %727 : vector<64x16xi32>
    %cst_278 = arith.constant 1.000000e+00 : f32
    %cst_279 = arith.constant 0.000000e+00 : f32
    %729 = vector.broadcast %cst_278 : f32 to vector<64x16xf32>
    %730 = vector.broadcast %cst_279 : f32 to vector<64x16xf32>
    %731 = arith.select %728, %729, %730 : vector<64x16xi1>, vector<64x16xf32>
    %cst_280 = arith.constant dense<0.000000e+00> : vector<128x16xf32>
    %732 = tpu.matmul %602, %731, %cst_280 {dimension_numbers = #tpu.dot_dimension_numbers<[1], [0], [0], [1], [0, 0, 1, 1], [], []>} : vector<128x64xf32>, vector<64x16xf32>, vector<128x16xf32> -> vector<128x16xf32>
    %c1_i32_281 = arith.constant 1 : i32
    %733 = vector.broadcast %c1_i32_281 : i32 to vector<1x16xi32>
    %734 = arith.shli %605, %733 : vector<1x16xi32>
    %c0_i32_282 = arith.constant 0 : i32
    %735 = vector.broadcast %c0_i32_282 : i32 to vector<1x16xi32>
    %736 = arith.addi %734, %735 : vector<1x16xi32>
    %c1_i32_283 = arith.constant 1 : i32
    %737 = vector.broadcast %c1_i32_283 : i32 to vector<1x16xi32>
    %738 = arith.shli %607, %737 : vector<1x16xi32>
    %c-1_i32_284 = arith.constant -1 : i32
    %739 = vector.broadcast %c-1_i32_284 : i32 to vector<1x16xi32>
    %740 = arith.addi %738, %739 : vector<1x16xi32>
    %c0_i32_285 = arith.constant 0 : i32
    %741 = vector.broadcast %c0_i32_285 : i32 to vector<1x16xi32>
    %742 = arith.cmpi sge, %736, %741 : vector<1x16xi32>
    %c8_i32_286 = arith.constant 8 : i32
    %743 = vector.broadcast %c8_i32_286 : i32 to vector<1x16xi32>
    %744 = arith.cmpi slt, %736, %743 : vector<1x16xi32>
    %745 = arith.andi %742, %744 : vector<1x16xi1>
    %c0_i32_287 = arith.constant 0 : i32
    %746 = vector.broadcast %c0_i32_287 : i32 to vector<1x16xi32>
    %747 = arith.cmpi sge, %740, %746 : vector<1x16xi32>
    %748 = arith.andi %745, %747 : vector<1x16xi1>
    %c8_i32_288 = arith.constant 8 : i32
    %749 = vector.broadcast %c8_i32_288 : i32 to vector<1x16xi32>
    %750 = arith.cmpi slt, %740, %749 : vector<1x16xi32>
    %751 = arith.andi %748, %750 : vector<1x16xi1>
    %c3_i32_289 = arith.constant 3 : i32
    %752 = vector.broadcast %c3_i32_289 : i32 to vector<1x16xi32>
    %753 = arith.shli %736, %752 : vector<1x16xi32>
    %754 = arith.addi %753, %740 : vector<1x16xi32>
    %c-1_i32_290 = arith.constant -1 : i32
    %755 = vector.broadcast %c-1_i32_290 : i32 to vector<1x16xi32>
    %756 = arith.select %751, %754, %755 : vector<1x16xi1>, vector<1x16xi32>
    %757 = vector.broadcast %608 : vector<64x1xi32> to vector<64x16xi32>
    %758 = vector.broadcast %756 : vector<1x16xi32> to vector<64x16xi32>
    %759 = arith.cmpi eq, %757, %758 : vector<64x16xi32>
    %cst_291 = arith.constant 1.000000e+00 : f32
    %cst_292 = arith.constant 0.000000e+00 : f32
    %760 = vector.broadcast %cst_291 : f32 to vector<64x16xf32>
    %761 = vector.broadcast %cst_292 : f32 to vector<64x16xf32>
    %762 = arith.select %759, %760, %761 : vector<64x16xi1>, vector<64x16xf32>
    %cst_293 = arith.constant dense<0.000000e+00> : vector<128x16xf32>
    %763 = tpu.matmul %602, %762, %cst_293 {dimension_numbers = #tpu.dot_dimension_numbers<[1], [0], [0], [1], [0, 0, 1, 1], [], []>} : vector<128x64xf32>, vector<64x16xf32>, vector<128x16xf32> -> vector<128x16xf32>
    %c1_i32_294 = arith.constant 1 : i32
    %764 = vector.broadcast %c1_i32_294 : i32 to vector<1x16xi32>
    %765 = arith.shli %605, %764 : vector<1x16xi32>
    %c0_i32_295 = arith.constant 0 : i32
    %766 = vector.broadcast %c0_i32_295 : i32 to vector<1x16xi32>
    %767 = arith.addi %765, %766 : vector<1x16xi32>
    %c1_i32_296 = arith.constant 1 : i32
    %768 = vector.broadcast %c1_i32_296 : i32 to vector<1x16xi32>
    %769 = arith.shli %607, %768 : vector<1x16xi32>
    %c0_i32_297 = arith.constant 0 : i32
    %770 = vector.broadcast %c0_i32_297 : i32 to vector<1x16xi32>
    %771 = arith.addi %769, %770 : vector<1x16xi32>
    %c0_i32_298 = arith.constant 0 : i32
    %772 = vector.broadcast %c0_i32_298 : i32 to vector<1x16xi32>
    %773 = arith.cmpi sge, %767, %772 : vector<1x16xi32>
    %c8_i32_299 = arith.constant 8 : i32
    %774 = vector.broadcast %c8_i32_299 : i32 to vector<1x16xi32>
    %775 = arith.cmpi slt, %767, %774 : vector<1x16xi32>
    %776 = arith.andi %773, %775 : vector<1x16xi1>
    %c0_i32_300 = arith.constant 0 : i32
    %777 = vector.broadcast %c0_i32_300 : i32 to vector<1x16xi32>
    %778 = arith.cmpi sge, %771, %777 : vector<1x16xi32>
    %779 = arith.andi %776, %778 : vector<1x16xi1>
    %c8_i32_301 = arith.constant 8 : i32
    %780 = vector.broadcast %c8_i32_301 : i32 to vector<1x16xi32>
    %781 = arith.cmpi slt, %771, %780 : vector<1x16xi32>
    %782 = arith.andi %779, %781 : vector<1x16xi1>
    %c3_i32_302 = arith.constant 3 : i32
    %783 = vector.broadcast %c3_i32_302 : i32 to vector<1x16xi32>
    %784 = arith.shli %767, %783 : vector<1x16xi32>
    %785 = arith.addi %784, %771 : vector<1x16xi32>
    %c-1_i32_303 = arith.constant -1 : i32
    %786 = vector.broadcast %c-1_i32_303 : i32 to vector<1x16xi32>
    %787 = arith.select %782, %785, %786 : vector<1x16xi1>, vector<1x16xi32>
    %788 = vector.broadcast %608 : vector<64x1xi32> to vector<64x16xi32>
    %789 = vector.broadcast %787 : vector<1x16xi32> to vector<64x16xi32>
    %790 = arith.cmpi eq, %788, %789 : vector<64x16xi32>
    %cst_304 = arith.constant 1.000000e+00 : f32
    %cst_305 = arith.constant 0.000000e+00 : f32
    %791 = vector.broadcast %cst_304 : f32 to vector<64x16xf32>
    %792 = vector.broadcast %cst_305 : f32 to vector<64x16xf32>
    %793 = arith.select %790, %791, %792 : vector<64x16xi1>, vector<64x16xf32>
    %cst_306 = arith.constant dense<0.000000e+00> : vector<128x16xf32>
    %794 = tpu.matmul %602, %793, %cst_306 {dimension_numbers = #tpu.dot_dimension_numbers<[1], [0], [0], [1], [0, 0, 1, 1], [], []>} : vector<128x64xf32>, vector<64x16xf32>, vector<128x16xf32> -> vector<128x16xf32>
    %c1_i32_307 = arith.constant 1 : i32
    %795 = vector.broadcast %c1_i32_307 : i32 to vector<1x16xi32>
    %796 = arith.shli %605, %795 : vector<1x16xi32>
    %c0_i32_308 = arith.constant 0 : i32
    %797 = vector.broadcast %c0_i32_308 : i32 to vector<1x16xi32>
    %798 = arith.addi %796, %797 : vector<1x16xi32>
    %c1_i32_309 = arith.constant 1 : i32
    %799 = vector.broadcast %c1_i32_309 : i32 to vector<1x16xi32>
    %800 = arith.shli %607, %799 : vector<1x16xi32>
    %c1_i32_310 = arith.constant 1 : i32
    %801 = vector.broadcast %c1_i32_310 : i32 to vector<1x16xi32>
    %802 = arith.addi %800, %801 : vector<1x16xi32>
    %c0_i32_311 = arith.constant 0 : i32
    %803 = vector.broadcast %c0_i32_311 : i32 to vector<1x16xi32>
    %804 = arith.cmpi sge, %798, %803 : vector<1x16xi32>
    %c8_i32_312 = arith.constant 8 : i32
    %805 = vector.broadcast %c8_i32_312 : i32 to vector<1x16xi32>
    %806 = arith.cmpi slt, %798, %805 : vector<1x16xi32>
    %807 = arith.andi %804, %806 : vector<1x16xi1>
    %c0_i32_313 = arith.constant 0 : i32
    %808 = vector.broadcast %c0_i32_313 : i32 to vector<1x16xi32>
    %809 = arith.cmpi sge, %802, %808 : vector<1x16xi32>
    %810 = arith.andi %807, %809 : vector<1x16xi1>
    %c8_i32_314 = arith.constant 8 : i32
    %811 = vector.broadcast %c8_i32_314 : i32 to vector<1x16xi32>
    %812 = arith.cmpi slt, %802, %811 : vector<1x16xi32>
    %813 = arith.andi %810, %812 : vector<1x16xi1>
    %c3_i32_315 = arith.constant 3 : i32
    %814 = vector.broadcast %c3_i32_315 : i32 to vector<1x16xi32>
    %815 = arith.shli %798, %814 : vector<1x16xi32>
    %816 = arith.addi %815, %802 : vector<1x16xi32>
    %c-1_i32_316 = arith.constant -1 : i32
    %817 = vector.broadcast %c-1_i32_316 : i32 to vector<1x16xi32>
    %818 = arith.select %813, %816, %817 : vector<1x16xi1>, vector<1x16xi32>
    %819 = vector.broadcast %608 : vector<64x1xi32> to vector<64x16xi32>
    %820 = vector.broadcast %818 : vector<1x16xi32> to vector<64x16xi32>
    %821 = arith.cmpi eq, %819, %820 : vector<64x16xi32>
    %cst_317 = arith.constant 1.000000e+00 : f32
    %cst_318 = arith.constant 0.000000e+00 : f32
    %822 = vector.broadcast %cst_317 : f32 to vector<64x16xf32>
    %823 = vector.broadcast %cst_318 : f32 to vector<64x16xf32>
    %824 = arith.select %821, %822, %823 : vector<64x16xi1>, vector<64x16xf32>
    %cst_319 = arith.constant dense<0.000000e+00> : vector<128x16xf32>
    %825 = tpu.matmul %602, %824, %cst_319 {dimension_numbers = #tpu.dot_dimension_numbers<[1], [0], [0], [1], [0, 0, 1, 1], [], []>} : vector<128x64xf32>, vector<64x16xf32>, vector<128x16xf32> -> vector<128x16xf32>
    %c1_i32_320 = arith.constant 1 : i32
    %826 = vector.broadcast %c1_i32_320 : i32 to vector<1x16xi32>
    %827 = arith.shli %605, %826 : vector<1x16xi32>
    %c0_i32_321 = arith.constant 0 : i32
    %828 = vector.broadcast %c0_i32_321 : i32 to vector<1x16xi32>
    %829 = arith.addi %827, %828 : vector<1x16xi32>
    %c1_i32_322 = arith.constant 1 : i32
    %830 = vector.broadcast %c1_i32_322 : i32 to vector<1x16xi32>
    %831 = arith.shli %607, %830 : vector<1x16xi32>
    %c2_i32_323 = arith.constant 2 : i32
    %832 = vector.broadcast %c2_i32_323 : i32 to vector<1x16xi32>
    %833 = arith.addi %831, %832 : vector<1x16xi32>
    %c0_i32_324 = arith.constant 0 : i32
    %834 = vector.broadcast %c0_i32_324 : i32 to vector<1x16xi32>
    %835 = arith.cmpi sge, %829, %834 : vector<1x16xi32>
    %c8_i32_325 = arith.constant 8 : i32
    %836 = vector.broadcast %c8_i32_325 : i32 to vector<1x16xi32>
    %837 = arith.cmpi slt, %829, %836 : vector<1x16xi32>
    %838 = arith.andi %835, %837 : vector<1x16xi1>
    %c0_i32_326 = arith.constant 0 : i32
    %839 = vector.broadcast %c0_i32_326 : i32 to vector<1x16xi32>
    %840 = arith.cmpi sge, %833, %839 : vector<1x16xi32>
    %841 = arith.andi %838, %840 : vector<1x16xi1>
    %c8_i32_327 = arith.constant 8 : i32
    %842 = vector.broadcast %c8_i32_327 : i32 to vector<1x16xi32>
    %843 = arith.cmpi slt, %833, %842 : vector<1x16xi32>
    %844 = arith.andi %841, %843 : vector<1x16xi1>
    %c3_i32_328 = arith.constant 3 : i32
    %845 = vector.broadcast %c3_i32_328 : i32 to vector<1x16xi32>
    %846 = arith.shli %829, %845 : vector<1x16xi32>
    %847 = arith.addi %846, %833 : vector<1x16xi32>
    %c-1_i32_329 = arith.constant -1 : i32
    %848 = vector.broadcast %c-1_i32_329 : i32 to vector<1x16xi32>
    %849 = arith.select %844, %847, %848 : vector<1x16xi1>, vector<1x16xi32>
    %850 = vector.broadcast %608 : vector<64x1xi32> to vector<64x16xi32>
    %851 = vector.broadcast %849 : vector<1x16xi32> to vector<64x16xi32>
    %852 = arith.cmpi eq, %850, %851 : vector<64x16xi32>
    %cst_330 = arith.constant 1.000000e+00 : f32
    %cst_331 = arith.constant 0.000000e+00 : f32
    %853 = vector.broadcast %cst_330 : f32 to vector<64x16xf32>
    %854 = vector.broadcast %cst_331 : f32 to vector<64x16xf32>
    %855 = arith.select %852, %853, %854 : vector<64x16xi1>, vector<64x16xf32>
    %cst_332 = arith.constant dense<0.000000e+00> : vector<128x16xf32>
    %856 = tpu.matmul %602, %855, %cst_332 {dimension_numbers = #tpu.dot_dimension_numbers<[1], [0], [0], [1], [0, 0, 1, 1], [], []>} : vector<128x64xf32>, vector<64x16xf32>, vector<128x16xf32> -> vector<128x16xf32>
    %c1_i32_333 = arith.constant 1 : i32
    %857 = vector.broadcast %c1_i32_333 : i32 to vector<1x16xi32>
    %858 = arith.shli %605, %857 : vector<1x16xi32>
    %c1_i32_334 = arith.constant 1 : i32
    %859 = vector.broadcast %c1_i32_334 : i32 to vector<1x16xi32>
    %860 = arith.addi %858, %859 : vector<1x16xi32>
    %c1_i32_335 = arith.constant 1 : i32
    %861 = vector.broadcast %c1_i32_335 : i32 to vector<1x16xi32>
    %862 = arith.shli %607, %861 : vector<1x16xi32>
    %c-1_i32_336 = arith.constant -1 : i32
    %863 = vector.broadcast %c-1_i32_336 : i32 to vector<1x16xi32>
    %864 = arith.addi %862, %863 : vector<1x16xi32>
    %c0_i32_337 = arith.constant 0 : i32
    %865 = vector.broadcast %c0_i32_337 : i32 to vector<1x16xi32>
    %866 = arith.cmpi sge, %860, %865 : vector<1x16xi32>
    %c8_i32_338 = arith.constant 8 : i32
    %867 = vector.broadcast %c8_i32_338 : i32 to vector<1x16xi32>
    %868 = arith.cmpi slt, %860, %867 : vector<1x16xi32>
    %869 = arith.andi %866, %868 : vector<1x16xi1>
    %c0_i32_339 = arith.constant 0 : i32
    %870 = vector.broadcast %c0_i32_339 : i32 to vector<1x16xi32>
    %871 = arith.cmpi sge, %864, %870 : vector<1x16xi32>
    %872 = arith.andi %869, %871 : vector<1x16xi1>
    %c8_i32_340 = arith.constant 8 : i32
    %873 = vector.broadcast %c8_i32_340 : i32 to vector<1x16xi32>
    %874 = arith.cmpi slt, %864, %873 : vector<1x16xi32>
    %875 = arith.andi %872, %874 : vector<1x16xi1>
    %c3_i32_341 = arith.constant 3 : i32
    %876 = vector.broadcast %c3_i32_341 : i32 to vector<1x16xi32>
    %877 = arith.shli %860, %876 : vector<1x16xi32>
    %878 = arith.addi %877, %864 : vector<1x16xi32>
    %c-1_i32_342 = arith.constant -1 : i32
    %879 = vector.broadcast %c-1_i32_342 : i32 to vector<1x16xi32>
    %880 = arith.select %875, %878, %879 : vector<1x16xi1>, vector<1x16xi32>
    %881 = vector.broadcast %608 : vector<64x1xi32> to vector<64x16xi32>
    %882 = vector.broadcast %880 : vector<1x16xi32> to vector<64x16xi32>
    %883 = arith.cmpi eq, %881, %882 : vector<64x16xi32>
    %cst_343 = arith.constant 1.000000e+00 : f32
    %cst_344 = arith.constant 0.000000e+00 : f32
    %884 = vector.broadcast %cst_343 : f32 to vector<64x16xf32>
    %885 = vector.broadcast %cst_344 : f32 to vector<64x16xf32>
    %886 = arith.select %883, %884, %885 : vector<64x16xi1>, vector<64x16xf32>
    %cst_345 = arith.constant dense<0.000000e+00> : vector<128x16xf32>
    %887 = tpu.matmul %602, %886, %cst_345 {dimension_numbers = #tpu.dot_dimension_numbers<[1], [0], [0], [1], [0, 0, 1, 1], [], []>} : vector<128x64xf32>, vector<64x16xf32>, vector<128x16xf32> -> vector<128x16xf32>
    %c1_i32_346 = arith.constant 1 : i32
    %888 = vector.broadcast %c1_i32_346 : i32 to vector<1x16xi32>
    %889 = arith.shli %605, %888 : vector<1x16xi32>
    %c1_i32_347 = arith.constant 1 : i32
    %890 = vector.broadcast %c1_i32_347 : i32 to vector<1x16xi32>
    %891 = arith.addi %889, %890 : vector<1x16xi32>
    %c1_i32_348 = arith.constant 1 : i32
    %892 = vector.broadcast %c1_i32_348 : i32 to vector<1x16xi32>
    %893 = arith.shli %607, %892 : vector<1x16xi32>
    %c0_i32_349 = arith.constant 0 : i32
    %894 = vector.broadcast %c0_i32_349 : i32 to vector<1x16xi32>
    %895 = arith.addi %893, %894 : vector<1x16xi32>
    %c0_i32_350 = arith.constant 0 : i32
    %896 = vector.broadcast %c0_i32_350 : i32 to vector<1x16xi32>
    %897 = arith.cmpi sge, %891, %896 : vector<1x16xi32>
    %c8_i32_351 = arith.constant 8 : i32
    %898 = vector.broadcast %c8_i32_351 : i32 to vector<1x16xi32>
    %899 = arith.cmpi slt, %891, %898 : vector<1x16xi32>
    %900 = arith.andi %897, %899 : vector<1x16xi1>
    %c0_i32_352 = arith.constant 0 : i32
    %901 = vector.broadcast %c0_i32_352 : i32 to vector<1x16xi32>
    %902 = arith.cmpi sge, %895, %901 : vector<1x16xi32>
    %903 = arith.andi %900, %902 : vector<1x16xi1>
    %c8_i32_353 = arith.constant 8 : i32
    %904 = vector.broadcast %c8_i32_353 : i32 to vector<1x16xi32>
    %905 = arith.cmpi slt, %895, %904 : vector<1x16xi32>
    %906 = arith.andi %903, %905 : vector<1x16xi1>
    %c3_i32_354 = arith.constant 3 : i32
    %907 = vector.broadcast %c3_i32_354 : i32 to vector<1x16xi32>
    %908 = arith.shli %891, %907 : vector<1x16xi32>
    %909 = arith.addi %908, %895 : vector<1x16xi32>
    %c-1_i32_355 = arith.constant -1 : i32
    %910 = vector.broadcast %c-1_i32_355 : i32 to vector<1x16xi32>
    %911 = arith.select %906, %909, %910 : vector<1x16xi1>, vector<1x16xi32>
    %912 = vector.broadcast %608 : vector<64x1xi32> to vector<64x16xi32>
    %913 = vector.broadcast %911 : vector<1x16xi32> to vector<64x16xi32>
    %914 = arith.cmpi eq, %912, %913 : vector<64x16xi32>
    %cst_356 = arith.constant 1.000000e+00 : f32
    %cst_357 = arith.constant 0.000000e+00 : f32
    %915 = vector.broadcast %cst_356 : f32 to vector<64x16xf32>
    %916 = vector.broadcast %cst_357 : f32 to vector<64x16xf32>
    %917 = arith.select %914, %915, %916 : vector<64x16xi1>, vector<64x16xf32>
    %cst_358 = arith.constant dense<0.000000e+00> : vector<128x16xf32>
    %918 = tpu.matmul %602, %917, %cst_358 {dimension_numbers = #tpu.dot_dimension_numbers<[1], [0], [0], [1], [0, 0, 1, 1], [], []>} : vector<128x64xf32>, vector<64x16xf32>, vector<128x16xf32> -> vector<128x16xf32>
    %c1_i32_359 = arith.constant 1 : i32
    %919 = vector.broadcast %c1_i32_359 : i32 to vector<1x16xi32>
    %920 = arith.shli %605, %919 : vector<1x16xi32>
    %c1_i32_360 = arith.constant 1 : i32
    %921 = vector.broadcast %c1_i32_360 : i32 to vector<1x16xi32>
    %922 = arith.addi %920, %921 : vector<1x16xi32>
    %c1_i32_361 = arith.constant 1 : i32
    %923 = vector.broadcast %c1_i32_361 : i32 to vector<1x16xi32>
    %924 = arith.shli %607, %923 : vector<1x16xi32>
    %c1_i32_362 = arith.constant 1 : i32
    %925 = vector.broadcast %c1_i32_362 : i32 to vector<1x16xi32>
    %926 = arith.addi %924, %925 : vector<1x16xi32>
    %c0_i32_363 = arith.constant 0 : i32
    %927 = vector.broadcast %c0_i32_363 : i32 to vector<1x16xi32>
    %928 = arith.cmpi sge, %922, %927 : vector<1x16xi32>
    %c8_i32_364 = arith.constant 8 : i32
    %929 = vector.broadcast %c8_i32_364 : i32 to vector<1x16xi32>
    %930 = arith.cmpi slt, %922, %929 : vector<1x16xi32>
    %931 = arith.andi %928, %930 : vector<1x16xi1>
    %c0_i32_365 = arith.constant 0 : i32
    %932 = vector.broadcast %c0_i32_365 : i32 to vector<1x16xi32>
    %933 = arith.cmpi sge, %926, %932 : vector<1x16xi32>
    %934 = arith.andi %931, %933 : vector<1x16xi1>
    %c8_i32_366 = arith.constant 8 : i32
    %935 = vector.broadcast %c8_i32_366 : i32 to vector<1x16xi32>
    %936 = arith.cmpi slt, %926, %935 : vector<1x16xi32>
    %937 = arith.andi %934, %936 : vector<1x16xi1>
    %c3_i32_367 = arith.constant 3 : i32
    %938 = vector.broadcast %c3_i32_367 : i32 to vector<1x16xi32>
    %939 = arith.shli %922, %938 : vector<1x16xi32>
    %940 = arith.addi %939, %926 : vector<1x16xi32>
    %c-1_i32_368 = arith.constant -1 : i32
    %941 = vector.broadcast %c-1_i32_368 : i32 to vector<1x16xi32>
    %942 = arith.select %937, %940, %941 : vector<1x16xi1>, vector<1x16xi32>
    %943 = vector.broadcast %608 : vector<64x1xi32> to vector<64x16xi32>
    %944 = vector.broadcast %942 : vector<1x16xi32> to vector<64x16xi32>
    %945 = arith.cmpi eq, %943, %944 : vector<64x16xi32>
    %cst_369 = arith.constant 1.000000e+00 : f32
    %cst_370 = arith.constant 0.000000e+00 : f32
    %946 = vector.broadcast %cst_369 : f32 to vector<64x16xf32>
    %947 = vector.broadcast %cst_370 : f32 to vector<64x16xf32>
    %948 = arith.select %945, %946, %947 : vector<64x16xi1>, vector<64x16xf32>
    %cst_371 = arith.constant dense<0.000000e+00> : vector<128x16xf32>
    %949 = tpu.matmul %602, %948, %cst_371 {dimension_numbers = #tpu.dot_dimension_numbers<[1], [0], [0], [1], [0, 0, 1, 1], [], []>} : vector<128x64xf32>, vector<64x16xf32>, vector<128x16xf32> -> vector<128x16xf32>
    %c1_i32_372 = arith.constant 1 : i32
    %950 = vector.broadcast %c1_i32_372 : i32 to vector<1x16xi32>
    %951 = arith.shli %605, %950 : vector<1x16xi32>
    %c1_i32_373 = arith.constant 1 : i32
    %952 = vector.broadcast %c1_i32_373 : i32 to vector<1x16xi32>
    %953 = arith.addi %951, %952 : vector<1x16xi32>
    %c1_i32_374 = arith.constant 1 : i32
    %954 = vector.broadcast %c1_i32_374 : i32 to vector<1x16xi32>
    %955 = arith.shli %607, %954 : vector<1x16xi32>
    %c2_i32_375 = arith.constant 2 : i32
    %956 = vector.broadcast %c2_i32_375 : i32 to vector<1x16xi32>
    %957 = arith.addi %955, %956 : vector<1x16xi32>
    %c0_i32_376 = arith.constant 0 : i32
    %958 = vector.broadcast %c0_i32_376 : i32 to vector<1x16xi32>
    %959 = arith.cmpi sge, %953, %958 : vector<1x16xi32>
    %c8_i32_377 = arith.constant 8 : i32
    %960 = vector.broadcast %c8_i32_377 : i32 to vector<1x16xi32>
    %961 = arith.cmpi slt, %953, %960 : vector<1x16xi32>
    %962 = arith.andi %959, %961 : vector<1x16xi1>
    %c0_i32_378 = arith.constant 0 : i32
    %963 = vector.broadcast %c0_i32_378 : i32 to vector<1x16xi32>
    %964 = arith.cmpi sge, %957, %963 : vector<1x16xi32>
    %965 = arith.andi %962, %964 : vector<1x16xi1>
    %c8_i32_379 = arith.constant 8 : i32
    %966 = vector.broadcast %c8_i32_379 : i32 to vector<1x16xi32>
    %967 = arith.cmpi slt, %957, %966 : vector<1x16xi32>
    %968 = arith.andi %965, %967 : vector<1x16xi1>
    %c3_i32_380 = arith.constant 3 : i32
    %969 = vector.broadcast %c3_i32_380 : i32 to vector<1x16xi32>
    %970 = arith.shli %953, %969 : vector<1x16xi32>
    %971 = arith.addi %970, %957 : vector<1x16xi32>
    %c-1_i32_381 = arith.constant -1 : i32
    %972 = vector.broadcast %c-1_i32_381 : i32 to vector<1x16xi32>
    %973 = arith.select %968, %971, %972 : vector<1x16xi1>, vector<1x16xi32>
    %974 = vector.broadcast %608 : vector<64x1xi32> to vector<64x16xi32>
    %975 = vector.broadcast %973 : vector<1x16xi32> to vector<64x16xi32>
    %976 = arith.cmpi eq, %974, %975 : vector<64x16xi32>
    %cst_382 = arith.constant 1.000000e+00 : f32
    %cst_383 = arith.constant 0.000000e+00 : f32
    %977 = vector.broadcast %cst_382 : f32 to vector<64x16xf32>
    %978 = vector.broadcast %cst_383 : f32 to vector<64x16xf32>
    %979 = arith.select %976, %977, %978 : vector<64x16xi1>, vector<64x16xf32>
    %cst_384 = arith.constant dense<0.000000e+00> : vector<128x16xf32>
    %980 = tpu.matmul %602, %979, %cst_384 {dimension_numbers = #tpu.dot_dimension_numbers<[1], [0], [0], [1], [0, 0, 1, 1], [], []>} : vector<128x64xf32>, vector<64x16xf32>, vector<128x16xf32> -> vector<128x16xf32>
    %c1_i32_385 = arith.constant 1 : i32
    %981 = vector.broadcast %c1_i32_385 : i32 to vector<1x16xi32>
    %982 = arith.shli %605, %981 : vector<1x16xi32>
    %c2_i32_386 = arith.constant 2 : i32
    %983 = vector.broadcast %c2_i32_386 : i32 to vector<1x16xi32>
    %984 = arith.addi %982, %983 : vector<1x16xi32>
    %c1_i32_387 = arith.constant 1 : i32
    %985 = vector.broadcast %c1_i32_387 : i32 to vector<1x16xi32>
    %986 = arith.shli %607, %985 : vector<1x16xi32>
    %c-1_i32_388 = arith.constant -1 : i32
    %987 = vector.broadcast %c-1_i32_388 : i32 to vector<1x16xi32>
    %988 = arith.addi %986, %987 : vector<1x16xi32>
    %c0_i32_389 = arith.constant 0 : i32
    %989 = vector.broadcast %c0_i32_389 : i32 to vector<1x16xi32>
    %990 = arith.cmpi sge, %984, %989 : vector<1x16xi32>
    %c8_i32_390 = arith.constant 8 : i32
    %991 = vector.broadcast %c8_i32_390 : i32 to vector<1x16xi32>
    %992 = arith.cmpi slt, %984, %991 : vector<1x16xi32>
    %993 = arith.andi %990, %992 : vector<1x16xi1>
    %c0_i32_391 = arith.constant 0 : i32
    %994 = vector.broadcast %c0_i32_391 : i32 to vector<1x16xi32>
    %995 = arith.cmpi sge, %988, %994 : vector<1x16xi32>
    %996 = arith.andi %993, %995 : vector<1x16xi1>
    %c8_i32_392 = arith.constant 8 : i32
    %997 = vector.broadcast %c8_i32_392 : i32 to vector<1x16xi32>
    %998 = arith.cmpi slt, %988, %997 : vector<1x16xi32>
    %999 = arith.andi %996, %998 : vector<1x16xi1>
    %c3_i32_393 = arith.constant 3 : i32
    %1000 = vector.broadcast %c3_i32_393 : i32 to vector<1x16xi32>
    %1001 = arith.shli %984, %1000 : vector<1x16xi32>
    %1002 = arith.addi %1001, %988 : vector<1x16xi32>
    %c-1_i32_394 = arith.constant -1 : i32
    %1003 = vector.broadcast %c-1_i32_394 : i32 to vector<1x16xi32>
    %1004 = arith.select %999, %1002, %1003 : vector<1x16xi1>, vector<1x16xi32>
    %1005 = vector.broadcast %608 : vector<64x1xi32> to vector<64x16xi32>
    %1006 = vector.broadcast %1004 : vector<1x16xi32> to vector<64x16xi32>
    %1007 = arith.cmpi eq, %1005, %1006 : vector<64x16xi32>
    %cst_395 = arith.constant 1.000000e+00 : f32
    %cst_396 = arith.constant 0.000000e+00 : f32
    %1008 = vector.broadcast %cst_395 : f32 to vector<64x16xf32>
    %1009 = vector.broadcast %cst_396 : f32 to vector<64x16xf32>
    %1010 = arith.select %1007, %1008, %1009 : vector<64x16xi1>, vector<64x16xf32>
    %cst_397 = arith.constant dense<0.000000e+00> : vector<128x16xf32>
    %1011 = tpu.matmul %602, %1010, %cst_397 {dimension_numbers = #tpu.dot_dimension_numbers<[1], [0], [0], [1], [0, 0, 1, 1], [], []>} : vector<128x64xf32>, vector<64x16xf32>, vector<128x16xf32> -> vector<128x16xf32>
    %c1_i32_398 = arith.constant 1 : i32
    %1012 = vector.broadcast %c1_i32_398 : i32 to vector<1x16xi32>
    %1013 = arith.shli %605, %1012 : vector<1x16xi32>
    %c2_i32_399 = arith.constant 2 : i32
    %1014 = vector.broadcast %c2_i32_399 : i32 to vector<1x16xi32>
    %1015 = arith.addi %1013, %1014 : vector<1x16xi32>
    %c1_i32_400 = arith.constant 1 : i32
    %1016 = vector.broadcast %c1_i32_400 : i32 to vector<1x16xi32>
    %1017 = arith.shli %607, %1016 : vector<1x16xi32>
    %c0_i32_401 = arith.constant 0 : i32
    %1018 = vector.broadcast %c0_i32_401 : i32 to vector<1x16xi32>
    %1019 = arith.addi %1017, %1018 : vector<1x16xi32>
    %c0_i32_402 = arith.constant 0 : i32
    %1020 = vector.broadcast %c0_i32_402 : i32 to vector<1x16xi32>
    %1021 = arith.cmpi sge, %1015, %1020 : vector<1x16xi32>
    %c8_i32_403 = arith.constant 8 : i32
    %1022 = vector.broadcast %c8_i32_403 : i32 to vector<1x16xi32>
    %1023 = arith.cmpi slt, %1015, %1022 : vector<1x16xi32>
    %1024 = arith.andi %1021, %1023 : vector<1x16xi1>
    %c0_i32_404 = arith.constant 0 : i32
    %1025 = vector.broadcast %c0_i32_404 : i32 to vector<1x16xi32>
    %1026 = arith.cmpi sge, %1019, %1025 : vector<1x16xi32>
    %1027 = arith.andi %1024, %1026 : vector<1x16xi1>
    %c8_i32_405 = arith.constant 8 : i32
    %1028 = vector.broadcast %c8_i32_405 : i32 to vector<1x16xi32>
    %1029 = arith.cmpi slt, %1019, %1028 : vector<1x16xi32>
    %1030 = arith.andi %1027, %1029 : vector<1x16xi1>
    %c3_i32_406 = arith.constant 3 : i32
    %1031 = vector.broadcast %c3_i32_406 : i32 to vector<1x16xi32>
    %1032 = arith.shli %1015, %1031 : vector<1x16xi32>
    %1033 = arith.addi %1032, %1019 : vector<1x16xi32>
    %c-1_i32_407 = arith.constant -1 : i32
    %1034 = vector.broadcast %c-1_i32_407 : i32 to vector<1x16xi32>
    %1035 = arith.select %1030, %1033, %1034 : vector<1x16xi1>, vector<1x16xi32>
    %1036 = vector.broadcast %608 : vector<64x1xi32> to vector<64x16xi32>
    %1037 = vector.broadcast %1035 : vector<1x16xi32> to vector<64x16xi32>
    %1038 = arith.cmpi eq, %1036, %1037 : vector<64x16xi32>
    %cst_408 = arith.constant 1.000000e+00 : f32
    %cst_409 = arith.constant 0.000000e+00 : f32
    %1039 = vector.broadcast %cst_408 : f32 to vector<64x16xf32>
    %1040 = vector.broadcast %cst_409 : f32 to vector<64x16xf32>
    %1041 = arith.select %1038, %1039, %1040 : vector<64x16xi1>, vector<64x16xf32>
    %cst_410 = arith.constant dense<0.000000e+00> : vector<128x16xf32>
    %1042 = tpu.matmul %602, %1041, %cst_410 {dimension_numbers = #tpu.dot_dimension_numbers<[1], [0], [0], [1], [0, 0, 1, 1], [], []>} : vector<128x64xf32>, vector<64x16xf32>, vector<128x16xf32> -> vector<128x16xf32>
    %c1_i32_411 = arith.constant 1 : i32
    %1043 = vector.broadcast %c1_i32_411 : i32 to vector<1x16xi32>
    %1044 = arith.shli %605, %1043 : vector<1x16xi32>
    %c2_i32_412 = arith.constant 2 : i32
    %1045 = vector.broadcast %c2_i32_412 : i32 to vector<1x16xi32>
    %1046 = arith.addi %1044, %1045 : vector<1x16xi32>
    %c1_i32_413 = arith.constant 1 : i32
    %1047 = vector.broadcast %c1_i32_413 : i32 to vector<1x16xi32>
    %1048 = arith.shli %607, %1047 : vector<1x16xi32>
    %c1_i32_414 = arith.constant 1 : i32
    %1049 = vector.broadcast %c1_i32_414 : i32 to vector<1x16xi32>
    %1050 = arith.addi %1048, %1049 : vector<1x16xi32>
    %c0_i32_415 = arith.constant 0 : i32
    %1051 = vector.broadcast %c0_i32_415 : i32 to vector<1x16xi32>
    %1052 = arith.cmpi sge, %1046, %1051 : vector<1x16xi32>
    %c8_i32_416 = arith.constant 8 : i32
    %1053 = vector.broadcast %c8_i32_416 : i32 to vector<1x16xi32>
    %1054 = arith.cmpi slt, %1046, %1053 : vector<1x16xi32>
    %1055 = arith.andi %1052, %1054 : vector<1x16xi1>
    %c0_i32_417 = arith.constant 0 : i32
    %1056 = vector.broadcast %c0_i32_417 : i32 to vector<1x16xi32>
    %1057 = arith.cmpi sge, %1050, %1056 : vector<1x16xi32>
    %1058 = arith.andi %1055, %1057 : vector<1x16xi1>
    %c8_i32_418 = arith.constant 8 : i32
    %1059 = vector.broadcast %c8_i32_418 : i32 to vector<1x16xi32>
    %1060 = arith.cmpi slt, %1050, %1059 : vector<1x16xi32>
    %1061 = arith.andi %1058, %1060 : vector<1x16xi1>
    %c3_i32_419 = arith.constant 3 : i32
    %1062 = vector.broadcast %c3_i32_419 : i32 to vector<1x16xi32>
    %1063 = arith.shli %1046, %1062 : vector<1x16xi32>
    %1064 = arith.addi %1063, %1050 : vector<1x16xi32>
    %c-1_i32_420 = arith.constant -1 : i32
    %1065 = vector.broadcast %c-1_i32_420 : i32 to vector<1x16xi32>
    %1066 = arith.select %1061, %1064, %1065 : vector<1x16xi1>, vector<1x16xi32>
    %1067 = vector.broadcast %608 : vector<64x1xi32> to vector<64x16xi32>
    %1068 = vector.broadcast %1066 : vector<1x16xi32> to vector<64x16xi32>
    %1069 = arith.cmpi eq, %1067, %1068 : vector<64x16xi32>
    %cst_421 = arith.constant 1.000000e+00 : f32
    %cst_422 = arith.constant 0.000000e+00 : f32
    %1070 = vector.broadcast %cst_421 : f32 to vector<64x16xf32>
    %1071 = vector.broadcast %cst_422 : f32 to vector<64x16xf32>
    %1072 = arith.select %1069, %1070, %1071 : vector<64x16xi1>, vector<64x16xf32>
    %cst_423 = arith.constant dense<0.000000e+00> : vector<128x16xf32>
    %1073 = tpu.matmul %602, %1072, %cst_423 {dimension_numbers = #tpu.dot_dimension_numbers<[1], [0], [0], [1], [0, 0, 1, 1], [], []>} : vector<128x64xf32>, vector<64x16xf32>, vector<128x16xf32> -> vector<128x16xf32>
    %c1_i32_424 = arith.constant 1 : i32
    %1074 = vector.broadcast %c1_i32_424 : i32 to vector<1x16xi32>
    %1075 = arith.shli %605, %1074 : vector<1x16xi32>
    %c2_i32_425 = arith.constant 2 : i32
    %1076 = vector.broadcast %c2_i32_425 : i32 to vector<1x16xi32>
    %1077 = arith.addi %1075, %1076 : vector<1x16xi32>
    %c1_i32_426 = arith.constant 1 : i32
    %1078 = vector.broadcast %c1_i32_426 : i32 to vector<1x16xi32>
    %1079 = arith.shli %607, %1078 : vector<1x16xi32>
    %c2_i32_427 = arith.constant 2 : i32
    %1080 = vector.broadcast %c2_i32_427 : i32 to vector<1x16xi32>
    %1081 = arith.addi %1079, %1080 : vector<1x16xi32>
    %c0_i32_428 = arith.constant 0 : i32
    %1082 = vector.broadcast %c0_i32_428 : i32 to vector<1x16xi32>
    %1083 = arith.cmpi sge, %1077, %1082 : vector<1x16xi32>
    %c8_i32_429 = arith.constant 8 : i32
    %1084 = vector.broadcast %c8_i32_429 : i32 to vector<1x16xi32>
    %1085 = arith.cmpi slt, %1077, %1084 : vector<1x16xi32>
    %1086 = arith.andi %1083, %1085 : vector<1x16xi1>
    %c0_i32_430 = arith.constant 0 : i32
    %1087 = vector.broadcast %c0_i32_430 : i32 to vector<1x16xi32>
    %1088 = arith.cmpi sge, %1081, %1087 : vector<1x16xi32>
    %1089 = arith.andi %1086, %1088 : vector<1x16xi1>
    %c8_i32_431 = arith.constant 8 : i32
    %1090 = vector.broadcast %c8_i32_431 : i32 to vector<1x16xi32>
    %1091 = arith.cmpi slt, %1081, %1090 : vector<1x16xi32>
    %1092 = arith.andi %1089, %1091 : vector<1x16xi1>
    %c3_i32_432 = arith.constant 3 : i32
    %1093 = vector.broadcast %c3_i32_432 : i32 to vector<1x16xi32>
    %1094 = arith.shli %1077, %1093 : vector<1x16xi32>
    %1095 = arith.addi %1094, %1081 : vector<1x16xi32>
    %c-1_i32_433 = arith.constant -1 : i32
    %1096 = vector.broadcast %c-1_i32_433 : i32 to vector<1x16xi32>
    %1097 = arith.select %1092, %1095, %1096 : vector<1x16xi1>, vector<1x16xi32>
    %1098 = vector.broadcast %608 : vector<64x1xi32> to vector<64x16xi32>
    %1099 = vector.broadcast %1097 : vector<1x16xi32> to vector<64x16xi32>
    %1100 = arith.cmpi eq, %1098, %1099 : vector<64x16xi32>
    %cst_434 = arith.constant 1.000000e+00 : f32
    %cst_435 = arith.constant 0.000000e+00 : f32
    %1101 = vector.broadcast %cst_434 : f32 to vector<64x16xf32>
    %1102 = vector.broadcast %cst_435 : f32 to vector<64x16xf32>
    %1103 = arith.select %1100, %1101, %1102 : vector<64x16xi1>, vector<64x16xf32>
    %cst_436 = arith.constant dense<0.000000e+00> : vector<128x16xf32>
    %1104 = tpu.matmul %602, %1103, %cst_436 {dimension_numbers = #tpu.dot_dimension_numbers<[1], [0], [0], [1], [0, 0, 1, 1], [], []>} : vector<128x64xf32>, vector<64x16xf32>, vector<128x16xf32> -> vector<128x16xf32>
    %c0_437 = arith.constant 0 : index
    %c0_438 = arith.constant 0 : index
    %1105 = vector.load %arg3[%c0_437, %c0_438] : memref<128x1024xf32, #tpu.memory_space<vmem>>, vector<128x1024xf32>
    %1106 = vector.extract_strided_slice %639 {offsets = [0, 0], sizes = [64, 16], strides = [1, 1]} : vector<128x16xf32> to vector<64x16xf32>
    %1107 = vector.extract_strided_slice %670 {offsets = [0, 0], sizes = [64, 16], strides = [1, 1]} : vector<128x16xf32> to vector<64x16xf32>
    %1108 = vector.extract_strided_slice %701 {offsets = [0, 0], sizes = [64, 16], strides = [1, 1]} : vector<128x16xf32> to vector<64x16xf32>
    %1109 = vector.extract_strided_slice %732 {offsets = [0, 0], sizes = [64, 16], strides = [1, 1]} : vector<128x16xf32> to vector<64x16xf32>
    %1110 = vector.extract_strided_slice %763 {offsets = [0, 0], sizes = [64, 16], strides = [1, 1]} : vector<128x16xf32> to vector<64x16xf32>
    %1111 = vector.extract_strided_slice %794 {offsets = [0, 0], sizes = [64, 16], strides = [1, 1]} : vector<128x16xf32> to vector<64x16xf32>
    %1112 = vector.extract_strided_slice %825 {offsets = [0, 0], sizes = [64, 16], strides = [1, 1]} : vector<128x16xf32> to vector<64x16xf32>
    %1113 = vector.extract_strided_slice %856 {offsets = [0, 0], sizes = [64, 16], strides = [1, 1]} : vector<128x16xf32> to vector<64x16xf32>
    %1114 = vector.extract_strided_slice %887 {offsets = [0, 0], sizes = [64, 16], strides = [1, 1]} : vector<128x16xf32> to vector<64x16xf32>
    %1115 = vector.extract_strided_slice %918 {offsets = [0, 0], sizes = [64, 16], strides = [1, 1]} : vector<128x16xf32> to vector<64x16xf32>
    %1116 = vector.extract_strided_slice %949 {offsets = [0, 0], sizes = [64, 16], strides = [1, 1]} : vector<128x16xf32> to vector<64x16xf32>
    %1117 = vector.extract_strided_slice %980 {offsets = [0, 0], sizes = [64, 16], strides = [1, 1]} : vector<128x16xf32> to vector<64x16xf32>
    %1118 = vector.extract_strided_slice %1011 {offsets = [0, 0], sizes = [64, 16], strides = [1, 1]} : vector<128x16xf32> to vector<64x16xf32>
    %1119 = vector.extract_strided_slice %1042 {offsets = [0, 0], sizes = [64, 16], strides = [1, 1]} : vector<128x16xf32> to vector<64x16xf32>
    %1120 = vector.extract_strided_slice %1073 {offsets = [0, 0], sizes = [64, 16], strides = [1, 1]} : vector<128x16xf32> to vector<64x16xf32>
    %1121 = vector.extract_strided_slice %1104 {offsets = [0, 0], sizes = [64, 16], strides = [1, 1]} : vector<128x16xf32> to vector<64x16xf32>
    %1122 = tpu.concatenate %1106, %1107, %1108, %1109, %1110, %1111, %1112, %1113, %1114, %1115, %1116, %1117, %1118, %1119, %1120, %1121 in 0 : vector<64x16xf32>, vector<64x16xf32>, vector<64x16xf32>, vector<64x16xf32>, vector<64x16xf32>, vector<64x16xf32>, vector<64x16xf32>, vector<64x16xf32>, vector<64x16xf32>, vector<64x16xf32>, vector<64x16xf32>, vector<64x16xf32>, vector<64x16xf32>, vector<64x16xf32>, vector<64x16xf32>, vector<64x16xf32> -> vector<1024x16xf32>
    %cst_439 = arith.constant dense<0.000000e+00> : vector<128x16xf32>
    %1123 = tpu.matmul %1105, %1122, %cst_439 {dimension_numbers = #tpu.dot_dimension_numbers<[1], [0], [0], [1], [0, 0, 1, 1], [], []>} : vector<128x1024xf32>, vector<1024x16xf32>, vector<128x16xf32> -> vector<128x16xf32>
    %1124 = vector.extract_strided_slice %639 {offsets = [64, 0], sizes = [64, 16], strides = [1, 1]} : vector<128x16xf32> to vector<64x16xf32>
    %1125 = vector.extract_strided_slice %670 {offsets = [64, 0], sizes = [64, 16], strides = [1, 1]} : vector<128x16xf32> to vector<64x16xf32>
    %1126 = vector.extract_strided_slice %701 {offsets = [64, 0], sizes = [64, 16], strides = [1, 1]} : vector<128x16xf32> to vector<64x16xf32>
    %1127 = vector.extract_strided_slice %732 {offsets = [64, 0], sizes = [64, 16], strides = [1, 1]} : vector<128x16xf32> to vector<64x16xf32>
    %1128 = vector.extract_strided_slice %763 {offsets = [64, 0], sizes = [64, 16], strides = [1, 1]} : vector<128x16xf32> to vector<64x16xf32>
    %1129 = vector.extract_strided_slice %794 {offsets = [64, 0], sizes = [64, 16], strides = [1, 1]} : vector<128x16xf32> to vector<64x16xf32>
    %1130 = vector.extract_strided_slice %825 {offsets = [64, 0], sizes = [64, 16], strides = [1, 1]} : vector<128x16xf32> to vector<64x16xf32>
    %1131 = vector.extract_strided_slice %856 {offsets = [64, 0], sizes = [64, 16], strides = [1, 1]} : vector<128x16xf32> to vector<64x16xf32>
    %1132 = vector.extract_strided_slice %887 {offsets = [64, 0], sizes = [64, 16], strides = [1, 1]} : vector<128x16xf32> to vector<64x16xf32>
    %1133 = vector.extract_strided_slice %918 {offsets = [64, 0], sizes = [64, 16], strides = [1, 1]} : vector<128x16xf32> to vector<64x16xf32>
    %1134 = vector.extract_strided_slice %949 {offsets = [64, 0], sizes = [64, 16], strides = [1, 1]} : vector<128x16xf32> to vector<64x16xf32>
    %1135 = vector.extract_strided_slice %980 {offsets = [64, 0], sizes = [64, 16], strides = [1, 1]} : vector<128x16xf32> to vector<64x16xf32>
    %1136 = vector.extract_strided_slice %1011 {offsets = [64, 0], sizes = [64, 16], strides = [1, 1]} : vector<128x16xf32> to vector<64x16xf32>
    %1137 = vector.extract_strided_slice %1042 {offsets = [64, 0], sizes = [64, 16], strides = [1, 1]} : vector<128x16xf32> to vector<64x16xf32>
    %1138 = vector.extract_strided_slice %1073 {offsets = [64, 0], sizes = [64, 16], strides = [1, 1]} : vector<128x16xf32> to vector<64x16xf32>
    %1139 = vector.extract_strided_slice %1104 {offsets = [64, 0], sizes = [64, 16], strides = [1, 1]} : vector<128x16xf32> to vector<64x16xf32>
    %1140 = tpu.concatenate %1124, %1125, %1126, %1127, %1128, %1129, %1130, %1131, %1132, %1133, %1134, %1135, %1136, %1137, %1138, %1139 in 0 : vector<64x16xf32>, vector<64x16xf32>, vector<64x16xf32>, vector<64x16xf32>, vector<64x16xf32>, vector<64x16xf32>, vector<64x16xf32>, vector<64x16xf32>, vector<64x16xf32>, vector<64x16xf32>, vector<64x16xf32>, vector<64x16xf32>, vector<64x16xf32>, vector<64x16xf32>, vector<64x16xf32>, vector<64x16xf32> -> vector<1024x16xf32>
    %cst_440 = arith.constant dense<0.000000e+00> : vector<128x16xf32>
    %1141 = tpu.matmul %1105, %1140, %cst_440 {dimension_numbers = #tpu.dot_dimension_numbers<[1], [0], [0], [1], [0, 0, 1, 1], [], []>} : vector<128x1024xf32>, vector<1024x16xf32>, vector<128x16xf32> -> vector<128x16xf32>
    %cst_441 = arith.constant dense<0.000000e+00> : vector<128xf32>
    %1142 = vector.multi_reduction <add>, %1123, %cst_441 [1] : vector<128x16xf32> to vector<128xf32>
    %1143 = vector.shape_cast %1142 : vector<128xf32> to vector<128x1xf32>
    %cst_442 = arith.constant 0.000000e+00 : f32
    %1144 = vector.broadcast %cst_442 : f32 to vector<128x1xf32>
    %1145 = arith.addf %1144, %1143 : vector<128x1xf32>
    %cst_443 = arith.constant dense<0.000000e+00> : vector<128xf32>
    %1146 = vector.multi_reduction <add>, %1141, %cst_443 [1] : vector<128x16xf32> to vector<128xf32>
    %1147 = vector.shape_cast %1146 : vector<128xf32> to vector<128x1xf32>
    %1148 = arith.addf %1145, %1147 : vector<128x1xf32>
    %cst_444 = arith.constant 3.200000e+01 : f32
    %1149 = vector.broadcast %cst_444 : f32 to vector<128x1xf32>
    %1150 = arith.divf %1148, %1149 : vector<128x1xf32>
    %1151 = vector.broadcast %1150 : vector<128x1xf32> to vector<128x16xf32>
    %1152 = arith.subf %1123, %1151 : vector<128x16xf32>
    %1153 = arith.mulf %1152, %1152 : vector<128x16xf32>
    %cst_445 = arith.constant dense<0.000000e+00> : vector<128xf32>
    %1154 = vector.multi_reduction <add>, %1153, %cst_445 [1] : vector<128x16xf32> to vector<128xf32>
    %1155 = vector.shape_cast %1154 : vector<128xf32> to vector<128x1xf32>
    %cst_446 = arith.constant 0.000000e+00 : f32
    %1156 = vector.broadcast %cst_446 : f32 to vector<128x1xf32>
    %1157 = arith.addf %1156, %1155 : vector<128x1xf32>
    %1158 = vector.broadcast %1150 : vector<128x1xf32> to vector<128x16xf32>
    %1159 = arith.subf %1141, %1158 : vector<128x16xf32>
    %1160 = arith.mulf %1159, %1159 : vector<128x16xf32>
    %cst_447 = arith.constant dense<0.000000e+00> : vector<128xf32>
    %1161 = vector.multi_reduction <add>, %1160, %cst_447 [1] : vector<128x16xf32> to vector<128xf32>
    %1162 = vector.shape_cast %1161 : vector<128xf32> to vector<128x1xf32>
    %1163 = arith.addf %1157, %1162 : vector<128x1xf32>
    %cst_448 = arith.constant 3.200000e+01 : f32
    %1164 = vector.broadcast %cst_448 : f32 to vector<128x1xf32>
    %1165 = arith.divf %1163, %1164 : vector<128x1xf32>
    %cst_449 = arith.constant 9.99999974E-6 : f32
    %1166 = vector.broadcast %cst_449 : f32 to vector<128x1xf32>
    %1167 = arith.addf %1165, %1166 : vector<128x1xf32>
    %1168 = math.rsqrt %1167 : vector<128x1xf32>
    %c0_450 = arith.constant 0 : index
    %c0_451 = arith.constant 0 : index
    %1169 = vector.load %arg6[%c0_450, %c0_451] : memref<128x1xf32, #tpu.memory_space<vmem>>, vector<128x1xf32>
    %1170 = arith.mulf %1168, %1169 : vector<128x1xf32>
    %c0_452 = arith.constant 0 : index
    %c0_453 = arith.constant 0 : index
    %1171 = vector.load %arg7[%c0_452, %c0_453] : memref<128x1xf32, #tpu.memory_space<vmem>>, vector<128x1xf32>
    %1172 = vector.broadcast %1150 : vector<128x1xf32> to vector<128x16xf32>
    %1173 = arith.subf %1123, %1172 : vector<128x16xf32>
    %1174 = vector.broadcast %1170 : vector<128x1xf32> to vector<128x16xf32>
    %1175 = arith.mulf %1173, %1174 : vector<128x16xf32>
    %1176 = vector.broadcast %1171 : vector<128x1xf32> to vector<128x16xf32>
    %1177 = arith.addf %1175, %1176 : vector<128x16xf32>
    %cst_454 = arith.constant 0.000000e+00 : f32
    %1178 = vector.broadcast %cst_454 : f32 to vector<128x16xf32>
    %1179 = arith.cmpf ogt, %1177, %1178 : vector<128x16xf32>
    %cst_455 = arith.constant 2.000000e-01 : f32
    %1180 = vector.broadcast %cst_455 : f32 to vector<128x16xf32>
    %1181 = arith.mulf %1180, %1177 : vector<128x16xf32>
    %1182 = arith.select %1179, %1177, %1181 : vector<128x16xi1>, vector<128x16xf32>
    %1183 = vector.broadcast %1150 : vector<128x1xf32> to vector<128x16xf32>
    %1184 = arith.subf %1141, %1183 : vector<128x16xf32>
    %1185 = vector.broadcast %1170 : vector<128x1xf32> to vector<128x16xf32>
    %1186 = arith.mulf %1184, %1185 : vector<128x16xf32>
    %1187 = vector.broadcast %1171 : vector<128x1xf32> to vector<128x16xf32>
    %1188 = arith.addf %1186, %1187 : vector<128x16xf32>
    %cst_456 = arith.constant 0.000000e+00 : f32
    %1189 = vector.broadcast %cst_456 : f32 to vector<128x16xf32>
    %1190 = arith.cmpf ogt, %1188, %1189 : vector<128x16xf32>
    %cst_457 = arith.constant 2.000000e-01 : f32
    %1191 = vector.broadcast %cst_457 : f32 to vector<128x16xf32>
    %1192 = arith.mulf %1191, %1188 : vector<128x16xf32>
    %1193 = arith.select %1190, %1188, %1192 : vector<128x16xi1>, vector<128x16xf32>
    %1194 = tpu.concatenate %1182, %1193 in 0 : vector<128x16xf32>, vector<128x16xf32> -> vector<256x16xf32>
    %c0_458 = arith.constant 0 : index
    %c0_459 = arith.constant 0 : index
    %1195 = vector.load %arg11[%c0_458, %c0_459] : memref<256x16xf32, #tpu.memory_space<vmem>>, vector<256x16xf32>
    tpu.vector_store %arg11[%c0_458, %c0_459], %1194 {strides = array<i32>} : memref<256x16xf32, #tpu.memory_space<vmem>>, vector<256x16xf32>,
    %c0_460 = arith.constant 0 : index
    %c0_461 = arith.constant 0 : index
    %1196 = vector.load %arg8[%c0_460, %c0_461] : memref<128x16xf32, #tpu.memory_space<vmem>>, vector<128x16xf32>
    %1197 = arith.mulf %1182, %1196 : vector<128x16xf32>
    %c0_462 = arith.constant 0 : index
    %c0_463 = arith.constant 0 : index
    %1198 = vector.load %arg8[%c0_462, %c0_463] : memref<128x16xf32, #tpu.memory_space<vmem>>, vector<128x16xf32>
    %1199 = arith.mulf %1193, %1198 : vector<128x16xf32>
    %1200 = tpu.concatenate %1197, %1199 in 0 : vector<128x16xf32>, vector<128x16xf32> -> vector<256x16xf32>
    %1201 = tpu.iota {dimensions = array<i32: 0>} : vector<2x1xi32>
    %1202 = tpu.iota {dimensions = array<i32: 1>} : vector<1x256xi32>
    %c7_i32_464 = arith.constant 7 : i32
    %1203 = vector.broadcast %c7_i32_464 : i32 to vector<1x256xi32>
    %1204 = arith.shrsi %1202, %1203 : vector<1x256xi32>
    %1205 = vector.broadcast %1204 : vector<1x256xi32> to vector<2x256xi32>
    %1206 = vector.broadcast %1201 : vector<2x1xi32> to vector<2x256xi32>
    %1207 = arith.cmpi eq, %1205, %1206 : vector<2x256xi32>
    %cst_465 = arith.constant 1.000000e+00 : f32
    %cst_466 = arith.constant 0.000000e+00 : f32
    %1208 = vector.broadcast %cst_465 : f32 to vector<2x256xf32>
    %1209 = vector.broadcast %cst_466 : f32 to vector<2x256xf32>
    %1210 = arith.select %1207, %1208, %1209 : vector<2x256xi1>, vector<2x256xf32>
    %cst_467 = arith.constant dense<0.000000e+00> : vector<2x16xf32>
    %1211 = tpu.matmul %1210, %1200, %cst_467 {dimension_numbers = #tpu.dot_dimension_numbers<[1], [0], [0], [1], [0, 0, 1, 1], [], []>} : vector<2x256xf32>, vector<256x16xf32>, vector<2x16xf32> -> vector<2x16xf32>
    %cst_468 = arith.constant dense<0.000000e+00> : vector<2xf32>
    %1212 = vector.multi_reduction <add>, %1211, %cst_468 [1] : vector<2x16xf32> to vector<2xf32>
    %1213 = vector.shape_cast %1212 : vector<2xf32> to vector<2x1xf32>
    %c0_469 = arith.constant 0 : index
    %c0_470 = arith.constant 0 : index
    %1214 = vector.load %arg9[%c0_469, %c0_470] : memref<1x1xf32, #tpu.memory_space<vmem>>, vector<1x1xf32>
    %1215 = vector.broadcast %1214 : vector<1x1xf32> to vector<2x1xf32>
    %1216 = arith.addf %1213, %1215 : vector<2x1xf32>
    %cst_471 = arith.constant 0.000000e+00 : f32
    %1217 = vector.broadcast %cst_471 : f32 to vector<2x1xf32>
    %1218 = arith.subf %1217, %1216 : vector<2x1xf32>
    %1219 = math.exp %1218 : vector<2x1xf32>
    %cst_472 = arith.constant 1.000000e+00 : f32
    %1220 = vector.broadcast %cst_472 : f32 to vector<2x1xf32>
    %1221 = arith.addf %1220, %1219 : vector<2x1xf32>
    %cst_473 = arith.constant 1.000000e+00 : f32
    %1222 = vector.broadcast %cst_473 : f32 to vector<2x1xf32>
    %1223 = arith.divf %1222, %1221 : vector<2x1xf32>
    %c0_474 = arith.constant 0 : index
    %c0_475 = arith.constant 0 : index
    %1224 = vector.load %arg10[%c0_474, %c0_475] : memref<2x1xf32, #tpu.memory_space<vmem>>, vector<2x1xf32>
    tpu.vector_store %arg10[%c0_474, %c0_475], %1223 {strides = array<i32>} : memref<2x1xf32, #tpu.memory_space<vmem>>, vector<2x1xf32>,
    return
  }
}

</mosaic_0001>

<llo_original>
// kernel: discriminator_forward.1
$region0: #{discriminator_forward.1}
  #allocation0 [shape = 'u32[]', space=smem, size = 0x4, offset = 0x4, fixed_abs, tag = 'smem constant byte address 0x4 - core index']
  #allocation1 [shape = 'u32[144,128]{1,0:T(1,128)}', space=vmem, size = 0x12000, scoped, tag = 'internal scratch']
  #allocation2 [shape = 'f32[1,1]{1,0:T(1,128)S(1)}', space=vmem, size = 0x200, scoped, tag = 'scoped memory for discriminator_forward.1']
  %s0 = inlined_call_operand.vmem [shape: f32[128,512], index: 0, kind: input, shape index: {}]
  %s1 = inlined_call_operand.vmem [shape: f32[32,128], index: 1, kind: input, shape index: {}]
  %s2 = inlined_call_operand.vmem [shape: f32[64,512], index: 2, kind: input, shape index: {}]
  %s3 = inlined_call_operand.vmem [shape: f32[128,1024], index: 3, kind: input, shape index: {}]
  %s4 = inlined_call_operand.vmem [shape: f32[64,1], index: 4, kind: input, shape index: {}]
  %s5 = inlined_call_operand.vmem [shape: f32[64,1], index: 5, kind: input, shape index: {}]
  %s6 = inlined_call_operand.vmem [shape: f32[128,1], index: 6, kind: input, shape index: {}]
  %s7 = inlined_call_operand.vmem [shape: f32[128,1], index: 7, kind: input, shape index: {}]
  %s8 = inlined_call_operand.vmem [shape: f32[128,16], index: 8, kind: input, shape index: {}]
  %s9 = inlined_call_operand.<no memory space> [shape: f32[1,1], index: 9, kind: input, shape index: {}]
  %s10 = inlined_call_operand.vmem [shape: f32[2,1], index: 10, kind: output, shape index: {0}]
  %s11 = inlined_call_operand.hbm [shape: f32[256,16], index: 11, kind: output, shape index: {1}]
  %12 = xla_tuple %s10, %s11
  %s13 = sld [smem:[#allocation0]]
  $region58: #{discriminator_forward.1} parent=0
    _
  %s15 = ssub.s32 1, %s13
  %s16 = scalar_select 0, %s15, %s13
  %v17 = vstv %s9
  %18 = vst [vmem:[#allocation2] sm:$0x1] %v17
  $region1: #{discriminator_forward.1} parent=0
    #allocation3 [shape = 'u8[131072]{0}', space=vmem, size = 0x20000, scoped, tag = 'output window, operand 1, single buffered']
    #allocation4 [shape = 's32[1]{0}', space=sflag, size = 0x4, scoped, tag = 'scoped memory for discriminator_forward.1']
    %19 = vsyncpa [#allocation4], 0
    // Predicated region
    $region2: #{discriminator_forward.1} parent=1 // pred_check
      _
    $region3: #{discriminator_forward.1} parent=1 // pred_check_branch
      %21 = sbr.rel (0) target = $region5
    $region4: #{discriminator_forward.1} parent=1 // pred_region
      _
    $region5: #{discriminator_forward.1} parent=1 // pred_fallthru
      _
    // Predicated region
    $region6: #{discriminator_forward.1} parent=1 // pred_check
      _
    $region7: #{discriminator_forward.1} parent=1 // pred_check_branch
      %23 = sbr.rel (0) target = $region9
    $region8: #{discriminator_forward.1} parent=1 // pred_region
      _
    $region9: #{discriminator_forward.1} parent=1 // pred_fallthru
      _
    // Predicated region
    $region10: #{discriminator_forward.1} parent=1 // pred_check
      _
    $region11: #{discriminator_forward.1} parent=1 // pred_check_branch
      %25 = sbr.rel (0) target = $region13
    $region12: #{discriminator_forward.1} parent=1 // pred_region
      _
    $region13: #{discriminator_forward.1} parent=1 // pred_fallthru
      _
    // Predicated region
    $region14: #{discriminator_forward.1} parent=1 // pred_check
      _
    $region15: #{discriminator_forward.1} parent=1 // pred_check_branch
      %27 = sbr.rel (0) target = $region17
    $region16: #{discriminator_forward.1} parent=1 // pred_region
      _
    $region17: #{discriminator_forward.1} parent=1 // pred_fallthru
      _
    // Predicated region
    $region18: #{discriminator_forward.1} parent=1 // pred_check
      _
    $region19: #{discriminator_forward.1} parent=1 // pred_check_branch
      %29 = sbr.rel (0) target = $region21
    $region20: #{discriminator_forward.1} parent=1 // pred_region
      _
    $region21: #{discriminator_forward.1} parent=1 // pred_fallthru
      _
    // Predicated region
    $region22: #{discriminator_forward.1} parent=1 // pred_check
      _
    $region23: #{discriminator_forward.1} parent=1 // pred_check_branch
      %31 = sbr.rel (0) target = $region25
    $region24: #{discriminator_forward.1} parent=1 // pred_region
      _
    $region25: #{discriminator_forward.1} parent=1 // pred_fallthru
      _
    // Predicated region
    $region26: #{discriminator_forward.1} parent=1 // pred_check
      _
    $region27: #{discriminator_forward.1} parent=1 // pred_check_branch
      %33 = sbr.rel (0) target = $region29
    $region28: #{discriminator_forward.1} parent=1 // pred_region
      _
    $region29: #{discriminator_forward.1} parent=1 // pred_fallthru
      _
    // Predicated region
    $region30: #{discriminator_forward.1} parent=1 // pred_check
      _
    $region31: #{discriminator_forward.1} parent=1 // pred_check_branch
      %35 = sbr.rel (0) target = $region33
    $region32: #{discriminator_forward.1} parent=1 // pred_region
      _
    $region33: #{discriminator_forward.1} parent=1 // pred_fallthru
      _
    // Predicated region
    $region34: #{discriminator_forward.1} parent=1 // pred_check
      _
    $region35: #{discriminator_forward.1} parent=1 // pred_check_branch
      %37 = sbr.rel (0) target = $region37
    $region36: #{discriminator_forward.1} parent=1 // pred_region
      _
    $region37: #{discriminator_forward.1} parent=1 // pred_fallthru
      _
    // Predicated region
    $region38: #{discriminator_forward.1} parent=1 // pred_check
      _
    $region39: #{discriminator_forward.1} parent=1 // pred_check_branch
      %39 = sbr.rel (0) target = $region41
    $region40: #{discriminator_forward.1} parent=1 // pred_region
      _
    $region41: #{discriminator_forward.1} parent=1 // pred_fallthru
      _
    %v40 = vld [vmem:[%s1] sm:$0xff]
    %v41 = vld [vmem:[%s1 + $0x8] sm:$0xff]
    %v42 = vld [vmem:[%s1 + $0x10] sm:$0xff]
    %v43 = vld [vmem:[%s1 + $0x18] sm:$0xff]
    %v44 = vld [vmem:[%s0] sm:$0xff]
    %v45 = vld [vmem:[%s0 + $0x8] sm:$0xff]
    %v46 = vld [vmem:[%s0 + $0x10] sm:$0xff]
    %v47 = vld [vmem:[%s0 + $0x18] sm:$0xff]
    %v48 = vld [vmem:[%s0 + $0x20] sm:$0xff]
    %v49 = vld [vmem:[%s0 + $0x28] sm:$0xff]
    %v50 = vld [vmem:[%s0 + $0x30] sm:$0xff]
    %v51 = vld [vmem:[%s0 + $0x38] sm:$0xff]
    %v52 = vld [vmem:[%s0 + $0x40] sm:$0xff]
    %v53 = vld [vmem:[%s0 + $0x48] sm:$0xff]
    %v54 = vld [vmem:[%s0 + $0x50] sm:$0xff]
    %v55 = vld [vmem:[%s0 + $0x58] sm:$0xff]
    %v56 = vld [vmem:[%s0 + $0x60] sm:$0xff]
    %v57 = vld [vmem:[%s0 + $0x68] sm:$0xff]
    %v58 = vld [vmem:[%s0 + $0x70] sm:$0xff]
    %v59 = vld [vmem:[%s0 + $0x78] sm:$0xff]
    %v60 = vld [vmem:[%s0 + $0x80] sm:$0xff]
    %v61 = vld [vmem:[%s0 + $0x88] sm:$0xff]
    %v62 = vld [vmem:[%s0 + $0x90] sm:$0xff]
    %v63 = vld [vmem:[%s0 + $0x98] sm:$0xff]
    %v64 = vld [vmem:[%s0 + $0xa0] sm:$0xff]
    %v65 = vld [vmem:[%s0 + $0xa8] sm:$0xff]
    %v66 = vld [vmem:[%s0 + $0xb0] sm:$0xff]
    %v67 = vld [vmem:[%s0 + $0xb8] sm:$0xff]
    %v68 = vld [vmem:[%s0 + $0xc0] sm:$0xff]
    %v69 = vld [vmem:[%s0 + $0xc8] sm:$0xff]
    %v70 = vld [vmem:[%s0 + $0xd0] sm:$0xff]
    %v71 = vld [vmem:[%s0 + $0xd8] sm:$0xff]
    %v72 = vld [vmem:[%s0 + $0xe0] sm:$0xff]
    %v73 = vld [vmem:[%s0 + $0xe8] sm:$0xff]
    %v74 = vld [vmem:[%s0 + $0xf0] sm:$0xff]
    %v75 = vld [vmem:[%s0 + $0xf8] sm:$0xff]
    %v76 = vld [vmem:[%s0 + $0x100] sm:$0xff]
    %v77 = vld [vmem:[%s0 + $0x108] sm:$0xff]
    %v78 = vld [vmem:[%s0 + $0x110] sm:$0xff]
    %v79 = vld [vmem:[%s0 + $0x118] sm:$0xff]
    %v80 = vld [vmem:[%s0 + $0x120] sm:$0xff]
    %v81 = vld [vmem:[%s0 + $0x128] sm:$0xff]
    %v82 = vld [vmem:[%s0 + $0x130] sm:$0xff]
    %v83 = vld [vmem:[%s0 + $0x138] sm:$0xff]
    %v84 = vld [vmem:[%s0 + $0x140] sm:$0xff]
    %v85 = vld [vmem:[%s0 + $0x148] sm:$0xff]
    %v86 = vld [vmem:[%s0 + $0x150] sm:$0xff]
    %v87 = vld [vmem:[%s0 + $0x158] sm:$0xff]
    %v88 = vld [vmem:[%s0 + $0x160] sm:$0xff]
    %v89 = vld [vmem:[%s0 + $0x168] sm:$0xff]
    %v90 = vld [vmem:[%s0 + $0x170] sm:$0xff]
    %v91 = vld [vmem:[%s0 + $0x178] sm:$0xff]
    %v92 = vld [vmem:[%s0 + $0x180] sm:$0xff]
    %v93 = vld [vmem:[%s0 + $0x188] sm:$0xff]
    %v94 = vld [vmem:[%s0 + $0x190] sm:$0xff]
    %v95 = vld [vmem:[%s0 + $0x198] sm:$0xff]
    %v96 = vld [vmem:[%s0 + $0x1a0] sm:$0xff]
    %v97 = vld [vmem:[%s0 + $0x1a8] sm:$0xff]
    %v98 = vld [vmem:[%s0 + $0x1b0] sm:$0xff]
    %v99 = vld [vmem:[%s0 + $0x1b8] sm:$0xff]
    %v100 = vld [vmem:[%s0 + $0x1c0] sm:$0xff]
    %v101 = vld [vmem:[%s0 + $0x1c8] sm:$0xff]
    %v102 = vld [vmem:[%s0 + $0x1d0] sm:$0xff]
    %v103 = vld [vmem:[%s0 + $0x1d8] sm:$0xff]
    %v104 = vld [vmem:[%s0 + $0x1e0] sm:$0xff]
    %v105 = vld [vmem:[%s0 + $0x1e8] sm:$0xff]
    %v106 = vld [vmem:[%s0 + $0x1f0] sm:$0xff]
    %v107 = vld [vmem:[%s0 + $0x1f8] sm:$0xff]
    %108 = vmatprep.subr.mxu0 %v45
    %109 = vmatpush1.msra.mxu0 %v44
    %110 = vmatprep.subr.mxu0 %v49
    %111 = vmatpush1.msra.mxu0 %v48
    %112 = vmatprep.subr.mxu0 %v53
    %113 = vmatpush1.msra.mxu0 %v52
    %114 = vmatprep.subr.mxu0 %v57
    %115 = vmatpush1.msra.mxu0 %v56
    %116 = vmatprep.subr.mxu0 %v61
    %117 = vmatpush1.msra.mxu0 %v60
    %118 = vmatprep.subr.mxu0 %v65
    %119 = vmatpush1.msra.mxu0 %v64
    %120 = vmatprep.subr.mxu0 %v69
    %121 = vmatpush1.msra.mxu0 %v68
    %122 = vmatprep.subr.mxu0 %v73
    %123 = vmatpush1.msra.mxu0 %v72
    %124 = vmatprep.subr.mxu0 %v77
    %125 = vmatpush1.msra.mxu0 %v76
    %126 = vmatprep.subr.mxu0 %v81
    %127 = vmatpush1.msra.mxu0 %v80
    %128 = vmatprep.subr.mxu0 %v85
    %129 = vmatpush1.msra.mxu0 %v84
    %130 = vmatprep.subr.mxu0 %v89
    %131 = vmatpush1.msra.mxu0 %v88
    %132 = vmatprep.subr.mxu0 %v93
    %133 = vmatpush1.msra.mxu0 %v92
    %134 = vmatprep.subr.mxu0 %v97
    %135 = vmatpush1.msra.mxu0 %v96
    %136 = vmatprep.subr.mxu0 %v101
    %137 = vmatpush1.msra.mxu0 %v100
    %138 = vmatprep.subr.mxu0 %v105
    %139 = vmatpush1.msra.mxu0 %v104
    %140 = vmatprep.subr.mxu0 0.0
    %141 = vmatpush1.msra.mxu0 0.0
    %142 = vmatprep.subr.mxu0 0.0
    %143 = vmatpush1.msra.mxu0 0.0
    %144 = vmatprep.subr.mxu0 0.0
    %145 = vmatpush1.msra.mxu0 0.0
    %146 = vmatprep.subr.mxu0 0.0
    %147 = vmatpush1.msra.mxu0 0.0
    %148 = vmatprep.subr.mxu0 0.0
    %149 = vmatpush1.msra.mxu0 0.0
    %150 = vmatprep.subr.mxu0 0.0
    %151 = vmatpush1.msra.mxu0 0.0
    %152 = vmatprep.subr.mxu0 0.0
    %153 = vmatpush1.msra.mxu0 0.0
    %154 = vmatprep.subr.mxu0 0.0
    %155 = vmatpush1.msra.mxu0 0.0
    %156 = vmatprep.subr.mxu0 0.0
    %157 = vmatpush1.msra.mxu0 0.0
    %158 = vmatprep.subr.mxu0 0.0
    %159 = vmatpush1.msra.mxu0 0.0
    %160 = vmatprep.subr.mxu0 0.0
    %161 = vmatpush1.msra.mxu0 0.0
    %162 = vmatprep.subr.mxu0 0.0
    %163 = vmatpush1.msra.mxu0 0.0
    %164 = vmatprep.subr.mxu0 0.0
    %165 = vmatpush1.msra.mxu0 0.0
    %166 = vmatprep.subr.mxu0 0.0
    %167 = vmatpush1.msra.mxu0 0.0
    %168 = vmatprep.subr.mxu0 0.0
    %169 = vmatpush1.msra.mxu0 0.0
    %170 = vmatprep.subr.mxu0 0.0
    %171 = vmatpush1.msra.mxu0 0.0
    %172 = vmatprep.mubr.f32.mxu0 0.0
    %173 = vmatmul.mubr.f32.gmra.mrb[0].mxu0 %v40
    %v174 = vpop.f32.mrb[0].mxu0
    %v175 = vadd.f32 0.0, %v174
    %v176 = vpop.f32.mrb[0].mxu0
    %v177 = vadd.f32 0.0, %v176
    %178 = vmatprep.mubr.f32.mxu0 0.0
    %179 = vmatmul.mubr.f32.gmra.mrb[0].mxu0 %v41
    %v180 = vpop.f32.mrb[0].mxu0
    %v181 = vadd.f32 0.0, %v180
    %v182 = vpop.f32.mrb[0].mxu0
    %v183 = vadd.f32 0.0, %v182
    %184 = vmatprep.mubr.f32.mxu0 0.0
    %185 = vmatmul.mubr.f32.gmra.mrb[0].mxu0 %v42
    %v186 = vpop.f32.mrb[0].mxu0
    %v187 = vadd.f32 0.0, %v186
    %v188 = vpop.f32.mrb[0].mxu0
    %v189 = vadd.f32 0.0, %v188
    %190 = vmatprep.mubr.f32.mxu0 0.0
    %191 = vmatmul.mubr.f32.gmra.mrb[0].mxu0 %v43
    %v192 = vpop.f32.mrb[0].mxu0
    %v193 = vadd.f32 0.0, %v192
    %v194 = vpop.f32.mrb[0].mxu0
    %v195 = vadd.f32 0.0, %v194
    %196 = vdwg.mxu0
    %197 = vmatprep.subr.mxu0 %v47
    %198 = vmatpush1.msra.mxu0 %v46
    %199 = vmatprep.subr.mxu0 %v51
    %200 = vmatpush1.msra.mxu0 %v50
    %201 = vmatprep.subr.mxu0 %v55
    %202 = vmatpush1.msra.mxu0 %v54
    %203 = vmatprep.subr.mxu0 %v59
    %204 = vmatpush1.msra.mxu0 %v58
    %205 = vmatprep.subr.mxu0 %v63
    %206 = vmatpush1.msra.mxu0 %v62
    %207 = vmatprep.subr.mxu0 %v67
    %208 = vmatpush1.msra.mxu0 %v66
    %209 = vmatprep.subr.mxu0 %v71
    %210 = vmatpush1.msra.mxu0 %v70
    %211 = vmatprep.subr.mxu0 %v75
    %212 = vmatpush1.msra.mxu0 %v74
    %213 = vmatprep.subr.mxu0 %v79
    %214 = vmatpush1.msra.mxu0 %v78
    %215 = vmatprep.subr.mxu0 %v83
    %216 = vmatpush1.msra.mxu0 %v82
    %217 = vmatprep.subr.mxu0 %v87
    %218 = vmatpush1.msra.mxu0 %v86
    %219 = vmatprep.subr.mxu0 %v91
    %220 = vmatpush1.msra.mxu0 %v90
    %221 = vmatprep.subr.mxu0 %v95
    %222 = vmatpush1.msra.mxu0 %v94
    %223 = vmatprep.subr.mxu0 %v99
    %224 = vmatpush1.msra.mxu0 %v98
    %225 = vmatprep.subr.mxu0 %v103
    %226 = vmatpush1.msra.mxu0 %v102
    %227 = vmatprep.subr.mxu0 %v107
    %228 = vmatpush1.msra.mxu0 %v106
    %229 = vmatprep.subr.mxu0 0.0
    %230 = vmatpush1.msra.mxu0 0.0
    %231 = vmatprep.subr.mxu0 0.0
    %232 = vmatpush1.msra.mxu0 0.0
    %233 = vmatprep.subr.mxu0 0.0
    %234 = vmatpush1.msra.mxu0 0.0
    %235 = vmatprep.subr.mxu0 0.0
    %236 = vmatpush1.msra.mxu0 0.0
    %237 = vmatprep.subr.mxu0 0.0
    %238 = vmatpush1.msra.mxu0 0.0
    %239 = vmatprep.subr.mxu0 0.0
    %240 = vmatpush1.msra.mxu0 0.0
    %241 = vmatprep.subr.mxu0 0.0
    %242 = vmatpush1.msra.mxu0 0.0
    %243 = vmatprep.subr.mxu0 0.0
    %244 = vmatpush1.msra.mxu0 0.0
    %245 = vmatprep.subr.mxu0 0.0
    %246 = vmatpush1.msra.mxu0 0.0
    %247 = vmatprep.subr.mxu0 0.0
    %248 = vmatpush1.msra.mxu0 0.0
    %249 = vmatprep.subr.mxu0 0.0
    %250 = vmatpush1.msra.mxu0 0.0
    %251 = vmatprep.subr.mxu0 0.0
    %252 = vmatpush1.msra.mxu0 0.0
    %253 = vmatprep.subr.mxu0 0.0
    %254 = vmatpush1.msra.mxu0 0.0
    %255 = vmatprep.subr.mxu0 0.0
    %256 = vmatpush1.msra.mxu0 0.0
    %257 = vmatprep.subr.mxu0 0.0
    %258 = vmatpush1.msra.mxu0 0.0
    %259 = vmatprep.subr.mxu0 0.0
    %260 = vmatpush1.msra.mxu0 0.0
    %261 = vmatprep.mubr.f32.mxu0 0.0
    %262 = vmatmul.mubr.f32.gmra.mrb[0].mxu0 %v40
    %v263 = vpop.f32.mrb[0].mxu0
    %v264 = vadd.f32 0.0, %v263
    %v265 = vpop.f32.mrb[0].mxu0
    %v266 = vadd.f32 0.0, %v265
    %267 = vmatprep.mubr.f32.mxu0 0.0
    %268 = vmatmul.mubr.f32.gmra.mrb[0].mxu0 %v41
    %v269 = vpop.f32.mrb[0].mxu0
    %v270 = vadd.f32 0.0, %v269
    %v271 = vpop.f32.mrb[0].mxu0
    %v272 = vadd.f32 0.0, %v271
    %273 = vmatprep.mubr.f32.mxu0 0.0
    %274 = vmatmul.mubr.f32.gmra.mrb[0].mxu0 %v42
    %v275 = vpop.f32.mrb[0].mxu0
    %v276 = vadd.f32 0.0, %v275
    %v277 = vpop.f32.mrb[0].mxu0
    %v278 = vadd.f32 0.0, %v277
    %279 = vmatprep.mubr.f32.mxu0 0.0
    %280 = vmatmul.mubr.f32.gmra.mrb[0].mxu0 %v43
    %v281 = vpop.f32.mrb[0].mxu0
    %v282 = vadd.f32 0.0, %v281
    %v283 = vpop.f32.mrb[0].mxu0
    %v284 = vadd.f32 0.0, %v283
    %285 = vdwg.mxu0
    %vm286 = vcmp.gt.f32.partialorder %v175, 0.0
    %vm287 = vcmp.gt.f32.partialorder %v177, 0.0
    %vm288 = vcmp.gt.f32.partialorder %v264, 0.0
    %vm289 = vcmp.gt.f32.partialorder %v266, 0.0
    %vm290 = vcmp.gt.f32.partialorder %v181, 0.0
    %vm291 = vcmp.gt.f32.partialorder %v183, 0.0
    %vm292 = vcmp.gt.f32.partialorder %v270, 0.0
    %vm293 = vcmp.gt.f32.partialorder %v272, 0.0
    %vm294 = vcmp.gt.f32.partialorder %v187, 0.0
    %vm295 = vcmp.gt.f32.partialorder %v189, 0.0
    %vm296 = vcmp.gt.f32.partialorder %v276, 0.0
    %vm297 = vcmp.gt.f32.partialorder %v278, 0.0
    %vm298 = vcmp.gt.f32.partialorder %v193, 0.0
    %vm299 = vcmp.gt.f32.partialorder %v195, 0.0
    %vm300 = vcmp.gt.f32.partialorder %v282, 0.0
    %vm301 = vcmp.gt.f32.partialorder %v284, 0.0
    %v302 = vmul.f32 %v175, 0.2
    %v303 = vmul.f32 %v177, 0.2
    %v304 = vmul.f32 %v264, 0.2
    %v305 = vmul.f32 %v266, 0.2
    %v306 = vmul.f32 %v181, 0.2
    %v307 = vmul.f32 %v183, 0.2
    %v308 = vmul.f32 %v270, 0.2
    %v309 = vmul.f32 %v272, 0.2
    %v310 = vmul.f32 %v187, 0.2
    %v311 = vmul.f32 %v189, 0.2
    %v312 = vmul.f32 %v276, 0.2
    %v313 = vmul.f32 %v278, 0.2
    %v314 = vmul.f32 %v193, 0.2
    %v315 = vmul.f32 %v195, 0.2
    %v316 = vmul.f32 %v282, 0.2
    %v317 = vmul.f32 %v284, 0.2
    %v318 = vsel %vm286, %v175, %v302
    %v319 = vsel %vm287, %v177, %v303
    %v320 = vsel %vm288, %v264, %v304
    %v321 = vsel %vm289, %v266, %v305
    %v322 = vsel %vm290, %v181, %v306
    %v323 = vsel %vm291, %v183, %v307
    %v324 = vsel %vm292, %v270, %v308
    %v325 = vsel %vm293, %v272, %v309
    %v326 = vsel %vm294, %v187, %v310
    %v327 = vsel %vm295, %v189, %v311
    %v328 = vsel %vm296, %v276, %v312
    %v329 = vsel %vm297, %v278, %v313
    %v330 = vsel %vm298, %v193, %v314
    %v331 = vsel %vm299, %v195, %v315
    %v332 = vsel %vm300, %v282, %v316
    %v333 = vsel %vm301, %v284, %v317
    %v334 = vlaneseq
    %v335 = vand.u32 %v334, 127
    %v336 = vshra.s32 %v335, 3
    %v337 = vand.u32 %v335, 7
    %v338 = vlaneseq
    %v339 = vshrl.u32 %v338, 7
    %v340 = vadd.s32 %v339, 8
    %v341 = vadd.s32 %v339, 16
    %v342 = vadd.s32 %v339, 24
    %v343 = vadd.s32 %v339, 32
    %v344 = vadd.s32 %v339, 40
    %v345 = vadd.s32 %v339, 48
    %v346 = vadd.s32 %v339, 56
    %v347 = vadd.s32 %v339, 64
    %v348 = vadd.s32 %v339, 72
    %v349 = vadd.s32 %v339, 80
    %v350 = vadd.s32 %v339, 88
    %v351 = vadd.s32 %v339, 96
    %v352 = vadd.s32 %v339, 104
    %v353 = vadd.s32 %v339, 112
    %v354 = vadd.s32 %v339, 120
    %v355 = vadd.s32 %v339, 128
    %v356 = vadd.s32 %v339, 136
    %v357 = vadd.s32 %v339, 144
    %v358 = vadd.s32 %v339, 152
    %v359 = vadd.s32 %v339, 160
    %v360 = vadd.s32 %v339, 168
    %v361 = vadd.s32 %v339, 176
    %v362 = vadd.s32 %v339, 184
    %v363 = vadd.s32 %v339, 192
    %v364 = vadd.s32 %v339, 200
    %v365 = vadd.s32 %v339, 208
    %v366 = vadd.s32 %v339, 216
    %v367 = vadd.s32 %v339, 224
    %v368 = vadd.s32 %v339, 232
    %v369 = vadd.s32 %v339, 240
    %v370 = vadd.s32 %v339, 248
    %v371 = vshll.u32 %v336, 1
    %v372 = vadd.s32 %v371, 4294967295
    %v373 = vshll.u32 %v337, 1
    %v374 = vadd.s32 %v373, 4294967295
    %vm375 = vcmp.ge.s32.totalorder %v372, 0
    %vm376 = vcmp.lt.s32.totalorder %v372, 16
    %vm377 = vmand %vm375, %vm376
    %vm378 = vcmp.ge.s32.totalorder %v374, 0
    %vm379 = vmand %vm377, %vm378
    %vm380 = vcmp.lt.s32.totalorder %v374, 16
    %vm381 = vmand %vm379, %vm380
    %v382 = vshll.u32 %v372, 4
    %v383 = vadd.s32 %v382, %v374
    %v384 = vsel %vm381, %v383, 4294967295
    %vm385 = vcmp.eq.s32.totalorder %v339, %v384
    %vm386 = vcmp.eq.s32.totalorder %v340, %v384
    %vm387 = vcmp.eq.s32.totalorder %v341, %v384
    %vm388 = vcmp.eq.s32.totalorder %v342, %v384
    %vm389 = vcmp.eq.s32.totalorder %v343, %v384
    %vm390 = vcmp.eq.s32.totalorder %v344, %v384
    %vm391 = vcmp.eq.s32.totalorder %v345, %v384
    %vm392 = vcmp.eq.s32.totalorder %v346, %v384
    %vm393 = vcmp.eq.s32.totalorder %v347, %v384
    %vm394 = vcmp.eq.s32.totalorder %v348, %v384
    %vm395 = vcmp.eq.s32.totalorder %v349, %v384
    %vm396 = vcmp.eq.s32.totalorder %v350, %v384
    %vm397 = vcmp.eq.s32.totalorder %v351, %v384
    %vm398 = vcmp.eq.s32.totalorder %v352, %v384
    %vm399 = vcmp.eq.s32.totalorder %v353, %v384
    %vm400 = vcmp.eq.s32.totalorder %v354, %v384
    %vm401 = vcmp.eq.s32.totalorder %v355, %v384
    %vm402 = vcmp.eq.s32.totalorder %v356, %v384
    %vm403 = vcmp.eq.s32.totalorder %v357, %v384
    %vm404 = vcmp.eq.s32.totalorder %v358, %v384
    %vm405 = vcmp.eq.s32.totalorder %v359, %v384
    %vm406 = vcmp.eq.s32.totalorder %v360, %v384
    %vm407 = vcmp.eq.s32.totalorder %v361, %v384
    %vm408 = vcmp.eq.s32.totalorder %v362, %v384
    %vm409 = vcmp.eq.s32.totalorder %v363, %v384
    %vm410 = vcmp.eq.s32.totalorder %v364, %v384
    %vm411 = vcmp.eq.s32.totalorder %v365, %v384
    %vm412 = vcmp.eq.s32.totalorder %v366, %v384
    %vm413 = vcmp.eq.s32.totalorder %v367, %v384
    %vm414 = vcmp.eq.s32.totalorder %v368, %v384
    %vm415 = vcmp.eq.s32.totalorder %v369, %v384
    %vm416 = vcmp.eq.s32.totalorder %v370, %v384
    %v417 = vsel %vm385, 1.0, 0.0
    %v418 = vsel %vm386, 1.0, 0.0
    %v419 = vsel %vm387, 1.0, 0.0
    %v420 = vsel %vm388, 1.0, 0.0
    %v421 = vsel %vm389, 1.0, 0.0
    %v422 = vsel %vm390, 1.0, 0.0
    %v423 = vsel %vm391, 1.0, 0.0
    %v424 = vsel %vm392, 1.0, 0.0
    %v425 = vsel %vm393, 1.0, 0.0
    %v426 = vsel %vm394, 1.0, 0.0
    %v427 = vsel %vm395, 1.0, 0.0
    %v428 = vsel %vm396, 1.0, 0.0
    %v429 = vsel %vm397, 1.0, 0.0
    %v430 = vsel %vm398, 1.0, 0.0
    %v431 = vsel %vm399, 1.0, 0.0
    %v432 = vsel %vm400, 1.0, 0.0
    %v433 = vsel %vm401, 1.0, 0.0
    %v434 = vsel %vm402, 1.0, 0.0
    %v435 = vsel %vm403, 1.0, 0.0
    %v436 = vsel %vm404, 1.0, 0.0
    %v437 = vsel %vm405, 1.0, 0.0
    %v438 = vsel %vm406, 1.0, 0.0
    %v439 = vsel %vm407, 1.0, 0.0
    %v440 = vsel %vm408, 1.0, 0.0
    %v441 = vsel %vm409, 1.0, 0.0
    %v442 = vsel %vm410, 1.0, 0.0
    %v443 = vsel %vm411, 1.0, 0.0
    %v444 = vsel %vm412, 1.0, 0.0
    %v445 = vsel %vm413, 1.0, 0.0
    %v446 = vsel %vm414, 1.0, 0.0
    %v447 = vsel %vm415, 1.0, 0.0
    %v448 = vsel %vm416, 1.0, 0.0
    %449 = vmatprep.subr.mxu0 0.0
    %450 = vmatpush1.msra.mxu0 %v417
    %451 = vmatprep.subr.mxu0 0.0
    %452 = vmatpush1.msra.mxu0 %v418
    %453 = vmatprep.subr.mxu0 0.0
    %454 = vmatpush1.msra.mxu0 %v419
    %455 = vmatprep.subr.mxu0 0.0
    %456 = vmatpush1.msra.mxu0 %v420
    %457 = vmatprep.subr.mxu0 0.0
    %458 = vmatpush1.msra.mxu0 %v421
    %459 = vmatprep.subr.mxu0 0.0
    %460 = vmatpush1.msra.mxu0 %v422
    %461 = vmatprep.subr.mxu0 0.0
    %462 = vmatpush1.msra.mxu0 %v423
    %463 = vmatprep.subr.mxu0 0.0
    %464 = vmatpush1.msra.mxu0 %v424
    %465 = vmatprep.subr.mxu0 0.0
    %466 = vmatpush1.msra.mxu0 %v425
    %467 = vmatprep.subr.mxu0 0.0
    %468 = vmatpush1.msra.mxu0 %v426
    %469 = vmatprep.subr.mxu0 0.0
    %470 = vmatpush1.msra.mxu0 %v427
    %471 = vmatprep.subr.mxu0 0.0
    %472 = vmatpush1.msra.mxu0 %v428
    %473 = vmatprep.subr.mxu0 0.0
    %474 = vmatpush1.msra.mxu0 %v429
    %475 = vmatprep.subr.mxu0 0.0
    %476 = vmatpush1.msra.mxu0 %v430
    %477 = vmatprep.subr.mxu0 0.0
    %478 = vmatpush1.msra.mxu0 %v431
    %479 = vmatprep.subr.mxu0 0.0
    %480 = vmatpush1.msra.mxu0 %v432
    %481 = vmatprep.subr.mxu0 0.0
    %482 = vmatpush1.msra.mxu0 %v433
    %483 = vmatprep.subr.mxu0 0.0
    %484 = vmatpush1.msra.mxu0 %v434
    %485 = vmatprep.subr.mxu0 0.0
    %486 = vmatpush1.msra.mxu0 %v435
    %487 = vmatprep.subr.mxu0 0.0
    %488 = vmatpush1.msra.mxu0 %v436
    %489 = vmatprep.subr.mxu0 0.0
    %490 = vmatpush1.msra.mxu0 %v437
    %491 = vmatprep.subr.mxu0 0.0
    %492 = vmatpush1.msra.mxu0 %v438
    %493 = vmatprep.subr.mxu0 0.0
    %494 = vmatpush1.msra.mxu0 %v439
    %495 = vmatprep.subr.mxu0 0.0
    %496 = vmatpush1.msra.mxu0 %v440
    %497 = vmatprep.subr.mxu0 0.0
    %498 = vmatpush1.msra.mxu0 %v441
    %499 = vmatprep.subr.mxu0 0.0
    %500 = vmatpush1.msra.mxu0 %v442
    %501 = vmatprep.subr.mxu0 0.0
    %502 = vmatpush1.msra.mxu0 %v443
    %503 = vmatprep.subr.mxu0 0.0
    %504 = vmatpush1.msra.mxu0 %v444
    %505 = vmatprep.subr.mxu0 0.0
    %506 = vmatpush1.msra.mxu0 %v445
    %507 = vmatprep.subr.mxu0 0.0
    %508 = vmatpush1.msra.mxu0 %v446
    %509 = vmatprep.subr.mxu0 0.0
    %510 = vmatpush1.msra.mxu0 %v447
    %511 = vmatprep.subr.mxu0 0.0
    %512 = vmatpush1.msra.mxu0 %v448
    %513 = vmatprep.mubr.f32.mxu0 %v319
    %514 = vmatmul.mubr.f32.gmra.mrb[0].mxu0 %v318
    %v515 = vpop.f32.mrb[0].mxu0
    %v516 = vadd.f32 0.0, %v515
    %v517 = vpop.f32.mrb[0].mxu0
    %518 = vmatprep.mubr.f32.mxu0 %v323
    %519 = vmatmul.mubr.f32.gmra.mrb[0].mxu0 %v322
    %v520 = vpop.f32.mrb[0].mxu0
    %v521 = vadd.f32 0.0, %v520
    %v522 = vpop.f32.mrb[0].mxu0
    %523 = vmatprep.mubr.f32.mxu0 %v327
    %524 = vmatmul.mubr.f32.gmra.mrb[0].mxu0 %v326
    %v525 = vpop.f32.mrb[0].mxu0
    %v526 = vadd.f32 0.0, %v525
    %v527 = vpop.f32.mrb[0].mxu0
    %528 = vmatprep.mubr.f32.mxu0 %v331
    %529 = vmatmul.mubr.f32.gmra.mrb[0].mxu0 %v330
    %v530 = vpop.f32.mrb[0].mxu0
    %v531 = vadd.f32 0.0, %v530
    %v532 = vpop.f32.mrb[0].mxu0
    %533 = vmatprep.mubr.f32.mxu0 %v321
    %534 = vmatmul.mubr.f32.gmra.mrb[0].mxu0 %v320
    %v535 = vpop.f32.mrb[0].mxu0
    %v536 = vadd.f32 0.0, %v535
    %v537 = vpop.f32.mrb[0].mxu0
    %538 = vmatprep.mubr.f32.mxu0 %v325
    %539 = vmatmul.mubr.f32.gmra.mrb[0].mxu0 %v324
    %v540 = vpop.f32.mrb[0].mxu0
    %v541 = vadd.f32 0.0, %v540
    %v542 = vpop.f32.mrb[0].mxu0
    %543 = vmatprep.mubr.f32.mxu0 %v329
    %544 = vmatmul.mubr.f32.gmra.mrb[0].mxu0 %v328
    %v545 = vpop.f32.mrb[0].mxu0
    %v546 = vadd.f32 0.0, %v545
    %v547 = vpop.f32.mrb[0].mxu0
    %548 = vmatprep.mubr.f32.mxu0 %v333
    %549 = vmatmul.mubr.f32.gmra.mrb[0].mxu0 %v332
    %v550 = vpop.f32.mrb[0].mxu0
    %v551 = vadd.f32 0.0, %v550
    %v552 = vpop.f32.mrb[0].mxu0
    %553 = vdwg.mxu0
    %vm554 = vcmp.ge.s32.totalorder %v373, 0
    %vm555 = vmand %vm377, %vm554
    %vm556 = vcmp.lt.s32.totalorder %v373, 16
    %vm557 = vmand %vm555, %vm556
    %v558 = vadd.s32 %v382, %v373
    %v559 = vsel %vm557, %v558, 4294967295
    %vm560 = vcmp.eq.s32.totalorder %v339, %v559
    %vm561 = vcmp.eq.s32.totalorder %v340, %v559
    %vm562 = vcmp.eq.s32.totalorder %v341, %v559
    %vm563 = vcmp.eq.s32.totalorder %v342, %v559
    %vm564 = vcmp.eq.s32.totalorder %v343, %v559
    %vm565 = vcmp.eq.s32.totalorder %v344, %v559
    %vm566 = vcmp.eq.s32.totalorder %v345, %v559
    %vm567 = vcmp.eq.s32.totalorder %v346, %v559
    %vm568 = vcmp.eq.s32.totalorder %v347, %v559
    %vm569 = vcmp.eq.s32.totalorder %v348, %v559
    %vm570 = vcmp.eq.s32.totalorder %v349, %v559
    %vm571 = vcmp.eq.s32.totalorder %v350, %v559
    %vm572 = vcmp.eq.s32.totalorder %v351, %v559
    %vm573 = vcmp.eq.s32.totalorder %v352, %v559
    %vm574 = vcmp.eq.s32.totalorder %v353, %v559
    %vm575 = vcmp.eq.s32.totalorder %v354, %v559
    %vm576 = vcmp.eq.s32.totalorder %v355, %v559
    %vm577 = vcmp.eq.s32.totalorder %v356, %v559
    %vm578 = vcmp.eq.s32.totalorder %v357, %v559
    %vm579 = vcmp.eq.s32.totalorder %v358, %v559
    %vm580 = vcmp.eq.s32.totalorder %v359, %v559
    %vm581 = vcmp.eq.s32.totalorder %v360, %v559
    %vm582 = vcmp.eq.s32.totalorder %v361, %v559
    %vm583 = vcmp.eq.s32.totalorder %v362, %v559
    %vm584 = vcmp.eq.s32.totalorder %v363, %v559
    %vm585 = vcmp.eq.s32.totalorder %v364, %v559
    %vm586 = vcmp.eq.s32.totalorder %v365, %v559
    %vm587 = vcmp.eq.s32.totalorder %v366, %v559
    %vm588 = vcmp.eq.s32.totalorder %v367, %v559
    %vm589 = vcmp.eq.s32.totalorder %v368, %v559
    %vm590 = vcmp.eq.s32.totalorder %v369, %v559
    %vm591 = vcmp.eq.s32.totalorder %v370, %v559
    %v592 = vsel %vm560, 1.0, 0.0
    %v593 = vsel %vm561, 1.0, 0.0
    %v594 = vsel %vm562, 1.0, 0.0
    %v595 = vsel %vm563, 1.0, 0.0
    %v596 = vsel %vm564, 1.0, 0.0
    %v597 = vsel %vm565, 1.0, 0.0
    %v598 = vsel %vm566, 1.0, 0.0
    %v599 = vsel %vm567, 1.0, 0.0
    %v600 = vsel %vm568, 1.0, 0.0
    %v601 = vsel %vm569, 1.0, 0.0
    %v602 = vsel %vm570, 1.0, 0.0
    %v603 = vsel %vm571, 1.0, 0.0
    %v604 = vsel %vm572, 1.0, 0.0
    %v605 = vsel %vm573, 1.0, 0.0
    %v606 = vsel %vm574, 1.0, 0.0
    %v607 = vsel %vm575, 1.0, 0.0
    %v608 = vsel %vm576, 1.0, 0.0
    %v609 = vsel %vm577, 1.0, 0.0
    %v610 = vsel %vm578, 1.0, 0.0
    %v611 = vsel %vm579, 1.0, 0.0
    %v612 = vsel %vm580, 1.0, 0.0
    %v613 = vsel %vm581, 1.0, 0.0
    %v614 = vsel %vm582, 1.0, 0.0
    %v615 = vsel %vm583, 1.0, 0.0
    %v616 = vsel %vm584, 1.0, 0.0
    %v617 = vsel %vm585, 1.0, 0.0
    %v618 = vsel %vm586, 1.0, 0.0
    %v619 = vsel %vm587, 1.0, 0.0
    %v620 = vsel %vm588, 1.0, 0.0
    %v621 = vsel %vm589, 1.0, 0.0
    %v622 = vsel %vm590, 1.0, 0.0
    %v623 = vsel %vm591, 1.0, 0.0
    %624 = vmatprep.subr.mxu0 0.0
    %625 = vmatpush1.msra.mxu0 %v592
    %626 = vmatprep.subr.mxu0 0.0
    %627 = vmatpush1.msra.mxu0 %v593
    %628 = vmatprep.subr.mxu0 0.0
    %629 = vmatpush1.msra.mxu0 %v594
    %630 = vmatprep.subr.mxu0 0.0
    %631 = vmatpush1.msra.mxu0 %v595
    %632 = vmatprep.subr.mxu0 0.0
    %633 = vmatpush1.msra.mxu0 %v596
    %634 = vmatprep.subr.mxu0 0.0
    %635 = vmatpush1.msra.mxu0 %v597
    %636 = vmatprep.subr.mxu0 0.0
    %637 = vmatpush1.msra.mxu0 %v598
    %638 = vmatprep.subr.mxu0 0.0
    %639 = vmatpush1.msra.mxu0 %v599
    %640 = vmatprep.subr.mxu0 0.0
    %641 = vmatpush1.msra.mxu0 %v600
    %642 = vmatprep.subr.mxu0 0.0
    %643 = vmatpush1.msra.mxu0 %v601
    %644 = vmatprep.subr.mxu0 0.0
    %645 = vmatpush1.msra.mxu0 %v602
    %646 = vmatprep.subr.mxu0 0.0
    %647 = vmatpush1.msra.mxu0 %v603
    %648 = vmatprep.subr.mxu0 0.0
    %649 = vmatpush1.msra.mxu0 %v604
    %650 = vmatprep.subr.mxu0 0.0
    %651 = vmatpush1.msra.mxu0 %v605
    %652 = vmatprep.subr.mxu0 0.0
    %653 = vmatpush1.msra.mxu0 %v606
    %654 = vmatprep.subr.mxu0 0.0
    %655 = vmatpush1.msra.mxu0 %v607
    %656 = vmatprep.subr.mxu0 0.0
    %657 = vmatpush1.msra.mxu0 %v608
    %658 = vmatprep.subr.mxu0 0.0
    %659 = vmatpush1.msra.mxu0 %v609
    %660 = vmatprep.subr.mxu0 0.0
    %661 = vmatpush1.msra.mxu0 %v610
    %662 = vmatprep.subr.mxu0 0.0
    %663 = vmatpush1.msra.mxu0 %v611
    %664 = vmatprep.subr.mxu0 0.0
    %665 = vmatpush1.msra.mxu0 %v612
    %666 = vmatprep.subr.mxu0 0.0
    %667 = vmatpush1.msra.mxu0 %v613
    %668 = vmatprep.subr.mxu0 0.0
    %669 = vmatpush1.msra.mxu0 %v614
    %670 = vmatprep.subr.mxu0 0.0
    %671 = vmatpush1.msra.mxu0 %v615
    %672 = vmatprep.subr.mxu0 0.0
    %673 = vmatpush1.msra.mxu0 %v616
    %674 = vmatprep.subr.mxu0 0.0
    %675 = vmatpush1.msra.mxu0 %v617
    %676 = vmatprep.subr.mxu0 0.0
    %677 = vmatpush1.msra.mxu0 %v618
    %678 = vmatprep.subr.mxu0 0.0
    %679 = vmatpush1.msra.mxu0 %v619
    %680 = vmatprep.subr.mxu0 0.0
    %681 = vmatpush1.msra.mxu0 %v620
    %682 = vmatprep.subr.mxu0 0.0
    %683 = vmatpush1.msra.mxu0 %v621
    %684 = vmatprep.subr.mxu0 0.0
    %685 = vmatpush1.msra.mxu0 %v622
    %686 = vmatprep.subr.mxu0 0.0
    %687 = vmatpush1.msra.mxu0 %v623
    %688 = vmatprep.mubr.f32.mxu0 %v319
    %689 = vmatmul.mubr.f32.gmra.mrb[0].mxu0 %v318
    %v690 = vpop.f32.mrb[0].mxu0
    %v691 = vadd.f32 0.0, %v690
    %v692 = vpop.f32.mrb[0].mxu0
    %693 = vmatprep.mubr.f32.mxu0 %v323
    %694 = vmatmul.mubr.f32.gmra.mrb[0].mxu0 %v322
    %v695 = vpop.f32.mrb[0].mxu0
    %v696 = vadd.f32 0.0, %v695
    %v697 = vpop.f32.mrb[0].mxu0
    %698 = vmatprep.mubr.f32.mxu0 %v327
    %699 = vmatmul.mubr.f32.gmra.mrb[0].mxu0 %v326
    %v700 = vpop.f32.mrb[0].mxu0
    %v701 = vadd.f32 0.0, %v700
    %v702 = vpop.f32.mrb[0].mxu0
    %703 = vmatprep.mubr.f32.mxu0 %v331
    %704 = vmatmul.mubr.f32.gmra.mrb[0].mxu0 %v330
    %v705 = vpop.f32.mrb[0].mxu0
    %v706 = vadd.f32 0.0, %v705
    %v707 = vpop.f32.mrb[0].mxu0
    %708 = vmatprep.mubr.f32.mxu0 %v321
    %709 = vmatmul.mubr.f32.gmra.mrb[0].mxu0 %v320
    %v710 = vpop.f32.mrb[0].mxu0
    %v711 = vadd.f32 0.0, %v710
    %v712 = vpop.f32.mrb[0].mxu0
    %713 = vmatprep.mubr.f32.mxu0 %v325
    %714 = vmatmul.mubr.f32.gmra.mrb[0].mxu0 %v324
    %v715 = vpop.f32.mrb[0].mxu0
    %v716 = vadd.f32 0.0, %v715
    %v717 = vpop.f32.mrb[0].mxu0
    %718 = vmatprep.mubr.f32.mxu0 %v329
    %719 = vmatmul.mubr.f32.gmra.mrb[0].mxu0 %v328
    %v720 = vpop.f32.mrb[0].mxu0
    %v721 = vadd.f32 0.0, %v720
    %v722 = vpop.f32.mrb[0].mxu0
    %723 = vmatprep.mubr.f32.mxu0 %v333
    %724 = vmatmul.mubr.f32.gmra.mrb[0].mxu0 %v332
    %v725 = vpop.f32.mrb[0].mxu0
    %v726 = vadd.f32 0.0, %v725
    %v727 = vpop.f32.mrb[0].mxu0
    %728 = vdwg.mxu0
    %v729 = vadd.s32 %v373, 1
    %vm730 = vcmp.ge.s32.totalorder %v729, 0
    %vm731 = vmand %vm377, %vm730
    %vm732 = vcmp.lt.s32.totalorder %v729, 16
    %vm733 = vmand %vm731, %vm732
    %v734 = vadd.s32 %v382, %v729
    %v735 = vsel %vm733, %v734, 4294967295
    %vm736 = vcmp.eq.s32.totalorder %v339, %v735
    %vm737 = vcmp.eq.s32.totalorder %v340, %v735
    %vm738 = vcmp.eq.s32.totalorder %v341, %v735
    %vm739 = vcmp.eq.s32.totalorder %v342, %v735
    %vm740 = vcmp.eq.s32.totalorder %v343, %v735
    %vm741 = vcmp.eq.s32.totalorder %v344, %v735
    %vm742 = vcmp.eq.s32.totalorder %v345, %v735
    %vm743 = vcmp.eq.s32.totalorder %v346, %v735
    %vm744 = vcmp.eq.s32.totalorder %v347, %v735
    %vm745 = vcmp.eq.s32.totalorder %v348, %v735
    %vm746 = vcmp.eq.s32.totalorder %v349, %v735
    %vm747 = vcmp.eq.s32.totalorder %v350, %v735
    %vm748 = vcmp.eq.s32.totalorder %v351, %v735
    %vm749 = vcmp.eq.s32.totalorder %v352, %v735
    %vm750 = vcmp.eq.s32.totalorder %v353, %v735
    %vm751 = vcmp.eq.s32.totalorder %v354, %v735
    %vm752 = vcmp.eq.s32.totalorder %v355, %v735
    %vm753 = vcmp.eq.s32.totalorder %v356, %v735
    %vm754 = vcmp.eq.s32.totalorder %v357, %v735
    %vm755 = vcmp.eq.s32.totalorder %v358, %v735
    %vm756 = vcmp.eq.s32.totalorder %v359, %v735
    %vm757 = vcmp.eq.s32.totalorder %v360, %v735
    %vm758 = vcmp.eq.s32.totalorder %v361, %v735
    %vm759 = vcmp.eq.s32.totalorder %v362, %v735
    %vm760 = vcmp.eq.s32.totalorder %v363, %v735
    %vm761 = vcmp.eq.s32.totalorder %v364, %v735
    %vm762 = vcmp.eq.s32.totalorder %v365, %v735
    %vm763 = vcmp.eq.s32.totalorder %v366, %v735
    %vm764 = vcmp.eq.s32.totalorder %v367, %v735
    %vm765 = vcmp.eq.s32.totalorder %v368, %v735
    %vm766 = vcmp.eq.s32.totalorder %v369, %v735
    %vm767 = vcmp.eq.s32.totalorder %v370, %v735
    %v768 = vsel %vm736, 1.0, 0.0
    %v769 = vsel %vm737, 1.0, 0.0
    %v770 = vsel %vm738, 1.0, 0.0
    %v771 = vsel %vm739, 1.0, 0.0
    %v772 = vsel %vm740, 1.0, 0.0
    %v773 = vsel %vm741, 1.0, 0.0
    %v774 = vsel %vm742, 1.0, 0.0
    %v775 = vsel %vm743, 1.0, 0.0
    %v776 = vsel %vm744, 1.0, 0.0
    %v777 = vsel %vm745, 1.0, 0.0
    %v778 = vsel %vm746, 1.0, 0.0
    %v779 = vsel %vm747, 1.0, 0.0
    %v780 = vsel %vm748, 1.0, 0.0
    %v781 = vsel %vm749, 1.0, 0.0
    %v782 = vsel %vm750, 1.0, 0.0
    %v783 = vsel %vm751, 1.0, 0.0
    %v784 = vsel %vm752, 1.0, 0.0
    %v785 = vsel %vm753, 1.0, 0.0
    %v786 = vsel %vm754, 1.0, 0.0
    %v787 = vsel %vm755, 1.0, 0.0
    %v788 = vsel %vm756, 1.0, 0.0
    %v789 = vsel %vm757, 1.0, 0.0
    %v790 = vsel %vm758, 1.0, 0.0
    %v791 = vsel %vm759, 1.0, 0.0
    %v792 = vsel %vm760, 1.0, 0.0
    %v793 = vsel %vm761, 1.0, 0.0
    %v794 = vsel %vm762, 1.0, 0.0
    %v795 = vsel %vm763, 1.0, 0.0
    %v796 = vsel %vm764, 1.0, 0.0
    %v797 = vsel %vm765, 1.0, 0.0
    %v798 = vsel %vm766, 1.0, 0.0
    %v799 = vsel %vm767, 1.0, 0.0
    %800 = vmatprep.subr.mxu0 0.0
    %801 = vmatpush1.msra.mxu0 %v768
    %802 = vmatprep.subr.mxu0 0.0
    %803 = vmatpush1.msra.mxu0 %v769
    %804 = vmatprep.subr.mxu0 0.0
    %805 = vmatpush1.msra.mxu0 %v770
    %806 = vmatprep.subr.mxu0 0.0
    %807 = vmatpush1.msra.mxu0 %v771
    %808 = vmatprep.subr.mxu0 0.0
    %809 = vmatpush1.msra.mxu0 %v772
    %810 = vmatprep.subr.mxu0 0.0
    %811 = vmatpush1.msra.mxu0 %v773
    %812 = vmatprep.subr.mxu0 0.0
    %813 = vmatpush1.msra.mxu0 %v774
    %814 = vmatprep.subr.mxu0 0.0
    %815 = vmatpush1.msra.mxu0 %v775
    %816 = vmatprep.subr.mxu0 0.0
    %817 = vmatpush1.msra.mxu0 %v776
    %818 = vmatprep.subr.mxu0 0.0
    %819 = vmatpush1.msra.mxu0 %v777
    %820 = vmatprep.subr.mxu0 0.0
    %821 = vmatpush1.msra.mxu0 %v778
    %822 = vmatprep.subr.mxu0 0.0
    %823 = vmatpush1.msra.mxu0 %v779
    %824 = vmatprep.subr.mxu0 0.0
    %825 = vmatpush1.msra.mxu0 %v780
    %826 = vmatprep.subr.mxu0 0.0
    %827 = vmatpush1.msra.mxu0 %v781
    %828 = vmatprep.subr.mxu0 0.0
    %829 = vmatpush1.msra.mxu0 %v782
    %830 = vmatprep.subr.mxu0 0.0
    %831 = vmatpush1.msra.mxu0 %v783
    %832 = vmatprep.subr.mxu0 0.0
    %833 = vmatpush1.msra.mxu0 %v784
    %834 = vmatprep.subr.mxu0 0.0
    %835 = vmatpush1.msra.mxu0 %v785
    %836 = vmatprep.subr.mxu0 0.0
    %837 = vmatpush1.msra.mxu0 %v786
    %838 = vmatprep.subr.mxu0 0.0
    %839 = vmatpush1.msra.mxu0 %v787
    %840 = vmatprep.subr.mxu0 0.0
    %841 = vmatpush1.msra.mxu0 %v788
    %842 = vmatprep.subr.mxu0 0.0
    %843 = vmatpush1.msra.mxu0 %v789
    %844 = vmatprep.subr.mxu0 0.0
    %845 = vmatpush1.msra.mxu0 %v790
    %846 = vmatprep.subr.mxu0 0.0
    %847 = vmatpush1.msra.mxu0 %v791
    %848 = vmatprep.subr.mxu0 0.0
    %849 = vmatpush1.msra.mxu0 %v792
    %850 = vmatprep.subr.mxu0 0.0
    %851 = vmatpush1.msra.mxu0 %v793
    %852 = vmatprep.subr.mxu0 0.0
    %853 = vmatpush1.msra.mxu0 %v794
    %854 = vmatprep.subr.mxu0 0.0
    %855 = vmatpush1.msra.mxu0 %v795
    %856 = vmatprep.subr.mxu0 0.0
    %857 = vmatpush1.msra.mxu0 %v796
    %858 = vmatprep.subr.mxu0 0.0
    %859 = vmatpush1.msra.mxu0 %v797
    %860 = vmatprep.subr.mxu0 0.0
    %861 = vmatpush1.msra.mxu0 %v798
    %862 = vmatprep.subr.mxu0 0.0
    %863 = vmatpush1.msra.mxu0 %v799
    %864 = vmatprep.mubr.f32.mxu0 %v319
    %865 = vmatmul.mubr.f32.gmra.mrb[0].mxu0 %v318
    %v866 = vpop.f32.mrb[0].mxu0
    %v867 = vadd.f32 0.0, %v866
    %v868 = vpop.f32.mrb[0].mxu0
    %869 = vmatprep.mubr.f32.mxu0 %v323
    %870 = vmatmul.mubr.f32.gmra.mrb[0].mxu0 %v322
    %v871 = vpop.f32.mrb[0].mxu0
    %v872 = vadd.f32 0.0, %v871
    %v873 = vpop.f32.mrb[0].mxu0
    %874 = vmatprep.mubr.f32.mxu0 %v327
    %875 = vmatmul.mubr.f32.gmra.mrb[0].mxu0 %v326
    %v876 = vpop.f32.mrb[0].mxu0
    %v877 = vadd.f32 0.0, %v876
    %v878 = vpop.f32.mrb[0].mxu0
    %879 = vmatprep.mubr.f32.mxu0 %v331
    %880 = vmatmul.mubr.f32.gmra.mrb[0].mxu0 %v330
    %v881 = vpop.f32.mrb[0].mxu0
    %v882 = vadd.f32 0.0, %v881
    %v883 = vpop.f32.mrb[0].mxu0
    %884 = vmatprep.mubr.f32.mxu0 %v321
    %885 = vmatmul.mubr.f32.gmra.mrb[0].mxu0 %v320
    %v886 = vpop.f32.mrb[0].mxu0
    %v887 = vadd.f32 0.0, %v886
    %v888 = vpop.f32.mrb[0].mxu0
    %889 = vmatprep.mubr.f32.mxu0 %v325
    %890 = vmatmul.mubr.f32.gmra.mrb[0].mxu0 %v324
    %v891 = vpop.f32.mrb[0].mxu0
    %v892 = vadd.f32 0.0, %v891
    %v893 = vpop.f32.mrb[0].mxu0
    %894 = vmatprep.mubr.f32.mxu0 %v329
    %895 = vmatmul.mubr.f32.gmra.mrb[0].mxu0 %v328
    %v896 = vpop.f32.mrb[0].mxu0
    %v897 = vadd.f32 0.0, %v896
    %v898 = vpop.f32.mrb[0].mxu0
    %899 = vmatprep.mubr.f32.mxu0 %v333
    %900 = vmatmul.mubr.f32.gmra.mrb[0].mxu0 %v332
    %v901 = vpop.f32.mrb[0].mxu0
    %v902 = vadd.f32 0.0, %v901
    %v903 = vpop.f32.mrb[0].mxu0
    %904 = vdwg.mxu0
    %v905 = vadd.s32 %v373, 2
    %vm906 = vcmp.ge.s32.totalorder %v905, 0
    %vm907 = vmand %vm377, %vm906
    %vm908 = vcmp.lt.s32.totalorder %v905, 16
    %vm909 = vmand %vm907, %vm908
    %v910 = vadd.s32 %v382, %v905
    %v911 = vsel %vm909, %v910, 4294967295
    %vm912 = vcmp.eq.s32.totalorder %v339, %v911
    %vm913 = vcmp.eq.s32.totalorder %v340, %v911
    %vm914 = vcmp.eq.s32.totalorder %v341, %v911
    %vm915 = vcmp.eq.s32.totalorder %v342, %v911
    %vm916 = vcmp.eq.s32.totalorder %v343, %v911
    %vm917 = vcmp.eq.s32.totalorder %v344, %v911
    %vm918 = vcmp.eq.s32.totalorder %v345, %v911
    %vm919 = vcmp.eq.s32.totalorder %v346, %v911
    %vm920 = vcmp.eq.s32.totalorder %v347, %v911
    %vm921 = vcmp.eq.s32.totalorder %v348, %v911
    %vm922 = vcmp.eq.s32.totalorder %v349, %v911
    %vm923 = vcmp.eq.s32.totalorder %v350, %v911
    %vm924 = vcmp.eq.s32.totalorder %v351, %v911
    %vm925 = vcmp.eq.s32.totalorder %v352, %v911
    %vm926 = vcmp.eq.s32.totalorder %v353, %v911
    %vm927 = vcmp.eq.s32.totalorder %v354, %v911
    %vm928 = vcmp.eq.s32.totalorder %v355, %v911
    %vm929 = vcmp.eq.s32.totalorder %v356, %v911
    %vm930 = vcmp.eq.s32.totalorder %v357, %v911
    %vm931 = vcmp.eq.s32.totalorder %v358, %v911
    %vm932 = vcmp.eq.s32.totalorder %v359, %v911
    %vm933 = vcmp.eq.s32.totalorder %v360, %v911
    %vm934 = vcmp.eq.s32.totalorder %v361, %v911
    %vm935 = vcmp.eq.s32.totalorder %v362, %v911
    %vm936 = vcmp.eq.s32.totalorder %v363, %v911
    %vm937 = vcmp.eq.s32.totalorder %v364, %v911
    %vm938 = vcmp.eq.s32.totalorder %v365, %v911
    %vm939 = vcmp.eq.s32.totalorder %v366, %v911
    %vm940 = vcmp.eq.s32.totalorder %v367, %v911
    %vm941 = vcmp.eq.s32.totalorder %v368, %v911
    %vm942 = vcmp.eq.s32.totalorder %v369, %v911
    %vm943 = vcmp.eq.s32.totalorder %v370, %v911
    %v944 = vsel %vm912, 1.0, 0.0
    %v945 = vsel %vm913, 1.0, 0.0
    %v946 = vsel %vm914, 1.0, 0.0
    %v947 = vsel %vm915, 1.0, 0.0
    %v948 = vsel %vm916, 1.0, 0.0
    %v949 = vsel %vm917, 1.0, 0.0
    %v950 = vsel %vm918, 1.0, 0.0
    %v951 = vsel %vm919, 1.0, 0.0
    %v952 = vsel %vm920, 1.0, 0.0
    %v953 = vsel %vm921, 1.0, 0.0
    %v954 = vsel %vm922, 1.0, 0.0
    %v955 = vsel %vm923, 1.0, 0.0
    %v956 = vsel %vm924, 1.0, 0.0
    %v957 = vsel %vm925, 1.0, 0.0
    %v958 = vsel %vm926, 1.0, 0.0
    %v959 = vsel %vm927, 1.0, 0.0
    %v960 = vsel %vm928, 1.0, 0.0
    %v961 = vsel %vm929, 1.0, 0.0
    %v962 = vsel %vm930, 1.0, 0.0
    %v963 = vsel %vm931, 1.0, 0.0
    %v964 = vsel %vm932, 1.0, 0.0
    %v965 = vsel %vm933, 1.0, 0.0
    %v966 = vsel %vm934, 1.0, 0.0
    %v967 = vsel %vm935, 1.0, 0.0
    %v968 = vsel %vm936, 1.0, 0.0
    %v969 = vsel %vm937, 1.0, 0.0
    %v970 = vsel %vm938, 1.0, 0.0
    %v971 = vsel %vm939, 1.0, 0.0
    %v972 = vsel %vm940, 1.0, 0.0
    %v973 = vsel %vm941, 1.0, 0.0
    %v974 = vsel %vm942, 1.0, 0.0
    %v975 = vsel %vm943, 1.0, 0.0
    %976 = vmatprep.subr.mxu0 0.0
    %977 = vmatpush1.msra.mxu0 %v944
    %978 = vmatprep.subr.mxu0 0.0
    %979 = vmatpush1.msra.mxu0 %v945
    %980 = vmatprep.subr.mxu0 0.0
    %981 = vmatpush1.msra.mxu0 %v946
    %982 = vmatprep.subr.mxu0 0.0
    %983 = vmatpush1.msra.mxu0 %v947
    %984 = vmatprep.subr.mxu0 0.0
    %985 = vmatpush1.msra.mxu0 %v948
    %986 = vmatprep.subr.mxu0 0.0
    %987 = vmatpush1.msra.mxu0 %v949
    %988 = vmatprep.subr.mxu0 0.0
    %989 = vmatpush1.msra.mxu0 %v950
    %990 = vmatprep.subr.mxu0 0.0
    %991 = vmatpush1.msra.mxu0 %v951
    %992 = vmatprep.subr.mxu0 0.0
    %993 = vmatpush1.msra.mxu0 %v952
    %994 = vmatprep.subr.mxu0 0.0
    %995 = vmatpush1.msra.mxu0 %v953
    %996 = vmatprep.subr.mxu0 0.0
    %997 = vmatpush1.msra.mxu0 %v954
    %998 = vmatprep.subr.mxu0 0.0
    %999 = vmatpush1.msra.mxu0 %v955
    %1000 = vmatprep.subr.mxu0 0.0
    %1001 = vmatpush1.msra.mxu0 %v956
    %1002 = vmatprep.subr.mxu0 0.0
    %1003 = vmatpush1.msra.mxu0 %v957
    %1004 = vmatprep.subr.mxu0 0.0
    %1005 = vmatpush1.msra.mxu0 %v958
    %1006 = vmatprep.subr.mxu0 0.0
    %1007 = vmatpush1.msra.mxu0 %v959
    %1008 = vmatprep.subr.mxu0 0.0
    %1009 = vmatpush1.msra.mxu0 %v960
    %1010 = vmatprep.subr.mxu0 0.0
    %1011 = vmatpush1.msra.mxu0 %v961
    %1012 = vmatprep.subr.mxu0 0.0
    %1013 = vmatpush1.msra.mxu0 %v962
    %1014 = vmatprep.subr.mxu0 0.0
    %1015 = vmatpush1.msra.mxu0 %v963
    %1016 = vmatprep.subr.mxu0 0.0
    %1017 = vmatpush1.msra.mxu0 %v964
    %1018 = vmatprep.subr.mxu0 0.0
    %1019 = vmatpush1.msra.mxu0 %v965
    %1020 = vmatprep.subr.mxu0 0.0
    %1021 = vmatpush1.msra.mxu0 %v966
    %1022 = vmatprep.subr.mxu0 0.0
    %1023 = vmatpush1.msra.mxu0 %v967
    %1024 = vmatprep.subr.mxu0 0.0
    %1025 = vmatpush1.msra.mxu0 %v968
    %1026 = vmatprep.subr.mxu0 0.0
    %1027 = vmatpush1.msra.mxu0 %v969
    %1028 = vmatprep.subr.mxu0 0.0
    %1029 = vmatpush1.msra.mxu0 %v970
    %1030 = vmatprep.subr.mxu0 0.0
    %1031 = vmatpush1.msra.mxu0 %v971
    %1032 = vmatprep.subr.mxu0 0.0
    %1033 = vmatpush1.msra.mxu0 %v972
    %1034 = vmatprep.subr.mxu0 0.0
    %1035 = vmatpush1.msra.mxu0 %v973
    %1036 = vmatprep.subr.mxu0 0.0
    %1037 = vmatpush1.msra.mxu0 %v974
    %1038 = vmatprep.subr.mxu0 0.0
    %1039 = vmatpush1.msra.mxu0 %v975
    %1040 = vmatprep.mubr.f32.mxu0 %v319
    %1041 = vmatmul.mubr.f32.gmra.mrb[0].mxu0 %v318
    %v1042 = vpop.f32.mrb[0].mxu0
    %v1043 = vadd.f32 0.0, %v1042
    %v1044 = vpop.f32.mrb[0].mxu0
    %1045 = vmatprep.mubr.f32.mxu0 %v323
    %1046 = vmatmul.mubr.f32.gmra.mrb[0].mxu0 %v322
    %v1047 = vpop.f32.mrb[0].mxu0
    %v1048 = vadd.f32 0.0, %v1047
    %v1049 = vpop.f32.mrb[0].mxu0
    %1050 = vmatprep.mubr.f32.mxu0 %v327
    %1051 = vmatmul.mubr.f32.gmra.mrb[0].mxu0 %v326
    %v1052 = vpop.f32.mrb[0].mxu0
    %v1053 = vadd.f32 0.0, %v1052
    %v1054 = vpop.f32.mrb[0].mxu0
    %1055 = vmatprep.mubr.f32.mxu0 %v331
    %1056 = vmatmul.mubr.f32.gmra.mrb[0].mxu0 %v330
    %v1057 = vpop.f32.mrb[0].mxu0
    %v1058 = vadd.f32 0.0, %v1057
    %v1059 = vpop.f32.mrb[0].mxu0
    %1060 = vmatprep.mubr.f32.mxu0 %v321
    %1061 = vmatmul.mubr.f32.gmra.mrb[0].mxu0 %v320
    %v1062 = vpop.f32.mrb[0].mxu0
    %v1063 = vadd.f32 0.0, %v1062
    %v1064 = vpop.f32.mrb[0].mxu0
    %1065 = vmatprep.mubr.f32.mxu0 %v325
    %1066 = vmatmul.mubr.f32.gmra.mrb[0].mxu0 %v324
    %v1067 = vpop.f32.mrb[0].mxu0
    %v1068 = vadd.f32 0.0, %v1067
    %v1069 = vpop.f32.mrb[0].mxu0
    %1070 = vmatprep.mubr.f32.mxu0 %v329
    %1071 = vmatmul.mubr.f32.gmra.mrb[0].mxu0 %v328
    %v1072 = vpop.f32.mrb[0].mxu0
    %v1073 = vadd.f32 0.0, %v1072
    %v1074 = vpop.f32.mrb[0].mxu0
    %1075 = vmatprep.mubr.f32.mxu0 %v333
    %1076 = vmatmul.mubr.f32.gmra.mrb[0].mxu0 %v332
    %v1077 = vpop.f32.mrb[0].mxu0
    %v1078 = vadd.f32 0.0, %v1077
    %v1079 = vpop.f32.mrb[0].mxu0
    %1080 = vdwg.mxu0
    %vm1081 = vcmp.ge.s32.totalorder %v371, 0
    %vm1082 = vcmp.lt.s32.totalorder %v371, 16
    %vm1083 = vmand %vm1081, %vm1082
    %vm1084 = vmand %vm1083, %vm378
    %vm1085 = vmand %vm1084, %vm380
    %v1086 = vshll.u32 %v371, 4
    %v1087 = vadd.s32 %v1086, %v374
    %v1088 = vsel %vm1085, %v1087, 4294967295
    %vm1089 = vcmp.eq.s32.totalorder %v339, %v1088
    %vm1090 = vcmp.eq.s32.totalorder %v340, %v1088
    %vm1091 = vcmp.eq.s32.totalorder %v341, %v1088
    %vm1092 = vcmp.eq.s32.totalorder %v342, %v1088
    %vm1093 = vcmp.eq.s32.totalorder %v343, %v1088
    %vm1094 = vcmp.eq.s32.totalorder %v344, %v1088
    %vm1095 = vcmp.eq.s32.totalorder %v345, %v1088
    %vm1096 = vcmp.eq.s32.totalorder %v346, %v1088
    %vm1097 = vcmp.eq.s32.totalorder %v347, %v1088
    %vm1098 = vcmp.eq.s32.totalorder %v348, %v1088
    %vm1099 = vcmp.eq.s32.totalorder %v349, %v1088
    %vm1100 = vcmp.eq.s32.totalorder %v350, %v1088
    %vm1101 = vcmp.eq.s32.totalorder %v351, %v1088
    %vm1102 = vcmp.eq.s32.totalorder %v352, %v1088
    %vm1103 = vcmp.eq.s32.totalorder %v353, %v1088
    %vm1104 = vcmp.eq.s32.totalorder %v354, %v1088
    %vm1105 = vcmp.eq.s32.totalorder %v355, %v1088
    %vm1106 = vcmp.eq.s32.totalorder %v356, %v1088
    %vm1107 = vcmp.eq.s32.totalorder %v357, %v1088
    %vm1108 = vcmp.eq.s32.totalorder %v358, %v1088
    %vm1109 = vcmp.eq.s32.totalorder %v359, %v1088
    %vm1110 = vcmp.eq.s32.totalorder %v360, %v1088
    %vm1111 = vcmp.eq.s32.totalorder %v361, %v1088
    %vm1112 = vcmp.eq.s32.totalorder %v362, %v1088
    %vm1113 = vcmp.eq.s32.totalorder %v363, %v1088
    %vm1114 = vcmp.eq.s32.totalorder %v364, %v1088
    %vm1115 = vcmp.eq.s32.totalorder %v365, %v1088
    %vm1116 = vcmp.eq.s32.totalorder %v366, %v1088
    %vm1117 = vcmp.eq.s32.totalorder %v367, %v1088
    %vm1118 = vcmp.eq.s32.totalorder %v368, %v1088
    %vm1119 = vcmp.eq.s32.totalorder %v369, %v1088
    %vm1120 = vcmp.eq.s32.totalorder %v370, %v1088
    %v1121 = vsel %vm1089, 1.0, 0.0
    %v1122 = vsel %vm1090, 1.0, 0.0
    %v1123 = vsel %vm1091, 1.0, 0.0
    %v1124 = vsel %vm1092, 1.0, 0.0
    %v1125 = vsel %vm1093, 1.0, 0.0
    %v1126 = vsel %vm1094, 1.0, 0.0
    %v1127 = vsel %vm1095, 1.0, 0.0
    %v1128 = vsel %vm1096, 1.0, 0.0
    %v1129 = vsel %vm1097, 1.0, 0.0
    %v1130 = vsel %vm1098, 1.0, 0.0
    %v1131 = vsel %vm1099, 1.0, 0.0
    %v1132 = vsel %vm1100, 1.0, 0.0
    %v1133 = vsel %vm1101, 1.0, 0.0
    %v1134 = vsel %vm1102, 1.0, 0.0
    %v1135 = vsel %vm1103, 1.0, 0.0
    %v1136 = vsel %vm1104, 1.0, 0.0
    %v1137 = vsel %vm1105, 1.0, 0.0
    %v1138 = vsel %vm1106, 1.0, 0.0
    %v1139 = vsel %vm1107, 1.0, 0.0
    %v1140 = vsel %vm1108, 1.0, 0.0
    %v1141 = vsel %vm1109, 1.0, 0.0
    %v1142 = vsel %vm1110, 1.0, 0.0
    %v1143 = vsel %vm1111, 1.0, 0.0
    %v1144 = vsel %vm1112, 1.0, 0.0
    %v1145 = vsel %vm1113, 1.0, 0.0
    %v1146 = vsel %vm1114, 1.0, 0.0
    %v1147 = vsel %vm1115, 1.0, 0.0
    %v1148 = vsel %vm1116, 1.0, 0.0
    %v1149 = vsel %vm1117, 1.0, 0.0
    %v1150 = vsel %vm1118, 1.0, 0.0
    %v1151 = vsel %vm1119, 1.0, 0.0
    %v1152 = vsel %vm1120, 1.0, 0.0
    %1153 = vmatprep.subr.mxu0 0.0
    %1154 = vmatpush1.msra.mxu0 %v1121
    %1155 = vmatprep.subr.mxu0 0.0
    %1156 = vmatpush1.msra.mxu0 %v1122
    %1157 = vmatprep.subr.mxu0 0.0
    %1158 = vmatpush1.msra.mxu0 %v1123
    %1159 = vmatprep.subr.mxu0 0.0
    %1160 = vmatpush1.msra.mxu0 %v1124
    %1161 = vmatprep.subr.mxu0 0.0
    %1162 = vmatpush1.msra.mxu0 %v1125
    %1163 = vmatprep.subr.mxu0 0.0
    %1164 = vmatpush1.msra.mxu0 %v1126
    %1165 = vmatprep.subr.mxu0 0.0
    %1166 = vmatpush1.msra.mxu0 %v1127
    %1167 = vmatprep.subr.mxu0 0.0
    %1168 = vmatpush1.msra.mxu0 %v1128
    %1169 = vmatprep.subr.mxu0 0.0
    %1170 = vmatpush1.msra.mxu0 %v1129
    %1171 = vmatprep.subr.mxu0 0.0
    %1172 = vmatpush1.msra.mxu0 %v1130
    %1173 = vmatprep.subr.mxu0 0.0
    %1174 = vmatpush1.msra.mxu0 %v1131
    %1175 = vmatprep.subr.mxu0 0.0
    %1176 = vmatpush1.msra.mxu0 %v1132
    %1177 = vmatprep.subr.mxu0 0.0
    %1178 = vmatpush1.msra.mxu0 %v1133
    %1179 = vmatprep.subr.mxu0 0.0
    %1180 = vmatpush1.msra.mxu0 %v1134
    %1181 = vmatprep.subr.mxu0 0.0
    %1182 = vmatpush1.msra.mxu0 %v1135
    %1183 = vmatprep.subr.mxu0 0.0
    %1184 = vmatpush1.msra.mxu0 %v1136
    %1185 = vmatprep.subr.mxu0 0.0
    %1186 = vmatpush1.msra.mxu0 %v1137
    %1187 = vmatprep.subr.mxu0 0.0
    %1188 = vmatpush1.msra.mxu0 %v1138
    %1189 = vmatprep.subr.mxu0 0.0
    %1190 = vmatpush1.msra.mxu0 %v1139
    %1191 = vmatprep.subr.mxu0 0.0
    %1192 = vmatpush1.msra.mxu0 %v1140
    %1193 = vmatprep.subr.mxu0 0.0
    %1194 = vmatpush1.msra.mxu0 %v1141
    %1195 = vmatprep.subr.mxu0 0.0
    %1196 = vmatpush1.msra.mxu0 %v1142
    %1197 = vmatprep.subr.mxu0 0.0
    %1198 = vmatpush1.msra.mxu0 %v1143
    %1199 = vmatprep.subr.mxu0 0.0
    %1200 = vmatpush1.msra.mxu0 %v1144
    %1201 = vmatprep.subr.mxu0 0.0
    %1202 = vmatpush1.msra.mxu0 %v1145
    %1203 = vmatprep.subr.mxu0 0.0
    %1204 = vmatpush1.msra.mxu0 %v1146
    %1205 = vmatprep.subr.mxu0 0.0
    %1206 = vmatpush1.msra.mxu0 %v1147
    %1207 = vmatprep.subr.mxu0 0.0
    %1208 = vmatpush1.msra.mxu0 %v1148
    %1209 = vmatprep.subr.mxu0 0.0
    %1210 = vmatpush1.msra.mxu0 %v1149
    %1211 = vmatprep.subr.mxu0 0.0
    %1212 = vmatpush1.msra.mxu0 %v1150
    %1213 = vmatprep.subr.mxu0 0.0
    %1214 = vmatpush1.msra.mxu0 %v1151
    %1215 = vmatprep.subr.mxu0 0.0
    %1216 = vmatpush1.msra.mxu0 %v1152
    %1217 = vmatprep.mubr.f32.mxu0 %v319
    %1218 = vmatmul.mubr.f32.gmra.mrb[0].mxu0 %v318
    %v1219 = vpop.f32.mrb[0].mxu0
    %v1220 = vadd.f32 0.0, %v1219
    %v1221 = vpop.f32.mrb[0].mxu0
    %1222 = vmatprep.mubr.f32.mxu0 %v323
    %1223 = vmatmul.mubr.f32.gmra.mrb[0].mxu0 %v322
    %v1224 = vpop.f32.mrb[0].mxu0
    %v1225 = vadd.f32 0.0, %v1224
    %v1226 = vpop.f32.mrb[0].mxu0
    %1227 = vmatprep.mubr.f32.mxu0 %v327
    %1228 = vmatmul.mubr.f32.gmra.mrb[0].mxu0 %v326
    %v1229 = vpop.f32.mrb[0].mxu0
    %v1230 = vadd.f32 0.0, %v1229
    %v1231 = vpop.f32.mrb[0].mxu0
    %1232 = vmatprep.mubr.f32.mxu0 %v331
    %1233 = vmatmul.mubr.f32.gmra.mrb[0].mxu0 %v330
    %v1234 = vpop.f32.mrb[0].mxu0
    %v1235 = vadd.f32 0.0, %v1234
    %v1236 = vpop.f32.mrb[0].mxu0
    %1237 = vmatprep.mubr.f32.mxu0 %v321
    %1238 = vmatmul.mubr.f32.gmra.mrb[0].mxu0 %v320
    %v1239 = vpop.f32.mrb[0].mxu0
    %v1240 = vadd.f32 0.0, %v1239
    %v1241 = vpop.f32.mrb[0].mxu0
    %1242 = vmatprep.mubr.f32.mxu0 %v325
    %1243 = vmatmul.mubr.f32.gmra.mrb[0].mxu0 %v324
    %v1244 = vpop.f32.mrb[0].mxu0
    %v1245 = vadd.f32 0.0, %v1244
    %v1246 = vpop.f32.mrb[0].mxu0
    %1247 = vmatprep.mubr.f32.mxu0 %v329
    %1248 = vmatmul.mubr.f32.gmra.mrb[0].mxu0 %v328
    %v1249 = vpop.f32.mrb[0].mxu0
    %v1250 = vadd.f32 0.0, %v1249
    %v1251 = vpop.f32.mrb[0].mxu0
    %1252 = vmatprep.mubr.f32.mxu0 %v333
    %1253 = vmatmul.mubr.f32.gmra.mrb[0].mxu0 %v332
    %v1254 = vpop.f32.mrb[0].mxu0
    %v1255 = vadd.f32 0.0, %v1254
    %v1256 = vpop.f32.mrb[0].mxu0
    %1257 = vdwg.mxu0
    %vm1258 = vmand %vm1083, %vm554
    %vm1259 = vmand %vm1258, %vm556
    %v1260 = vadd.s32 %v1086, %v373
    %v1261 = vsel %vm1259, %v1260, 4294967295
    %vm1262 = vcmp.eq.s32.totalorder %v339, %v1261
    %vm1263 = vcmp.eq.s32.totalorder %v340, %v1261
    %vm1264 = vcmp.eq.s32.totalorder %v341, %v1261
    %vm1265 = vcmp.eq.s32.totalorder %v342, %v1261
    %vm1266 = vcmp.eq.s32.totalorder %v343, %v1261
    %vm1267 = vcmp.eq.s32.totalorder %v344, %v1261
    %vm1268 = vcmp.eq.s32.totalorder %v345, %v1261
    %vm1269 = vcmp.eq.s32.totalorder %v346, %v1261
    %vm1270 = vcmp.eq.s32.totalorder %v347, %v1261
    %vm1271 = vcmp.eq.s32.totalorder %v348, %v1261
    %vm1272 = vcmp.eq.s32.totalorder %v349, %v1261
    %vm1273 = vcmp.eq.s32.totalorder %v350, %v1261
    %vm1274 = vcmp.eq.s32.totalorder %v351, %v1261
    %vm1275 = vcmp.eq.s32.totalorder %v352, %v1261
    %vm1276 = vcmp.eq.s32.totalorder %v353, %v1261
    %vm1277 = vcmp.eq.s32.totalorder %v354, %v1261
    %vm1278 = vcmp.eq.s32.totalorder %v355, %v1261
    %vm1279 = vcmp.eq.s32.totalorder %v356, %v1261
    %vm1280 = vcmp.eq.s32.totalorder %v357, %v1261
    %vm1281 = vcmp.eq.s32.totalorder %v358, %v1261
    %vm1282 = vcmp.eq.s32.totalorder %v359, %v1261
    %vm1283 = vcmp.eq.s32.totalorder %v360, %v1261
    %vm1284 = vcmp.eq.s32.totalorder %v361, %v1261
    %vm1285 = vcmp.eq.s32.totalorder %v362, %v1261
    %vm1286 = vcmp.eq.s32.totalorder %v363, %v1261
    %vm1287 = vcmp.eq.s32.totalorder %v364, %v1261
    %vm1288 = vcmp.eq.s32.totalorder %v365, %v1261
    %vm1289 = vcmp.eq.s32.totalorder %v366, %v1261
    %vm1290 = vcmp.eq.s32.totalorder %v367, %v1261
    %vm1291 = vcmp.eq.s32.totalorder %v368, %v1261
    %vm1292 = vcmp.eq.s32.totalorder %v369, %v1261
    %vm1293 = vcmp.eq.s32.totalorder %v370, %v1261
    %v1294 = vsel %vm1262, 1.0, 0.0
    %v1295 = vsel %vm1263, 1.0, 0.0
    %v1296 = vsel %vm1264, 1.0, 0.0
    %v1297 = vsel %vm1265, 1.0, 0.0
    %v1298 = vsel %vm1266, 1.0, 0.0
    %v1299 = vsel %vm1267, 1.0, 0.0
    %v1300 = vsel %vm1268, 1.0, 0.0
    %v1301 = vsel %vm1269, 1.0, 0.0
    %v1302 = vsel %vm1270, 1.0, 0.0
    %v1303 = vsel %vm1271, 1.0, 0.0
    %v1304 = vsel %vm1272, 1.0, 0.0
    %v1305 = vsel %vm1273, 1.0, 0.0
    %v1306 = vsel %vm1274, 1.0, 0.0
    %v1307 = vsel %vm1275, 1.0, 0.0
    %v1308 = vsel %vm1276, 1.0, 0.0
    %v1309 = vsel %vm1277, 1.0, 0.0
    %v1310 = vsel %vm1278, 1.0, 0.0
    %v1311 = vsel %vm1279, 1.0, 0.0
    %v1312 = vsel %vm1280, 1.0, 0.0
    %v1313 = vsel %vm1281, 1.0, 0.0
    %v1314 = vsel %vm1282, 1.0, 0.0
    %v1315 = vsel %vm1283, 1.0, 0.0
    %v1316 = vsel %vm1284, 1.0, 0.0
    %v1317 = vsel %vm1285, 1.0, 0.0
    %v1318 = vsel %vm1286, 1.0, 0.0
    %v1319 = vsel %vm1287, 1.0, 0.0
    %v1320 = vsel %vm1288, 1.0, 0.0
    %v1321 = vsel %vm1289, 1.0, 0.0
    %v1322 = vsel %vm1290, 1.0, 0.0
    %v1323 = vsel %vm1291, 1.0, 0.0
    %v1324 = vsel %vm1292, 1.0, 0.0
    %v1325 = vsel %vm1293, 1.0, 0.0
    %1326 = vmatprep.subr.mxu0 0.0
    %1327 = vmatpush1.msra.mxu0 %v1294
    %1328 = vmatprep.subr.mxu0 0.0
    %1329 = vmatpush1.msra.mxu0 %v1295
    %1330 = vmatprep.subr.mxu0 0.0
    %1331 = vmatpush1.msra.mxu0 %v1296
    %1332 = vmatprep.subr.mxu0 0.0
    %1333 = vmatpush1.msra.mxu0 %v1297
    %1334 = vmatprep.subr.mxu0 0.0
    %1335 = vmatpush1.msra.mxu0 %v1298
    %1336 = vmatprep.subr.mxu0 0.0
    %1337 = vmatpush1.msra.mxu0 %v1299
    %1338 = vmatprep.subr.mxu0 0.0
    %1339 = vmatpush1.msra.mxu0 %v1300
    %1340 = vmatprep.subr.mxu0 0.0
    %1341 = vmatpush1.msra.mxu0 %v1301
    %1342 = vmatprep.subr.mxu0 0.0
    %1343 = vmatpush1.msra.mxu0 %v1302
    %1344 = vmatprep.subr.mxu0 0.0
    %1345 = vmatpush1.msra.mxu0 %v1303
    %1346 = vmatprep.subr.mxu0 0.0
    %1347 = vmatpush1.msra.mxu0 %v1304
    %1348 = vmatprep.subr.mxu0 0.0
    %1349 = vmatpush1.msra.mxu0 %v1305
    %1350 = vmatprep.subr.mxu0 0.0
    %1351 = vmatpush1.msra.mxu0 %v1306
    %1352 = vmatprep.subr.mxu0 0.0
    %1353 = vmatpush1.msra.mxu0 %v1307
    %1354 = vmatprep.subr.mxu0 0.0
    %1355 = vmatpush1.msra.mxu0 %v1308
    %1356 = vmatprep.subr.mxu0 0.0
    %1357 = vmatpush1.msra.mxu0 %v1309
    %1358 = vmatprep.subr.mxu0 0.0
    %1359 = vmatpush1.msra.mxu0 %v1310
    %1360 = vmatprep.subr.mxu0 0.0
    %1361 = vmatpush1.msra.mxu0 %v1311
    %1362 = vmatprep.subr.mxu0 0.0
    %1363 = vmatpush1.msra.mxu0 %v1312
    %1364 = vmatprep.subr.mxu0 0.0
    %1365 = vmatpush1.msra.mxu0 %v1313
    %1366 = vmatprep.subr.mxu0 0.0
    %1367 = vmatpush1.msra.mxu0 %v1314
    %1368 = vmatprep.subr.mxu0 0.0
    %1369 = vmatpush1.msra.mxu0 %v1315
    %1370 = vmatprep.subr.mxu0 0.0
    %1371 = vmatpush1.msra.mxu0 %v1316
    %1372 = vmatprep.subr.mxu0 0.0
    %1373 = vmatpush1.msra.mxu0 %v1317
    %1374 = vmatprep.subr.mxu0 0.0
    %1375 = vmatpush1.msra.mxu0 %v1318
    %1376 = vmatprep.subr.mxu0 0.0
    %1377 = vmatpush1.msra.mxu0 %v1319
    %1378 = vmatprep.subr.mxu0 0.0
    %1379 = vmatpush1.msra.mxu0 %v1320
    %1380 = vmatprep.subr.mxu0 0.0
    %1381 = vmatpush1.msra.mxu0 %v1321
    %1382 = vmatprep.subr.mxu0 0.0
    %1383 = vmatpush1.msra.mxu0 %v1322
    %1384 = vmatprep.subr.mxu0 0.0
    %1385 = vmatpush1.msra.mxu0 %v1323
    %1386 = vmatprep.subr.mxu0 0.0
    %1387 = vmatpush1.msra.mxu0 %v1324
    %1388 = vmatprep.subr.mxu0 0.0
    %1389 = vmatpush1.msra.mxu0 %v1325
    %1390 = vmatprep.mubr.f32.mxu0 %v319
    %1391 = vmatmul.mubr.f32.gmra.mrb[0].mxu0 %v318
    %v1392 = vpop.f32.mrb[0].mxu0
    %v1393 = vadd.f32 0.0, %v1392
    %v1394 = vpop.f32.mrb[0].mxu0
    %1395 = vmatprep.mubr.f32.mxu0 %v323
    %1396 = vmatmul.mubr.f32.gmra.mrb[0].mxu0 %v322
    %v1397 = vpop.f32.mrb[0].mxu0
    %v1398 = vadd.f32 0.0, %v1397
    %v1399 = vpop.f32.mrb[0].mxu0
    %1400 = vmatprep.mubr.f32.mxu0 %v327
    %1401 = vmatmul.mubr.f32.gmra.mrb[0].mxu0 %v326
    %v1402 = vpop.f32.mrb[0].mxu0
    %v1403 = vadd.f32 0.0, %v1402
    %v1404 = vpop.f32.mrb[0].mxu0
    %1405 = vmatprep.mubr.f32.mxu0 %v331
    %1406 = vmatmul.mubr.f32.gmra.mrb[0].mxu0 %v330
    %v1407 = vpop.f32.mrb[0].mxu0
    %v1408 = vadd.f32 0.0, %v1407
    %v1409 = vpop.f32.mrb[0].mxu0
    %1410 = vmatprep.mubr.f32.mxu0 %v321
    %1411 = vmatmul.mubr.f32.gmra.mrb[0].mxu0 %v320
    %v1412 = vpop.f32.mrb[0].mxu0
    %v1413 = vadd.f32 0.0, %v1412
    %v1414 = vpop.f32.mrb[0].mxu0
    %1415 = vmatprep.mubr.f32.mxu0 %v325
    %1416 = vmatmul.mubr.f32.gmra.mrb[0].mxu0 %v324
    %v1417 = vpop.f32.mrb[0].mxu0
    %v1418 = vadd.f32 0.0, %v1417
    %v1419 = vpop.f32.mrb[0].mxu0
    %1420 = vmatprep.mubr.f32.mxu0 %v329
    %1421 = vmatmul.mubr.f32.gmra.mrb[0].mxu0 %v328
    %v1422 = vpop.f32.mrb[0].mxu0
    %v1423 = vadd.f32 0.0, %v1422
    %v1424 = vpop.f32.mrb[0].mxu0
    %1425 = vmatprep.mubr.f32.mxu0 %v333
    %1426 = vmatmul.mubr.f32.gmra.mrb[0].mxu0 %v332
    %v1427 = vpop.f32.mrb[0].mxu0
    %v1428 = vadd.f32 0.0, %v1427
    %v1429 = vpop.f32.mrb[0].mxu0
    %1430 = vdwg.mxu0
    %vm1431 = vmand %vm1083, %vm730
    %vm1432 = vmand %vm1431, %vm732
    %v1433 = vadd.s32 %v1086, %v729
    %v1434 = vsel %vm1432, %v1433, 4294967295
    %vm1435 = vcmp.eq.s32.totalorder %v339, %v1434
    %vm1436 = vcmp.eq.s32.totalorder %v340, %v1434
    %vm1437 = vcmp.eq.s32.totalorder %v341, %v1434
    %vm1438 = vcmp.eq.s32.totalorder %v342, %v1434
    %vm1439 = vcmp.eq.s32.totalorder %v343, %v1434
    %vm1440 = vcmp.eq.s32.totalorder %v344, %v1434
    %vm1441 = vcmp.eq.s32.totalorder %v345, %v1434
    %vm1442 = vcmp.eq.s32.totalorder %v346, %v1434
    %vm1443 = vcmp.eq.s32.totalorder %v347, %v1434
    %vm1444 = vcmp.eq.s32.totalorder %v348, %v1434
    %vm1445 = vcmp.eq.s32.totalorder %v349, %v1434
    %vm1446 = vcmp.eq.s32.totalorder %v350, %v1434
    %vm1447 = vcmp.eq.s32.totalorder %v351, %v1434
    %vm1448 = vcmp.eq.s32.totalorder %v352, %v1434
    %vm1449 = vcmp.eq.s32.totalorder %v353, %v1434
    %vm1450 = vcmp.eq.s32.totalorder %v354, %v1434
    %vm1451 = vcmp.eq.s32.totalorder %v355, %v1434
    %vm1452 = vcmp.eq.s32.totalorder %v356, %v1434
    %vm1453 = vcmp.eq.s32.totalorder %v357, %v1434
    %vm1454 = vcmp.eq.s32.totalorder %v358, %v1434
    %vm1455 = vcmp.eq.s32.totalorder %v359, %v1434
    %vm1456 = vcmp.eq.s32.totalorder %v360, %v1434
    %vm1457 = vcmp.eq.s32.totalorder %v361, %v1434
    %vm1458 = vcmp.eq.s32.totalorder %v362, %v1434
    %vm1459 = vcmp.eq.s32.totalorder %v363, %v1434
    %vm1460 = vcmp.eq.s32.totalorder %v364, %v1434
    %vm1461 = vcmp.eq.s32.totalorder %v365, %v1434
    %vm1462 = vcmp.eq.s32.totalorder %v366, %v1434
    %vm1463 = vcmp.eq.s32.totalorder %v367, %v1434
    %vm1464 = vcmp.eq.s32.totalorder %v368, %v1434
    %vm1465 = vcmp.eq.s32.totalorder %v369, %v1434
    %vm1466 = vcmp.eq.s32.totalorder %v370, %v1434
    %v1467 = vsel %vm1435, 1.0, 0.0
    %v1468 = vsel %vm1436, 1.0, 0.0
    %v1469 = vsel %vm1437, 1.0, 0.0
    %v1470 = vsel %vm1438, 1.0, 0.0
    %v1471 = vsel %vm1439, 1.0, 0.0
    %v1472 = vsel %vm1440, 1.0, 0.0
    %v1473 = vsel %vm1441, 1.0, 0.0
    %v1474 = vsel %vm1442, 1.0, 0.0
    %v1475 = vsel %vm1443, 1.0, 0.0
    %v1476 = vsel %vm1444, 1.0, 0.0
    %v1477 = vsel %vm1445, 1.0, 0.0
    %v1478 = vsel %vm1446, 1.0, 0.0
    %v1479 = vsel %vm1447, 1.0, 0.0
    %v1480 = vsel %vm1448, 1.0, 0.0
    %v1481 = vsel %vm1449, 1.0, 0.0
    %v1482 = vsel %vm1450, 1.0, 0.0
    %v1483 = vsel %vm1451, 1.0, 0.0
    %v1484 = vsel %vm1452, 1.0, 0.0
    %v1485 = vsel %vm1453, 1.0, 0.0
    %v1486 = vsel %vm1454, 1.0, 0.0
    %v1487 = vsel %vm1455, 1.0, 0.0
    %v1488 = vsel %vm1456, 1.0, 0.0
    %v1489 = vsel %vm1457, 1.0, 0.0
    %v1490 = vsel %vm1458, 1.0, 0.0
    %v1491 = vsel %vm1459, 1.0, 0.0
    %v1492 = vsel %vm1460, 1.0, 0.0
    %v1493 = vsel %vm1461, 1.0, 0.0
    %v1494 = vsel %vm1462, 1.0, 0.0
    %v1495 = vsel %vm1463, 1.0, 0.0
    %v1496 = vsel %vm1464, 1.0, 0.0
    %v1497 = vsel %vm1465, 1.0, 0.0
    %v1498 = vsel %vm1466, 1.0, 0.0
    %1499 = vmatprep.subr.mxu0 0.0
    %1500 = vmatpush1.msra.mxu0 %v1467
    %1501 = vmatprep.subr.mxu0 0.0
    %1502 = vmatpush1.msra.mxu0 %v1468
    %1503 = vmatprep.subr.mxu0 0.0
    %1504 = vmatpush1.msra.mxu0 %v1469
    %1505 = vmatprep.subr.mxu0 0.0
    %1506 = vmatpush1.msra.mxu0 %v1470
    %1507 = vmatprep.subr.mxu0 0.0
    %1508 = vmatpush1.msra.mxu0 %v1471
    %1509 = vmatprep.subr.mxu0 0.0
    %1510 = vmatpush1.msra.mxu0 %v1472
    %1511 = vmatprep.subr.mxu0 0.0
    %1512 = vmatpush1.msra.mxu0 %v1473
    %1513 = vmatprep.subr.mxu0 0.0
    %1514 = vmatpush1.msra.mxu0 %v1474
    %1515 = vmatprep.subr.mxu0 0.0
    %1516 = vmatpush1.msra.mxu0 %v1475
    %1517 = vmatprep.subr.mxu0 0.0
    %1518 = vmatpush1.msra.mxu0 %v1476
    %1519 = vmatprep.subr.mxu0 0.0
    %1520 = vmatpush1.msra.mxu0 %v1477
    %1521 = vmatprep.subr.mxu0 0.0
    %1522 = vmatpush1.msra.mxu0 %v1478
    %1523 = vmatprep.subr.mxu0 0.0
    %1524 = vmatpush1.msra.mxu0 %v1479
    %1525 = vmatprep.subr.mxu0 0.0
    %1526 = vmatpush1.msra.mxu0 %v1480
    %1527 = vmatprep.subr.mxu0 0.0
    %1528 = vmatpush1.msra.mxu0 %v1481
    %1529 = vmatprep.subr.mxu0 0.0
    %1530 = vmatpush1.msra.mxu0 %v1482
    %1531 = vmatprep.subr.mxu0 0.0
    %1532 = vmatpush1.msra.mxu0 %v1483
    %1533 = vmatprep.subr.mxu0 0.0
    %1534 = vmatpush1.msra.mxu0 %v1484
    %1535 = vmatprep.subr.mxu0 0.0
    %1536 = vmatpush1.msra.mxu0 %v1485
    %1537 = vmatprep.subr.mxu0 0.0
    %1538 = vmatpush1.msra.mxu0 %v1486
    %1539 = vmatprep.subr.mxu0 0.0
    %1540 = vmatpush1.msra.mxu0 %v1487
    %1541 = vmatprep.subr.mxu0 0.0
    %1542 = vmatpush1.msra.mxu0 %v1488
    %1543 = vmatprep.subr.mxu0 0.0
    %1544 = vmatpush1.msra.mxu0 %v1489
    %1545 = vmatprep.subr.mxu0 0.0
    %1546 = vmatpush1.msra.mxu0 %v1490
    %1547 = vmatprep.subr.mxu0 0.0
    %1548 = vmatpush1.msra.mxu0 %v1491
    %1549 = vmatprep.subr.mxu0 0.0
    %1550 = vmatpush1.msra.mxu0 %v1492
    %1551 = vmatprep.subr.mxu0 0.0
    %1552 = vmatpush1.msra.mxu0 %v1493
    %1553 = vmatprep.subr.mxu0 0.0
    %1554 = vmatpush1.msra.mxu0 %v1494
    %1555 = vmatprep.subr.mxu0 0.0
    %1556 = vmatpush1.msra.mxu0 %v1495
    %1557 = vmatprep.subr.mxu0 0.0
    %1558 = vmatpush1.msra.mxu0 %v1496
    %1559 = vmatprep.subr.mxu0 0.0
    %1560 = vmatpush1.msra.mxu0 %v1497
    %1561 = vmatprep.subr.mxu0 0.0
    %1562 = vmatpush1.msra.mxu0 %v1498
    %1563 = vmatprep.mubr.f32.mxu0 %v319
    %1564 = vmatmul.mubr.f32.gmra.mrb[0].mxu0 %v318
    %v1565 = vpop.f32.mrb[0].mxu0
    %v1566 = vadd.f32 0.0, %v1565
    %v1567 = vpop.f32.mrb[0].mxu0
    %1568 = vmatprep.mubr.f32.mxu0 %v323
    %1569 = vmatmul.mubr.f32.gmra.mrb[0].mxu0 %v322
    %v1570 = vpop.f32.mrb[0].mxu0
    %v1571 = vadd.f32 0.0, %v1570
    %v1572 = vpop.f32.mrb[0].mxu0
    %1573 = vmatprep.mubr.f32.mxu0 %v327
    %1574 = vmatmul.mubr.f32.gmra.mrb[0].mxu0 %v326
    %v1575 = vpop.f32.mrb[0].mxu0
    %v1576 = vadd.f32 0.0, %v1575
    %v1577 = vpop.f32.mrb[0].mxu0
    %1578 = vmatprep.mubr.f32.mxu0 %v331
    %1579 = vmatmul.mubr.f32.gmra.mrb[0].mxu0 %v330
    %v1580 = vpop.f32.mrb[0].mxu0
    %v1581 = vadd.f32 0.0, %v1580
    %v1582 = vpop.f32.mrb[0].mxu0
    %1583 = vmatprep.mubr.f32.mxu0 %v321
    %1584 = vmatmul.mubr.f32.gmra.mrb[0].mxu0 %v320
    %v1585 = vpop.f32.mrb[0].mxu0
    %v1586 = vadd.f32 0.0, %v1585
    %v1587 = vpop.f32.mrb[0].mxu0
    %1588 = vmatprep.mubr.f32.mxu0 %v325
    %1589 = vmatmul.mubr.f32.gmra.mrb[0].mxu0 %v324
    %v1590 = vpop.f32.mrb[0].mxu0
    %v1591 = vadd.f32 0.0, %v1590
    %v1592 = vpop.f32.mrb[0].mxu0
    %1593 = vmatprep.mubr.f32.mxu0 %v329
    %1594 = vmatmul.mubr.f32.gmra.mrb[0].mxu0 %v328
    %v1595 = vpop.f32.mrb[0].mxu0
    %v1596 = vadd.f32 0.0, %v1595
    %v1597 = vpop.f32.mrb[0].mxu0
    %1598 = vmatprep.mubr.f32.mxu0 %v333
    %1599 = vmatmul.mubr.f32.gmra.mrb[0].mxu0 %v332
    %v1600 = vpop.f32.mrb[0].mxu0
    %v1601 = vadd.f32 0.0, %v1600
    %v1602 = vpop.f32.mrb[0].mxu0
    %1603 = vdwg.mxu0
    %vm1604 = vmand %vm1083, %vm906
    %vm1605 = vmand %vm1604, %vm908
    %v1606 = vadd.s32 %v1086, %v905
    %v1607 = vsel %vm1605, %v1606, 4294967295
    %vm1608 = vcmp.eq.s32.totalorder %v339, %v1607
    %vm1609 = vcmp.eq.s32.totalorder %v340, %v1607
    %vm1610 = vcmp.eq.s32.totalorder %v341, %v1607
    %vm1611 = vcmp.eq.s32.totalorder %v342, %v1607
    %vm1612 = vcmp.eq.s32.totalorder %v343, %v1607
    %vm1613 = vcmp.eq.s32.totalorder %v344, %v1607
    %vm1614 = vcmp.eq.s32.totalorder %v345, %v1607
    %vm1615 = vcmp.eq.s32.totalorder %v346, %v1607
    %vm1616 = vcmp.eq.s32.totalorder %v347, %v1607
    %vm1617 = vcmp.eq.s32.totalorder %v348, %v1607
    %vm1618 = vcmp.eq.s32.totalorder %v349, %v1607
    %vm1619 = vcmp.eq.s32.totalorder %v350, %v1607
    %vm1620 = vcmp.eq.s32.totalorder %v351, %v1607
    %vm1621 = vcmp.eq.s32.totalorder %v352, %v1607
    %vm1622 = vcmp.eq.s32.totalorder %v353, %v1607
    %vm1623 = vcmp.eq.s32.totalorder %v354, %v1607
    %vm1624 = vcmp.eq.s32.totalorder %v355, %v1607
    %vm1625 = vcmp.eq.s32.totalorder %v356, %v1607
    %vm1626 = vcmp.eq.s32.totalorder %v357, %v1607
    %vm1627 = vcmp.eq.s32.totalorder %v358, %v1607
    %vm1628 = vcmp.eq.s32.totalorder %v359, %v1607
    %vm1629 = vcmp.eq.s32.totalorder %v360, %v1607
    %vm1630 = vcmp.eq.s32.totalorder %v361, %v1607
    %vm1631 = vcmp.eq.s32.totalorder %v362, %v1607
    %vm1632 = vcmp.eq.s32.totalorder %v363, %v1607
    %vm1633 = vcmp.eq.s32.totalorder %v364, %v1607
    %vm1634 = vcmp.eq.s32.totalorder %v365, %v1607
    %vm1635 = vcmp.eq.s32.totalorder %v366, %v1607
    %vm1636 = vcmp.eq.s32.totalorder %v367, %v1607
    %vm1637 = vcmp.eq.s32.totalorder %v368, %v1607
    %vm1638 = vcmp.eq.s32.totalorder %v369, %v1607
    %vm1639 = vcmp.eq.s32.totalorder %v370, %v1607
    %v1640 = vsel %vm1608, 1.0, 0.0
    %v1641 = vsel %vm1609, 1.0, 0.0
    %v1642 = vsel %vm1610, 1.0, 0.0
    %v1643 = vsel %vm1611, 1.0, 0.0
    %v1644 = vsel %vm1612, 1.0, 0.0
    %v1645 = vsel %vm1613, 1.0, 0.0
    %v1646 = vsel %vm1614, 1.0, 0.0
    %v1647 = vsel %vm1615, 1.0, 0.0
    %v1648 = vsel %vm1616, 1.0, 0.0
    %v1649 = vsel %vm1617, 1.0, 0.0
    %v1650 = vsel %vm1618, 1.0, 0.0
    %v1651 = vsel %vm1619, 1.0, 0.0
    %v1652 = vsel %vm1620, 1.0, 0.0
    %v1653 = vsel %vm1621, 1.0, 0.0
    %v1654 = vsel %vm1622, 1.0, 0.0
    %v1655 = vsel %vm1623, 1.0, 0.0
    %v1656 = vsel %vm1624, 1.0, 0.0
    %v1657 = vsel %vm1625, 1.0, 0.0
    %v1658 = vsel %vm1626, 1.0, 0.0
    %v1659 = vsel %vm1627, 1.0, 0.0
    %v1660 = vsel %vm1628, 1.0, 0.0
    %v1661 = vsel %vm1629, 1.0, 0.0
    %v1662 = vsel %vm1630, 1.0, 0.0
    %v1663 = vsel %vm1631, 1.0, 0.0
    %v1664 = vsel %vm1632, 1.0, 0.0
    %v1665 = vsel %vm1633, 1.0, 0.0
    %v1666 = vsel %vm1634, 1.0, 0.0
    %v1667 = vsel %vm1635, 1.0, 0.0
    %v1668 = vsel %vm1636, 1.0, 0.0
    %v1669 = vsel %vm1637, 1.0, 0.0
    %v1670 = vsel %vm1638, 1.0, 0.0
    %v1671 = vsel %vm1639, 1.0, 0.0
    %1672 = vmatprep.subr.mxu0 0.0
    %1673 = vmatpush1.msra.mxu0 %v1640
    %1674 = vmatprep.subr.mxu0 0.0
    %1675 = vmatpush1.msra.mxu0 %v1641
    %1676 = vmatprep.subr.mxu0 0.0
    %1677 = vmatpush1.msra.mxu0 %v1642
    %1678 = vmatprep.subr.mxu0 0.0
    %1679 = vmatpush1.msra.mxu0 %v1643
    %1680 = vmatprep.subr.mxu0 0.0
    %1681 = vmatpush1.msra.mxu0 %v1644
    %1682 = vmatprep.subr.mxu0 0.0
    %1683 = vmatpush1.msra.mxu0 %v1645
    %1684 = vmatprep.subr.mxu0 0.0
    %1685 = vmatpush1.msra.mxu0 %v1646
    %1686 = vmatprep.subr.mxu0 0.0
    %1687 = vmatpush1.msra.mxu0 %v1647
    %1688 = vmatprep.subr.mxu0 0.0
    %1689 = vmatpush1.msra.mxu0 %v1648
    %1690 = vmatprep.subr.mxu0 0.0
    %1691 = vmatpush1.msra.mxu0 %v1649
    %1692 = vmatprep.subr.mxu0 0.0
    %1693 = vmatpush1.msra.mxu0 %v1650
    %1694 = vmatprep.subr.mxu0 0.0
    %1695 = vmatpush1.msra.mxu0 %v1651
    %1696 = vmatprep.subr.mxu0 0.0
    %1697 = vmatpush1.msra.mxu0 %v1652
    %1698 = vmatprep.subr.mxu0 0.0
    %1699 = vmatpush1.msra.mxu0 %v1653
    %1700 = vmatprep.subr.mxu0 0.0
    %1701 = vmatpush1.msra.mxu0 %v1654
    %1702 = vmatprep.subr.mxu0 0.0
    %1703 = vmatpush1.msra.mxu0 %v1655
    %1704 = vmatprep.subr.mxu0 0.0
    %1705 = vmatpush1.msra.mxu0 %v1656
    %1706 = vmatprep.subr.mxu0 0.0
    %1707 = vmatpush1.msra.mxu0 %v1657
    %1708 = vmatprep.subr.mxu0 0.0
    %1709 = vmatpush1.msra.mxu0 %v1658
    %1710 = vmatprep.subr.mxu0 0.0
    %1711 = vmatpush1.msra.mxu0 %v1659
    %1712 = vmatprep.subr.mxu0 0.0
    %1713 = vmatpush1.msra.mxu0 %v1660
    %1714 = vmatprep.subr.mxu0 0.0
    %1715 = vmatpush1.msra.mxu0 %v1661
    %1716 = vmatprep.subr.mxu0 0.0
    %1717 = vmatpush1.msra.mxu0 %v1662
    %1718 = vmatprep.subr.mxu0 0.0
    %1719 = vmatpush1.msra.mxu0 %v1663
    %1720 = vmatprep.subr.mxu0 0.0
    %1721 = vmatpush1.msra.mxu0 %v1664
    %1722 = vmatprep.subr.mxu0 0.0
    %1723 = vmatpush1.msra.mxu0 %v1665
    %1724 = vmatprep.subr.mxu0 0.0
    %1725 = vmatpush1.msra.mxu0 %v1666
    %1726 = vmatprep.subr.mxu0 0.0
    %1727 = vmatpush1.msra.mxu0 %v1667
    %1728 = vmatprep.subr.mxu0 0.0
    %1729 = vmatpush1.msra.mxu0 %v1668
    %1730 = vmatprep.subr.mxu0 0.0
    %1731 = vmatpush1.msra.mxu0 %v1669
    %1732 = vmatprep.subr.mxu0 0.0
    %1733 = vmatpush1.msra.mxu0 %v1670
    %1734 = vmatprep.subr.mxu0 0.0
    %1735 = vmatpush1.msra.mxu0 %v1671
    %1736 = vmatprep.mubr.f32.mxu0 %v319
    %1737 = vmatmul.mubr.f32.gmra.mrb[0].mxu0 %v318
    %v1738 = vpop.f32.mrb[0].mxu0
    %v1739 = vadd.f32 0.0, %v1738
    %v1740 = vpop.f32.mrb[0].mxu0
    %1741 = vmatprep.mubr.f32.mxu0 %v323
    %1742 = vmatmul.mubr.f32.gmra.mrb[0].mxu0 %v322
    %v1743 = vpop.f32.mrb[0].mxu0
    %v1744 = vadd.f32 0.0, %v1743
    %v1745 = vpop.f32.mrb[0].mxu0
    %1746 = vmatprep.mubr.f32.mxu0 %v327
    %1747 = vmatmul.mubr.f32.gmra.mrb[0].mxu0 %v326
    %v1748 = vpop.f32.mrb[0].mxu0
    %v1749 = vadd.f32 0.0, %v1748
    %v1750 = vpop.f32.mrb[0].mxu0
    %1751 = vmatprep.mubr.f32.mxu0 %v331
    %1752 = vmatmul.mubr.f32.gmra.mrb[0].mxu0 %v330
    %v1753 = vpop.f32.mrb[0].mxu0
    %v1754 = vadd.f32 0.0, %v1753
    %v1755 = vpop.f32.mrb[0].mxu0
    %1756 = vmatprep.mubr.f32.mxu0 %v321
    %1757 = vmatmul.mubr.f32.gmra.mrb[0].mxu0 %v320
    %v1758 = vpop.f32.mrb[0].mxu0
    %v1759 = vadd.f32 0.0, %v1758
    %v1760 = vpop.f32.mrb[0].mxu0
    %1761 = vmatprep.mubr.f32.mxu0 %v325
    %1762 = vmatmul.mubr.f32.gmra.mrb[0].mxu0 %v324
    %v1763 = vpop.f32.mrb[0].mxu0
    %v1764 = vadd.f32 0.0, %v1763
    %v1765 = vpop.f32.mrb[0].mxu0
    %1766 = vmatprep.mubr.f32.mxu0 %v329
    %1767 = vmatmul.mubr.f32.gmra.mrb[0].mxu0 %v328
    %v1768 = vpop.f32.mrb[0].mxu0
    %v1769 = vadd.f32 0.0, %v1768
    %v1770 = vpop.f32.mrb[0].mxu0
    %1771 = vmatprep.mubr.f32.mxu0 %v333
    %1772 = vmatmul.mubr.f32.gmra.mrb[0].mxu0 %v332
    %v1773 = vpop.f32.mrb[0].mxu0
    %v1774 = vadd.f32 0.0, %v1773
    %v1775 = vpop.f32.mrb[0].mxu0
    %1776 = vdwg.mxu0
    %v1777 = vadd.s32 %v371, 1
    %vm1778 = vcmp.ge.s32.totalorder %v1777, 0
    %vm1779 = vcmp.lt.s32.totalorder %v1777, 16
    %vm1780 = vmand %vm1778, %vm1779
    %vm1781 = vmand %vm1780, %vm378
    %vm1782 = vmand %vm1781, %vm380
    %v1783 = vshll.u32 %v1777, 4
    %v1784 = vadd.s32 %v1783, %v374
    %v1785 = vsel %vm1782, %v1784, 4294967295
    %vm1786 = vcmp.eq.s32.totalorder %v339, %v1785
    %vm1787 = vcmp.eq.s32.totalorder %v340, %v1785
    %vm1788 = vcmp.eq.s32.totalorder %v341, %v1785
    %vm1789 = vcmp.eq.s32.totalorder %v342, %v1785
    %vm1790 = vcmp.eq.s32.totalorder %v343, %v1785
    %vm1791 = vcmp.eq.s32.totalorder %v344, %v1785
    %vm1792 = vcmp.eq.s32.totalorder %v345, %v1785
    %vm1793 = vcmp.eq.s32.totalorder %v346, %v1785
    %vm1794 = vcmp.eq.s32.totalorder %v347, %v1785
    %vm1795 = vcmp.eq.s32.totalorder %v348, %v1785
    %vm1796 = vcmp.eq.s32.totalorder %v349, %v1785
    %vm1797 = vcmp.eq.s32.totalorder %v350, %v1785
    %vm1798 = vcmp.eq.s32.totalorder %v351, %v1785
    %vm1799 = vcmp.eq.s32.totalorder %v352, %v1785
    %vm1800 = vcmp.eq.s32.totalorder %v353, %v1785
    %vm1801 = vcmp.eq.s32.totalorder %v354, %v1785
    %vm1802 = vcmp.eq.s32.totalorder %v355, %v1785
    %vm1803 = vcmp.eq.s32.totalorder %v356, %v1785
    %vm1804 = vcmp.eq.s32.totalorder %v357, %v1785
    %vm1805 = vcmp.eq.s32.totalorder %v358, %v1785
    %vm1806 = vcmp.eq.s32.totalorder %v359, %v1785
    %vm1807 = vcmp.eq.s32.totalorder %v360, %v1785
    %vm1808 = vcmp.eq.s32.totalorder %v361, %v1785
    %vm1809 = vcmp.eq.s32.totalorder %v362, %v1785
    %vm1810 = vcmp.eq.s32.totalorder %v363, %v1785
    %vm1811 = vcmp.eq.s32.totalorder %v364, %v1785
    %vm1812 = vcmp.eq.s32.totalorder %v365, %v1785
    %vm1813 = vcmp.eq.s32.totalorder %v366, %v1785
    %vm1814 = vcmp.eq.s32.totalorder %v367, %v1785
    %vm1815 = vcmp.eq.s32.totalorder %v368, %v1785
    %vm1816 = vcmp.eq.s32.totalorder %v369, %v1785
    %vm1817 = vcmp.eq.s32.totalorder %v370, %v1785
    %v1818 = vsel %vm1786, 1.0, 0.0
    %v1819 = vsel %vm1787, 1.0, 0.0
    %v1820 = vsel %vm1788, 1.0, 0.0
    %v1821 = vsel %vm1789, 1.0, 0.0
    %v1822 = vsel %vm1790, 1.0, 0.0
    %v1823 = vsel %vm1791, 1.0, 0.0
    %v1824 = vsel %vm1792, 1.0, 0.0
    %v1825 = vsel %vm1793, 1.0, 0.0
    %v1826 = vsel %vm1794, 1.0, 0.0
    %v1827 = vsel %vm1795, 1.0, 0.0
    %v1828 = vsel %vm1796, 1.0, 0.0
    %v1829 = vsel %vm1797, 1.0, 0.0
    %v1830 = vsel %vm1798, 1.0, 0.0
    %v1831 = vsel %vm1799, 1.0, 0.0
    %v1832 = vsel %vm1800, 1.0, 0.0
    %v1833 = vsel %vm1801, 1.0, 0.0
    %v1834 = vsel %vm1802, 1.0, 0.0
    %v1835 = vsel %vm1803, 1.0, 0.0
    %v1836 = vsel %vm1804, 1.0, 0.0
    %v1837 = vsel %vm1805, 1.0, 0.0
    %v1838 = vsel %vm1806, 1.0, 0.0
    %v1839 = vsel %vm1807, 1.0, 0.0
    %v1840 = vsel %vm1808, 1.0, 0.0
    %v1841 = vsel %vm1809, 1.0, 0.0
    %v1842 = vsel %vm1810, 1.0, 0.0
    %v1843 = vsel %vm1811, 1.0, 0.0
    %v1844 = vsel %vm1812, 1.0, 0.0
    %v1845 = vsel %vm1813, 1.0, 0.0
    %v1846 = vsel %vm1814, 1.0, 0.0
    %v1847 = vsel %vm1815, 1.0, 0.0
    %v1848 = vsel %vm1816, 1.0, 0.0
    %v1849 = vsel %vm1817, 1.0, 0.0
    %1850 = vmatprep.subr.mxu0 0.0
    %1851 = vmatpush1.msra.mxu0 %v1818
    %1852 = vmatprep.subr.mxu0 0.0
    %1853 = vmatpush1.msra.mxu0 %v1819
    %1854 = vmatprep.subr.mxu0 0.0
    %1855 = vmatpush1.msra.mxu0 %v1820
    %1856 = vmatprep.subr.mxu0 0.0
    %1857 = vmatpush1.msra.mxu0 %v1821
    %1858 = vmatprep.subr.mxu0 0.0
    %1859 = vmatpush1.msra.mxu0 %v1822
    %1860 = vmatprep.subr.mxu0 0.0
    %1861 = vmatpush1.msra.mxu0 %v1823
    %1862 = vmatprep.subr.mxu0 0.0
    %1863 = vmatpush1.msra.mxu0 %v1824
    %1864 = vmatprep.subr.mxu0 0.0
    %1865 = vmatpush1.msra.mxu0 %v1825
    %1866 = vmatprep.subr.mxu0 0.0
    %1867 = vmatpush1.msra.mxu0 %v1826
    %1868 = vmatprep.subr.mxu0 0.0
    %1869 = vmatpush1.msra.mxu0 %v1827
    %1870 = vmatprep.subr.mxu0 0.0
    %1871 = vmatpush1.msra.mxu0 %v1828
    %1872 = vmatprep.subr.mxu0 0.0
    %1873 = vmatpush1.msra.mxu0 %v1829
    %1874 = vmatprep.subr.mxu0 0.0
    %1875 = vmatpush1.msra.mxu0 %v1830
    %1876 = vmatprep.subr.mxu0 0.0
    %1877 = vmatpush1.msra.mxu0 %v1831
    %1878 = vmatprep.subr.mxu0 0.0
    %1879 = vmatpush1.msra.mxu0 %v1832
    %1880 = vmatprep.subr.mxu0 0.0
    %1881 = vmatpush1.msra.mxu0 %v1833
    %1882 = vmatprep.subr.mxu0 0.0
    %1883 = vmatpush1.msra.mxu0 %v1834
    %1884 = vmatprep.subr.mxu0 0.0
    %1885 = vmatpush1.msra.mxu0 %v1835
    %1886 = vmatprep.subr.mxu0 0.0
    %1887 = vmatpush1.msra.mxu0 %v1836
    %1888 = vmatprep.subr.mxu0 0.0
    %1889 = vmatpush1.msra.mxu0 %v1837
    %1890 = vmatprep.subr.mxu0 0.0
    %1891 = vmatpush1.msra.mxu0 %v1838
    %1892 = vmatprep.subr.mxu0 0.0
    %1893 = vmatpush1.msra.mxu0 %v1839
    %1894 = vmatprep.subr.mxu0 0.0
    %1895 = vmatpush1.msra.mxu0 %v1840
    %1896 = vmatprep.subr.mxu0 0.0
    %1897 = vmatpush1.msra.mxu0 %v1841
    %1898 = vmatprep.subr.mxu0 0.0
    %1899 = vmatpush1.msra.mxu0 %v1842
    %1900 = vmatprep.subr.mxu0 0.0
    %1901 = vmatpush1.msra.mxu0 %v1843
    %1902 = vmatprep.subr.mxu0 0.0
    %1903 = vmatpush1.msra.mxu0 %v1844
    %1904 = vmatprep.subr.mxu0 0.0
    %1905 = vmatpush1.msra.mxu0 %v1845
    %1906 = vmatprep.subr.mxu0 0.0
    %1907 = vmatpush1.msra.mxu0 %v1846
    %1908 = vmatprep.subr.mxu0 0.0
    %1909 = vmatpush1.msra.mxu0 %v1847
    %1910 = vmatprep.subr.mxu0 0.0
    %1911 = vmatpush1.msra.mxu0 %v1848
    %1912 = vmatprep.subr.mxu0 0.0
    %1913 = vmatpush1.msra.mxu0 %v1849
    %1914 = vmatprep.mubr.f32.mxu0 %v319
    %1915 = vmatmul.mubr.f32.gmra.mrb[0].mxu0 %v318
    %v1916 = vpop.f32.mrb[0].mxu0
    %v1917 = vadd.f32 0.0, %v1916
    %v1918 = vpop.f32.mrb[0].mxu0
    %1919 = vmatprep.mubr.f32.mxu0 %v323
    %1920 = vmatmul.mubr.f32.gmra.mrb[0].mxu0 %v322
    %v1921 = vpop.f32.mrb[0].mxu0
    %v1922 = vadd.f32 0.0, %v1921
    %v1923 = vpop.f32.mrb[0].mxu0
    %1924 = vmatprep.mubr.f32.mxu0 %v327
    %1925 = vmatmul.mubr.f32.gmra.mrb[0].mxu0 %v326
    %v1926 = vpop.f32.mrb[0].mxu0
    %v1927 = vadd.f32 0.0, %v1926
    %v1928 = vpop.f32.mrb[0].mxu0
    %1929 = vmatprep.mubr.f32.mxu0 %v331
    %1930 = vmatmul.mubr.f32.gmra.mrb[0].mxu0 %v330
    %v1931 = vpop.f32.mrb[0].mxu0
    %v1932 = vadd.f32 0.0, %v1931
    %v1933 = vpop.f32.mrb[0].mxu0
    %1934 = vmatprep.mubr.f32.mxu0 %v321
    %1935 = vmatmul.mubr.f32.gmra.mrb[0].mxu0 %v320
    %v1936 = vpop.f32.mrb[0].mxu0
    %v1937 = vadd.f32 0.0, %v1936
    %v1938 = vpop.f32.mrb[0].mxu0
    %1939 = vmatprep.mubr.f32.mxu0 %v325
    %1940 = vmatmul.mubr.f32.gmra.mrb[0].mxu0 %v324
    %v1941 = vpop.f32.mrb[0].mxu0
    %v1942 = vadd.f32 0.0, %v1941
    %v1943 = vpop.f32.mrb[0].mxu0
    %1944 = vmatprep.mubr.f32.mxu0 %v329
    %1945 = vmatmul.mubr.f32.gmra.mrb[0].mxu0 %v328
    %v1946 = vpop.f32.mrb[0].mxu0
    %v1947 = vadd.f32 0.0, %v1946
    %v1948 = vpop.f32.mrb[0].mxu0
    %1949 = vmatprep.mubr.f32.mxu0 %v333
    %1950 = vmatmul.mubr.f32.gmra.mrb[0].mxu0 %v332
    %v1951 = vpop.f32.mrb[0].mxu0
    %v1952 = vadd.f32 0.0, %v1951
    %v1953 = vpop.f32.mrb[0].mxu0
    %1954 = vdwg.mxu0
    %vm1955 = vmand %vm1780, %vm554
    %vm1956 = vmand %vm1955, %vm556
    %v1957 = vadd.s32 %v1783, %v373
    %v1958 = vsel %vm1956, %v1957, 4294967295
    %vm1959 = vcmp.eq.s32.totalorder %v339, %v1958
    %vm1960 = vcmp.eq.s32.totalorder %v340, %v1958
    %vm1961 = vcmp.eq.s32.totalorder %v341, %v1958
    %vm1962 = vcmp.eq.s32.totalorder %v342, %v1958
    %vm1963 = vcmp.eq.s32.totalorder %v343, %v1958
    %vm1964 = vcmp.eq.s32.totalorder %v344, %v1958
    %vm1965 = vcmp.eq.s32.totalorder %v345, %v1958
    %vm1966 = vcmp.eq.s32.totalorder %v346, %v1958
    %vm1967 = vcmp.eq.s32.totalorder %v347, %v1958
    %vm1968 = vcmp.eq.s32.totalorder %v348, %v1958
    %vm1969 = vcmp.eq.s32.totalorder %v349, %v1958
    %vm1970 = vcmp.eq.s32.totalorder %v350, %v1958
    %vm1971 = vcmp.eq.s32.totalorder %v351, %v1958
    %vm1972 = vcmp.eq.s32.totalorder %v352, %v1958
    %vm1973 = vcmp.eq.s32.totalorder %v353, %v1958
    %vm1974 = vcmp.eq.s32.totalorder %v354, %v1958
    %vm1975 = vcmp.eq.s32.totalorder %v355, %v1958
    %vm1976 = vcmp.eq.s32.totalorder %v356, %v1958
    %vm1977 = vcmp.eq.s32.totalorder %v357, %v1958
    %vm1978 = vcmp.eq.s32.totalorder %v358, %v1958
    %vm1979 = vcmp.eq.s32.totalorder %v359, %v1958
    %vm1980 = vcmp.eq.s32.totalorder %v360, %v1958
    %vm1981 = vcmp.eq.s32.totalorder %v361, %v1958
    %vm1982 = vcmp.eq.s32.totalorder %v362, %v1958
    %vm1983 = vcmp.eq.s32.totalorder %v363, %v1958
    %vm1984 = vcmp.eq.s32.totalorder %v364, %v1958
    %vm1985 = vcmp.eq.s32.totalorder %v365, %v1958
    %vm1986 = vcmp.eq.s32.totalorder %v366, %v1958
    %vm1987 = vcmp.eq.s32.totalorder %v367, %v1958
    %vm1988 = vcmp.eq.s32.totalorder %v368, %v1958
    %vm1989 = vcmp.eq.s32.totalorder %v369, %v1958
    %vm1990 = vcmp.eq.s32.totalorder %v370, %v1958
    %v1991 = vsel %vm1959, 1.0, 0.0
    %v1992 = vsel %vm1960, 1.0, 0.0
    %v1993 = vsel %vm1961, 1.0, 0.0
    %v1994 = vsel %vm1962, 1.0, 0.0
    %v1995 = vsel %vm1963, 1.0, 0.0
    %v1996 = vsel %vm1964, 1.0, 0.0
    %v1997 = vsel %vm1965, 1.0, 0.0
    %v1998 = vsel %vm1966, 1.0, 0.0
    %v1999 = vsel %vm1967, 1.0, 0.0
    %v2000 = vsel %vm1968, 1.0, 0.0
    %v2001 = vsel %vm1969, 1.0, 0.0
    %v2002 = vsel %vm1970, 1.0, 0.0
    %v2003 = vsel %vm1971, 1.0, 0.0
    %v2004 = vsel %vm1972, 1.0, 0.0
    %v2005 = vsel %vm1973, 1.0, 0.0
    %v2006 = vsel %vm1974, 1.0, 0.0
    %v2007 = vsel %vm1975, 1.0, 0.0
    %v2008 = vsel %vm1976, 1.0, 0.0
    %v2009 = vsel %vm1977, 1.0, 0.0
    %v2010 = vsel %vm1978, 1.0, 0.0
    %v2011 = vsel %vm1979, 1.0, 0.0
    %v2012 = vsel %vm1980, 1.0, 0.0
    %v2013 = vsel %vm1981, 1.0, 0.0
    %v2014 = vsel %vm1982, 1.0, 0.0
    %v2015 = vsel %vm1983, 1.0, 0.0
    %v2016 = vsel %vm1984, 1.0, 0.0
    %v2017 = vsel %vm1985, 1.0, 0.0
    %v2018 = vsel %vm1986, 1.0, 0.0
    %v2019 = vsel %vm1987, 1.0, 0.0
    %v2020 = vsel %vm1988, 1.0, 0.0
    %v2021 = vsel %vm1989, 1.0, 0.0
    %v2022 = vsel %vm1990, 1.0, 0.0
    %2023 = vmatprep.subr.mxu0 0.0
    %2024 = vmatpush1.msra.mxu0 %v1991
    %2025 = vmatprep.subr.mxu0 0.0
    %2026 = vmatpush1.msra.mxu0 %v1992
    %2027 = vmatprep.subr.mxu0 0.0
    %2028 = vmatpush1.msra.mxu0 %v1993
    %2029 = vmatprep.subr.mxu0 0.0
    %2030 = vmatpush1.msra.mxu0 %v1994
    %2031 = vmatprep.subr.mxu0 0.0
    %2032 = vmatpush1.msra.mxu0 %v1995
    %2033 = vmatprep.subr.mxu0 0.0
    %2034 = vmatpush1.msra.mxu0 %v1996
    %2035 = vmatprep.subr.mxu0 0.0
    %2036 = vmatpush1.msra.mxu0 %v1997
    %2037 = vmatprep.subr.mxu0 0.0
    %2038 = vmatpush1.msra.mxu0 %v1998
    %2039 = vmatprep.subr.mxu0 0.0
    %2040 = vmatpush1.msra.mxu0 %v1999
    %2041 = vmatprep.subr.mxu0 0.0
    %2042 = vmatpush1.msra.mxu0 %v2000
    %2043 = vmatprep.subr.mxu0 0.0
    %2044 = vmatpush1.msra.mxu0 %v2001
    %2045 = vmatprep.subr.mxu0 0.0
    %2046 = vmatpush1.msra.mxu0 %v2002
    %2047 = vmatprep.subr.mxu0 0.0
    %2048 = vmatpush1.msra.mxu0 %v2003
    %2049 = vmatprep.subr.mxu0 0.0
    %2050 = vmatpush1.msra.mxu0 %v2004
    %2051 = vmatprep.subr.mxu0 0.0
    %2052 = vmatpush1.msra.mxu0 %v2005
    %2053 = vmatprep.subr.mxu0 0.0
    %2054 = vmatpush1.msra.mxu0 %v2006
    %2055 = vmatprep.subr.mxu0 0.0
    %2056 = vmatpush1.msra.mxu0 %v2007
    %2057 = vmatprep.subr.mxu0 0.0
    %2058 = vmatpush1.msra.mxu0 %v2008
    %2059 = vmatprep.subr.mxu0 0.0
    %2060 = vmatpush1.msra.mxu0 %v2009
    %2061 = vmatprep.subr.mxu0 0.0
    %2062 = vmatpush1.msra.mxu0 %v2010
    %2063 = vmatprep.subr.mxu0 0.0
    %2064 = vmatpush1.msra.mxu0 %v2011
    %2065 = vmatprep.subr.mxu0 0.0
    %2066 = vmatpush1.msra.mxu0 %v2012
    %2067 = vmatprep.subr.mxu0 0.0
    %2068 = vmatpush1.msra.mxu0 %v2013
    %2069 = vmatprep.subr.mxu0 0.0
    %2070 = vmatpush1.msra.mxu0 %v2014
    %2071 = vmatprep.subr.mxu0 0.0
    %2072 = vmatpush1.msra.mxu0 %v2015
    %2073 = vmatprep.subr.mxu0 0.0
    %2074 = vmatpush1.msra.mxu0 %v2016
    %2075 = vmatprep.subr.mxu0 0.0
    %2076 = vmatpush1.msra.mxu0 %v2017
    %2077 = vmatprep.subr.mxu0 0.0
    %2078 = vmatpush1.msra.mxu0 %v2018
    %2079 = vmatprep.subr.mxu0 0.0
    %2080 = vmatpush1.msra.mxu0 %v2019
    %2081 = vmatprep.subr.mxu0 0.0
    %2082 = vmatpush1.msra.mxu0 %v2020
    %2083 = vmatprep.subr.mxu0 0.0
    %2084 = vmatpush1.msra.mxu0 %v2021
    %2085 = vmatprep.subr.mxu0 0.0
    %2086 = vmatpush1.msra.mxu0 %v2022
    %2087 = vmatprep.mubr.f32.mxu0 %v319
    %2088 = vmatmul.mubr.f32.gmra.mrb[0].mxu0 %v318
    %v2089 = vpop.f32.mrb[0].mxu0
    %v2090 = vadd.f32 0.0, %v2089
    %v2091 = vpop.f32.mrb[0].mxu0
    %2092 = vmatprep.mubr.f32.mxu0 %v323
    %2093 = vmatmul.mubr.f32.gmra.mrb[0].mxu0 %v322
    %v2094 = vpop.f32.mrb[0].mxu0
    %v2095 = vadd.f32 0.0, %v2094
    %v2096 = vpop.f32.mrb[0].mxu0
    %2097 = vmatprep.mubr.f32.mxu0 %v327
    %2098 = vmatmul.mubr.f32.gmra.mrb[0].mxu0 %v326
    %v2099 = vpop.f32.mrb[0].mxu0
    %v2100 = vadd.f32 0.0, %v2099
    %v2101 = vpop.f32.mrb[0].mxu0
    %2102 = vmatprep.mubr.f32.mxu0 %v331
    %2103 = vmatmul.mubr.f32.gmra.mrb[0].mxu0 %v330
    %v2104 = vpop.f32.mrb[0].mxu0
    %v2105 = vadd.f32 0.0, %v2104
    %v2106 = vpop.f32.mrb[0].mxu0
    %2107 = vmatprep.mubr.f32.mxu0 %v321
    %2108 = vmatmul.mubr.f32.gmra.mrb[0].mxu0 %v320
    %v2109 = vpop.f32.mrb[0].mxu0
    %v2110 = vadd.f32 0.0, %v2109
    %v2111 = vpop.f32.mrb[0].mxu0
    %2112 = vmatprep.mubr.f32.mxu0 %v325
    %2113 = vmatmul.mubr.f32.gmra.mrb[0].mxu0 %v324
    %v2114 = vpop.f32.mrb[0].mxu0
    %v2115 = vadd.f32 0.0, %v2114
    %v2116 = vpop.f32.mrb[0].mxu0
    %2117 = vmatprep.mubr.f32.mxu0 %v329
    %2118 = vmatmul.mubr.f32.gmra.mrb[0].mxu0 %v328
    %v2119 = vpop.f32.mrb[0].mxu0
    %v2120 = vadd.f32 0.0, %v2119
    %v2121 = vpop.f32.mrb[0].mxu0
    %2122 = vmatprep.mubr.f32.mxu0 %v333
    %2123 = vmatmul.mubr.f32.gmra.mrb[0].mxu0 %v332
    %v2124 = vpop.f32.mrb[0].mxu0
    %v2125 = vadd.f32 0.0, %v2124
    %v2126 = vpop.f32.mrb[0].mxu0
    %2127 = vdwg.mxu0
    %vm2128 = vmand %vm1780, %vm730
    %vm2129 = vmand %vm2128, %vm732
    %v2130 = vadd.s32 %v1783, %v729
    %v2131 = vsel %vm2129, %v2130, 4294967295
    %vm2132 = vcmp.eq.s32.totalorder %v339, %v2131
    %vm2133 = vcmp.eq.s32.totalorder %v340, %v2131
    %vm2134 = vcmp.eq.s32.totalorder %v341, %v2131
    %vm2135 = vcmp.eq.s32.totalorder %v342, %v2131
    %vm2136 = vcmp.eq.s32.totalorder %v343, %v2131
    %vm2137 = vcmp.eq.s32.totalorder %v344, %v2131
    %vm2138 = vcmp.eq.s32.totalorder %v345, %v2131
    %vm2139 = vcmp.eq.s32.totalorder %v346, %v2131
    %vm2140 = vcmp.eq.s32.totalorder %v347, %v2131
    %vm2141 = vcmp.eq.s32.totalorder %v348, %v2131
    %vm2142 = vcmp.eq.s32.totalorder %v349, %v2131
    %vm2143 = vcmp.eq.s32.totalorder %v350, %v2131
    %vm2144 = vcmp.eq.s32.totalorder %v351, %v2131
    %vm2145 = vcmp.eq.s32.totalorder %v352, %v2131
    %vm2146 = vcmp.eq.s32.totalorder %v353, %v2131
    %vm2147 = vcmp.eq.s32.totalorder %v354, %v2131
    %vm2148 = vcmp.eq.s32.totalorder %v355, %v2131
    %vm2149 = vcmp.eq.s32.totalorder %v356, %v2131
    %vm2150 = vcmp.eq.s32.totalorder %v357, %v2131
    %vm2151 = vcmp.eq.s32.totalorder %v358, %v2131
    %vm2152 = vcmp.eq.s32.totalorder %v359, %v2131
    %vm2153 = vcmp.eq.s32.totalorder %v360, %v2131
    %vm2154 = vcmp.eq.s32.totalorder %v361, %v2131
    %vm2155 = vcmp.eq.s32.totalorder %v362, %v2131
    %vm2156 = vcmp.eq.s32.totalorder %v363, %v2131
    %vm2157 = vcmp.eq.s32.totalorder %v364, %v2131
    %vm2158 = vcmp.eq.s32.totalorder %v365, %v2131
    %vm2159 = vcmp.eq.s32.totalorder %v366, %v2131
    %vm2160 = vcmp.eq.s32.totalorder %v367, %v2131
    %vm2161 = vcmp.eq.s32.totalorder %v368, %v2131
    %vm2162 = vcmp.eq.s32.totalorder %v369, %v2131
    %vm2163 = vcmp.eq.s32.totalorder %v370, %v2131
    %v2164 = vsel %vm2132, 1.0, 0.0
    %v2165 = vsel %vm2133, 1.0, 0.0
    %v2166 = vsel %vm2134, 1.0, 0.0
    %v2167 = vsel %vm2135, 1.0, 0.0
    %v2168 = vsel %vm2136, 1.0, 0.0
    %v2169 = vsel %vm2137, 1.0, 0.0
    %v2170 = vsel %vm2138, 1.0, 0.0
    %v2171 = vsel %vm2139, 1.0, 0.0
    %v2172 = vsel %vm2140, 1.0, 0.0
    %v2173 = vsel %vm2141, 1.0, 0.0
    %v2174 = vsel %vm2142, 1.0, 0.0
    %v2175 = vsel %vm2143, 1.0, 0.0
    %v2176 = vsel %vm2144, 1.0, 0.0
    %v2177 = vsel %vm2145, 1.0, 0.0
    %v2178 = vsel %vm2146, 1.0, 0.0
    %v2179 = vsel %vm2147, 1.0, 0.0
    %v2180 = vsel %vm2148, 1.0, 0.0
    %v2181 = vsel %vm2149, 1.0, 0.0
    %v2182 = vsel %vm2150, 1.0, 0.0
    %v2183 = vsel %vm2151, 1.0, 0.0
    %v2184 = vsel %vm2152, 1.0, 0.0
    %v2185 = vsel %vm2153, 1.0, 0.0
    %v2186 = vsel %vm2154, 1.0, 0.0
    %v2187 = vsel %vm2155, 1.0, 0.0
    %v2188 = vsel %vm2156, 1.0, 0.0
    %v2189 = vsel %vm2157, 1.0, 0.0
    %v2190 = vsel %vm2158, 1.0, 0.0
    %v2191 = vsel %vm2159, 1.0, 0.0
    %v2192 = vsel %vm2160, 1.0, 0.0
    %v2193 = vsel %vm2161, 1.0, 0.0
    %v2194 = vsel %vm2162, 1.0, 0.0
    %v2195 = vsel %vm2163, 1.0, 0.0
    %2196 = vmatprep.subr.mxu0 0.0
    %2197 = vmatpush1.msra.mxu0 %v2164
    %2198 = vmatprep.subr.mxu0 0.0
    %2199 = vmatpush1.msra.mxu0 %v2165
    %2200 = vmatprep.subr.mxu0 0.0
    %2201 = vmatpush1.msra.mxu0 %v2166
    %2202 = vmatprep.subr.mxu0 0.0
    %2203 = vmatpush1.msra.mxu0 %v2167
    %2204 = vmatprep.subr.mxu0 0.0
    %2205 = vmatpush1.msra.mxu0 %v2168
    %2206 = vmatprep.subr.mxu0 0.0
    %2207 = vmatpush1.msra.mxu0 %v2169
    %2208 = vmatprep.subr.mxu0 0.0
    %2209 = vmatpush1.msra.mxu0 %v2170
    %2210 = vmatprep.subr.mxu0 0.0
    %2211 = vmatpush1.msra.mxu0 %v2171
    %2212 = vmatprep.subr.mxu0 0.0
    %2213 = vmatpush1.msra.mxu0 %v2172
    %2214 = vmatprep.subr.mxu0 0.0
    %2215 = vmatpush1.msra.mxu0 %v2173
    %2216 = vmatprep.subr.mxu0 0.0
    %2217 = vmatpush1.msra.mxu0 %v2174
    %2218 = vmatprep.subr.mxu0 0.0
    %2219 = vmatpush1.msra.mxu0 %v2175
    %2220 = vmatprep.subr.mxu0 0.0
    %2221 = vmatpush1.msra.mxu0 %v2176
    %2222 = vmatprep.subr.mxu0 0.0
    %2223 = vmatpush1.msra.mxu0 %v2177
    %2224 = vmatprep.subr.mxu0 0.0
    %2225 = vmatpush1.msra.mxu0 %v2178
    %2226 = vmatprep.subr.mxu0 0.0
    %2227 = vmatpush1.msra.mxu0 %v2179
    %2228 = vmatprep.subr.mxu0 0.0
    %2229 = vmatpush1.msra.mxu0 %v2180
    %2230 = vmatprep.subr.mxu0 0.0
    %2231 = vmatpush1.msra.mxu0 %v2181
    %2232 = vmatprep.subr.mxu0 0.0
    %2233 = vmatpush1.msra.mxu0 %v2182
    %2234 = vmatprep.subr.mxu0 0.0
    %2235 = vmatpush1.msra.mxu0 %v2183
    %2236 = vmatprep.subr.mxu0 0.0
    %2237 = vmatpush1.msra.mxu0 %v2184
    %2238 = vmatprep.subr.mxu0 0.0
    %2239 = vmatpush1.msra.mxu0 %v2185
    %2240 = vmatprep.subr.mxu0 0.0
    %2241 = vmatpush1.msra.mxu0 %v2186
    %2242 = vmatprep.subr.mxu0 0.0
    %2243 = vmatpush1.msra.mxu0 %v2187
    %2244 = vmatprep.subr.mxu0 0.0
    %2245 = vmatpush1.msra.mxu0 %v2188
    %2246 = vmatprep.subr.mxu0 0.0
    %2247 = vmatpush1.msra.mxu0 %v2189
    %2248 = vmatprep.subr.mxu0 0.0
    %2249 = vmatpush1.msra.mxu0 %v2190
    %2250 = vmatprep.subr.mxu0 0.0
    %2251 = vmatpush1.msra.mxu0 %v2191
    %2252 = vmatprep.subr.mxu0 0.0
    %2253 = vmatpush1.msra.mxu0 %v2192
    %2254 = vmatprep.subr.mxu0 0.0
    %2255 = vmatpush1.msra.mxu0 %v2193
    %2256 = vmatprep.subr.mxu0 0.0
    %2257 = vmatpush1.msra.mxu0 %v2194
    %2258 = vmatprep.subr.mxu0 0.0
    %2259 = vmatpush1.msra.mxu0 %v2195
    %2260 = vmatprep.mubr.f32.mxu0 %v319
    %2261 = vmatmul.mubr.f32.gmra.mrb[0].mxu0 %v318
    %v2262 = vpop.f32.mrb[0].mxu0
    %v2263 = vadd.f32 0.0, %v2262
    %v2264 = vpop.f32.mrb[0].mxu0
    %2265 = vmatprep.mubr.f32.mxu0 %v323
    %2266 = vmatmul.mubr.f32.gmra.mrb[0].mxu0 %v322
    %v2267 = vpop.f32.mrb[0].mxu0
    %v2268 = vadd.f32 0.0, %v2267
    %v2269 = vpop.f32.mrb[0].mxu0
    %2270 = vmatprep.mubr.f32.mxu0 %v327
    %2271 = vmatmul.mubr.f32.gmra.mrb[0].mxu0 %v326
    %v2272 = vpop.f32.mrb[0].mxu0
    %v2273 = vadd.f32 0.0, %v2272
    %v2274 = vpop.f32.mrb[0].mxu0
    %2275 = vmatprep.mubr.f32.mxu0 %v331
    %2276 = vmatmul.mubr.f32.gmra.mrb[0].mxu0 %v330
    %v2277 = vpop.f32.mrb[0].mxu0
    %v2278 = vadd.f32 0.0, %v2277
    %v2279 = vpop.f32.mrb[0].mxu0
    %2280 = vmatprep.mubr.f32.mxu0 %v321
    %2281 = vmatmul.mubr.f32.gmra.mrb[0].mxu0 %v320
    %v2282 = vpop.f32.mrb[0].mxu0
    %v2283 = vadd.f32 0.0, %v2282
    %v2284 = vpop.f32.mrb[0].mxu0
    %2285 = vmatprep.mubr.f32.mxu0 %v325
    %2286 = vmatmul.mubr.f32.gmra.mrb[0].mxu0 %v324
    %v2287 = vpop.f32.mrb[0].mxu0
    %v2288 = vadd.f32 0.0, %v2287
    %v2289 = vpop.f32.mrb[0].mxu0
    %2290 = vmatprep.mubr.f32.mxu0 %v329
    %2291 = vmatmul.mubr.f32.gmra.mrb[0].mxu0 %v328
    %v2292 = vpop.f32.mrb[0].mxu0
    %v2293 = vadd.f32 0.0, %v2292
    %v2294 = vpop.f32.mrb[0].mxu0
    %2295 = vmatprep.mubr.f32.mxu0 %v333
    %2296 = vmatmul.mubr.f32.gmra.mrb[0].mxu0 %v332
    %v2297 = vpop.f32.mrb[0].mxu0
    %v2298 = vadd.f32 0.0, %v2297
    %v2299 = vpop.f32.mrb[0].mxu0
    %2300 = vdwg.mxu0
    %vm2301 = vmand %vm1780, %vm906
    %vm2302 = vmand %vm2301, %vm908
    %v2303 = vadd.s32 %v1783, %v905
    %v2304 = vsel %vm2302, %v2303, 4294967295
    %vm2305 = vcmp.eq.s32.totalorder %v339, %v2304
    %vm2306 = vcmp.eq.s32.totalorder %v340, %v2304
    %vm2307 = vcmp.eq.s32.totalorder %v341, %v2304
    %vm2308 = vcmp.eq.s32.totalorder %v342, %v2304
    %vm2309 = vcmp.eq.s32.totalorder %v343, %v2304
    %vm2310 = vcmp.eq.s32.totalorder %v344, %v2304
    %vm2311 = vcmp.eq.s32.totalorder %v345, %v2304
    %vm2312 = vcmp.eq.s32.totalorder %v346, %v2304
    %vm2313 = vcmp.eq.s32.totalorder %v347, %v2304
    %vm2314 = vcmp.eq.s32.totalorder %v348, %v2304
    %vm2315 = vcmp.eq.s32.totalorder %v349, %v2304
    %vm2316 = vcmp.eq.s32.totalorder %v350, %v2304
    %vm2317 = vcmp.eq.s32.totalorder %v351, %v2304
    %vm2318 = vcmp.eq.s32.totalorder %v352, %v2304
    %vm2319 = vcmp.eq.s32.totalorder %v353, %v2304
    %vm2320 = vcmp.eq.s32.totalorder %v354, %v2304
    %vm2321 = vcmp.eq.s32.totalorder %v355, %v2304
    %vm2322 = vcmp.eq.s32.totalorder %v356, %v2304
    %vm2323 = vcmp.eq.s32.totalorder %v357, %v2304
    %vm2324 = vcmp.eq.s32.totalorder %v358, %v2304
    %vm2325 = vcmp.eq.s32.totalorder %v359, %v2304
    %vm2326 = vcmp.eq.s32.totalorder %v360, %v2304
    %vm2327 = vcmp.eq.s32.totalorder %v361, %v2304
    %vm2328 = vcmp.eq.s32.totalorder %v362, %v2304
    %vm2329 = vcmp.eq.s32.totalorder %v363, %v2304
    %vm2330 = vcmp.eq.s32.totalorder %v364, %v2304
    %vm2331 = vcmp.eq.s32.totalorder %v365, %v2304
    %vm2332 = vcmp.eq.s32.totalorder %v366, %v2304
    %vm2333 = vcmp.eq.s32.totalorder %v367, %v2304
    %vm2334 = vcmp.eq.s32.totalorder %v368, %v2304
    %vm2335 = vcmp.eq.s32.totalorder %v369, %v2304
    %vm2336 = vcmp.eq.s32.totalorder %v370, %v2304
    %v2337 = vsel %vm2305, 1.0, 0.0
    %v2338 = vsel %vm2306, 1.0, 0.0
    %v2339 = vsel %vm2307, 1.0, 0.0
    %v2340 = vsel %vm2308, 1.0, 0.0
    %v2341 = vsel %vm2309, 1.0, 0.0
    %v2342 = vsel %vm2310, 1.0, 0.0
    %v2343 = vsel %vm2311, 1.0, 0.0
    %v2344 = vsel %vm2312, 1.0, 0.0
    %v2345 = vsel %vm2313, 1.0, 0.0
    %v2346 = vsel %vm2314, 1.0, 0.0
    %v2347 = vsel %vm2315, 1.0, 0.0
    %v2348 = vsel %vm2316, 1.0, 0.0
    %v2349 = vsel %vm2317, 1.0, 0.0
    %v2350 = vsel %vm2318, 1.0, 0.0
    %v2351 = vsel %vm2319, 1.0, 0.0
    %v2352 = vsel %vm2320, 1.0, 0.0
    %v2353 = vsel %vm2321, 1.0, 0.0
    %v2354 = vsel %vm2322, 1.0, 0.0
    %v2355 = vsel %vm2323, 1.0, 0.0
    %v2356 = vsel %vm2324, 1.0, 0.0
    %v2357 = vsel %vm2325, 1.0, 0.0
    %v2358 = vsel %vm2326, 1.0, 0.0
    %v2359 = vsel %vm2327, 1.0, 0.0
    %v2360 = vsel %vm2328, 1.0, 0.0
    %v2361 = vsel %vm2329, 1.0, 0.0
    %v2362 = vsel %vm2330, 1.0, 0.0
    %v2363 = vsel %vm2331, 1.0, 0.0
    %v2364 = vsel %vm2332, 1.0, 0.0
    %v2365 = vsel %vm2333, 1.0, 0.0
    %v2366 = vsel %vm2334, 1.0, 0.0
    %v2367 = vsel %vm2335, 1.0, 0.0
    %v2368 = vsel %vm2336, 1.0, 0.0
    %2369 = vmatprep.subr.mxu0 0.0
    %2370 = vmatpush1.msra.mxu0 %v2337
    %2371 = vmatprep.subr.mxu0 0.0
    %2372 = vmatpush1.msra.mxu0 %v2338
    %2373 = vmatprep.subr.mxu0 0.0
    %2374 = vmatpush1.msra.mxu0 %v2339
    %2375 = vmatprep.subr.mxu0 0.0
    %2376 = vmatpush1.msra.mxu0 %v2340
    %2377 = vmatprep.subr.mxu0 0.0
    %2378 = vmatpush1.msra.mxu0 %v2341
    %2379 = vmatprep.subr.mxu0 0.0
    %2380 = vmatpush1.msra.mxu0 %v2342
    %2381 = vmatprep.subr.mxu0 0.0
    %2382 = vmatpush1.msra.mxu0 %v2343
    %2383 = vmatprep.subr.mxu0 0.0
    %2384 = vmatpush1.msra.mxu0 %v2344
    %2385 = vmatprep.subr.mxu0 0.0
    %2386 = vmatpush1.msra.mxu0 %v2345
    %2387 = vmatprep.subr.mxu0 0.0
    %2388 = vmatpush1.msra.mxu0 %v2346
    %2389 = vmatprep.subr.mxu0 0.0
    %2390 = vmatpush1.msra.mxu0 %v2347
    %2391 = vmatprep.subr.mxu0 0.0
    %2392 = vmatpush1.msra.mxu0 %v2348
    %2393 = vmatprep.subr.mxu0 0.0
    %2394 = vmatpush1.msra.mxu0 %v2349
    %2395 = vmatprep.subr.mxu0 0.0
    %2396 = vmatpush1.msra.mxu0 %v2350
    %2397 = vmatprep.subr.mxu0 0.0
    %2398 = vmatpush1.msra.mxu0 %v2351
    %2399 = vmatprep.subr.mxu0 0.0
    %2400 = vmatpush1.msra.mxu0 %v2352
    %2401 = vmatprep.subr.mxu0 0.0
    %2402 = vmatpush1.msra.mxu0 %v2353
    %2403 = vmatprep.subr.mxu0 0.0
    %2404 = vmatpush1.msra.mxu0 %v2354
    %2405 = vmatprep.subr.mxu0 0.0
    %2406 = vmatpush1.msra.mxu0 %v2355
    %2407 = vmatprep.subr.mxu0 0.0
    %2408 = vmatpush1.msra.mxu0 %v2356
    %2409 = vmatprep.subr.mxu0 0.0
    %2410 = vmatpush1.msra.mxu0 %v2357
    %2411 = vmatprep.subr.mxu0 0.0
    %2412 = vmatpush1.msra.mxu0 %v2358
    %2413 = vmatprep.subr.mxu0 0.0
    %2414 = vmatpush1.msra.mxu0 %v2359
    %2415 = vmatprep.subr.mxu0 0.0
    %2416 = vmatpush1.msra.mxu0 %v2360
    %2417 = vmatprep.subr.mxu0 0.0
    %2418 = vmatpush1.msra.mxu0 %v2361
    %2419 = vmatprep.subr.mxu0 0.0
    %2420 = vmatpush1.msra.mxu0 %v2362
    %2421 = vmatprep.subr.mxu0 0.0
    %2422 = vmatpush1.msra.mxu0 %v2363
    %2423 = vmatprep.subr.mxu0 0.0
    %2424 = vmatpush1.msra.mxu0 %v2364
    %2425 = vmatprep.subr.mxu0 0.0
    %2426 = vmatpush1.msra.mxu0 %v2365
    %2427 = vmatprep.subr.mxu0 0.0
    %2428 = vmatpush1.msra.mxu0 %v2366
    %2429 = vmatprep.subr.mxu0 0.0
    %2430 = vmatpush1.msra.mxu0 %v2367
    %2431 = vmatprep.subr.mxu0 0.0
    %2432 = vmatpush1.msra.mxu0 %v2368
    %2433 = vmatprep.mubr.f32.mxu0 %v319
    %2434 = vmatmul.mubr.f32.gmra.mrb[0].mxu0 %v318
    %v2435 = vpop.f32.mrb[0].mxu0
    %v2436 = vadd.f32 0.0, %v2435
    %v2437 = vpop.f32.mrb[0].mxu0
    %2438 = vmatprep.mubr.f32.mxu0 %v323
    %2439 = vmatmul.mubr.f32.gmra.mrb[0].mxu0 %v322
    %v2440 = vpop.f32.mrb[0].mxu0
    %v2441 = vadd.f32 0.0, %v2440
    %v2442 = vpop.f32.mrb[0].mxu0
    %2443 = vmatprep.mubr.f32.mxu0 %v327
    %2444 = vmatmul.mubr.f32.gmra.mrb[0].mxu0 %v326
    %v2445 = vpop.f32.mrb[0].mxu0
    %v2446 = vadd.f32 0.0, %v2445
    %v2447 = vpop.f32.mrb[0].mxu0
    %2448 = vmatprep.mubr.f32.mxu0 %v331
    %2449 = vmatmul.mubr.f32.gmra.mrb[0].mxu0 %v330
    %v2450 = vpop.f32.mrb[0].mxu0
    %v2451 = vadd.f32 0.0, %v2450
    %v2452 = vpop.f32.mrb[0].mxu0
    %2453 = vmatprep.mubr.f32.mxu0 %v321
    %2454 = vmatmul.mubr.f32.gmra.mrb[0].mxu0 %v320
    %v2455 = vpop.f32.mrb[0].mxu0
    %v2456 = vadd.f32 0.0, %v2455
    %v2457 = vpop.f32.mrb[0].mxu0
    %2458 = vmatprep.mubr.f32.mxu0 %v325
    %2459 = vmatmul.mubr.f32.gmra.mrb[0].mxu0 %v324
    %v2460 = vpop.f32.mrb[0].mxu0
    %v2461 = vadd.f32 0.0, %v2460
    %v2462 = vpop.f32.mrb[0].mxu0
    %2463 = vmatprep.mubr.f32.mxu0 %v329
    %2464 = vmatmul.mubr.f32.gmra.mrb[0].mxu0 %v328
    %v2465 = vpop.f32.mrb[0].mxu0
    %v2466 = vadd.f32 0.0, %v2465
    %v2467 = vpop.f32.mrb[0].mxu0
    %2468 = vmatprep.mubr.f32.mxu0 %v333
    %2469 = vmatmul.mubr.f32.gmra.mrb[0].mxu0 %v332
    %v2470 = vpop.f32.mrb[0].mxu0
    %v2471 = vadd.f32 0.0, %v2470
    %v2472 = vpop.f32.mrb[0].mxu0
    %2473 = vdwg.mxu0
    %v2474 = vadd.s32 %v371, 2
    %vm2475 = vcmp.ge.s32.totalorder %v2474, 0
    %vm2476 = vcmp.lt.s32.totalorder %v2474, 16
    %vm2477 = vmand %vm2475, %vm2476
    %vm2478 = vmand %vm2477, %vm378
    %vm2479 = vmand %vm2478, %vm380
    %v2480 = vshll.u32 %v2474, 4
    %v2481 = vadd.s32 %v2480, %v374
    %v2482 = vsel %vm2479, %v2481, 4294967295
    %vm2483 = vcmp.eq.s32.totalorder %v339, %v2482
    %vm2484 = vcmp.eq.s32.totalorder %v340, %v2482
    %vm2485 = vcmp.eq.s32.totalorder %v341, %v2482
    %vm2486 = vcmp.eq.s32.totalorder %v342, %v2482
    %vm2487 = vcmp.eq.s32.totalorder %v343, %v2482
    %vm2488 = vcmp.eq.s32.totalorder %v344, %v2482
    %vm2489 = vcmp.eq.s32.totalorder %v345, %v2482
    %vm2490 = vcmp.eq.s32.totalorder %v346, %v2482
    %vm2491 = vcmp.eq.s32.totalorder %v347, %v2482
    %vm2492 = vcmp.eq.s32.totalorder %v348, %v2482
    %vm2493 = vcmp.eq.s32.totalorder %v349, %v2482
    %vm2494 = vcmp.eq.s32.totalorder %v350, %v2482
    %vm2495 = vcmp.eq.s32.totalorder %v351, %v2482
    %vm2496 = vcmp.eq.s32.totalorder %v352, %v2482
    %vm2497 = vcmp.eq.s32.totalorder %v353, %v2482
    %vm2498 = vcmp.eq.s32.totalorder %v354, %v2482
    %vm2499 = vcmp.eq.s32.totalorder %v355, %v2482
    %vm2500 = vcmp.eq.s32.totalorder %v356, %v2482
    %vm2501 = vcmp.eq.s32.totalorder %v357, %v2482
    %vm2502 = vcmp.eq.s32.totalorder %v358, %v2482
    %vm2503 = vcmp.eq.s32.totalorder %v359, %v2482
    %vm2504 = vcmp.eq.s32.totalorder %v360, %v2482
    %vm2505 = vcmp.eq.s32.totalorder %v361, %v2482
    %vm2506 = vcmp.eq.s32.totalorder %v362, %v2482
    %vm2507 = vcmp.eq.s32.totalorder %v363, %v2482
    %vm2508 = vcmp.eq.s32.totalorder %v364, %v2482
    %vm2509 = vcmp.eq.s32.totalorder %v365, %v2482
    %vm2510 = vcmp.eq.s32.totalorder %v366, %v2482
    %vm2511 = vcmp.eq.s32.totalorder %v367, %v2482
    %vm2512 = vcmp.eq.s32.totalorder %v368, %v2482
    %vm2513 = vcmp.eq.s32.totalorder %v369, %v2482
    %vm2514 = vcmp.eq.s32.totalorder %v370, %v2482
    %v2515 = vsel %vm2483, 1.0, 0.0
    %v2516 = vsel %vm2484, 1.0, 0.0
    %v2517 = vsel %vm2485, 1.0, 0.0
    %v2518 = vsel %vm2486, 1.0, 0.0
    %v2519 = vsel %vm2487, 1.0, 0.0
    %v2520 = vsel %vm2488, 1.0, 0.0
    %v2521 = vsel %vm2489, 1.0, 0.0
    %v2522 = vsel %vm2490, 1.0, 0.0
    %v2523 = vsel %vm2491, 1.0, 0.0
    %v2524 = vsel %vm2492, 1.0, 0.0
    %v2525 = vsel %vm2493, 1.0, 0.0
    %v2526 = vsel %vm2494, 1.0, 0.0
    %v2527 = vsel %vm2495, 1.0, 0.0
    %v2528 = vsel %vm2496, 1.0, 0.0
    %v2529 = vsel %vm2497, 1.0, 0.0
    %v2530 = vsel %vm2498, 1.0, 0.0
    %v2531 = vsel %vm2499, 1.0, 0.0
    %v2532 = vsel %vm2500, 1.0, 0.0
    %v2533 = vsel %vm2501, 1.0, 0.0
    %v2534 = vsel %vm2502, 1.0, 0.0
    %v2535 = vsel %vm2503, 1.0, 0.0
    %v2536 = vsel %vm2504, 1.0, 0.0
    %v2537 = vsel %vm2505, 1.0, 0.0
    %v2538 = vsel %vm2506, 1.0, 0.0
    %v2539 = vsel %vm2507, 1.0, 0.0
    %v2540 = vsel %vm2508, 1.0, 0.0
    %v2541 = vsel %vm2509, 1.0, 0.0
    %v2542 = vsel %vm2510, 1.0, 0.0
    %v2543 = vsel %vm2511, 1.0, 0.0
    %v2544 = vsel %vm2512, 1.0, 0.0
    %v2545 = vsel %vm2513, 1.0, 0.0
    %v2546 = vsel %vm2514, 1.0, 0.0
    %2547 = vmatprep.subr.mxu0 0.0
    %2548 = vmatpush1.msra.mxu0 %v2515
    %2549 = vmatprep.subr.mxu0 0.0
    %2550 = vmatpush1.msra.mxu0 %v2516
    %2551 = vmatprep.subr.mxu0 0.0
    %2552 = vmatpush1.msra.mxu0 %v2517
    %2553 = vmatprep.subr.mxu0 0.0
    %2554 = vmatpush1.msra.mxu0 %v2518
    %2555 = vmatprep.subr.mxu0 0.0
    %2556 = vmatpush1.msra.mxu0 %v2519
    %2557 = vmatprep.subr.mxu0 0.0
    %2558 = vmatpush1.msra.mxu0 %v2520
    %2559 = vmatprep.subr.mxu0 0.0
    %2560 = vmatpush1.msra.mxu0 %v2521
    %2561 = vmatprep.subr.mxu0 0.0
    %2562 = vmatpush1.msra.mxu0 %v2522
    %2563 = vmatprep.subr.mxu0 0.0
    %2564 = vmatpush1.msra.mxu0 %v2523
    %2565 = vmatprep.subr.mxu0 0.0
    %2566 = vmatpush1.msra.mxu0 %v2524
    %2567 = vmatprep.subr.mxu0 0.0
    %2568 = vmatpush1.msra.mxu0 %v2525
    %2569 = vmatprep.subr.mxu0 0.0
    %2570 = vmatpush1.msra.mxu0 %v2526
    %2571 = vmatprep.subr.mxu0 0.0
    %2572 = vmatpush1.msra.mxu0 %v2527
    %2573 = vmatprep.subr.mxu0 0.0
    %2574 = vmatpush1.msra.mxu0 %v2528
    %2575 = vmatprep.subr.mxu0 0.0
    %2576 = vmatpush1.msra.mxu0 %v2529
    %2577 = vmatprep.subr.mxu0 0.0
    %2578 = vmatpush1.msra.mxu0 %v2530
    %2579 = vmatprep.subr.mxu0 0.0
    %2580 = vmatpush1.msra.mxu0 %v2531
    %2581 = vmatprep.subr.mxu0 0.0
    %2582 = vmatpush1.msra.mxu0 %v2532
    %2583 = vmatprep.subr.mxu0 0.0
    %2584 = vmatpush1.msra.mxu0 %v2533
    %2585 = vmatprep.subr.mxu0 0.0
    %2586 = vmatpush1.msra.mxu0 %v2534
    %2587 = vmatprep.subr.mxu0 0.0
    %2588 = vmatpush1.msra.mxu0 %v2535
    %2589 = vmatprep.subr.mxu0 0.0
    %2590 = vmatpush1.msra.mxu0 %v2536
    %2591 = vmatprep.subr.mxu0 0.0
    %2592 = vmatpush1.msra.mxu0 %v2537
    %2593 = vmatprep.subr.mxu0 0.0
    %2594 = vmatpush1.msra.mxu0 %v2538
    %2595 = vmatprep.subr.mxu0 0.0
    %2596 = vmatpush1.msra.mxu0 %v2539
    %2597 = vmatprep.subr.mxu0 0.0
    %2598 = vmatpush1.msra.mxu0 %v2540
    %2599 = vmatprep.subr.mxu0 0.0
    %2600 = vmatpush1.msra.mxu0 %v2541
    %2601 = vmatprep.subr.mxu0 0.0
    %2602 = vmatpush1.msra.mxu0 %v2542
    %2603 = vmatprep.subr.mxu0 0.0
    %2604 = vmatpush1.msra.mxu0 %v2543
    %2605 = vmatprep.subr.mxu0 0.0
    %2606 = vmatpush1.msra.mxu0 %v2544
    %2607 = vmatprep.subr.mxu0 0.0
    %2608 = vmatpush1.msra.mxu0 %v2545
    %2609 = vmatprep.subr.mxu0 0.0
    %2610 = vmatpush1.msra.mxu0 %v2546
    %2611 = vmatprep.mubr.f32.mxu0 %v319
    %2612 = vmatmul.mubr.f32.gmra.mrb[0].mxu0 %v318
    %v2613 = vpop.f32.mrb[0].mxu0
    %v2614 = vadd.f32 0.0, %v2613
    %v2615 = vpop.f32.mrb[0].mxu0
    %2616 = vmatprep.mubr.f32.mxu0 %v323
    %2617 = vmatmul.mubr.f32.gmra.mrb[0].mxu0 %v322
    %v2618 = vpop.f32.mrb[0].mxu0
    %v2619 = vadd.f32 0.0, %v2618
    %v2620 = vpop.f32.mrb[0].mxu0
    %2621 = vmatprep.mubr.f32.mxu0 %v327
    %2622 = vmatmul.mubr.f32.gmra.mrb[0].mxu0 %v326
    %v2623 = vpop.f32.mrb[0].mxu0
    %v2624 = vadd.f32 0.0, %v2623
    %v2625 = vpop.f32.mrb[0].mxu0
    %2626 = vmatprep.mubr.f32.mxu0 %v331
    %2627 = vmatmul.mubr.f32.gmra.mrb[0].mxu0 %v330
    %v2628 = vpop.f32.mrb[0].mxu0
    %v2629 = vadd.f32 0.0, %v2628
    %v2630 = vpop.f32.mrb[0].mxu0
    %2631 = vmatprep.mubr.f32.mxu0 %v321
    %2632 = vmatmul.mubr.f32.gmra.mrb[0].mxu0 %v320
    %v2633 = vpop.f32.mrb[0].mxu0
    %v2634 = vadd.f32 0.0, %v2633
    %v2635 = vpop.f32.mrb[0].mxu0
    %2636 = vmatprep.mubr.f32.mxu0 %v325
    %2637 = vmatmul.mubr.f32.gmra.mrb[0].mxu0 %v324
    %v2638 = vpop.f32.mrb[0].mxu0
    %v2639 = vadd.f32 0.0, %v2638
    %v2640 = vpop.f32.mrb[0].mxu0
    %2641 = vmatprep.mubr.f32.mxu0 %v329
    %2642 = vmatmul.mubr.f32.gmra.mrb[0].mxu0 %v328
    %v2643 = vpop.f32.mrb[0].mxu0
    %v2644 = vadd.f32 0.0, %v2643
    %v2645 = vpop.f32.mrb[0].mxu0
    %2646 = vmatprep.mubr.f32.mxu0 %v333
    %2647 = vmatmul.mubr.f32.gmra.mrb[0].mxu0 %v332
    %v2648 = vpop.f32.mrb[0].mxu0
    %v2649 = vadd.f32 0.0, %v2648
    %v2650 = vpop.f32.mrb[0].mxu0
    %2651 = vdwg.mxu0
    %vm2652 = vmand %vm2477, %vm554
    %vm2653 = vmand %vm2652, %vm556
    %v2654 = vadd.s32 %v2480, %v373
    %v2655 = vsel %vm2653, %v2654, 4294967295
    %vm2656 = vcmp.eq.s32.totalorder %v339, %v2655
    %vm2657 = vcmp.eq.s32.totalorder %v340, %v2655
    %vm2658 = vcmp.eq.s32.totalorder %v341, %v2655
    %vm2659 = vcmp.eq.s32.totalorder %v342, %v2655
    %vm2660 = vcmp.eq.s32.totalorder %v343, %v2655
    %vm2661 = vcmp.eq.s32.totalorder %v344, %v2655
    %vm2662 = vcmp.eq.s32.totalorder %v345, %v2655
    %vm2663 = vcmp.eq.s32.totalorder %v346, %v2655
    %vm2664 = vcmp.eq.s32.totalorder %v347, %v2655
    %vm2665 = vcmp.eq.s32.totalorder %v348, %v2655
    %vm2666 = vcmp.eq.s32.totalorder %v349, %v2655
    %vm2667 = vcmp.eq.s32.totalorder %v350, %v2655
    %vm2668 = vcmp.eq.s32.totalorder %v351, %v2655
    %vm2669 = vcmp.eq.s32.totalorder %v352, %v2655
    %vm2670 = vcmp.eq.s32.totalorder %v353, %v2655
    %vm2671 = vcmp.eq.s32.totalorder %v354, %v2655
    %vm2672 = vcmp.eq.s32.totalorder %v355, %v2655
    %vm2673 = vcmp.eq.s32.totalorder %v356, %v2655
    %vm2674 = vcmp.eq.s32.totalorder %v357, %v2655
    %vm2675 = vcmp.eq.s32.totalorder %v358, %v2655
    %vm2676 = vcmp.eq.s32.totalorder %v359, %v2655
    %vm2677 = vcmp.eq.s32.totalorder %v360, %v2655
    %vm2678 = vcmp.eq.s32.totalorder %v361, %v2655
    %vm2679 = vcmp.eq.s32.totalorder %v362, %v2655
    %vm2680 = vcmp.eq.s32.totalorder %v363, %v2655
    %vm2681 = vcmp.eq.s32.totalorder %v364, %v2655
    %vm2682 = vcmp.eq.s32.totalorder %v365, %v2655
    %vm2683 = vcmp.eq.s32.totalorder %v366, %v2655
    %vm2684 = vcmp.eq.s32.totalorder %v367, %v2655
    %vm2685 = vcmp.eq.s32.totalorder %v368, %v2655
    %vm2686 = vcmp.eq.s32.totalorder %v369, %v2655
    %vm2687 = vcmp.eq.s32.totalorder %v370, %v2655
    %v2688 = vsel %vm2656, 1.0, 0.0
    %v2689 = vsel %vm2657, 1.0, 0.0
    %v2690 = vsel %vm2658, 1.0, 0.0
    %v2691 = vsel %vm2659, 1.0, 0.0
    %v2692 = vsel %vm2660, 1.0, 0.0
    %v2693 = vsel %vm2661, 1.0, 0.0
    %v2694 = vsel %vm2662, 1.0, 0.0
    %v2695 = vsel %vm2663, 1.0, 0.0
    %v2696 = vsel %vm2664, 1.0, 0.0
    %v2697 = vsel %vm2665, 1.0, 0.0
    %v2698 = vsel %vm2666, 1.0, 0.0
    %v2699 = vsel %vm2667, 1.0, 0.0
    %v2700 = vsel %vm2668, 1.0, 0.0
    %v2701 = vsel %vm2669, 1.0, 0.0
    %v2702 = vsel %vm2670, 1.0, 0.0
    %v2703 = vsel %vm2671, 1.0, 0.0
    %v2704 = vsel %vm2672, 1.0, 0.0
    %v2705 = vsel %vm2673, 1.0, 0.0
    %v2706 = vsel %vm2674, 1.0, 0.0
    %v2707 = vsel %vm2675, 1.0, 0.0
    %v2708 = vsel %vm2676, 1.0, 0.0
    %v2709 = vsel %vm2677, 1.0, 0.0
    %v2710 = vsel %vm2678, 1.0, 0.0
    %v2711 = vsel %vm2679, 1.0, 0.0
    %v2712 = vsel %vm2680, 1.0, 0.0
    %v2713 = vsel %vm2681, 1.0, 0.0
    %v2714 = vsel %vm2682, 1.0, 0.0
    %v2715 = vsel %vm2683, 1.0, 0.0
    %v2716 = vsel %vm2684, 1.0, 0.0
    %v2717 = vsel %vm2685, 1.0, 0.0
    %v2718 = vsel %vm2686, 1.0, 0.0
    %v2719 = vsel %vm2687, 1.0, 0.0
    %2720 = vmatprep.subr.mxu0 0.0
    %2721 = vmatpush1.msra.mxu0 %v2688
    %2722 = vmatprep.subr.mxu0 0.0
    %2723 = vmatpush1.msra.mxu0 %v2689
    %2724 = vmatprep.subr.mxu0 0.0
    %2725 = vmatpush1.msra.mxu0 %v2690
    %2726 = vmatprep.subr.mxu0 0.0
    %2727 = vmatpush1.msra.mxu0 %v2691
    %2728 = vmatprep.subr.mxu0 0.0
    %2729 = vmatpush1.msra.mxu0 %v2692
    %2730 = vmatprep.subr.mxu0 0.0
    %2731 = vmatpush1.msra.mxu0 %v2693
    %2732 = vmatprep.subr.mxu0 0.0
    %2733 = vmatpush1.msra.mxu0 %v2694
    %2734 = vmatprep.subr.mxu0 0.0
    %2735 = vmatpush1.msra.mxu0 %v2695
    %2736 = vmatprep.subr.mxu0 0.0
    %2737 = vmatpush1.msra.mxu0 %v2696
    %2738 = vmatprep.subr.mxu0 0.0
    %2739 = vmatpush1.msra.mxu0 %v2697
    %2740 = vmatprep.subr.mxu0 0.0
    %2741 = vmatpush1.msra.mxu0 %v2698
    %2742 = vmatprep.subr.mxu0 0.0
    %2743 = vmatpush1.msra.mxu0 %v2699
    %2744 = vmatprep.subr.mxu0 0.0
    %2745 = vmatpush1.msra.mxu0 %v2700
    %2746 = vmatprep.subr.mxu0 0.0
    %2747 = vmatpush1.msra.mxu0 %v2701
    %2748 = vmatprep.subr.mxu0 0.0
    %2749 = vmatpush1.msra.mxu0 %v2702
    %2750 = vmatprep.subr.mxu0 0.0
    %2751 = vmatpush1.msra.mxu0 %v2703
    %2752 = vmatprep.subr.mxu0 0.0
    %2753 = vmatpush1.msra.mxu0 %v2704
    %2754 = vmatprep.subr.mxu0 0.0
    %2755 = vmatpush1.msra.mxu0 %v2705
    %2756 = vmatprep.subr.mxu0 0.0
    %2757 = vmatpush1.msra.mxu0 %v2706
    %2758 = vmatprep.subr.mxu0 0.0
    %2759 = vmatpush1.msra.mxu0 %v2707
    %2760 = vmatprep.subr.mxu0 0.0
    %2761 = vmatpush1.msra.mxu0 %v2708
    %2762 = vmatprep.subr.mxu0 0.0
    %2763 = vmatpush1.msra.mxu0 %v2709
    %2764 = vmatprep.subr.mxu0 0.0
    %2765 = vmatpush1.msra.mxu0 %v2710
    %2766 = vmatprep.subr.mxu0 0.0
    %2767 = vmatpush1.msra.mxu0 %v2711
    %2768 = vmatprep.subr.mxu0 0.0
    %2769 = vmatpush1.msra.mxu0 %v2712
    %2770 = vmatprep.subr.mxu0 0.0
    %2771 = vmatpush1.msra.mxu0 %v2713
    %2772 = vmatprep.subr.mxu0 0.0
    %2773 = vmatpush1.msra.mxu0 %v2714
    %2774 = vmatprep.subr.mxu0 0.0
    %2775 = vmatpush1.msra.mxu0 %v2715
    %2776 = vmatprep.subr.mxu0 0.0
    %2777 = vmatpush1.msra.mxu0 %v2716
    %2778 = vmatprep.subr.mxu0 0.0
    %2779 = vmatpush1.msra.mxu0 %v2717
    %2780 = vmatprep.subr.mxu0 0.0
    %2781 = vmatpush1.msra.mxu0 %v2718
    %2782 = vmatprep.subr.mxu0 0.0
    %2783 = vmatpush1.msra.mxu0 %v2719
    %2784 = vmatprep.mubr.f32.mxu0 %v319
    %2785 = vmatmul.mubr.f32.gmra.mrb[0].mxu0 %v318
    %v2786 = vpop.f32.mrb[0].mxu0
    %v2787 = vadd.f32 0.0, %v2786
    %v2788 = vpop.f32.mrb[0].mxu0
    %2789 = vmatprep.mubr.f32.mxu0 %v323
    %2790 = vmatmul.mubr.f32.gmra.mrb[0].mxu0 %v322
    %v2791 = vpop.f32.mrb[0].mxu0
    %v2792 = vadd.f32 0.0, %v2791
    %v2793 = vpop.f32.mrb[0].mxu0
    %2794 = vmatprep.mubr.f32.mxu0 %v327
    %2795 = vmatmul.mubr.f32.gmra.mrb[0].mxu0 %v326
    %v2796 = vpop.f32.mrb[0].mxu0
    %v2797 = vadd.f32 0.0, %v2796
    %v2798 = vpop.f32.mrb[0].mxu0
    %2799 = vmatprep.mubr.f32.mxu0 %v331
    %2800 = vmatmul.mubr.f32.gmra.mrb[0].mxu0 %v330
    %v2801 = vpop.f32.mrb[0].mxu0
    %v2802 = vadd.f32 0.0, %v2801
    %v2803 = vpop.f32.mrb[0].mxu0
    %2804 = vmatprep.mubr.f32.mxu0 %v321
    %2805 = vmatmul.mubr.f32.gmra.mrb[0].mxu0 %v320
    %v2806 = vpop.f32.mrb[0].mxu0
    %v2807 = vadd.f32 0.0, %v2806
    %v2808 = vpop.f32.mrb[0].mxu0
    %2809 = vmatprep.mubr.f32.mxu0 %v325
    %2810 = vmatmul.mubr.f32.gmra.mrb[0].mxu0 %v324
    %v2811 = vpop.f32.mrb[0].mxu0
    %v2812 = vadd.f32 0.0, %v2811
    %v2813 = vpop.f32.mrb[0].mxu0
    %2814 = vmatprep.mubr.f32.mxu0 %v329
    %2815 = vmatmul.mubr.f32.gmra.mrb[0].mxu0 %v328
    %v2816 = vpop.f32.mrb[0].mxu0
    %v2817 = vadd.f32 0.0, %v2816
    %v2818 = vpop.f32.mrb[0].mxu0
    %2819 = vmatprep.mubr.f32.mxu0 %v333
    %2820 = vmatmul.mubr.f32.gmra.mrb[0].mxu0 %v332
    %v2821 = vpop.f32.mrb[0].mxu0
    %v2822 = vadd.f32 0.0, %v2821
    %v2823 = vpop.f32.mrb[0].mxu0
    %2824 = vdwg.mxu0
    %vm2825 = vmand %vm2477, %vm730
    %vm2826 = vmand %vm2825, %vm732
    %v2827 = vadd.s32 %v2480, %v729
    %v2828 = vsel %vm2826, %v2827, 4294967295
    %vm2829 = vcmp.eq.s32.totalorder %v339, %v2828
    %vm2830 = vcmp.eq.s32.totalorder %v340, %v2828
    %vm2831 = vcmp.eq.s32.totalorder %v341, %v2828
    %vm2832 = vcmp.eq.s32.totalorder %v342, %v2828
    %vm2833 = vcmp.eq.s32.totalorder %v343, %v2828
    %vm2834 = vcmp.eq.s32.totalorder %v344, %v2828
    %vm2835 = vcmp.eq.s32.totalorder %v345, %v2828
    %vm2836 = vcmp.eq.s32.totalorder %v346, %v2828
    %vm2837 = vcmp.eq.s32.totalorder %v347, %v2828
    %vm2838 = vcmp.eq.s32.totalorder %v348, %v2828
    %vm2839 = vcmp.eq.s32.totalorder %v349, %v2828
    %vm2840 = vcmp.eq.s32.totalorder %v350, %v2828
    %vm2841 = vcmp.eq.s32.totalorder %v351, %v2828
    %vm2842 = vcmp.eq.s32.totalorder %v352, %v2828
    %vm2843 = vcmp.eq.s32.totalorder %v353, %v2828
    %vm2844 = vcmp.eq.s32.totalorder %v354, %v2828
    %vm2845 = vcmp.eq.s32.totalorder %v355, %v2828
    %vm2846 = vcmp.eq.s32.totalorder %v356, %v2828
    %vm2847 = vcmp.eq.s32.totalorder %v357, %v2828
    %vm2848 = vcmp.eq.s32.totalorder %v358, %v2828
    %vm2849 = vcmp.eq.s32.totalorder %v359, %v2828
    %vm2850 = vcmp.eq.s32.totalorder %v360, %v2828
    %vm2851 = vcmp.eq.s32.totalorder %v361, %v2828
    %vm2852 = vcmp.eq.s32.totalorder %v362, %v2828
    %vm2853 = vcmp.eq.s32.totalorder %v363, %v2828
    %vm2854 = vcmp.eq.s32.totalorder %v364, %v2828
    %vm2855 = vcmp.eq.s32.totalorder %v365, %v2828
    %vm2856 = vcmp.eq.s32.totalorder %v366, %v2828
    %vm2857 = vcmp.eq.s32.totalorder %v367, %v2828
    %vm2858 = vcmp.eq.s32.totalorder %v368, %v2828
    %vm2859 = vcmp.eq.s32.totalorder %v369, %v2828
    %vm2860 = vcmp.eq.s32.totalorder %v370, %v2828
    %v2861 = vsel %vm2829, 1.0, 0.0
    %v2862 = vsel %vm2830, 1.0, 0.0
    %v2863 = vsel %vm2831, 1.0, 0.0
    %v2864 = vsel %vm2832, 1.0, 0.0
    %v2865 = vsel %vm2833, 1.0, 0.0
    %v2866 = vsel %vm2834, 1.0, 0.0
    %v2867 = vsel %vm2835, 1.0, 0.0
    %v2868 = vsel %vm2836, 1.0, 0.0
    %v2869 = vsel %vm2837, 1.0, 0.0
    %v2870 = vsel %vm2838, 1.0, 0.0
    %v2871 = vsel %vm2839, 1.0, 0.0
    %v2872 = vsel %vm2840, 1.0, 0.0
    %v2873 = vsel %vm2841, 1.0, 0.0
    %v2874 = vsel %vm2842, 1.0, 0.0
    %v2875 = vsel %vm2843, 1.0, 0.0
    %v2876 = vsel %vm2844, 1.0, 0.0
    %v2877 = vsel %vm2845, 1.0, 0.0
    %v2878 = vsel %vm2846, 1.0, 0.0
    %v2879 = vsel %vm2847, 1.0, 0.0
    %v2880 = vsel %vm2848, 1.0, 0.0
    %v2881 = vsel %vm2849, 1.0, 0.0
    %v2882 = vsel %vm2850, 1.0, 0.0
    %v2883 = vsel %vm2851, 1.0, 0.0
    %v2884 = vsel %vm2852, 1.0, 0.0
    %v2885 = vsel %vm2853, 1.0, 0.0
    %v2886 = vsel %vm2854, 1.0, 0.0
    %v2887 = vsel %vm2855, 1.0, 0.0
    %v2888 = vsel %vm2856, 1.0, 0.0
    %v2889 = vsel %vm2857, 1.0, 0.0
    %v2890 = vsel %vm2858, 1.0, 0.0
    %v2891 = vsel %vm2859, 1.0, 0.0
    %v2892 = vsel %vm2860, 1.0, 0.0
    %2893 = vmatprep.subr.mxu0 0.0
    %2894 = vmatpush1.msra.mxu0 %v2861
    %2895 = vmatprep.subr.mxu0 0.0
    %2896 = vmatpush1.msra.mxu0 %v2862
    %2897 = vmatprep.subr.mxu0 0.0
    %2898 = vmatpush1.msra.mxu0 %v2863
    %2899 = vmatprep.subr.mxu0 0.0
    %2900 = vmatpush1.msra.mxu0 %v2864
    %2901 = vmatprep.subr.mxu0 0.0
    %2902 = vmatpush1.msra.mxu0 %v2865
    %2903 = vmatprep.subr.mxu0 0.0
    %2904 = vmatpush1.msra.mxu0 %v2866
    %2905 = vmatprep.subr.mxu0 0.0
    %2906 = vmatpush1.msra.mxu0 %v2867
    %2907 = vmatprep.subr.mxu0 0.0
    %2908 = vmatpush1.msra.mxu0 %v2868
    %2909 = vmatprep.subr.mxu0 0.0
    %2910 = vmatpush1.msra.mxu0 %v2869
    %2911 = vmatprep.subr.mxu0 0.0
    %2912 = vmatpush1.msra.mxu0 %v2870
    %2913 = vmatprep.subr.mxu0 0.0
    %2914 = vmatpush1.msra.mxu0 %v2871
    %2915 = vmatprep.subr.mxu0 0.0
    %2916 = vmatpush1.msra.mxu0 %v2872
    %2917 = vmatprep.subr.mxu0 0.0
    %2918 = vmatpush1.msra.mxu0 %v2873
    %2919 = vmatprep.subr.mxu0 0.0
    %2920 = vmatpush1.msra.mxu0 %v2874
    %2921 = vmatprep.subr.mxu0 0.0
    %2922 = vmatpush1.msra.mxu0 %v2875
    %2923 = vmatprep.subr.mxu0 0.0
    %2924 = vmatpush1.msra.mxu0 %v2876
    %2925 = vmatprep.subr.mxu0 0.0
    %2926 = vmatpush1.msra.mxu0 %v2877
    %2927 = vmatprep.subr.mxu0 0.0
    %2928 = vmatpush1.msra.mxu0 %v2878
    %2929 = vmatprep.subr.mxu0 0.0
    %2930 = vmatpush1.msra.mxu0 %v2879
    %2931 = vmatprep.subr.mxu0 0.0
    %2932 = vmatpush1.msra.mxu0 %v2880
    %2933 = vmatprep.subr.mxu0 0.0
    %2934 = vmatpush1.msra.mxu0 %v2881
    %2935 = vmatprep.subr.mxu0 0.0
    %2936 = vmatpush1.msra.mxu0 %v2882
    %2937 = vmatprep.subr.mxu0 0.0
    %2938 = vmatpush1.msra.mxu0 %v2883
    %2939 = vmatprep.subr.mxu0 0.0
    %2940 = vmatpush1.msra.mxu0 %v2884
    %2941 = vmatprep.subr.mxu0 0.0
    %2942 = vmatpush1.msra.mxu0 %v2885
    %2943 = vmatprep.subr.mxu0 0.0
    %2944 = vmatpush1.msra.mxu0 %v2886
    %2945 = vmatprep.subr.mxu0 0.0
    %2946 = vmatpush1.msra.mxu0 %v2887
    %2947 = vmatprep.subr.mxu0 0.0
    %2948 = vmatpush1.msra.mxu0 %v2888
    %2949 = vmatprep.subr.mxu0 0.0
    %2950 = vmatpush1.msra.mxu0 %v2889
    %2951 = vmatprep.subr.mxu0 0.0
    %2952 = vmatpush1.msra.mxu0 %v2890
    %2953 = vmatprep.subr.mxu0 0.0
    %2954 = vmatpush1.msra.mxu0 %v2891
    %2955 = vmatprep.subr.mxu0 0.0
    %2956 = vmatpush1.msra.mxu0 %v2892
    %2957 = vmatprep.mubr.f32.mxu0 %v319
    %2958 = vmatmul.mubr.f32.gmra.mrb[0].mxu0 %v318
    %v2959 = vpop.f32.mrb[0].mxu0
    %v2960 = vadd.f32 0.0, %v2959
    %v2961 = vpop.f32.mrb[0].mxu0
    %2962 = vmatprep.mubr.f32.mxu0 %v323
    %2963 = vmatmul.mubr.f32.gmra.mrb[0].mxu0 %v322
    %v2964 = vpop.f32.mrb[0].mxu0
    %v2965 = vadd.f32 0.0, %v2964
    %v2966 = vpop.f32.mrb[0].mxu0
    %2967 = vmatprep.mubr.f32.mxu0 %v327
    %2968 = vmatmul.mubr.f32.gmra.mrb[0].mxu0 %v326
    %v2969 = vpop.f32.mrb[0].mxu0
    %v2970 = vadd.f32 0.0, %v2969
    %v2971 = vpop.f32.mrb[0].mxu0
    %2972 = vmatprep.mubr.f32.mxu0 %v331
    %2973 = vmatmul.mubr.f32.gmra.mrb[0].mxu0 %v330
    %v2974 = vpop.f32.mrb[0].mxu0
    %v2975 = vadd.f32 0.0, %v2974
    %v2976 = vpop.f32.mrb[0].mxu0
    %2977 = vmatprep.mubr.f32.mxu0 %v321
    %2978 = vmatmul.mubr.f32.gmra.mrb[0].mxu0 %v320
    %v2979 = vpop.f32.mrb[0].mxu0
    %v2980 = vadd.f32 0.0, %v2979
    %v2981 = vpop.f32.mrb[0].mxu0
    %2982 = vmatprep.mubr.f32.mxu0 %v325
    %2983 = vmatmul.mubr.f32.gmra.mrb[0].mxu0 %v324
    %v2984 = vpop.f32.mrb[0].mxu0
    %v2985 = vadd.f32 0.0, %v2984
    %v2986 = vpop.f32.mrb[0].mxu0
    %2987 = vmatprep.mubr.f32.mxu0 %v329
    %2988 = vmatmul.mubr.f32.gmra.mrb[0].mxu0 %v328
    %v2989 = vpop.f32.mrb[0].mxu0
    %v2990 = vadd.f32 0.0, %v2989
    %v2991 = vpop.f32.mrb[0].mxu0
    %2992 = vmatprep.mubr.f32.mxu0 %v333
    %2993 = vmatmul.mubr.f32.gmra.mrb[0].mxu0 %v332
    %v2994 = vpop.f32.mrb[0].mxu0
    %v2995 = vadd.f32 0.0, %v2994
    %v2996 = vpop.f32.mrb[0].mxu0
    %2997 = vdwg.mxu0
    %vm2998 = vmand %vm2477, %vm906
    %vm2999 = vmand %vm2998, %vm908
    %v3000 = vadd.s32 %v2480, %v905
    %v3001 = vsel %vm2999, %v3000, 4294967295
    %vm3002 = vcmp.eq.s32.totalorder %v339, %v3001
    %vm3003 = vcmp.eq.s32.totalorder %v340, %v3001
    %vm3004 = vcmp.eq.s32.totalorder %v341, %v3001
    %vm3005 = vcmp.eq.s32.totalorder %v342, %v3001
    %vm3006 = vcmp.eq.s32.totalorder %v343, %v3001
    %vm3007 = vcmp.eq.s32.totalorder %v344, %v3001
    %vm3008 = vcmp.eq.s32.totalorder %v345, %v3001
    %vm3009 = vcmp.eq.s32.totalorder %v346, %v3001
    %vm3010 = vcmp.eq.s32.totalorder %v347, %v3001
    %vm3011 = vcmp.eq.s32.totalorder %v348, %v3001
    %vm3012 = vcmp.eq.s32.totalorder %v349, %v3001
    %vm3013 = vcmp.eq.s32.totalorder %v350, %v3001
    %vm3014 = vcmp.eq.s32.totalorder %v351, %v3001
    %vm3015 = vcmp.eq.s32.totalorder %v352, %v3001
    %vm3016 = vcmp.eq.s32.totalorder %v353, %v3001
    %vm3017 = vcmp.eq.s32.totalorder %v354, %v3001
    %vm3018 = vcmp.eq.s32.totalorder %v355, %v3001
    %vm3019 = vcmp.eq.s32.totalorder %v356, %v3001
    %vm3020 = vcmp.eq.s32.totalorder %v357, %v3001
    %vm3021 = vcmp.eq.s32.totalorder %v358, %v3001
    %vm3022 = vcmp.eq.s32.totalorder %v359, %v3001
    %vm3023 = vcmp.eq.s32.totalorder %v360, %v3001
    %vm3024 = vcmp.eq.s32.totalorder %v361, %v3001
    %vm3025 = vcmp.eq.s32.totalorder %v362, %v3001
    %vm3026 = vcmp.eq.s32.totalorder %v363, %v3001
    %vm3027 = vcmp.eq.s32.totalorder %v364, %v3001
    %vm3028 = vcmp.eq.s32.totalorder %v365, %v3001
    %vm3029 = vcmp.eq.s32.totalorder %v366, %v3001
    %vm3030 = vcmp.eq.s32.totalorder %v367, %v3001
    %vm3031 = vcmp.eq.s32.totalorder %v368, %v3001
    %vm3032 = vcmp.eq.s32.totalorder %v369, %v3001
    %vm3033 = vcmp.eq.s32.totalorder %v370, %v3001
    %v3034 = vsel %vm3002, 1.0, 0.0
    %v3035 = vsel %vm3003, 1.0, 0.0
    %v3036 = vsel %vm3004, 1.0, 0.0
    %v3037 = vsel %vm3005, 1.0, 0.0
    %v3038 = vsel %vm3006, 1.0, 0.0
    %v3039 = vsel %vm3007, 1.0, 0.0
    %v3040 = vsel %vm3008, 1.0, 0.0
    %v3041 = vsel %vm3009, 1.0, 0.0
    %v3042 = vsel %vm3010, 1.0, 0.0
    %v3043 = vsel %vm3011, 1.0, 0.0
    %v3044 = vsel %vm3012, 1.0, 0.0
    %v3045 = vsel %vm3013, 1.0, 0.0
    %v3046 = vsel %vm3014, 1.0, 0.0
    %v3047 = vsel %vm3015, 1.0, 0.0
    %v3048 = vsel %vm3016, 1.0, 0.0
    %v3049 = vsel %vm3017, 1.0, 0.0
    %v3050 = vsel %vm3018, 1.0, 0.0
    %v3051 = vsel %vm3019, 1.0, 0.0
    %v3052 = vsel %vm3020, 1.0, 0.0
    %v3053 = vsel %vm3021, 1.0, 0.0
    %v3054 = vsel %vm3022, 1.0, 0.0
    %v3055 = vsel %vm3023, 1.0, 0.0
    %v3056 = vsel %vm3024, 1.0, 0.0
    %v3057 = vsel %vm3025, 1.0, 0.0
    %v3058 = vsel %vm3026, 1.0, 0.0
    %v3059 = vsel %vm3027, 1.0, 0.0
    %v3060 = vsel %vm3028, 1.0, 0.0
    %v3061 = vsel %vm3029, 1.0, 0.0
    %v3062 = vsel %vm3030, 1.0, 0.0
    %v3063 = vsel %vm3031, 1.0, 0.0
    %v3064 = vsel %vm3032, 1.0, 0.0
    %v3065 = vsel %vm3033, 1.0, 0.0
    %3066 = vmatprep.subr.mxu0 0.0
    %3067 = vmatpush1.msra.mxu0 %v3034
    %3068 = vmatprep.subr.mxu0 0.0
    %3069 = vmatpush1.msra.mxu0 %v3035
    %3070 = vmatprep.subr.mxu0 0.0
    %3071 = vmatpush1.msra.mxu0 %v3036
    %3072 = vmatprep.subr.mxu0 0.0
    %3073 = vmatpush1.msra.mxu0 %v3037
    %3074 = vmatprep.subr.mxu0 0.0
    %3075 = vmatpush1.msra.mxu0 %v3038
    %3076 = vmatprep.subr.mxu0 0.0
    %3077 = vmatpush1.msra.mxu0 %v3039
    %3078 = vmatprep.subr.mxu0 0.0
    %3079 = vmatpush1.msra.mxu0 %v3040
    %3080 = vmatprep.subr.mxu0 0.0
    %3081 = vmatpush1.msra.mxu0 %v3041
    %3082 = vmatprep.subr.mxu0 0.0
    %3083 = vmatpush1.msra.mxu0 %v3042
    %3084 = vmatprep.subr.mxu0 0.0
    %3085 = vmatpush1.msra.mxu0 %v3043
    %3086 = vmatprep.subr.mxu0 0.0
    %3087 = vmatpush1.msra.mxu0 %v3044
    %3088 = vmatprep.subr.mxu0 0.0
    %3089 = vmatpush1.msra.mxu0 %v3045
    %3090 = vmatprep.subr.mxu0 0.0
    %3091 = vmatpush1.msra.mxu0 %v3046
    %3092 = vmatprep.subr.mxu0 0.0
    %3093 = vmatpush1.msra.mxu0 %v3047
    %3094 = vmatprep.subr.mxu0 0.0
    %3095 = vmatpush1.msra.mxu0 %v3048
    %3096 = vmatprep.subr.mxu0 0.0
    %3097 = vmatpush1.msra.mxu0 %v3049
    %3098 = vmatprep.subr.mxu0 0.0
    %3099 = vmatpush1.msra.mxu0 %v3050
    %3100 = vmatprep.subr.mxu0 0.0
    %3101 = vmatpush1.msra.mxu0 %v3051
    %3102 = vmatprep.subr.mxu0 0.0
    %3103 = vmatpush1.msra.mxu0 %v3052
    %3104 = vmatprep.subr.mxu0 0.0
    %3105 = vmatpush1.msra.mxu0 %v3053
    %3106 = vmatprep.subr.mxu0 0.0
    %3107 = vmatpush1.msra.mxu0 %v3054
    %3108 = vmatprep.subr.mxu0 0.0
    %3109 = vmatpush1.msra.mxu0 %v3055
    %3110 = vmatprep.subr.mxu0 0.0
    %3111 = vmatpush1.msra.mxu0 %v3056
    %3112 = vmatprep.subr.mxu0 0.0
    %3113 = vmatpush1.msra.mxu0 %v3057
    %3114 = vmatprep.subr.mxu0 0.0
    %3115 = vmatpush1.msra.mxu0 %v3058
    %3116 = vmatprep.subr.mxu0 0.0
    %3117 = vmatpush1.msra.mxu0 %v3059
    %3118 = vmatprep.subr.mxu0 0.0
    %3119 = vmatpush1.msra.mxu0 %v3060
    %3120 = vmatprep.subr.mxu0 0.0
    %3121 = vmatpush1.msra.mxu0 %v3061
    %3122 = vmatprep.subr.mxu0 0.0
    %3123 = vmatpush1.msra.mxu0 %v3062
    %3124 = vmatprep.subr.mxu0 0.0
    %3125 = vmatpush1.msra.mxu0 %v3063
    %3126 = vmatprep.subr.mxu0 0.0
    %3127 = vmatpush1.msra.mxu0 %v3064
    %3128 = vmatprep.subr.mxu0 0.0
    %3129 = vmatpush1.msra.mxu0 %v3065
    %3130 = vmatprep.mubr.f32.mxu0 %v319
    %3131 = vmatmul.mubr.f32.gmra.mrb[0].mxu0 %v318
    %v3132 = vpop.f32.mrb[0].mxu0
    %v3133 = vadd.f32 0.0, %v3132
    %v3134 = vpop.f32.mrb[0].mxu0
    %3135 = vmatprep.mubr.f32.mxu0 %v323
    %3136 = vmatmul.mubr.f32.gmra.mrb[0].mxu0 %v322
    %v3137 = vpop.f32.mrb[0].mxu0
    %v3138 = vadd.f32 0.0, %v3137
    %v3139 = vpop.f32.mrb[0].mxu0
    %3140 = vmatprep.mubr.f32.mxu0 %v327
    %3141 = vmatmul.mubr.f32.gmra.mrb[0].mxu0 %v326
    %v3142 = vpop.f32.mrb[0].mxu0
    %v3143 = vadd.f32 0.0, %v3142
    %v3144 = vpop.f32.mrb[0].mxu0
    %3145 = vmatprep.mubr.f32.mxu0 %v331
    %3146 = vmatmul.mubr.f32.gmra.mrb[0].mxu0 %v330
    %v3147 = vpop.f32.mrb[0].mxu0
    %v3148 = vadd.f32 0.0, %v3147
    %v3149 = vpop.f32.mrb[0].mxu0
    %3150 = vmatprep.mubr.f32.mxu0 %v321
    %3151 = vmatmul.mubr.f32.gmra.mrb[0].mxu0 %v320
    %v3152 = vpop.f32.mrb[0].mxu0
    %v3153 = vadd.f32 0.0, %v3152
    %v3154 = vpop.f32.mrb[0].mxu0
    %3155 = vmatprep.mubr.f32.mxu0 %v325
    %3156 = vmatmul.mubr.f32.gmra.mrb[0].mxu0 %v324
    %v3157 = vpop.f32.mrb[0].mxu0
    %v3158 = vadd.f32 0.0, %v3157
    %v3159 = vpop.f32.mrb[0].mxu0
    %3160 = vmatprep.mubr.f32.mxu0 %v329
    %3161 = vmatmul.mubr.f32.gmra.mrb[0].mxu0 %v328
    %v3162 = vpop.f32.mrb[0].mxu0
    %v3163 = vadd.f32 0.0, %v3162
    %v3164 = vpop.f32.mrb[0].mxu0
    %3165 = vmatprep.mubr.f32.mxu0 %v333
    %3166 = vmatmul.mubr.f32.gmra.mrb[0].mxu0 %v332
    %v3167 = vpop.f32.mrb[0].mxu0
    %v3168 = vadd.f32 0.0, %v3167
    %v3169 = vpop.f32.mrb[0].mxu0
    %3170 = vdwg.mxu0
    %v3171 = vld [vmem:[%s2] sm:$0xff]
    %v3172 = vld [vmem:[%s2 + $0x8] sm:$0xff]
    %v3173 = vld [vmem:[%s2 + $0x10] sm:$0xff]
    %v3174 = vld [vmem:[%s2 + $0x18] sm:$0xff]
    %v3175 = vld [vmem:[%s2 + $0x20] sm:$0xff]
    %v3176 = vld [vmem:[%s2 + $0x28] sm:$0xff]
    %v3177 = vld [vmem:[%s2 + $0x30] sm:$0xff]
    %v3178 = vld [vmem:[%s2 + $0x38] sm:$0xff]
    %v3179 = vld [vmem:[%s2 + $0x40] sm:$0xff]
    %v3180 = vld [vmem:[%s2 + $0x48] sm:$0xff]
    %v3181 = vld [vmem:[%s2 + $0x50] sm:$0xff]
    %v3182 = vld [vmem:[%s2 + $0x58] sm:$0xff]
    %v3183 = vld [vmem:[%s2 + $0x60] sm:$0xff]
    %v3184 = vld [vmem:[%s2 + $0x68] sm:$0xff]
    %v3185 = vld [vmem:[%s2 + $0x70] sm:$0xff]
    %v3186 = vld [vmem:[%s2 + $0x78] sm:$0xff]
    %v3187 = vld [vmem:[%s2 + $0x80] sm:$0xff]
    %v3188 = vld [vmem:[%s2 + $0x88] sm:$0xff]
    %v3189 = vld [vmem:[%s2 + $0x90] sm:$0xff]
    %v3190 = vld [vmem:[%s2 + $0x98] sm:$0xff]
    %v3191 = vld [vmem:[%s2 + $0xa0] sm:$0xff]
    %v3192 = vld [vmem:[%s2 + $0xa8] sm:$0xff]
    %v3193 = vld [vmem:[%s2 + $0xb0] sm:$0xff]
    %v3194 = vld [vmem:[%s2 + $0xb8] sm:$0xff]
    %v3195 = vld [vmem:[%s2 + $0xc0] sm:$0xff]
    %v3196 = vld [vmem:[%s2 + $0xc8] sm:$0xff]
    %v3197 = vld [vmem:[%s2 + $0xd0] sm:$0xff]
    %v3198 = vld [vmem:[%s2 + $0xd8] sm:$0xff]
    %v3199 = vld [vmem:[%s2 + $0xe0] sm:$0xff]
    %v3200 = vld [vmem:[%s2 + $0xe8] sm:$0xff]
    %v3201 = vld [vmem:[%s2 + $0xf0] sm:$0xff]
    %v3202 = vld [vmem:[%s2 + $0xf8] sm:$0xff]
    %3203 = vmatprep.subr.mxu0 0.0
    %3204 = vmatpush1.msra.mxu0 %v516
    %3205 = vmatprep.subr.mxu0 0.0
    %3206 = vmatpush1.msra.mxu0 %v521
    %3207 = vmatprep.subr.mxu0 0.0
    %3208 = vmatpush1.msra.mxu0 %v526
    %3209 = vmatprep.subr.mxu0 0.0
    %3210 = vmatpush1.msra.mxu0 %v531
    %3211 = vmatprep.subr.mxu0 0.0
    %3212 = vmatpush1.msra.mxu0 %v691
    %3213 = vmatprep.subr.mxu0 0.0
    %3214 = vmatpush1.msra.mxu0 %v696
    %3215 = vmatprep.subr.mxu0 0.0
    %3216 = vmatpush1.msra.mxu0 %v701
    %3217 = vmatprep.subr.mxu0 0.0
    %3218 = vmatpush1.msra.mxu0 %v706
    %3219 = vmatprep.subr.mxu0 0.0
    %3220 = vmatpush1.msra.mxu0 %v867
    %3221 = vmatprep.subr.mxu0 0.0
    %3222 = vmatpush1.msra.mxu0 %v872
    %3223 = vmatprep.subr.mxu0 0.0
    %3224 = vmatpush1.msra.mxu0 %v877
    %3225 = vmatprep.subr.mxu0 0.0
    %3226 = vmatpush1.msra.mxu0 %v882
    %3227 = vmatprep.subr.mxu0 0.0
    %3228 = vmatpush1.msra.mxu0 %v1043
    %3229 = vmatprep.subr.mxu0 0.0
    %3230 = vmatpush1.msra.mxu0 %v1048
    %3231 = vmatprep.subr.mxu0 0.0
    %3232 = vmatpush1.msra.mxu0 %v1053
    %3233 = vmatprep.subr.mxu0 0.0
    %3234 = vmatpush1.msra.mxu0 %v1058
    %3235 = vmatprep.subr.mxu0 0.0
    %3236 = vmatpush1.msra.mxu0 %v1220
    %3237 = vmatprep.subr.mxu0 0.0
    %3238 = vmatpush1.msra.mxu0 %v1225
    %3239 = vmatprep.subr.mxu0 0.0
    %3240 = vmatpush1.msra.mxu0 %v1230
    %3241 = vmatprep.subr.mxu0 0.0
    %3242 = vmatpush1.msra.mxu0 %v1235
    %3243 = vmatprep.subr.mxu0 0.0
    %3244 = vmatpush1.msra.mxu0 %v1393
    %3245 = vmatprep.subr.mxu0 0.0
    %3246 = vmatpush1.msra.mxu0 %v1398
    %3247 = vmatprep.subr.mxu0 0.0
    %3248 = vmatpush1.msra.mxu0 %v1403
    %3249 = vmatprep.subr.mxu0 0.0
    %3250 = vmatpush1.msra.mxu0 %v1408
    %3251 = vmatprep.subr.mxu0 0.0
    %3252 = vmatpush1.msra.mxu0 %v1566
    %3253 = vmatprep.subr.mxu0 0.0
    %3254 = vmatpush1.msra.mxu0 %v1571
    %3255 = vmatprep.subr.mxu0 0.0
    %3256 = vmatpush1.msra.mxu0 %v1576
    %3257 = vmatprep.subr.mxu0 0.0
    %3258 = vmatpush1.msra.mxu0 %v1581
    %3259 = vmatprep.subr.mxu0 0.0
    %3260 = vmatpush1.msra.mxu0 %v1739
    %3261 = vmatprep.subr.mxu0 0.0
    %3262 = vmatpush1.msra.mxu0 %v1744
    %3263 = vmatprep.subr.mxu0 0.0
    %3264 = vmatpush1.msra.mxu0 %v1749
    %3265 = vmatprep.subr.mxu0 0.0
    %3266 = vmatpush1.msra.mxu0 %v1754
    %3267 = vmatprep.mubr.f32.mxu0 %v3172
    %3268 = vmatmul.mubr.f32.gmra.mrb[0].mxu0 %v3171
    %v3269 = vpop.f32.mrb[0].mxu0
    %v3270 = vadd.f32 0.0, %v3269
    %v3271 = vpop.f32.mrb[0].mxu0
    %3272 = vmatprep.mubr.f32.mxu0 %v3176
    %3273 = vmatmul.mubr.f32.gmra.mrb[0].mxu0 %v3175
    %v3274 = vpop.f32.mrb[0].mxu0
    %v3275 = vadd.f32 0.0, %v3274
    %v3276 = vpop.f32.mrb[0].mxu0
    %3277 = vmatprep.mubr.f32.mxu0 %v3180
    %3278 = vmatmul.mubr.f32.gmra.mrb[0].mxu0 %v3179
    %v3279 = vpop.f32.mrb[0].mxu0
    %v3280 = vadd.f32 0.0, %v3279
    %v3281 = vpop.f32.mrb[0].mxu0
    %3282 = vmatprep.mubr.f32.mxu0 %v3184
    %3283 = vmatmul.mubr.f32.gmra.mrb[0].mxu0 %v3183
    %v3284 = vpop.f32.mrb[0].mxu0
    %v3285 = vadd.f32 0.0, %v3284
    %v3286 = vpop.f32.mrb[0].mxu0
    %3287 = vmatprep.mubr.f32.mxu0 %v3188
    %3288 = vmatmul.mubr.f32.gmra.mrb[0].mxu0 %v3187
    %v3289 = vpop.f32.mrb[0].mxu0
    %v3290 = vadd.f32 0.0, %v3289
    %v3291 = vpop.f32.mrb[0].mxu0
    %3292 = vmatprep.mubr.f32.mxu0 %v3192
    %3293 = vmatmul.mubr.f32.gmra.mrb[0].mxu0 %v3191
    %v3294 = vpop.f32.mrb[0].mxu0
    %v3295 = vadd.f32 0.0, %v3294
    %v3296 = vpop.f32.mrb[0].mxu0
    %3297 = vmatprep.mubr.f32.mxu0 %v3196
    %3298 = vmatmul.mubr.f32.gmra.mrb[0].mxu0 %v3195
    %v3299 = vpop.f32.mrb[0].mxu0
    %v3300 = vadd.f32 0.0, %v3299
    %v3301 = vpop.f32.mrb[0].mxu0
    %3302 = vmatprep.mubr.f32.mxu0 %v3200
    %3303 = vmatmul.mubr.f32.gmra.mrb[0].mxu0 %v3199
    %v3304 = vpop.f32.mrb[0].mxu0
    %v3305 = vadd.f32 0.0, %v3304
    %v3306 = vpop.f32.mrb[0].mxu0
    %3307 = vdwg.mxu0
    %3308 = vmatprep.subr.mxu0 0.0
    %3309 = vmatpush1.msra.mxu0 %v1917
    %3310 = vmatprep.subr.mxu0 0.0
    %3311 = vmatpush1.msra.mxu0 %v1922
    %3312 = vmatprep.subr.mxu0 0.0
    %3313 = vmatpush1.msra.mxu0 %v1927
    %3314 = vmatprep.subr.mxu0 0.0
    %3315 = vmatpush1.msra.mxu0 %v1932
    %3316 = vmatprep.subr.mxu0 0.0
    %3317 = vmatpush1.msra.mxu0 %v2090
    %3318 = vmatprep.subr.mxu0 0.0
    %3319 = vmatpush1.msra.mxu0 %v2095
    %3320 = vmatprep.subr.mxu0 0.0
    %3321 = vmatpush1.msra.mxu0 %v2100
    %3322 = vmatprep.subr.mxu0 0.0
    %3323 = vmatpush1.msra.mxu0 %v2105
    %3324 = vmatprep.subr.mxu0 0.0
    %3325 = vmatpush1.msra.mxu0 %v2263
    %3326 = vmatprep.subr.mxu0 0.0
    %3327 = vmatpush1.msra.mxu0 %v2268
    %3328 = vmatprep.subr.mxu0 0.0
    %3329 = vmatpush1.msra.mxu0 %v2273
    %3330 = vmatprep.subr.mxu0 0.0
    %3331 = vmatpush1.msra.mxu0 %v2278
    %3332 = vmatprep.subr.mxu0 0.0
    %3333 = vmatpush1.msra.mxu0 %v2436
    %3334 = vmatprep.subr.mxu0 0.0
    %3335 = vmatpush1.msra.mxu0 %v2441
    %3336 = vmatprep.subr.mxu0 0.0
    %3337 = vmatpush1.msra.mxu0 %v2446
    %3338 = vmatprep.subr.mxu0 0.0
    %3339 = vmatpush1.msra.mxu0 %v2451
    %3340 = vmatprep.subr.mxu0 0.0
    %3341 = vmatpush1.msra.mxu0 %v2614
    %3342 = vmatprep.subr.mxu0 0.0
    %3343 = vmatpush1.msra.mxu0 %v2619
    %3344 = vmatprep.subr.mxu0 0.0
    %3345 = vmatpush1.msra.mxu0 %v2624
    %3346 = vmatprep.subr.mxu0 0.0
    %3347 = vmatpush1.msra.mxu0 %v2629
    %3348 = vmatprep.subr.mxu0 0.0
    %3349 = vmatpush1.msra.mxu0 %v2787
    %3350 = vmatprep.subr.mxu0 0.0
    %3351 = vmatpush1.msra.mxu0 %v2792
    %3352 = vmatprep.subr.mxu0 0.0
    %3353 = vmatpush1.msra.mxu0 %v2797
    %3354 = vmatprep.subr.mxu0 0.0
    %3355 = vmatpush1.msra.mxu0 %v2802
    %3356 = vmatprep.subr.mxu0 0.0
    %3357 = vmatpush1.msra.mxu0 %v2960
    %3358 = vmatprep.subr.mxu0 0.0
    %3359 = vmatpush1.msra.mxu0 %v2965
    %3360 = vmatprep.subr.mxu0 0.0
    %3361 = vmatpush1.msra.mxu0 %v2970
    %3362 = vmatprep.subr.mxu0 0.0
    %3363 = vmatpush1.msra.mxu0 %v2975
    %3364 = vmatprep.subr.mxu0 0.0
    %3365 = vmatpush1.msra.mxu0 %v3133
    %3366 = vmatprep.subr.mxu0 0.0
    %3367 = vmatpush1.msra.mxu0 %v3138
    %3368 = vmatprep.subr.mxu0 0.0
    %3369 = vmatpush1.msra.mxu0 %v3143
    %3370 = vmatprep.subr.mxu0 0.0
    %3371 = vmatpush1.msra.mxu0 %v3148
    %3372 = vmatprep.mubr.f32.mxu0 %v3174
    %3373 = vmatmul.mubr.f32.gmra.mrb[0].mxu0 %v3173
    %v3374 = vpop.f32.mrb[0].mxu0
    %v3375 = vadd.f32 %v3270, %v3374
    %v3376 = vpop.f32.mrb[0].mxu0
    %3377 = vmatprep.mubr.f32.mxu0 %v3178
    %3378 = vmatmul.mubr.f32.gmra.mrb[0].mxu0 %v3177
    %v3379 = vpop.f32.mrb[0].mxu0
    %v3380 = vadd.f32 %v3275, %v3379
    %v3381 = vpop.f32.mrb[0].mxu0
    %3382 = vmatprep.mubr.f32.mxu0 %v3182
    %3383 = vmatmul.mubr.f32.gmra.mrb[0].mxu0 %v3181
    %v3384 = vpop.f32.mrb[0].mxu0
    %v3385 = vadd.f32 %v3280, %v3384
    %v3386 = vpop.f32.mrb[0].mxu0
    %3387 = vmatprep.mubr.f32.mxu0 %v3186
    %3388 = vmatmul.mubr.f32.gmra.mrb[0].mxu0 %v3185
    %v3389 = vpop.f32.mrb[0].mxu0
    %v3390 = vadd.f32 %v3285, %v3389
    %v3391 = vpop.f32.mrb[0].mxu0
    %3392 = vmatprep.mubr.f32.mxu0 %v3190
    %3393 = vmatmul.mubr.f32.gmra.mrb[0].mxu0 %v3189
    %v3394 = vpop.f32.mrb[0].mxu0
    %v3395 = vadd.f32 %v3290, %v3394
    %v3396 = vpop.f32.mrb[0].mxu0
    %3397 = vmatprep.mubr.f32.mxu0 %v3194
    %3398 = vmatmul.mubr.f32.gmra.mrb[0].mxu0 %v3193
    %v3399 = vpop.f32.mrb[0].mxu0
    %v3400 = vadd.f32 %v3295, %v3399
    %v3401 = vpop.f32.mrb[0].mxu0
    %3402 = vmatprep.mubr.f32.mxu0 %v3198
    %3403 = vmatmul.mubr.f32.gmra.mrb[0].mxu0 %v3197
    %v3404 = vpop.f32.mrb[0].mxu0
    %v3405 = vadd.f32 %v3300, %v3404
    %v3406 = vpop.f32.mrb[0].mxu0
    %3407 = vmatprep.mubr.f32.mxu0 %v3202
    %3408 = vmatmul.mubr.f32.gmra.mrb[0].mxu0 %v3201
    %v3409 = vpop.f32.mrb[0].mxu0
    %v3410 = vadd.f32 %v3305, %v3409
    %v3411 = vpop.f32.mrb[0].mxu0
    %3412 = vdwg.mxu0
    %3413 = vmatprep.subr.mxu0 0.0
    %3414 = vmatpush1.msra.mxu0 %v536
    %3415 = vmatprep.subr.mxu0 0.0
    %3416 = vmatpush1.msra.mxu0 %v541
    %3417 = vmatprep.subr.mxu0 0.0
    %3418 = vmatpush1.msra.mxu0 %v546
    %3419 = vmatprep.subr.mxu0 0.0
    %3420 = vmatpush1.msra.mxu0 %v551
    %3421 = vmatprep.subr.mxu0 0.0
    %3422 = vmatpush1.msra.mxu0 %v711
    %3423 = vmatprep.subr.mxu0 0.0
    %3424 = vmatpush1.msra.mxu0 %v716
    %3425 = vmatprep.subr.mxu0 0.0
    %3426 = vmatpush1.msra.mxu0 %v721
    %3427 = vmatprep.subr.mxu0 0.0
    %3428 = vmatpush1.msra.mxu0 %v726
    %3429 = vmatprep.subr.mxu0 0.0
    %3430 = vmatpush1.msra.mxu0 %v887
    %3431 = vmatprep.subr.mxu0 0.0
    %3432 = vmatpush1.msra.mxu0 %v892
    %3433 = vmatprep.subr.mxu0 0.0
    %3434 = vmatpush1.msra.mxu0 %v897
    %3435 = vmatprep.subr.mxu0 0.0
    %3436 = vmatpush1.msra.mxu0 %v902
    %3437 = vmatprep.subr.mxu0 0.0
    %3438 = vmatpush1.msra.mxu0 %v1063
    %3439 = vmatprep.subr.mxu0 0.0
    %3440 = vmatpush1.msra.mxu0 %v1068
    %3441 = vmatprep.subr.mxu0 0.0
    %3442 = vmatpush1.msra.mxu0 %v1073
    %3443 = vmatprep.subr.mxu0 0.0
    %3444 = vmatpush1.msra.mxu0 %v1078
    %3445 = vmatprep.subr.mxu0 0.0
    %3446 = vmatpush1.msra.mxu0 %v1240
    %3447 = vmatprep.subr.mxu0 0.0
    %3448 = vmatpush1.msra.mxu0 %v1245
    %3449 = vmatprep.subr.mxu0 0.0
    %3450 = vmatpush1.msra.mxu0 %v1250
    %3451 = vmatprep.subr.mxu0 0.0
    %3452 = vmatpush1.msra.mxu0 %v1255
    %3453 = vmatprep.subr.mxu0 0.0
    %3454 = vmatpush1.msra.mxu0 %v1413
    %3455 = vmatprep.subr.mxu0 0.0
    %3456 = vmatpush1.msra.mxu0 %v1418
    %3457 = vmatprep.subr.mxu0 0.0
    %3458 = vmatpush1.msra.mxu0 %v1423
    %3459 = vmatprep.subr.mxu0 0.0
    %3460 = vmatpush1.msra.mxu0 %v1428
    %3461 = vmatprep.subr.mxu0 0.0
    %3462 = vmatpush1.msra.mxu0 %v1586
    %3463 = vmatprep.subr.mxu0 0.0
    %3464 = vmatpush1.msra.mxu0 %v1591
    %3465 = vmatprep.subr.mxu0 0.0
    %3466 = vmatpush1.msra.mxu0 %v1596
    %3467 = vmatprep.subr.mxu0 0.0
    %3468 = vmatpush1.msra.mxu0 %v1601
    %3469 = vmatprep.subr.mxu0 0.0
    %3470 = vmatpush1.msra.mxu0 %v1759
    %3471 = vmatprep.subr.mxu0 0.0
    %3472 = vmatpush1.msra.mxu0 %v1764
    %3473 = vmatprep.subr.mxu0 0.0
    %3474 = vmatpush1.msra.mxu0 %v1769
    %3475 = vmatprep.subr.mxu0 0.0
    %3476 = vmatpush1.msra.mxu0 %v1774
    %3477 = vmatprep.mubr.f32.mxu0 %v3172
    %3478 = vmatmul.mubr.f32.gmra.mrb[0].mxu0 %v3171
    %v3479 = vpop.f32.mrb[0].mxu0
    %v3480 = vadd.f32 0.0, %v3479
    %v3481 = vpop.f32.mrb[0].mxu0
    %3482 = vmatprep.mubr.f32.mxu0 %v3176
    %3483 = vmatmul.mubr.f32.gmra.mrb[0].mxu0 %v3175
    %v3484 = vpop.f32.mrb[0].mxu0
    %v3485 = vadd.f32 0.0, %v3484
    %v3486 = vpop.f32.mrb[0].mxu0
    %3487 = vmatprep.mubr.f32.mxu0 %v3180
    %3488 = vmatmul.mubr.f32.gmra.mrb[0].mxu0 %v3179
    %v3489 = vpop.f32.mrb[0].mxu0
    %v3490 = vadd.f32 0.0, %v3489
    %v3491 = vpop.f32.mrb[0].mxu0
    %3492 = vmatprep.mubr.f32.mxu0 %v3184
    %3493 = vmatmul.mubr.f32.gmra.mrb[0].mxu0 %v3183
    %v3494 = vpop.f32.mrb[0].mxu0
    %v3495 = vadd.f32 0.0, %v3494
    %v3496 = vpop.f32.mrb[0].mxu0
    %3497 = vmatprep.mubr.f32.mxu0 %v3188
    %3498 = vmatmul.mubr.f32.gmra.mrb[0].mxu0 %v3187
    %v3499 = vpop.f32.mrb[0].mxu0
    %v3500 = vadd.f32 0.0, %v3499
    %v3501 = vpop.f32.mrb[0].mxu0
    %3502 = vmatprep.mubr.f32.mxu0 %v3192
    %3503 = vmatmul.mubr.f32.gmra.mrb[0].mxu0 %v3191
    %v3504 = vpop.f32.mrb[0].mxu0
    %v3505 = vadd.f32 0.0, %v3504
    %v3506 = vpop.f32.mrb[0].mxu0
    %3507 = vmatprep.mubr.f32.mxu0 %v3196
    %3508 = vmatmul.mubr.f32.gmra.mrb[0].mxu0 %v3195
    %v3509 = vpop.f32.mrb[0].mxu0
    %v3510 = vadd.f32 0.0, %v3509
    %v3511 = vpop.f32.mrb[0].mxu0
    %3512 = vmatprep.mubr.f32.mxu0 %v3200
    %3513 = vmatmul.mubr.f32.gmra.mrb[0].mxu0 %v3199
    %v3514 = vpop.f32.mrb[0].mxu0
    %v3515 = vadd.f32 0.0, %v3514
    %v3516 = vpop.f32.mrb[0].mxu0
    %3517 = vdwg.mxu0
    %3518 = vmatprep.subr.mxu0 0.0
    %3519 = vmatpush1.msra.mxu0 %v1937
    %3520 = vmatprep.subr.mxu0 0.0
    %3521 = vmatpush1.msra.mxu0 %v1942
    %3522 = vmatprep.subr.mxu0 0.0
    %3523 = vmatpush1.msra.mxu0 %v1947
    %3524 = vmatprep.subr.mxu0 0.0
    %3525 = vmatpush1.msra.mxu0 %v1952
    %3526 = vmatprep.subr.mxu0 0.0
    %3527 = vmatpush1.msra.mxu0 %v2110
    %3528 = vmatprep.subr.mxu0 0.0
    %3529 = vmatpush1.msra.mxu0 %v2115
    %3530 = vmatprep.subr.mxu0 0.0
    %3531 = vmatpush1.msra.mxu0 %v2120
    %3532 = vmatprep.subr.mxu0 0.0
    %3533 = vmatpush1.msra.mxu0 %v2125
    %3534 = vmatprep.subr.mxu0 0.0
    %3535 = vmatpush1.msra.mxu0 %v2283
    %3536 = vmatprep.subr.mxu0 0.0
    %3537 = vmatpush1.msra.mxu0 %v2288
    %3538 = vmatprep.subr.mxu0 0.0
    %3539 = vmatpush1.msra.mxu0 %v2293
    %3540 = vmatprep.subr.mxu0 0.0
    %3541 = vmatpush1.msra.mxu0 %v2298
    %3542 = vmatprep.subr.mxu0 0.0
    %3543 = vmatpush1.msra.mxu0 %v2456
    %3544 = vmatprep.subr.mxu0 0.0
    %3545 = vmatpush1.msra.mxu0 %v2461
    %3546 = vmatprep.subr.mxu0 0.0
    %3547 = vmatpush1.msra.mxu0 %v2466
    %3548 = vmatprep.subr.mxu0 0.0
    %3549 = vmatpush1.msra.mxu0 %v2471
    %3550 = vmatprep.subr.mxu0 0.0
    %3551 = vmatpush1.msra.mxu0 %v2634
    %3552 = vmatprep.subr.mxu0 0.0
    %3553 = vmatpush1.msra.mxu0 %v2639
    %3554 = vmatprep.subr.mxu0 0.0
    %3555 = vmatpush1.msra.mxu0 %v2644
    %3556 = vmatprep.subr.mxu0 0.0
    %3557 = vmatpush1.msra.mxu0 %v2649
    %3558 = vmatprep.subr.mxu0 0.0
    %3559 = vmatpush1.msra.mxu0 %v2807
    %3560 = vmatprep.subr.mxu0 0.0
    %3561 = vmatpush1.msra.mxu0 %v2812
    %3562 = vmatprep.subr.mxu0 0.0
    %3563 = vmatpush1.msra.mxu0 %v2817
    %3564 = vmatprep.subr.mxu0 0.0
    %3565 = vmatpush1.msra.mxu0 %v2822
    %3566 = vmatprep.subr.mxu0 0.0
    %3567 = vmatpush1.msra.mxu0 %v2980
    %3568 = vmatprep.subr.mxu0 0.0
    %3569 = vmatpush1.msra.mxu0 %v2985
    %3570 = vmatprep.subr.mxu0 0.0
    %3571 = vmatpush1.msra.mxu0 %v2990
    %3572 = vmatprep.subr.mxu0 0.0
    %3573 = vmatpush1.msra.mxu0 %v2995
    %3574 = vmatprep.subr.mxu0 0.0
    %3575 = vmatpush1.msra.mxu0 %v3153
    %3576 = vmatprep.subr.mxu0 0.0
    %3577 = vmatpush1.msra.mxu0 %v3158
    %3578 = vmatprep.subr.mxu0 0.0
    %3579 = vmatpush1.msra.mxu0 %v3163
    %3580 = vmatprep.subr.mxu0 0.0
    %3581 = vmatpush1.msra.mxu0 %v3168
    %3582 = vmatprep.mubr.f32.mxu0 %v3174
    %3583 = vmatmul.mubr.f32.gmra.mrb[0].mxu0 %v3173
    %v3584 = vpop.f32.mrb[0].mxu0
    %v3585 = vadd.f32 %v3480, %v3584
    %v3586 = vpop.f32.mrb[0].mxu0
    %3587 = vmatprep.mubr.f32.mxu0 %v3178
    %3588 = vmatmul.mubr.f32.gmra.mrb[0].mxu0 %v3177
    %v3589 = vpop.f32.mrb[0].mxu0
    %v3590 = vadd.f32 %v3485, %v3589
    %v3591 = vpop.f32.mrb[0].mxu0
    %3592 = vmatprep.mubr.f32.mxu0 %v3182
    %3593 = vmatmul.mubr.f32.gmra.mrb[0].mxu0 %v3181
    %v3594 = vpop.f32.mrb[0].mxu0
    %v3595 = vadd.f32 %v3490, %v3594
    %v3596 = vpop.f32.mrb[0].mxu0
    %3597 = vmatprep.mubr.f32.mxu0 %v3186
    %3598 = vmatmul.mubr.f32.gmra.mrb[0].mxu0 %v3185
    %v3599 = vpop.f32.mrb[0].mxu0
    %v3600 = vadd.f32 %v3495, %v3599
    %v3601 = vpop.f32.mrb[0].mxu0
    %3602 = vmatprep.mubr.f32.mxu0 %v3190
    %3603 = vmatmul.mubr.f32.gmra.mrb[0].mxu0 %v3189
    %v3604 = vpop.f32.mrb[0].mxu0
    %v3605 = vadd.f32 %v3500, %v3604
    %v3606 = vpop.f32.mrb[0].mxu0
    %3607 = vmatprep.mubr.f32.mxu0 %v3194
    %3608 = vmatmul.mubr.f32.gmra.mrb[0].mxu0 %v3193
    %v3609 = vpop.f32.mrb[0].mxu0
    %v3610 = vadd.f32 %v3505, %v3609
    %v3611 = vpop.f32.mrb[0].mxu0
    %3612 = vmatprep.mubr.f32.mxu0 %v3198
    %3613 = vmatmul.mubr.f32.gmra.mrb[0].mxu0 %v3197
    %v3614 = vpop.f32.mrb[0].mxu0
    %v3615 = vadd.f32 %v3510, %v3614
    %v3616 = vpop.f32.mrb[0].mxu0
    %3617 = vmatprep.mubr.f32.mxu0 %v3202
    %3618 = vmatmul.mubr.f32.gmra.mrb[0].mxu0 %v3201
    %v3619 = vpop.f32.mrb[0].mxu0
    %v3620 = vadd.f32 %v3515, %v3619
    %v3621 = vpop.f32.mrb[0].mxu0
    %3622 = vdwg.mxu0
    %vm3623 = vcmask 523264
    %v3624 = vsel %vm3623, %v3375, 0.0
    %3625 = vadd.xlane.f32.xlu0 %v3624
    %v3626 = vpop.xlane.xlu0 %3625
    %v3627 = vsel %vm3623, %v3380, 0.0
    %3628 = vadd.xlane.f32.xlu0 %v3627
    %v3629 = vpop.xlane.xlu0 %3628
    %v3630 = vsel %vm3623, %v3385, 0.0
    %3631 = vadd.xlane.f32.xlu0 %v3630
    %v3632 = vpop.xlane.xlu0 %3631
    %v3633 = vsel %vm3623, %v3390, 0.0
    %3634 = vadd.xlane.f32.xlu0 %v3633
    %v3635 = vpop.xlane.xlu0 %3634
    %v3636 = vsel %vm3623, %v3395, 0.0
    %3637 = vadd.xlane.f32.xlu0 %v3636
    %v3638 = vpop.xlane.xlu0 %3637
    %v3639 = vsel %vm3623, %v3400, 0.0
    %3640 = vadd.xlane.f32.xlu0 %v3639
    %v3641 = vpop.xlane.xlu0 %3640
    %v3642 = vsel %vm3623, %v3405, 0.0
    %3643 = vadd.xlane.f32.xlu0 %v3642
    %v3644 = vpop.xlane.xlu0 %3643
    %v3645 = vsel %vm3623, %v3410, 0.0
    %3646 = vadd.xlane.f32.xlu0 %v3645
    %v3647 = vpop.xlane.xlu0 %3646
    %v3648 = vadd.f32 %v3626, 0.0
    %v3649 = vadd.f32 %v3629, 0.0
    %v3650 = vadd.f32 %v3632, 0.0
    %v3651 = vadd.f32 %v3635, 0.0
    %v3652 = vadd.f32 %v3638, 0.0
    %v3653 = vadd.f32 %v3641, 0.0
    %v3654 = vadd.f32 %v3644, 0.0
    %v3655 = vadd.f32 %v3647, 0.0
    %v3656 = vsel %vm3623, %v3585, 0.0
    %3657 = vadd.xlane.f32.xlu0 %v3656
    %v3658 = vpop.xlane.xlu0 %3657
    %v3659 = vsel %vm3623, %v3590, 0.0
    %3660 = vadd.xlane.f32.xlu0 %v3659
    %v3661 = vpop.xlane.xlu0 %3660
    %v3662 = vsel %vm3623, %v3595, 0.0
    %3663 = vadd.xlane.f32.xlu0 %v3662
    %v3664 = vpop.xlane.xlu0 %3663
    %v3665 = vsel %vm3623, %v3600, 0.0
    %3666 = vadd.xlane.f32.xlu0 %v3665
    %v3667 = vpop.xlane.xlu0 %3666
    %v3668 = vsel %vm3623, %v3605, 0.0
    %3669 = vadd.xlane.f32.xlu0 %v3668
    %v3670 = vpop.xlane.xlu0 %3669
    %v3671 = vsel %vm3623, %v3610, 0.0
    %3672 = vadd.xlane.f32.xlu0 %v3671
    %v3673 = vpop.xlane.xlu0 %3672
    %v3674 = vsel %vm3623, %v3615, 0.0
    %3675 = vadd.xlane.f32.xlu0 %v3674
    %v3676 = vpop.xlane.xlu0 %3675
    %v3677 = vsel %vm3623, %v3620, 0.0
    %3678 = vadd.xlane.f32.xlu0 %v3677
    %v3679 = vpop.xlane.xlu0 %3678
    %v3680 = vadd.f32 %v3648, %v3658
    %v3681 = vadd.f32 %v3649, %v3661
    %v3682 = vadd.f32 %v3650, %v3664
    %v3683 = vadd.f32 %v3651, %v3667
    %v3684 = vadd.f32 %v3652, %v3670
    %v3685 = vadd.f32 %v3653, %v3673
    %v3686 = vadd.f32 %v3654, %v3676
    %v3687 = vadd.f32 %v3655, %v3679
    %v3688 = vrcp.pop 128.0
    %v3689 = vmul.f32 %v3680, %v3688
    %v3690 = vmul.f32 %v3681, %v3688
    %v3691 = vmul.f32 %v3682, %v3688
    %v3692 = vmul.f32 %v3683, %v3688
    %v3693 = vmul.f32 %v3684, %v3688
    %v3694 = vmul.f32 %v3685, %v3688
    %v3695 = vmul.f32 %v3686, %v3688
    %v3696 = vmul.f32 %v3687, %v3688
    %v3697 = vsub.f32 %v3375, %v3689
    %v3698 = vsub.f32 %v3380, %v3690
    %v3699 = vsub.f32 %v3385, %v3691
    %v3700 = vsub.f32 %v3390, %v3692
    %v3701 = vsub.f32 %v3395, %v3693
    %v3702 = vsub.f32 %v3400, %v3694
    %v3703 = vsub.f32 %v3405, %v3695
    %v3704 = vsub.f32 %v3410, %v3696
    %v3705 = vmul.f32 %v3697, %v3697
    %v3706 = vmul.f32 %v3698, %v3698
    %v3707 = vmul.f32 %v3699, %v3699
    %v3708 = vmul.f32 %v3700, %v3700
    %v3709 = vmul.f32 %v3701, %v3701
    %v3710 = vmul.f32 %v3702, %v3702
    %v3711 = vmul.f32 %v3703, %v3703
    %v3712 = vmul.f32 %v3704, %v3704
    %v3713 = vsel %vm3623, %v3705, 0.0
    %3714 = vadd.xlane.f32.xlu0 %v3713
    %v3715 = vpop.xlane.xlu0 %3714
    %v3716 = vsel %vm3623, %v3706, 0.0
    %3717 = vadd.xlane.f32.xlu0 %v3716
    %v3718 = vpop.xlane.xlu0 %3717
    %v3719 = vsel %vm3623, %v3707, 0.0
    %3720 = vadd.xlane.f32.xlu0 %v3719
    %v3721 = vpop.xlane.xlu0 %3720
    %v3722 = vsel %vm3623, %v3708, 0.0
    %3723 = vadd.xlane.f32.xlu0 %v3722
    %v3724 = vpop.xlane.xlu0 %3723
    %v3725 = vsel %vm3623, %v3709, 0.0
    %3726 = vadd.xlane.f32.xlu0 %v3725
    %v3727 = vpop.xlane.xlu0 %3726
    %v3728 = vsel %vm3623, %v3710, 0.0
    %3729 = vadd.xlane.f32.xlu0 %v3728
    %v3730 = vpop.xlane.xlu0 %3729
    %v3731 = vsel %vm3623, %v3711, 0.0
    %3732 = vadd.xlane.f32.xlu0 %v3731
    %v3733 = vpop.xlane.xlu0 %3732
    %v3734 = vsel %vm3623, %v3712, 0.0
    %3735 = vadd.xlane.f32.xlu0 %v3734
    %v3736 = vpop.xlane.xlu0 %3735
    %v3737 = vadd.f32 %v3715, 0.0
    %v3738 = vadd.f32 %v3718, 0.0
    %v3739 = vadd.f32 %v3721, 0.0
    %v3740 = vadd.f32 %v3724, 0.0
    %v3741 = vadd.f32 %v3727, 0.0
    %v3742 = vadd.f32 %v3730, 0.0
    %v3743 = vadd.f32 %v3733, 0.0
    %v3744 = vadd.f32 %v3736, 0.0
    %v3745 = vsub.f32 %v3585, %v3689
    %v3746 = vsub.f32 %v3590, %v3690
    %v3747 = vsub.f32 %v3595, %v3691
    %v3748 = vsub.f32 %v3600, %v3692
    %v3749 = vsub.f32 %v3605, %v3693
    %v3750 = vsub.f32 %v3610, %v3694
    %v3751 = vsub.f32 %v3615, %v3695
    %v3752 = vsub.f32 %v3620, %v3696
    %v3753 = vmul.f32 %v3745, %v3745
    %v3754 = vmul.f32 %v3746, %v3746
    %v3755 = vmul.f32 %v3747, %v3747
    %v3756 = vmul.f32 %v3748, %v3748
    %v3757 = vmul.f32 %v3749, %v3749
    %v3758 = vmul.f32 %v3750, %v3750
    %v3759 = vmul.f32 %v3751, %v3751
    %v3760 = vmul.f32 %v3752, %v3752
    %v3761 = vsel %vm3623, %v3753, 0.0
    %3762 = vadd.xlane.f32.xlu0 %v3761
    %v3763 = vpop.xlane.xlu0 %3762
    %v3764 = vsel %vm3623, %v3754, 0.0
    %3765 = vadd.xlane.f32.xlu0 %v3764
    %v3766 = vpop.xlane.xlu0 %3765
    %v3767 = vsel %vm3623, %v3755, 0.0
    %3768 = vadd.xlane.f32.xlu0 %v3767
    %v3769 = vpop.xlane.xlu0 %3768
    %v3770 = vsel %vm3623, %v3756, 0.0
    %3771 = vadd.xlane.f32.xlu0 %v3770
    %v3772 = vpop.xlane.xlu0 %3771
    %v3773 = vsel %vm3623, %v3757, 0.0
    %3774 = vadd.xlane.f32.xlu0 %v3773
    %v3775 = vpop.xlane.xlu0 %3774
    %v3776 = vsel %vm3623, %v3758, 0.0
    %3777 = vadd.xlane.f32.xlu0 %v3776
    %v3778 = vpop.xlane.xlu0 %3777
    %v3779 = vsel %vm3623, %v3759, 0.0
    %3780 = vadd.xlane.f32.xlu0 %v3779
    %v3781 = vpop.xlane.xlu0 %3780
    %v3782 = vsel %vm3623, %v3760, 0.0
    %3783 = vadd.xlane.f32.xlu0 %v3782
    %v3784 = vpop.xlane.xlu0 %3783
    %v3785 = vadd.f32 %v3737, %v3763
    %v3786 = vadd.f32 %v3738, %v3766
    %v3787 = vadd.f32 %v3739, %v3769
    %v3788 = vadd.f32 %v3740, %v3772
    %v3789 = vadd.f32 %v3741, %v3775
    %v3790 = vadd.f32 %v3742, %v3778
    %v3791 = vadd.f32 %v3743, %v3781
    %v3792 = vadd.f32 %v3744, %v3784
    %v3793 = vmul.f32 %v3785, %v3688
    %v3794 = vmul.f32 %v3786, %v3688
    %v3795 = vmul.f32 %v3787, %v3688
    %v3796 = vmul.f32 %v3788, %v3688
    %v3797 = vmul.f32 %v3789, %v3688
    %v3798 = vmul.f32 %v3790, %v3688
    %v3799 = vmul.f32 %v3791, %v3688
    %v3800 = vmul.f32 %v3792, %v3688
    %v3801 = vadd.f32 %v3793, 1e-05
    %v3802 = vadd.f32 %v3794, 1e-05
    %v3803 = vadd.f32 %v3795, 1e-05
    %v3804 = vadd.f32 %v3796, 1e-05
    %v3805 = vadd.f32 %v3797, 1e-05
    %v3806 = vadd.f32 %v3798, 1e-05
    %v3807 = vadd.f32 %v3799, 1e-05
    %v3808 = vadd.f32 %v3800, 1e-05
    %v3809 = vrsqrt.pop %v3801
    %v3810 = vrsqrt.pop %v3802
    %v3811 = vrsqrt.pop %v3803
    %v3812 = vrsqrt.pop %v3804
    %v3813 = vrsqrt.pop %v3805
    %v3814 = vrsqrt.pop %v3806
    %v3815 = vrsqrt.pop %v3807
    %v3816 = vrsqrt.pop %v3808
    %v3817 = vld [vmem:[%s4] sm:$0xff]
    %v3818 = vld [vmem:[%s4 + $0x8] sm:$0xff]
    %v3819 = vld [vmem:[%s4 + $0x10] sm:$0xff]
    %v3820 = vld [vmem:[%s4 + $0x18] sm:$0xff]
    %v3821 = vld [vmem:[%s4 + $0x20] sm:$0xff]
    %v3822 = vld [vmem:[%s4 + $0x28] sm:$0xff]
    %v3823 = vld [vmem:[%s4 + $0x30] sm:$0xff]
    %v3824 = vld [vmem:[%s4 + $0x38] sm:$0xff]
    %v3825 = vmul.f32 %v3809, %v3817
    %v3826 = vmul.f32 %v3810, %v3818
    %v3827 = vmul.f32 %v3811, %v3819
    %v3828 = vmul.f32 %v3812, %v3820
    %v3829 = vmul.f32 %v3813, %v3821
    %v3830 = vmul.f32 %v3814, %v3822
    %v3831 = vmul.f32 %v3815, %v3823
    %v3832 = vmul.f32 %v3816, %v3824
    %v3833 = vld [vmem:[%s5] sm:$0xff]
    %v3834 = vld [vmem:[%s5 + $0x8] sm:$0xff]
    %v3835 = vld [vmem:[%s5 + $0x10] sm:$0xff]
    %v3836 = vld [vmem:[%s5 + $0x18] sm:$0xff]
    %v3837 = vld [vmem:[%s5 + $0x20] sm:$0xff]
    %v3838 = vld [vmem:[%s5 + $0x28] sm:$0xff]
    %v3839 = vld [vmem:[%s5 + $0x30] sm:$0xff]
    %v3840 = vld [vmem:[%s5 + $0x38] sm:$0xff]
    %3842 = vset.pattern.permute.xlu0 0
    %3843 = vperm.xlu0 %3842, %v3825
    %v3844 = vpop.permute.xlu0 %3843
    %3847 = vset.pattern.permute.xlu0 0
    %3848 = vperm.xlu0 %3847, %v3826
    %v3849 = vpop.permute.xlu0 %3848
    %3852 = vset.pattern.permute.xlu0 0
    %3853 = vperm.xlu0 %3852, %v3827
    %v3854 = vpop.permute.xlu0 %3853
    %3857 = vset.pattern.permute.xlu0 0
    %3858 = vperm.xlu0 %3857, %v3828
    %v3859 = vpop.permute.xlu0 %3858
    %3862 = vset.pattern.permute.xlu0 0
    %3863 = vperm.xlu0 %3862, %v3829
    %v3864 = vpop.permute.xlu0 %3863
    %3867 = vset.pattern.permute.xlu0 0
    %3868 = vperm.xlu0 %3867, %v3830
    %v3869 = vpop.permute.xlu0 %3868
    %3872 = vset.pattern.permute.xlu0 0
    %3873 = vperm.xlu0 %3872, %v3831
    %v3874 = vpop.permute.xlu0 %3873
    %3877 = vset.pattern.permute.xlu0 0
    %3878 = vperm.xlu0 %3877, %v3832
    %v3879 = vpop.permute.xlu0 %3878
    %v3881 = vmul.f32 %v3697, %v3844
    %v3882 = vmul.f32 %v3698, %v3849
    %v3883 = vmul.f32 %v3699, %v3854
    %v3884 = vmul.f32 %v3700, %v3859
    %v3885 = vmul.f32 %v3701, %v3864
    %v3886 = vmul.f32 %v3702, %v3869
    %v3887 = vmul.f32 %v3703, %v3874
    %v3888 = vmul.f32 %v3704, %v3879
    %3890 = vset.pattern.permute.xlu0 0
    %3891 = vperm.xlu0 %3890, %v3833
    %v3892 = vpop.permute.xlu0 %3891
    %3895 = vset.pattern.permute.xlu0 0
    %3896 = vperm.xlu0 %3895, %v3834
    %v3897 = vpop.permute.xlu0 %3896
    %3900 = vset.pattern.permute.xlu0 0
    %3901 = vperm.xlu0 %3900, %v3835
    %v3902 = vpop.permute.xlu0 %3901
    %3905 = vset.pattern.permute.xlu0 0
    %3906 = vperm.xlu0 %3905, %v3836
    %v3907 = vpop.permute.xlu0 %3906
    %3910 = vset.pattern.permute.xlu0 0
    %3911 = vperm.xlu0 %3910, %v3837
    %v3912 = vpop.permute.xlu0 %3911
    %3915 = vset.pattern.permute.xlu0 0
    %3916 = vperm.xlu0 %3915, %v3838
    %v3917 = vpop.permute.xlu0 %3916
    %3920 = vset.pattern.permute.xlu0 0
    %3921 = vperm.xlu0 %3920, %v3839
    %v3922 = vpop.permute.xlu0 %3921
    %3925 = vset.pattern.permute.xlu0 0
    %3926 = vperm.xlu0 %3925, %v3840
    %v3927 = vpop.permute.xlu0 %3926
    %v3929 = vadd.f32 %v3881, %v3892
    %v3930 = vadd.f32 %v3882, %v3897
    %v3931 = vadd.f32 %v3883, %v3902
    %v3932 = vadd.f32 %v3884, %v3907
    %v3933 = vadd.f32 %v3885, %v3912
    %v3934 = vadd.f32 %v3886, %v3917
    %v3935 = vadd.f32 %v3887, %v3922
    %v3936 = vadd.f32 %v3888, %v3927
    %vm3937 = vcmp.gt.f32.partialorder %v3929, 0.0
    %vm3938 = vcmp.gt.f32.partialorder %v3930, 0.0
    %vm3939 = vcmp.gt.f32.partialorder %v3931, 0.0
    %vm3940 = vcmp.gt.f32.partialorder %v3932, 0.0
    %vm3941 = vcmp.gt.f32.partialorder %v3933, 0.0
    %vm3942 = vcmp.gt.f32.partialorder %v3934, 0.0
    %vm3943 = vcmp.gt.f32.partialorder %v3935, 0.0
    %vm3944 = vcmp.gt.f32.partialorder %v3936, 0.0
    %v3945 = vmul.f32 %v3929, 0.2
    %v3946 = vmul.f32 %v3930, 0.2
    %v3947 = vmul.f32 %v3931, 0.2
    %v3948 = vmul.f32 %v3932, 0.2
    %v3949 = vmul.f32 %v3933, 0.2
    %v3950 = vmul.f32 %v3934, 0.2
    %v3951 = vmul.f32 %v3935, 0.2
    %v3952 = vmul.f32 %v3936, 0.2
    %v3953 = vsel %vm3937, %v3929, %v3945
    %v3954 = vsel %vm3938, %v3930, %v3946
    %v3955 = vsel %vm3939, %v3931, %v3947
    %v3956 = vsel %vm3940, %v3932, %v3948
    %v3957 = vsel %vm3941, %v3933, %v3949
    %v3958 = vsel %vm3942, %v3934, %v3950
    %v3959 = vsel %vm3943, %v3935, %v3951
    %v3960 = vsel %vm3944, %v3936, %v3952
    %v3961 = vmul.f32 %v3745, %v3844
    %v3962 = vmul.f32 %v3746, %v3849
    %v3963 = vmul.f32 %v3747, %v3854
    %v3964 = vmul.f32 %v3748, %v3859
    %v3965 = vmul.f32 %v3749, %v3864
    %v3966 = vmul.f32 %v3750, %v3869
    %v3967 = vmul.f32 %v3751, %v3874
    %v3968 = vmul.f32 %v3752, %v3879
    %v3969 = vadd.f32 %v3961, %v3892
    %v3970 = vadd.f32 %v3962, %v3897
    %v3971 = vadd.f32 %v3963, %v3902
    %v3972 = vadd.f32 %v3964, %v3907
    %v3973 = vadd.f32 %v3965, %v3912
    %v3974 = vadd.f32 %v3966, %v3917
    %v3975 = vadd.f32 %v3967, %v3922
    %v3976 = vadd.f32 %v3968, %v3927
    %vm3977 = vcmp.gt.f32.partialorder %v3969, 0.0
    %vm3978 = vcmp.gt.f32.partialorder %v3970, 0.0
    %vm3979 = vcmp.gt.f32.partialorder %v3971, 0.0
    %vm3980 = vcmp.gt.f32.partialorder %v3972, 0.0
    %vm3981 = vcmp.gt.f32.partialorder %v3973, 0.0
    %vm3982 = vcmp.gt.f32.partialorder %v3974, 0.0
    %vm3983 = vcmp.gt.f32.partialorder %v3975, 0.0
    %vm3984 = vcmp.gt.f32.partialorder %v3976, 0.0
    %v3985 = vmul.f32 %v3969, 0.2
    %v3986 = vmul.f32 %v3970, 0.2
    %v3987 = vmul.f32 %v3971, 0.2
    %v3988 = vmul.f32 %v3972, 0.2
    %v3989 = vmul.f32 %v3973, 0.2
    %v3990 = vmul.f32 %v3974, 0.2
    %v3991 = vmul.f32 %v3975, 0.2
    %v3992 = vmul.f32 %v3976, 0.2
    %v3993 = vsel %vm3977, %v3969, %v3985
    %v3994 = vsel %vm3978, %v3970, %v3986
    %v3995 = vsel %vm3979, %v3971, %v3987
    %v3996 = vsel %vm3980, %v3972, %v3988
    %v3997 = vsel %vm3981, %v3973, %v3989
    %v3998 = vsel %vm3982, %v3974, %v3990
    %v3999 = vsel %vm3983, %v3975, %v3991
    %v4000 = vsel %vm3984, %v3976, %v3992
    %v4001 = vshra.s32 %v335, 2
    %v4002 = vand.u32 %v335, 3
    %v4003 = vshll.u32 %v4001, 1
    %v4004 = vadd.s32 %v4003, 4294967295
    %v4005 = vshll.u32 %v4002, 1
    %v4006 = vadd.s32 %v4005, 4294967295
    %vm4007 = vcmp.ge.s32.totalorder %v4004, 0
    %vm4008 = vcmp.lt.s32.totalorder %v4004, 8
    %vm4009 = vmand %vm4007, %vm4008
    %vm4010 = vcmp.ge.s32.totalorder %v4006, 0
    %vm4011 = vmand %vm4009, %vm4010
    %vm4012 = vcmp.lt.s32.totalorder %v4006, 8
    %vm4013 = vmand %vm4011, %vm4012
    %v4014 = vshll.u32 %v4004, 3
    %v4015 = vadd.s32 %v4014, %v4006
    %v4016 = vsel %vm4013, %v4015, 4294967295
    %vm4017 = vcmp.eq.s32.totalorder %v339, %v4016
    %vm4018 = vcmp.eq.s32.totalorder %v340, %v4016
    %vm4019 = vcmp.eq.s32.totalorder %v341, %v4016
    %vm4020 = vcmp.eq.s32.totalorder %v342, %v4016
    %vm4021 = vcmp.eq.s32.totalorder %v343, %v4016
    %vm4022 = vcmp.eq.s32.totalorder %v344, %v4016
    %vm4023 = vcmp.eq.s32.totalorder %v345, %v4016
    %vm4024 = vcmp.eq.s32.totalorder %v346, %v4016
    %v4025 = vsel %vm4017, 1.0, 0.0
    %v4026 = vsel %vm4018, 1.0, 0.0
    %v4027 = vsel %vm4019, 1.0, 0.0
    %v4028 = vsel %vm4020, 1.0, 0.0
    %v4029 = vsel %vm4021, 1.0, 0.0
    %v4030 = vsel %vm4022, 1.0, 0.0
    %v4031 = vsel %vm4023, 1.0, 0.0
    %v4032 = vsel %vm4024, 1.0, 0.0
    %v4034 = vsel %vm3623, %v3953, 0
    %v4037 = vsel %vm3623, %v3954, 0
    %v4040 = vsel %vm3623, %v3955, 0
    %v4043 = vsel %vm3623, %v3956, 0
    %v4046 = vsel %vm3623, %v3957, 0
    %v4049 = vsel %vm3623, %v3958, 0
    %v4052 = vsel %vm3623, %v3959, 0
    %v4055 = vsel %vm3623, %v3960, 0
    %v4058 = vsel %vm3623, %v3993, 0
    %v4061 = vsel %vm3623, %v3994, 0
    %v4064 = vsel %vm3623, %v3995, 0
    %v4067 = vsel %vm3623, %v3996, 0
    %v4070 = vsel %vm3623, %v3997, 0
    %v4073 = vsel %vm3623, %v3998, 0
    %v4076 = vsel %vm3623, %v3999, 0
    %v4079 = vsel %vm3623, %v4000, 0
    %4081 = vmatprep.subr.mxu0 0.0
    %4082 = vmatpush1.msra.mxu0 %v4025
    %4083 = vmatprep.subr.mxu0 0.0
    %4084 = vmatpush1.msra.mxu0 %v4026
    %4085 = vmatprep.subr.mxu0 0.0
    %4086 = vmatpush1.msra.mxu0 %v4027
    %4087 = vmatprep.subr.mxu0 0.0
    %4088 = vmatpush1.msra.mxu0 %v4028
    %4089 = vmatprep.subr.mxu0 0.0
    %4090 = vmatpush1.msra.mxu0 %v4029
    %4091 = vmatprep.subr.mxu0 0.0
    %4092 = vmatpush1.msra.mxu0 %v4030
    %4093 = vmatprep.subr.mxu0 0.0
    %4094 = vmatpush1.msra.mxu0 %v4031
    %4095 = vmatprep.subr.mxu0 0.0
    %4096 = vmatpush1.msra.mxu0 %v4032
    %4097 = vmatprep.subr.mxu0 0.0
    %4098 = vmatpush1.msra.mxu0 0.0
    %4099 = vmatprep.subr.mxu0 0.0
    %4100 = vmatpush1.msra.mxu0 0.0
    %4101 = vmatprep.subr.mxu0 0.0
    %4102 = vmatpush1.msra.mxu0 0.0
    %4103 = vmatprep.subr.mxu0 0.0
    %4104 = vmatpush1.msra.mxu0 0.0
    %4105 = vmatprep.subr.mxu0 0.0
    %4106 = vmatpush1.msra.mxu0 0.0
    %4107 = vmatprep.subr.mxu0 0.0
    %4108 = vmatpush1.msra.mxu0 0.0
    %4109 = vmatprep.subr.mxu0 0.0
    %4110 = vmatpush1.msra.mxu0 0.0
    %4111 = vmatprep.subr.mxu0 0.0
    %4112 = vmatpush1.msra.mxu0 0.0
    %4113 = vmatprep.subr.mxu0 0.0
    %4114 = vmatpush1.msra.mxu0 0.0
    %4115 = vmatprep.subr.mxu0 0.0
    %4116 = vmatpush1.msra.mxu0 0.0
    %4117 = vmatprep.subr.mxu0 0.0
    %4118 = vmatpush1.msra.mxu0 0.0
    %4119 = vmatprep.subr.mxu0 0.0
    %4120 = vmatpush1.msra.mxu0 0.0
    %4121 = vmatprep.subr.mxu0 0.0
    %4122 = vmatpush1.msra.mxu0 0.0
    %4123 = vmatprep.subr.mxu0 0.0
    %4124 = vmatpush1.msra.mxu0 0.0
    %4125 = vmatprep.subr.mxu0 0.0
    %4126 = vmatpush1.msra.mxu0 0.0
    %4127 = vmatprep.subr.mxu0 0.0
    %4128 = vmatpush1.msra.mxu0 0.0
    %4129 = vmatprep.subr.mxu0 0.0
    %4130 = vmatpush1.msra.mxu0 0.0
    %4131 = vmatprep.subr.mxu0 0.0
    %4132 = vmatpush1.msra.mxu0 0.0
    %4133 = vmatprep.subr.mxu0 0.0
    %4134 = vmatpush1.msra.mxu0 0.0
    %4135 = vmatprep.subr.mxu0 0.0
    %4136 = vmatpush1.msra.mxu0 0.0
    %4137 = vmatprep.subr.mxu0 0.0
    %4138 = vmatpush1.msra.mxu0 0.0
    %4139 = vmatprep.subr.mxu0 0.0
    %4140 = vmatpush1.msra.mxu0 0.0
    %4141 = vmatprep.subr.mxu0 0.0
    %4142 = vmatpush1.msra.mxu0 0.0
    %4143 = vmatprep.subr.mxu0 0.0
    %4144 = vmatpush1.msra.mxu0 0.0
    %4145 = vmatprep.mubr.f32.mxu0 0.0
    %4146 = vmatmul.mubr.f32.gmra.mrb[0].mxu0 %v4034
    %v4147 = vpop.f32.mrb[0].mxu0
    %v4148 = vadd.f32 0.0, %v4147
    %v4149 = vpop.f32.mrb[0].mxu0
    %4150 = vmatprep.mubr.f32.mxu0 0.0
    %4151 = vmatmul.mubr.f32.gmra.mrb[0].mxu0 %v4037
    %v4152 = vpop.f32.mrb[0].mxu0
    %v4153 = vadd.f32 0.0, %v4152
    %v4154 = vpop.f32.mrb[0].mxu0
    %4155 = vmatprep.mubr.f32.mxu0 0.0
    %4156 = vmatmul.mubr.f32.gmra.mrb[0].mxu0 %v4040
    %v4157 = vpop.f32.mrb[0].mxu0
    %v4158 = vadd.f32 0.0, %v4157
    %v4159 = vpop.f32.mrb[0].mxu0
    %4160 = vmatprep.mubr.f32.mxu0 0.0
    %4161 = vmatmul.mubr.f32.gmra.mrb[0].mxu0 %v4043
    %v4162 = vpop.f32.mrb[0].mxu0
    %v4163 = vadd.f32 0.0, %v4162
    %v4164 = vpop.f32.mrb[0].mxu0
    %4165 = vmatprep.mubr.f32.mxu0 0.0
    %4166 = vmatmul.mubr.f32.gmra.mrb[0].mxu0 %v4046
    %v4167 = vpop.f32.mrb[0].mxu0
    %v4168 = vadd.f32 0.0, %v4167
    %v4169 = vpop.f32.mrb[0].mxu0
    %4170 = vmatprep.mubr.f32.mxu0 0.0
    %4171 = vmatmul.mubr.f32.gmra.mrb[0].mxu0 %v4049
    %v4172 = vpop.f32.mrb[0].mxu0
    %v4173 = vadd.f32 0.0, %v4172
    %v4174 = vpop.f32.mrb[0].mxu0
    %4175 = vmatprep.mubr.f32.mxu0 0.0
    %4176 = vmatmul.mubr.f32.gmra.mrb[0].mxu0 %v4052
    %v4177 = vpop.f32.mrb[0].mxu0
    %v4178 = vadd.f32 0.0, %v4177
    %v4179 = vpop.f32.mrb[0].mxu0
    %4180 = vmatprep.mubr.f32.mxu0 0.0
    %4181 = vmatmul.mubr.f32.gmra.mrb[0].mxu0 %v4055
    %v4182 = vpop.f32.mrb[0].mxu0
    %v4183 = vadd.f32 0.0, %v4182
    %v4184 = vpop.f32.mrb[0].mxu0
    %4185 = vmatprep.mubr.f32.mxu0 0.0
    %4186 = vmatmul.mubr.f32.gmra.mrb[0].mxu0 %v4058
    %v4187 = vpop.f32.mrb[0].mxu0
    %v4188 = vadd.f32 0.0, %v4187
    %v4189 = vpop.f32.mrb[0].mxu0
    %4190 = vmatprep.mubr.f32.mxu0 0.0
    %4191 = vmatmul.mubr.f32.gmra.mrb[0].mxu0 %v4061
    %v4192 = vpop.f32.mrb[0].mxu0
    %v4193 = vadd.f32 0.0, %v4192
    %v4194 = vpop.f32.mrb[0].mxu0
    %4195 = vmatprep.mubr.f32.mxu0 0.0
    %4196 = vmatmul.mubr.f32.gmra.mrb[0].mxu0 %v4064
    %v4197 = vpop.f32.mrb[0].mxu0
    %v4198 = vadd.f32 0.0, %v4197
    %v4199 = vpop.f32.mrb[0].mxu0
    %4200 = vmatprep.mubr.f32.mxu0 0.0
    %4201 = vmatmul.mubr.f32.gmra.mrb[0].mxu0 %v4067
    %v4202 = vpop.f32.mrb[0].mxu0
    %v4203 = vadd.f32 0.0, %v4202
    %v4204 = vpop.f32.mrb[0].mxu0
    %4205 = vmatprep.mubr.f32.mxu0 0.0
    %4206 = vmatmul.mubr.f32.gmra.mrb[0].mxu0 %v4070
    %v4207 = vpop.f32.mrb[0].mxu0
    %v4208 = vadd.f32 0.0, %v4207
    %v4209 = vpop.f32.mrb[0].mxu0
    %4210 = vmatprep.mubr.f32.mxu0 0.0
    %4211 = vmatmul.mubr.f32.gmra.mrb[0].mxu0 %v4073
    %v4212 = vpop.f32.mrb[0].mxu0
    %v4213 = vadd.f32 0.0, %v4212
    %v4214 = vpop.f32.mrb[0].mxu0
    %4215 = vmatprep.mubr.f32.mxu0 0.0
    %4216 = vmatmul.mubr.f32.gmra.mrb[0].mxu0 %v4076
    %v4217 = vpop.f32.mrb[0].mxu0
    %v4218 = vadd.f32 0.0, %v4217
    %v4219 = vpop.f32.mrb[0].mxu0
    %4220 = vmatprep.mubr.f32.mxu0 0.0
    %4221 = vmatmul.mubr.f32.gmra.mrb[0].mxu0 %v4079
    %v4222 = vpop.f32.mrb[0].mxu0
    %v4223 = vadd.f32 0.0, %v4222
    %v4224 = vpop.f32.mrb[0].mxu0
    %4225 = vdwg.mxu0
    %vm4226 = vcmp.ge.s32.totalorder %v4005, 0
    %vm4227 = vmand %vm4009, %vm4226
    %vm4228 = vcmp.lt.s32.totalorder %v4005, 8
    %vm4229 = vmand %vm4227, %vm4228
    %v4230 = vadd.s32 %v4014, %v4005
    %v4231 = vsel %vm4229, %v4230, 4294967295
    %vm4232 = vcmp.eq.s32.totalorder %v339, %v4231
    %vm4233 = vcmp.eq.s32.totalorder %v340, %v4231
    %vm4234 = vcmp.eq.s32.totalorder %v341, %v4231
    %vm4235 = vcmp.eq.s32.totalorder %v342, %v4231
    %vm4236 = vcmp.eq.s32.totalorder %v343, %v4231
    %vm4237 = vcmp.eq.s32.totalorder %v344, %v4231
    %vm4238 = vcmp.eq.s32.totalorder %v345, %v4231
    %vm4239 = vcmp.eq.s32.totalorder %v346, %v4231
    %v4240 = vsel %vm4232, 1.0, 0.0
    %v4241 = vsel %vm4233, 1.0, 0.0
    %v4242 = vsel %vm4234, 1.0, 0.0
    %v4243 = vsel %vm4235, 1.0, 0.0
    %v4244 = vsel %vm4236, 1.0, 0.0
    %v4245 = vsel %vm4237, 1.0, 0.0
    %v4246 = vsel %vm4238, 1.0, 0.0
    %v4247 = vsel %vm4239, 1.0, 0.0
    %4248 = vmatprep.subr.mxu0 0.0
    %4249 = vmatpush1.msra.mxu0 %v4240
    %4250 = vmatprep.subr.mxu0 0.0
    %4251 = vmatpush1.msra.mxu0 %v4241
    %4252 = vmatprep.subr.mxu0 0.0
    %4253 = vmatpush1.msra.mxu0 %v4242
    %4254 = vmatprep.subr.mxu0 0.0
    %4255 = vmatpush1.msra.mxu0 %v4243
    %4256 = vmatprep.subr.mxu0 0.0
    %4257 = vmatpush1.msra.mxu0 %v4244
    %4258 = vmatprep.subr.mxu0 0.0
    %4259 = vmatpush1.msra.mxu0 %v4245
    %4260 = vmatprep.subr.mxu0 0.0
    %4261 = vmatpush1.msra.mxu0 %v4246
    %4262 = vmatprep.subr.mxu0 0.0
    %4263 = vmatpush1.msra.mxu0 %v4247
    %4264 = vmatprep.subr.mxu0 0.0
    %4265 = vmatpush1.msra.mxu0 0.0
    %4266 = vmatprep.subr.mxu0 0.0
    %4267 = vmatpush1.msra.mxu0 0.0
    %4268 = vmatprep.subr.mxu0 0.0
    %4269 = vmatpush1.msra.mxu0 0.0
    %4270 = vmatprep.subr.mxu0 0.0
    %4271 = vmatpush1.msra.mxu0 0.0
    %4272 = vmatprep.subr.mxu0 0.0
    %4273 = vmatpush1.msra.mxu0 0.0
    %4274 = vmatprep.subr.mxu0 0.0
    %4275 = vmatpush1.msra.mxu0 0.0
    %4276 = vmatprep.subr.mxu0 0.0
    %4277 = vmatpush1.msra.mxu0 0.0
    %4278 = vmatprep.subr.mxu0 0.0
    %4279 = vmatpush1.msra.mxu0 0.0
    %4280 = vmatprep.subr.mxu0 0.0
    %4281 = vmatpush1.msra.mxu0 0.0
    %4282 = vmatprep.subr.mxu0 0.0
    %4283 = vmatpush1.msra.mxu0 0.0
    %4284 = vmatprep.subr.mxu0 0.0
    %4285 = vmatpush1.msra.mxu0 0.0
    %4286 = vmatprep.subr.mxu0 0.0
    %4287 = vmatpush1.msra.mxu0 0.0
    %4288 = vmatprep.subr.mxu0 0.0
    %4289 = vmatpush1.msra.mxu0 0.0
    %4290 = vmatprep.subr.mxu0 0.0
    %4291 = vmatpush1.msra.mxu0 0.0
    %4292 = vmatprep.subr.mxu0 0.0
    %4293 = vmatpush1.msra.mxu0 0.0
    %4294 = vmatprep.subr.mxu0 0.0
    %4295 = vmatpush1.msra.mxu0 0.0
    %4296 = vmatprep.subr.mxu0 0.0
    %4297 = vmatpush1.msra.mxu0 0.0
    %4298 = vmatprep.subr.mxu0 0.0
    %4299 = vmatpush1.msra.mxu0 0.0
    %4300 = vmatprep.subr.mxu0 0.0
    %4301 = vmatpush1.msra.mxu0 0.0
    %4302 = vmatprep.subr.mxu0 0.0
    %4303 = vmatpush1.msra.mxu0 0.0
    %4304 = vmatprep.subr.mxu0 0.0
    %4305 = vmatpush1.msra.mxu0 0.0
    %4306 = vmatprep.subr.mxu0 0.0
    %4307 = vmatpush1.msra.mxu0 0.0
    %4308 = vmatprep.subr.mxu0 0.0
    %4309 = vmatpush1.msra.mxu0 0.0
    %4310 = vmatprep.subr.mxu0 0.0
    %4311 = vmatpush1.msra.mxu0 0.0
    %4312 = vmatprep.mubr.f32.mxu0 0.0
    %4313 = vmatmul.mubr.f32.gmra.mrb[0].mxu0 %v4034
    %v4314 = vpop.f32.mrb[0].mxu0
    %v4315 = vadd.f32 0.0, %v4314
    %v4316 = vpop.f32.mrb[0].mxu0
    %4317 = vmatprep.mubr.f32.mxu0 0.0
    %4318 = vmatmul.mubr.f32.gmra.mrb[0].mxu0 %v4037
    %v4319 = vpop.f32.mrb[0].mxu0
    %v4320 = vadd.f32 0.0, %v4319
    %v4321 = vpop.f32.mrb[0].mxu0
    %4322 = vmatprep.mubr.f32.mxu0 0.0
    %4323 = vmatmul.mubr.f32.gmra.mrb[0].mxu0 %v4040
    %v4324 = vpop.f32.mrb[0].mxu0
    %v4325 = vadd.f32 0.0, %v4324
    %v4326 = vpop.f32.mrb[0].mxu0
    %4327 = vmatprep.mubr.f32.mxu0 0.0
    %4328 = vmatmul.mubr.f32.gmra.mrb[0].mxu0 %v4043
    %v4329 = vpop.f32.mrb[0].mxu0
    %v4330 = vadd.f32 0.0, %v4329
    %v4331 = vpop.f32.mrb[0].mxu0
    %4332 = vmatprep.mubr.f32.mxu0 0.0
    %4333 = vmatmul.mubr.f32.gmra.mrb[0].mxu0 %v4046
    %v4334 = vpop.f32.mrb[0].mxu0
    %v4335 = vadd.f32 0.0, %v4334
    %v4336 = vpop.f32.mrb[0].mxu0
    %4337 = vmatprep.mubr.f32.mxu0 0.0
    %4338 = vmatmul.mubr.f32.gmra.mrb[0].mxu0 %v4049
    %v4339 = vpop.f32.mrb[0].mxu0
    %v4340 = vadd.f32 0.0, %v4339
    %v4341 = vpop.f32.mrb[0].mxu0
    %4342 = vmatprep.mubr.f32.mxu0 0.0
    %4343 = vmatmul.mubr.f32.gmra.mrb[0].mxu0 %v4052
    %v4344 = vpop.f32.mrb[0].mxu0
    %v4345 = vadd.f32 0.0, %v4344
    %v4346 = vpop.f32.mrb[0].mxu0
    %4347 = vmatprep.mubr.f32.mxu0 0.0
    %4348 = vmatmul.mubr.f32.gmra.mrb[0].mxu0 %v4055
    %v4349 = vpop.f32.mrb[0].mxu0
    %v4350 = vadd.f32 0.0, %v4349
    %v4351 = vpop.f32.mrb[0].mxu0
    %4352 = vmatprep.mubr.f32.mxu0 0.0
    %4353 = vmatmul.mubr.f32.gmra.mrb[0].mxu0 %v4058
    %v4354 = vpop.f32.mrb[0].mxu0
    %v4355 = vadd.f32 0.0, %v4354
    %v4356 = vpop.f32.mrb[0].mxu0
    %4357 = vmatprep.mubr.f32.mxu0 0.0
    %4358 = vmatmul.mubr.f32.gmra.mrb[0].mxu0 %v4061
    %v4359 = vpop.f32.mrb[0].mxu0
    %v4360 = vadd.f32 0.0, %v4359
    %v4361 = vpop.f32.mrb[0].mxu0
    %4362 = vmatprep.mubr.f32.mxu0 0.0
    %4363 = vmatmul.mubr.f32.gmra.mrb[0].mxu0 %v4064
    %v4364 = vpop.f32.mrb[0].mxu0
    %v4365 = vadd.f32 0.0, %v4364
    %v4366 = vpop.f32.mrb[0].mxu0
    %4367 = vmatprep.mubr.f32.mxu0 0.0
    %4368 = vmatmul.mubr.f32.gmra.mrb[0].mxu0 %v4067
    %v4369 = vpop.f32.mrb[0].mxu0
    %v4370 = vadd.f32 0.0, %v4369
    %v4371 = vpop.f32.mrb[0].mxu0
    %4372 = vmatprep.mubr.f32.mxu0 0.0
    %4373 = vmatmul.mubr.f32.gmra.mrb[0].mxu0 %v4070
    %v4374 = vpop.f32.mrb[0].mxu0
    %v4375 = vadd.f32 0.0, %v4374
    %v4376 = vpop.f32.mrb[0].mxu0
    %4377 = vmatprep.mubr.f32.mxu0 0.0
    %4378 = vmatmul.mubr.f32.gmra.mrb[0].mxu0 %v4073
    %v4379 = vpop.f32.mrb[0].mxu0
    %v4380 = vadd.f32 0.0, %v4379
    %v4381 = vpop.f32.mrb[0].mxu0
    %4382 = vmatprep.mubr.f32.mxu0 0.0
    %4383 = vmatmul.mubr.f32.gmra.mrb[0].mxu0 %v4076
    %v4384 = vpop.f32.mrb[0].mxu0
    %v4385 = vadd.f32 0.0, %v4384
    %v4386 = vpop.f32.mrb[0].mxu0
    %4387 = vmatprep.mubr.f32.mxu0 0.0
    %4388 = vmatmul.mubr.f32.gmra.mrb[0].mxu0 %v4079
    %v4389 = vpop.f32.mrb[0].mxu0
    %v4390 = vadd.f32 0.0, %v4389
    %v4391 = vpop.f32.mrb[0].mxu0
    %4392 = vdwg.mxu0
    %v4393 = vadd.s32 %v4005, 1
    %vm4394 = vcmp.ge.s32.totalorder %v4393, 0
    %vm4395 = vmand %vm4009, %vm4394
    %vm4396 = vcmp.lt.s32.totalorder %v4393, 8
    %vm4397 = vmand %vm4395, %vm4396
    %v4398 = vadd.s32 %v4014, %v4393
    %v4399 = vsel %vm4397, %v4398, 4294967295
    %vm4400 = vcmp.eq.s32.totalorder %v339, %v4399
    %vm4401 = vcmp.eq.s32.totalorder %v340, %v4399
    %vm4402 = vcmp.eq.s32.totalorder %v341, %v4399
    %vm4403 = vcmp.eq.s32.totalorder %v342, %v4399
    %vm4404 = vcmp.eq.s32.totalorder %v343, %v4399
    %vm4405 = vcmp.eq.s32.totalorder %v344, %v4399
    %vm4406 = vcmp.eq.s32.totalorder %v345, %v4399
    %vm4407 = vcmp.eq.s32.totalorder %v346, %v4399
    %v4408 = vsel %vm4400, 1.0, 0.0
    %v4409 = vsel %vm4401, 1.0, 0.0
    %v4410 = vsel %vm4402, 1.0, 0.0
    %v4411 = vsel %vm4403, 1.0, 0.0
    %v4412 = vsel %vm4404, 1.0, 0.0
    %v4413 = vsel %vm4405, 1.0, 0.0
    %v4414 = vsel %vm4406, 1.0, 0.0
    %v4415 = vsel %vm4407, 1.0, 0.0
    %4416 = vmatprep.subr.mxu0 0.0
    %4417 = vmatpush1.msra.mxu0 %v4408
    %4418 = vmatprep.subr.mxu0 0.0
    %4419 = vmatpush1.msra.mxu0 %v4409
    %4420 = vmatprep.subr.mxu0 0.0
    %4421 = vmatpush1.msra.mxu0 %v4410
    %4422 = vmatprep.subr.mxu0 0.0
    %4423 = vmatpush1.msra.mxu0 %v4411
    %4424 = vmatprep.subr.mxu0 0.0
    %4425 = vmatpush1.msra.mxu0 %v4412
    %4426 = vmatprep.subr.mxu0 0.0
    %4427 = vmatpush1.msra.mxu0 %v4413
    %4428 = vmatprep.subr.mxu0 0.0
    %4429 = vmatpush1.msra.mxu0 %v4414
    %4430 = vmatprep.subr.mxu0 0.0
    %4431 = vmatpush1.msra.mxu0 %v4415
    %4432 = vmatprep.subr.mxu0 0.0
    %4433 = vmatpush1.msra.mxu0 0.0
    %4434 = vmatprep.subr.mxu0 0.0
    %4435 = vmatpush1.msra.mxu0 0.0
    %4436 = vmatprep.subr.mxu0 0.0
    %4437 = vmatpush1.msra.mxu0 0.0
    %4438 = vmatprep.subr.mxu0 0.0
    %4439 = vmatpush1.msra.mxu0 0.0
    %4440 = vmatprep.subr.mxu0 0.0
    %4441 = vmatpush1.msra.mxu0 0.0
    %4442 = vmatprep.subr.mxu0 0.0
    %4443 = vmatpush1.msra.mxu0 0.0
    %4444 = vmatprep.subr.mxu0 0.0
    %4445 = vmatpush1.msra.mxu0 0.0
    %4446 = vmatprep.subr.mxu0 0.0
    %4447 = vmatpush1.msra.mxu0 0.0
    %4448 = vmatprep.subr.mxu0 0.0
    %4449 = vmatpush1.msra.mxu0 0.0
    %4450 = vmatprep.subr.mxu0 0.0
    %4451 = vmatpush1.msra.mxu0 0.0
    %4452 = vmatprep.subr.mxu0 0.0
    %4453 = vmatpush1.msra.mxu0 0.0
    %4454 = vmatprep.subr.mxu0 0.0
    %4455 = vmatpush1.msra.mxu0 0.0
    %4456 = vmatprep.subr.mxu0 0.0
    %4457 = vmatpush1.msra.mxu0 0.0
    %4458 = vmatprep.subr.mxu0 0.0
    %4459 = vmatpush1.msra.mxu0 0.0
    %4460 = vmatprep.subr.mxu0 0.0
    %4461 = vmatpush1.msra.mxu0 0.0
    %4462 = vmatprep.subr.mxu0 0.0
    %4463 = vmatpush1.msra.mxu0 0.0
    %4464 = vmatprep.subr.mxu0 0.0
    %4465 = vmatpush1.msra.mxu0 0.0
    %4466 = vmatprep.subr.mxu0 0.0
    %4467 = vmatpush1.msra.mxu0 0.0
    %4468 = vmatprep.subr.mxu0 0.0
    %4469 = vmatpush1.msra.mxu0 0.0
    %4470 = vmatprep.subr.mxu0 0.0
    %4471 = vmatpush1.msra.mxu0 0.0
    %4472 = vmatprep.subr.mxu0 0.0
    %4473 = vmatpush1.msra.mxu0 0.0
    %4474 = vmatprep.subr.mxu0 0.0
    %4475 = vmatpush1.msra.mxu0 0.0
    %4476 = vmatprep.subr.mxu0 0.0
    %4477 = vmatpush1.msra.mxu0 0.0
    %4478 = vmatprep.subr.mxu0 0.0
    %4479 = vmatpush1.msra.mxu0 0.0
    %4480 = vmatprep.mubr.f32.mxu0 0.0
    %4481 = vmatmul.mubr.f32.gmra.mrb[0].mxu0 %v4034
    %v4482 = vpop.f32.mrb[0].mxu0
    %v4483 = vadd.f32 0.0, %v4482
    %v4484 = vpop.f32.mrb[0].mxu0
    %4485 = vmatprep.mubr.f32.mxu0 0.0
    %4486 = vmatmul.mubr.f32.gmra.mrb[0].mxu0 %v4037
    %v4487 = vpop.f32.mrb[0].mxu0
    %v4488 = vadd.f32 0.0, %v4487
    %v4489 = vpop.f32.mrb[0].mxu0
    %4490 = vmatprep.mubr.f32.mxu0 0.0
    %4491 = vmatmul.mubr.f32.gmra.mrb[0].mxu0 %v4040
    %v4492 = vpop.f32.mrb[0].mxu0
    %v4493 = vadd.f32 0.0, %v4492
    %v4494 = vpop.f32.mrb[0].mxu0
    %4495 = vmatprep.mubr.f32.mxu0 0.0
    %4496 = vmatmul.mubr.f32.gmra.mrb[0].mxu0 %v4043
    %v4497 = vpop.f32.mrb[0].mxu0
    %v4498 = vadd.f32 0.0, %v4497
    %v4499 = vpop.f32.mrb[0].mxu0
    %4500 = vmatprep.mubr.f32.mxu0 0.0
    %4501 = vmatmul.mubr.f32.gmra.mrb[0].mxu0 %v4046
    %v4502 = vpop.f32.mrb[0].mxu0
    %v4503 = vadd.f32 0.0, %v4502
    %v4504 = vpop.f32.mrb[0].mxu0
    %4505 = vmatprep.mubr.f32.mxu0 0.0
    %4506 = vmatmul.mubr.f32.gmra.mrb[0].mxu0 %v4049
    %v4507 = vpop.f32.mrb[0].mxu0
    %v4508 = vadd.f32 0.0, %v4507
    %v4509 = vpop.f32.mrb[0].mxu0
    %4510 = vmatprep.mubr.f32.mxu0 0.0
    %4511 = vmatmul.mubr.f32.gmra.mrb[0].mxu0 %v4052
    %v4512 = vpop.f32.mrb[0].mxu0
    %v4513 = vadd.f32 0.0, %v4512
    %v4514 = vpop.f32.mrb[0].mxu0
    %4515 = vmatprep.mubr.f32.mxu0 0.0
    %4516 = vmatmul.mubr.f32.gmra.mrb[0].mxu0 %v4055
    %v4517 = vpop.f32.mrb[0].mxu0
    %v4518 = vadd.f32 0.0, %v4517
    %v4519 = vpop.f32.mrb[0].mxu0
    %4520 = vmatprep.mubr.f32.mxu0 0.0
    %4521 = vmatmul.mubr.f32.gmra.mrb[0].mxu0 %v4058
    %v4522 = vpop.f32.mrb[0].mxu0
    %v4523 = vadd.f32 0.0, %v4522
    %v4524 = vpop.f32.mrb[0].mxu0
    %4525 = vmatprep.mubr.f32.mxu0 0.0
    %4526 = vmatmul.mubr.f32.gmra.mrb[0].mxu0 %v4061
    %v4527 = vpop.f32.mrb[0].mxu0
    %v4528 = vadd.f32 0.0, %v4527
    %v4529 = vpop.f32.mrb[0].mxu0
    %4530 = vmatprep.mubr.f32.mxu0 0.0
    %4531 = vmatmul.mubr.f32.gmra.mrb[0].mxu0 %v4064
    %v4532 = vpop.f32.mrb[0].mxu0
    %v4533 = vadd.f32 0.0, %v4532
    %v4534 = vpop.f32.mrb[0].mxu0
    %4535 = vmatprep.mubr.f32.mxu0 0.0
    %4536 = vmatmul.mubr.f32.gmra.mrb[0].mxu0 %v4067
    %v4537 = vpop.f32.mrb[0].mxu0
    %v4538 = vadd.f32 0.0, %v4537
    %v4539 = vpop.f32.mrb[0].mxu0
    %4540 = vmatprep.mubr.f32.mxu0 0.0
    %4541 = vmatmul.mubr.f32.gmra.mrb[0].mxu0 %v4070
    %v4542 = vpop.f32.mrb[0].mxu0
    %v4543 = vadd.f32 0.0, %v4542
    %v4544 = vpop.f32.mrb[0].mxu0
    %4545 = vmatprep.mubr.f32.mxu0 0.0
    %4546 = vmatmul.mubr.f32.gmra.mrb[0].mxu0 %v4073
    %v4547 = vpop.f32.mrb[0].mxu0
    %v4548 = vadd.f32 0.0, %v4547
    %v4549 = vpop.f32.mrb[0].mxu0
    %4550 = vmatprep.mubr.f32.mxu0 0.0
    %4551 = vmatmul.mubr.f32.gmra.mrb[0].mxu0 %v4076
    %v4552 = vpop.f32.mrb[0].mxu0
    %v4553 = vadd.f32 0.0, %v4552
    %v4554 = vpop.f32.mrb[0].mxu0
    %4555 = vmatprep.mubr.f32.mxu0 0.0
    %4556 = vmatmul.mubr.f32.gmra.mrb[0].mxu0 %v4079
    %v4557 = vpop.f32.mrb[0].mxu0
    %v4558 = vadd.f32 0.0, %v4557
    %v4559 = vpop.f32.mrb[0].mxu0
    %4560 = vdwg.mxu0
    %v4561 = vadd.s32 %v4005, 2
    %vm4562 = vcmp.ge.s32.totalorder %v4561, 0
    %vm4563 = vmand %vm4009, %vm4562
    %vm4564 = vcmp.lt.s32.totalorder %v4561, 8
    %vm4565 = vmand %vm4563, %vm4564
    %v4566 = vadd.s32 %v4014, %v4561
    %v4567 = vsel %vm4565, %v4566, 4294967295
    %vm4568 = vcmp.eq.s32.totalorder %v339, %v4567
    %vm4569 = vcmp.eq.s32.totalorder %v340, %v4567
    %vm4570 = vcmp.eq.s32.totalorder %v341, %v4567
    %vm4571 = vcmp.eq.s32.totalorder %v342, %v4567
    %vm4572 = vcmp.eq.s32.totalorder %v343, %v4567
    %vm4573 = vcmp.eq.s32.totalorder %v344, %v4567
    %vm4574 = vcmp.eq.s32.totalorder %v345, %v4567
    %vm4575 = vcmp.eq.s32.totalorder %v346, %v4567
    %v4576 = vsel %vm4568, 1.0, 0.0
    %v4577 = vsel %vm4569, 1.0, 0.0
    %v4578 = vsel %vm4570, 1.0, 0.0
    %v4579 = vsel %vm4571, 1.0, 0.0
    %v4580 = vsel %vm4572, 1.0, 0.0
    %v4581 = vsel %vm4573, 1.0, 0.0
    %v4582 = vsel %vm4574, 1.0, 0.0
    %v4583 = vsel %vm4575, 1.0, 0.0
    %4584 = vmatprep.subr.mxu0 0.0
    %4585 = vmatpush1.msra.mxu0 %v4576
    %4586 = vmatprep.subr.mxu0 0.0
    %4587 = vmatpush1.msra.mxu0 %v4577
    %4588 = vmatprep.subr.mxu0 0.0
    %4589 = vmatpush1.msra.mxu0 %v4578
    %4590 = vmatprep.subr.mxu0 0.0
    %4591 = vmatpush1.msra.mxu0 %v4579
    %4592 = vmatprep.subr.mxu0 0.0
    %4593 = vmatpush1.msra.mxu0 %v4580
    %4594 = vmatprep.subr.mxu0 0.0
    %4595 = vmatpush1.msra.mxu0 %v4581
    %4596 = vmatprep.subr.mxu0 0.0
    %4597 = vmatpush1.msra.mxu0 %v4582
    %4598 = vmatprep.subr.mxu0 0.0
    %4599 = vmatpush1.msra.mxu0 %v4583
    %4600 = vmatprep.subr.mxu0 0.0
    %4601 = vmatpush1.msra.mxu0 0.0
    %4602 = vmatprep.subr.mxu0 0.0
    %4603 = vmatpush1.msra.mxu0 0.0
    %4604 = vmatprep.subr.mxu0 0.0
    %4605 = vmatpush1.msra.mxu0 0.0
    %4606 = vmatprep.subr.mxu0 0.0
    %4607 = vmatpush1.msra.mxu0 0.0
    %4608 = vmatprep.subr.mxu0 0.0
    %4609 = vmatpush1.msra.mxu0 0.0
    %4610 = vmatprep.subr.mxu0 0.0
    %4611 = vmatpush1.msra.mxu0 0.0
    %4612 = vmatprep.subr.mxu0 0.0
    %4613 = vmatpush1.msra.mxu0 0.0
    %4614 = vmatprep.subr.mxu0 0.0
    %4615 = vmatpush1.msra.mxu0 0.0
    %4616 = vmatprep.subr.mxu0 0.0
    %4617 = vmatpush1.msra.mxu0 0.0
    %4618 = vmatprep.subr.mxu0 0.0
    %4619 = vmatpush1.msra.mxu0 0.0
    %4620 = vmatprep.subr.mxu0 0.0
    %4621 = vmatpush1.msra.mxu0 0.0
    %4622 = vmatprep.subr.mxu0 0.0
    %4623 = vmatpush1.msra.mxu0 0.0
    %4624 = vmatprep.subr.mxu0 0.0
    %4625 = vmatpush1.msra.mxu0 0.0
    %4626 = vmatprep.subr.mxu0 0.0
    %4627 = vmatpush1.msra.mxu0 0.0
    %4628 = vmatprep.subr.mxu0 0.0
    %4629 = vmatpush1.msra.mxu0 0.0
    %4630 = vmatprep.subr.mxu0 0.0
    %4631 = vmatpush1.msra.mxu0 0.0
    %4632 = vmatprep.subr.mxu0 0.0
    %4633 = vmatpush1.msra.mxu0 0.0
    %4634 = vmatprep.subr.mxu0 0.0
    %4635 = vmatpush1.msra.mxu0 0.0
    %4636 = vmatprep.subr.mxu0 0.0
    %4637 = vmatpush1.msra.mxu0 0.0
    %4638 = vmatprep.subr.mxu0 0.0
    %4639 = vmatpush1.msra.mxu0 0.0
    %4640 = vmatprep.subr.mxu0 0.0
    %4641 = vmatpush1.msra.mxu0 0.0
    %4642 = vmatprep.subr.mxu0 0.0
    %4643 = vmatpush1.msra.mxu0 0.0
    %4644 = vmatprep.subr.mxu0 0.0
    %4645 = vmatpush1.msra.mxu0 0.0
    %4646 = vmatprep.subr.mxu0 0.0
    %4647 = vmatpush1.msra.mxu0 0.0
    %4648 = vmatprep.mubr.f32.mxu0 0.0
    %4649 = vmatmul.mubr.f32.gmra.mrb[0].mxu0 %v4034
    %v4650 = vpop.f32.mrb[0].mxu0
    %v4651 = vadd.f32 0.0, %v4650
    %v4652 = vpop.f32.mrb[0].mxu0
    %4653 = vmatprep.mubr.f32.mxu0 0.0
    %4654 = vmatmul.mubr.f32.gmra.mrb[0].mxu0 %v4037
    %v4655 = vpop.f32.mrb[0].mxu0
    %v4656 = vadd.f32 0.0, %v4655
    %v4657 = vpop.f32.mrb[0].mxu0
    %4658 = vmatprep.mubr.f32.mxu0 0.0
    %4659 = vmatmul.mubr.f32.gmra.mrb[0].mxu0 %v4040
    %v4660 = vpop.f32.mrb[0].mxu0
    %v4661 = vadd.f32 0.0, %v4660
    %v4662 = vpop.f32.mrb[0].mxu0
    %4663 = vmatprep.mubr.f32.mxu0 0.0
    %4664 = vmatmul.mubr.f32.gmra.mrb[0].mxu0 %v4043
    %v4665 = vpop.f32.mrb[0].mxu0
    %v4666 = vadd.f32 0.0, %v4665
    %v4667 = vpop.f32.mrb[0].mxu0
    %4668 = vmatprep.mubr.f32.mxu0 0.0
    %4669 = vmatmul.mubr.f32.gmra.mrb[0].mxu0 %v4046
    %v4670 = vpop.f32.mrb[0].mxu0
    %v4671 = vadd.f32 0.0, %v4670
    %v4672 = vpop.f32.mrb[0].mxu0
    %4673 = vmatprep.mubr.f32.mxu0 0.0
    %4674 = vmatmul.mubr.f32.gmra.mrb[0].mxu0 %v4049
    %v4675 = vpop.f32.mrb[0].mxu0
    %v4676 = vadd.f32 0.0, %v4675
    %v4677 = vpop.f32.mrb[0].mxu0
    %4678 = vmatprep.mubr.f32.mxu0 0.0
    %4679 = vmatmul.mubr.f32.gmra.mrb[0].mxu0 %v4052
    %v4680 = vpop.f32.mrb[0].mxu0
    %v4681 = vadd.f32 0.0, %v4680
    %v4682 = vpop.f32.mrb[0].mxu0
    %4683 = vmatprep.mubr.f32.mxu0 0.0
    %4684 = vmatmul.mubr.f32.gmra.mrb[0].mxu0 %v4055
    %v4685 = vpop.f32.mrb[0].mxu0
    %v4686 = vadd.f32 0.0, %v4685
    %v4687 = vpop.f32.mrb[0].mxu0
    %4688 = vmatprep.mubr.f32.mxu0 0.0
    %4689 = vmatmul.mubr.f32.gmra.mrb[0].mxu0 %v4058
    %v4690 = vpop.f32.mrb[0].mxu0
    %v4691 = vadd.f32 0.0, %v4690
    %v4692 = vpop.f32.mrb[0].mxu0
    %4693 = vmatprep.mubr.f32.mxu0 0.0
    %4694 = vmatmul.mubr.f32.gmra.mrb[0].mxu0 %v4061
    %v4695 = vpop.f32.mrb[0].mxu0
    %v4696 = vadd.f32 0.0, %v4695
    %v4697 = vpop.f32.mrb[0].mxu0
    %4698 = vmatprep.mubr.f32.mxu0 0.0
    %4699 = vmatmul.mubr.f32.gmra.mrb[0].mxu0 %v4064
    %v4700 = vpop.f32.mrb[0].mxu0
    %v4701 = vadd.f32 0.0, %v4700
    %v4702 = vpop.f32.mrb[0].mxu0
    %4703 = vmatprep.mubr.f32.mxu0 0.0
    %4704 = vmatmul.mubr.f32.gmra.mrb[0].mxu0 %v4067
    %v4705 = vpop.f32.mrb[0].mxu0
    %v4706 = vadd.f32 0.0, %v4705
    %v4707 = vpop.f32.mrb[0].mxu0
    %4708 = vmatprep.mubr.f32.mxu0 0.0
    %4709 = vmatmul.mubr.f32.gmra.mrb[0].mxu0 %v4070
    %v4710 = vpop.f32.mrb[0].mxu0
    %v4711 = vadd.f32 0.0, %v4710
    %v4712 = vpop.f32.mrb[0].mxu0
    %4713 = vmatprep.mubr.f32.mxu0 0.0
    %4714 = vmatmul.mubr.f32.gmra.mrb[0].mxu0 %v4073
    %v4715 = vpop.f32.mrb[0].mxu0
    %v4716 = vadd.f32 0.0, %v4715
    %v4717 = vpop.f32.mrb[0].mxu0
    %4718 = vmatprep.mubr.f32.mxu0 0.0
    %4719 = vmatmul.mubr.f32.gmra.mrb[0].mxu0 %v4076
    %v4720 = vpop.f32.mrb[0].mxu0
    %v4721 = vadd.f32 0.0, %v4720
    %v4722 = vpop.f32.mrb[0].mxu0
    %4723 = vmatprep.mubr.f32.mxu0 0.0
    %4724 = vmatmul.mubr.f32.gmra.mrb[0].mxu0 %v4079
    %v4725 = vpop.f32.mrb[0].mxu0
    %v4726 = vadd.f32 0.0, %v4725
    %v4727 = vpop.f32.mrb[0].mxu0
    %4728 = vdwg.mxu0
    %vm4729 = vcmp.ge.s32.totalorder %v4003, 0
    %vm4730 = vcmp.lt.s32.totalorder %v4003, 8
    %vm4731 = vmand %vm4729, %vm4730
    %vm4732 = vmand %vm4731, %vm4010
    %vm4733 = vmand %vm4732, %vm4012
    %v4734 = vshll.u32 %v4003, 3
    %v4735 = vadd.s32 %v4734, %v4006
    %v4736 = vsel %vm4733, %v4735, 4294967295
    %vm4737 = vcmp.eq.s32.totalorder %v339, %v4736
    %vm4738 = vcmp.eq.s32.totalorder %v340, %v4736
    %vm4739 = vcmp.eq.s32.totalorder %v341, %v4736
    %vm4740 = vcmp.eq.s32.totalorder %v342, %v4736
    %vm4741 = vcmp.eq.s32.totalorder %v343, %v4736
    %vm4742 = vcmp.eq.s32.totalorder %v344, %v4736
    %vm4743 = vcmp.eq.s32.totalorder %v345, %v4736
    %vm4744 = vcmp.eq.s32.totalorder %v346, %v4736
    %v4745 = vsel %vm4737, 1.0, 0.0
    %v4746 = vsel %vm4738, 1.0, 0.0
    %v4747 = vsel %vm4739, 1.0, 0.0
    %v4748 = vsel %vm4740, 1.0, 0.0
    %v4749 = vsel %vm4741, 1.0, 0.0
    %v4750 = vsel %vm4742, 1.0, 0.0
    %v4751 = vsel %vm4743, 1.0, 0.0
    %v4752 = vsel %vm4744, 1.0, 0.0
    %4753 = vmatprep.subr.mxu0 0.0
    %4754 = vmatpush1.msra.mxu0 %v4745
    %4755 = vmatprep.subr.mxu0 0.0
    %4756 = vmatpush1.msra.mxu0 %v4746
    %4757 = vmatprep.subr.mxu0 0.0
    %4758 = vmatpush1.msra.mxu0 %v4747
    %4759 = vmatprep.subr.mxu0 0.0
    %4760 = vmatpush1.msra.mxu0 %v4748
    %4761 = vmatprep.subr.mxu0 0.0
    %4762 = vmatpush1.msra.mxu0 %v4749
    %4763 = vmatprep.subr.mxu0 0.0
    %4764 = vmatpush1.msra.mxu0 %v4750
    %4765 = vmatprep.subr.mxu0 0.0
    %4766 = vmatpush1.msra.mxu0 %v4751
    %4767 = vmatprep.subr.mxu0 0.0
    %4768 = vmatpush1.msra.mxu0 %v4752
    %4769 = vmatprep.subr.mxu0 0.0
    %4770 = vmatpush1.msra.mxu0 0.0
    %4771 = vmatprep.subr.mxu0 0.0
    %4772 = vmatpush1.msra.mxu0 0.0
    %4773 = vmatprep.subr.mxu0 0.0
    %4774 = vmatpush1.msra.mxu0 0.0
    %4775 = vmatprep.subr.mxu0 0.0
    %4776 = vmatpush1.msra.mxu0 0.0
    %4777 = vmatprep.subr.mxu0 0.0
    %4778 = vmatpush1.msra.mxu0 0.0
    %4779 = vmatprep.subr.mxu0 0.0
    %4780 = vmatpush1.msra.mxu0 0.0
    %4781 = vmatprep.subr.mxu0 0.0
    %4782 = vmatpush1.msra.mxu0 0.0
    %4783 = vmatprep.subr.mxu0 0.0
    %4784 = vmatpush1.msra.mxu0 0.0
    %4785 = vmatprep.subr.mxu0 0.0
    %4786 = vmatpush1.msra.mxu0 0.0
    %4787 = vmatprep.subr.mxu0 0.0
    %4788 = vmatpush1.msra.mxu0 0.0
    %4789 = vmatprep.subr.mxu0 0.0
    %4790 = vmatpush1.msra.mxu0 0.0
    %4791 = vmatprep.subr.mxu0 0.0
    %4792 = vmatpush1.msra.mxu0 0.0
    %4793 = vmatprep.subr.mxu0 0.0
    %4794 = vmatpush1.msra.mxu0 0.0
    %4795 = vmatprep.subr.mxu0 0.0
    %4796 = vmatpush1.msra.mxu0 0.0
    %4797 = vmatprep.subr.mxu0 0.0
    %4798 = vmatpush1.msra.mxu0 0.0
    %4799 = vmatprep.subr.mxu0 0.0
    %4800 = vmatpush1.msra.mxu0 0.0
    %4801 = vmatprep.subr.mxu0 0.0
    %4802 = vmatpush1.msra.mxu0 0.0
    %4803 = vmatprep.subr.mxu0 0.0
    %4804 = vmatpush1.msra.mxu0 0.0
    %4805 = vmatprep.subr.mxu0 0.0
    %4806 = vmatpush1.msra.mxu0 0.0
    %4807 = vmatprep.subr.mxu0 0.0
    %4808 = vmatpush1.msra.mxu0 0.0
    %4809 = vmatprep.subr.mxu0 0.0
    %4810 = vmatpush1.msra.mxu0 0.0
    %4811 = vmatprep.subr.mxu0 0.0
    %4812 = vmatpush1.msra.mxu0 0.0
    %4813 = vmatprep.subr.mxu0 0.0
    %4814 = vmatpush1.msra.mxu0 0.0
    %4815 = vmatprep.subr.mxu0 0.0
    %4816 = vmatpush1.msra.mxu0 0.0
    %4817 = vmatprep.mubr.f32.mxu0 0.0
    %4818 = vmatmul.mubr.f32.gmra.mrb[0].mxu0 %v4034
    %v4819 = vpop.f32.mrb[0].mxu0
    %v4820 = vadd.f32 0.0, %v4819
    %v4821 = vpop.f32.mrb[0].mxu0
    %4822 = vmatprep.mubr.f32.mxu0 0.0
    %4823 = vmatmul.mubr.f32.gmra.mrb[0].mxu0 %v4037
    %v4824 = vpop.f32.mrb[0].mxu0
    %v4825 = vadd.f32 0.0, %v4824
    %v4826 = vpop.f32.mrb[0].mxu0
    %4827 = vmatprep.mubr.f32.mxu0 0.0
    %4828 = vmatmul.mubr.f32.gmra.mrb[0].mxu0 %v4040
    %v4829 = vpop.f32.mrb[0].mxu0
    %v4830 = vadd.f32 0.0, %v4829
    %v4831 = vpop.f32.mrb[0].mxu0
    %4832 = vmatprep.mubr.f32.mxu0 0.0
    %4833 = vmatmul.mubr.f32.gmra.mrb[0].mxu0 %v4043
    %v4834 = vpop.f32.mrb[0].mxu0
    %v4835 = vadd.f32 0.0, %v4834
    %v4836 = vpop.f32.mrb[0].mxu0
    %4837 = vmatprep.mubr.f32.mxu0 0.0
    %4838 = vmatmul.mubr.f32.gmra.mrb[0].mxu0 %v4046
    %v4839 = vpop.f32.mrb[0].mxu0
    %v4840 = vadd.f32 0.0, %v4839
    %v4841 = vpop.f32.mrb[0].mxu0
    %4842 = vmatprep.mubr.f32.mxu0 0.0
    %4843 = vmatmul.mubr.f32.gmra.mrb[0].mxu0 %v4049
    %v4844 = vpop.f32.mrb[0].mxu0
    %v4845 = vadd.f32 0.0, %v4844
    %v4846 = vpop.f32.mrb[0].mxu0
    %4847 = vmatprep.mubr.f32.mxu0 0.0
    %4848 = vmatmul.mubr.f32.gmra.mrb[0].mxu0 %v4052
    %v4849 = vpop.f32.mrb[0].mxu0
    %v4850 = vadd.f32 0.0, %v4849
    %v4851 = vpop.f32.mrb[0].mxu0
    %4852 = vmatprep.mubr.f32.mxu0 0.0
    %4853 = vmatmul.mubr.f32.gmra.mrb[0].mxu0 %v4055
    %v4854 = vpop.f32.mrb[0].mxu0
    %v4855 = vadd.f32 0.0, %v4854
    %v4856 = vpop.f32.mrb[0].mxu0
    %4857 = vmatprep.mubr.f32.mxu0 0.0
    %4858 = vmatmul.mubr.f32.gmra.mrb[0].mxu0 %v4058
    %v4859 = vpop.f32.mrb[0].mxu0
    %v4860 = vadd.f32 0.0, %v4859
    %v4861 = vpop.f32.mrb[0].mxu0
    %4862 = vmatprep.mubr.f32.mxu0 0.0
    %4863 = vmatmul.mubr.f32.gmra.mrb[0].mxu0 %v4061
    %v4864 = vpop.f32.mrb[0].mxu0
    %v4865 = vadd.f32 0.0, %v4864
    %v4866 = vpop.f32.mrb[0].mxu0
    %4867 = vmatprep.mubr.f32.mxu0 0.0
    %4868 = vmatmul.mubr.f32.gmra.mrb[0].mxu0 %v4064
    %v4869 = vpop.f32.mrb[0].mxu0
    %v4870 = vadd.f32 0.0, %v4869
    %v4871 = vpop.f32.mrb[0].mxu0
    %4872 = vmatprep.mubr.f32.mxu0 0.0
    %4873 = vmatmul.mubr.f32.gmra.mrb[0].mxu0 %v4067
    %v4874 = vpop.f32.mrb[0].mxu0
    %v4875 = vadd.f32 0.0, %v4874
    %v4876 = vpop.f32.mrb[0].mxu0
    %4877 = vmatprep.mubr.f32.mxu0 0.0
    %4878 = vmatmul.mubr.f32.gmra.mrb[0].mxu0 %v4070
    %v4879 = vpop.f32.mrb[0].mxu0
    %v4880 = vadd.f32 0.0, %v4879
    %v4881 = vpop.f32.mrb[0].mxu0
    %4882 = vmatprep.mubr.f32.mxu0 0.0
    %4883 = vmatmul.mubr.f32.gmra.mrb[0].mxu0 %v4073
    %v4884 = vpop.f32.mrb[0].mxu0
    %v4885 = vadd.f32 0.0, %v4884
    %v4886 = vpop.f32.mrb[0].mxu0
    %4887 = vmatprep.mubr.f32.mxu0 0.0
    %4888 = vmatmul.mubr.f32.gmra.mrb[0].mxu0 %v4076
    %v4889 = vpop.f32.mrb[0].mxu0
    %v4890 = vadd.f32 0.0, %v4889
    %v4891 = vpop.f32.mrb[0].mxu0
    %4892 = vmatprep.mubr.f32.mxu0 0.0
    %4893 = vmatmul.mubr.f32.gmra.mrb[0].mxu0 %v4079
    %v4894 = vpop.f32.mrb[0].mxu0
    %v4895 = vadd.f32 0.0, %v4894
    %v4896 = vpop.f32.mrb[0].mxu0
    %4897 = vdwg.mxu0
    %vm4898 = vmand %vm4731, %vm4226
    %vm4899 = vmand %vm4898, %vm4228
    %v4900 = vadd.s32 %v4734, %v4005
    %v4901 = vsel %vm4899, %v4900, 4294967295
    %vm4902 = vcmp.eq.s32.totalorder %v339, %v4901
    %vm4903 = vcmp.eq.s32.totalorder %v340, %v4901
    %vm4904 = vcmp.eq.s32.totalorder %v341, %v4901
    %vm4905 = vcmp.eq.s32.totalorder %v342, %v4901
    %vm4906 = vcmp.eq.s32.totalorder %v343, %v4901
    %vm4907 = vcmp.eq.s32.totalorder %v344, %v4901
    %vm4908 = vcmp.eq.s32.totalorder %v345, %v4901
    %vm4909 = vcmp.eq.s32.totalorder %v346, %v4901
    %v4910 = vsel %vm4902, 1.0, 0.0
    %v4911 = vsel %vm4903, 1.0, 0.0
    %v4912 = vsel %vm4904, 1.0, 0.0
    %v4913 = vsel %vm4905, 1.0, 0.0
    %v4914 = vsel %vm4906, 1.0, 0.0
    %v4915 = vsel %vm4907, 1.0, 0.0
    %v4916 = vsel %vm4908, 1.0, 0.0
    %v4917 = vsel %vm4909, 1.0, 0.0
    %4918 = vmatprep.subr.mxu0 0.0
    %4919 = vmatpush1.msra.mxu0 %v4910
    %4920 = vmatprep.subr.mxu0 0.0
    %4921 = vmatpush1.msra.mxu0 %v4911
    %4922 = vmatprep.subr.mxu0 0.0
    %4923 = vmatpush1.msra.mxu0 %v4912
    %4924 = vmatprep.subr.mxu0 0.0
    %4925 = vmatpush1.msra.mxu0 %v4913
    %4926 = vmatprep.subr.mxu0 0.0
    %4927 = vmatpush1.msra.mxu0 %v4914
    %4928 = vmatprep.subr.mxu0 0.0
    %4929 = vmatpush1.msra.mxu0 %v4915
    %4930 = vmatprep.subr.mxu0 0.0
    %4931 = vmatpush1.msra.mxu0 %v4916
    %4932 = vmatprep.subr.mxu0 0.0
    %4933 = vmatpush1.msra.mxu0 %v4917
    %4934 = vmatprep.subr.mxu0 0.0
    %4935 = vmatpush1.msra.mxu0 0.0
    %4936 = vmatprep.subr.mxu0 0.0
    %4937 = vmatpush1.msra.mxu0 0.0
    %4938 = vmatprep.subr.mxu0 0.0
    %4939 = vmatpush1.msra.mxu0 0.0
    %4940 = vmatprep.subr.mxu0 0.0
    %4941 = vmatpush1.msra.mxu0 0.0
    %4942 = vmatprep.subr.mxu0 0.0
    %4943 = vmatpush1.msra.mxu0 0.0
    %4944 = vmatprep.subr.mxu0 0.0
    %4945 = vmatpush1.msra.mxu0 0.0
    %4946 = vmatprep.subr.mxu0 0.0
    %4947 = vmatpush1.msra.mxu0 0.0
    %4948 = vmatprep.subr.mxu0 0.0
    %4949 = vmatpush1.msra.mxu0 0.0
    %4950 = vmatprep.subr.mxu0 0.0
    %4951 = vmatpush1.msra.mxu0 0.0
    %4952 = vmatprep.subr.mxu0 0.0
    %4953 = vmatpush1.msra.mxu0 0.0
    %4954 = vmatprep.subr.mxu0 0.0
    %4955 = vmatpush1.msra.mxu0 0.0
    %4956 = vmatprep.subr.mxu0 0.0
    %4957 = vmatpush1.msra.mxu0 0.0
    %4958 = vmatprep.subr.mxu0 0.0
    %4959 = vmatpush1.msra.mxu0 0.0
    %4960 = vmatprep.subr.mxu0 0.0
    %4961 = vmatpush1.msra.mxu0 0.0
    %4962 = vmatprep.subr.mxu0 0.0
    %4963 = vmatpush1.msra.mxu0 0.0
    %4964 = vmatprep.subr.mxu0 0.0
    %4965 = vmatpush1.msra.mxu0 0.0
    %4966 = vmatprep.subr.mxu0 0.0
    %4967 = vmatpush1.msra.mxu0 0.0
    %4968 = vmatprep.subr.mxu0 0.0
    %4969 = vmatpush1.msra.mxu0 0.0
    %4970 = vmatprep.subr.mxu0 0.0
    %4971 = vmatpush1.msra.mxu0 0.0
    %4972 = vmatprep.subr.mxu0 0.0
    %4973 = vmatpush1.msra.mxu0 0.0
    %4974 = vmatprep.subr.mxu0 0.0
    %4975 = vmatpush1.msra.mxu0 0.0
    %4976 = vmatprep.subr.mxu0 0.0
    %4977 = vmatpush1.msra.mxu0 0.0
    %4978 = vmatprep.subr.mxu0 0.0
    %4979 = vmatpush1.msra.mxu0 0.0
    %4980 = vmatprep.subr.mxu0 0.0
    %4981 = vmatpush1.msra.mxu0 0.0
    %4982 = vmatprep.mubr.f32.mxu0 0.0
    %4983 = vmatmul.mubr.f32.gmra.mrb[0].mxu0 %v4034
    %v4984 = vpop.f32.mrb[0].mxu0
    %v4985 = vadd.f32 0.0, %v4984
    %v4986 = vpop.f32.mrb[0].mxu0
    %4987 = vmatprep.mubr.f32.mxu0 0.0
    %4988 = vmatmul.mubr.f32.gmra.mrb[0].mxu0 %v4037
    %v4989 = vpop.f32.mrb[0].mxu0
    %v4990 = vadd.f32 0.0, %v4989
    %v4991 = vpop.f32.mrb[0].mxu0
    %4992 = vmatprep.mubr.f32.mxu0 0.0
    %4993 = vmatmul.mubr.f32.gmra.mrb[0].mxu0 %v4040
    %v4994 = vpop.f32.mrb[0].mxu0
    %v4995 = vadd.f32 0.0, %v4994
    %v4996 = vpop.f32.mrb[0].mxu0
    %4997 = vmatprep.mubr.f32.mxu0 0.0
    %4998 = vmatmul.mubr.f32.gmra.mrb[0].mxu0 %v4043
    %v4999 = vpop.f32.mrb[0].mxu0
    %v5000 = vadd.f32 0.0, %v4999
    %v5001 = vpop.f32.mrb[0].mxu0
    %5002 = vmatprep.mubr.f32.mxu0 0.0
    %5003 = vmatmul.mubr.f32.gmra.mrb[0].mxu0 %v4046
    %v5004 = vpop.f32.mrb[0].mxu0
    %v5005 = vadd.f32 0.0, %v5004
    %v5006 = vpop.f32.mrb[0].mxu0
    %5007 = vmatprep.mubr.f32.mxu0 0.0
    %5008 = vmatmul.mubr.f32.gmra.mrb[0].mxu0 %v4049
    %v5009 = vpop.f32.mrb[0].mxu0
    %v5010 = vadd.f32 0.0, %v5009
    %v5011 = vpop.f32.mrb[0].mxu0
    %5012 = vmatprep.mubr.f32.mxu0 0.0
    %5013 = vmatmul.mubr.f32.gmra.mrb[0].mxu0 %v4052
    %v5014 = vpop.f32.mrb[0].mxu0
    %v5015 = vadd.f32 0.0, %v5014
    %v5016 = vpop.f32.mrb[0].mxu0
    %5017 = vmatprep.mubr.f32.mxu0 0.0
    %5018 = vmatmul.mubr.f32.gmra.mrb[0].mxu0 %v4055
    %v5019 = vpop.f32.mrb[0].mxu0
    %v5020 = vadd.f32 0.0, %v5019
    %v5021 = vpop.f32.mrb[0].mxu0
    %5022 = vmatprep.mubr.f32.mxu0 0.0
    %5023 = vmatmul.mubr.f32.gmra.mrb[0].mxu0 %v4058
    %v5024 = vpop.f32.mrb[0].mxu0
    %v5025 = vadd.f32 0.0, %v5024
    %v5026 = vpop.f32.mrb[0].mxu0
    %5027 = vmatprep.mubr.f32.mxu0 0.0
    %5028 = vmatmul.mubr.f32.gmra.mrb[0].mxu0 %v4061
    %v5029 = vpop.f32.mrb[0].mxu0
    %v5030 = vadd.f32 0.0, %v5029
    %v5031 = vpop.f32.mrb[0].mxu0
    %5032 = vmatprep.mubr.f32.mxu0 0.0
    %5033 = vmatmul.mubr.f32.gmra.mrb[0].mxu0 %v4064
    %v5034 = vpop.f32.mrb[0].mxu0
    %v5035 = vadd.f32 0.0, %v5034
    %v5036 = vpop.f32.mrb[0].mxu0
    %5037 = vmatprep.mubr.f32.mxu0 0.0
    %5038 = vmatmul.mubr.f32.gmra.mrb[0].mxu0 %v4067
    %v5039 = vpop.f32.mrb[0].mxu0
    %v5040 = vadd.f32 0.0, %v5039
    %v5041 = vpop.f32.mrb[0].mxu0
    %5042 = vmatprep.mubr.f32.mxu0 0.0
    %5043 = vmatmul.mubr.f32.gmra.mrb[0].mxu0 %v4070
    %v5044 = vpop.f32.mrb[0].mxu0
    %v5045 = vadd.f32 0.0, %v5044
    %v5046 = vpop.f32.mrb[0].mxu0
    %5047 = vmatprep.mubr.f32.mxu0 0.0
    %5048 = vmatmul.mubr.f32.gmra.mrb[0].mxu0 %v4073
    %v5049 = vpop.f32.mrb[0].mxu0
    %v5050 = vadd.f32 0.0, %v5049
    %v5051 = vpop.f32.mrb[0].mxu0
    %5052 = vmatprep.mubr.f32.mxu0 0.0
    %5053 = vmatmul.mubr.f32.gmra.mrb[0].mxu0 %v4076
    %v5054 = vpop.f32.mrb[0].mxu0
    %v5055 = vadd.f32 0.0, %v5054
    %v5056 = vpop.f32.mrb[0].mxu0
    %5057 = vmatprep.mubr.f32.mxu0 0.0
    %5058 = vmatmul.mubr.f32.gmra.mrb[0].mxu0 %v4079
    %v5059 = vpop.f32.mrb[0].mxu0
    %v5060 = vadd.f32 0.0, %v5059
    %v5061 = vpop.f32.mrb[0].mxu0
    %5062 = vdwg.mxu0
    %vm5063 = vmand %vm4731, %vm4394
    %vm5064 = vmand %vm5063, %vm4396
    %v5065 = vadd.s32 %v4734, %v4393
    %v5066 = vsel %vm5064, %v5065, 4294967295
    %vm5067 = vcmp.eq.s32.totalorder %v339, %v5066
    %vm5068 = vcmp.eq.s32.totalorder %v340, %v5066
    %vm5069 = vcmp.eq.s32.totalorder %v341, %v5066
    %vm5070 = vcmp.eq.s32.totalorder %v342, %v5066
    %vm5071 = vcmp.eq.s32.totalorder %v343, %v5066
    %vm5072 = vcmp.eq.s32.totalorder %v344, %v5066
    %vm5073 = vcmp.eq.s32.totalorder %v345, %v5066
    %vm5074 = vcmp.eq.s32.totalorder %v346, %v5066
    %v5075 = vsel %vm5067, 1.0, 0.0
    %v5076 = vsel %vm5068, 1.0, 0.0
    %v5077 = vsel %vm5069, 1.0, 0.0
    %v5078 = vsel %vm5070, 1.0, 0.0
    %v5079 = vsel %vm5071, 1.0, 0.0
    %v5080 = vsel %vm5072, 1.0, 0.0
    %v5081 = vsel %vm5073, 1.0, 0.0
    %v5082 = vsel %vm5074, 1.0, 0.0
    %5083 = vmatprep.subr.mxu0 0.0
    %5084 = vmatpush1.msra.mxu0 %v5075
    %5085 = vmatprep.subr.mxu0 0.0
    %5086 = vmatpush1.msra.mxu0 %v5076
    %5087 = vmatprep.subr.mxu0 0.0
    %5088 = vmatpush1.msra.mxu0 %v5077
    %5089 = vmatprep.subr.mxu0 0.0
    %5090 = vmatpush1.msra.mxu0 %v5078
    %5091 = vmatprep.subr.mxu0 0.0
    %5092 = vmatpush1.msra.mxu0 %v5079
    %5093 = vmatprep.subr.mxu0 0.0
    %5094 = vmatpush1.msra.mxu0 %v5080
    %5095 = vmatprep.subr.mxu0 0.0
    %5096 = vmatpush1.msra.mxu0 %v5081
    %5097 = vmatprep.subr.mxu0 0.0
    %5098 = vmatpush1.msra.mxu0 %v5082
    %5099 = vmatprep.subr.mxu0 0.0
    %5100 = vmatpush1.msra.mxu0 0.0
    %5101 = vmatprep.subr.mxu0 0.0
    %5102 = vmatpush1.msra.mxu0 0.0
    %5103 = vmatprep.subr.mxu0 0.0
    %5104 = vmatpush1.msra.mxu0 0.0
    %5105 = vmatprep.subr.mxu0 0.0
    %5106 = vmatpush1.msra.mxu0 0.0
    %5107 = vmatprep.subr.mxu0 0.0
    %5108 = vmatpush1.msra.mxu0 0.0
    %5109 = vmatprep.subr.mxu0 0.0
    %5110 = vmatpush1.msra.mxu0 0.0
    %5111 = vmatprep.subr.mxu0 0.0
    %5112 = vmatpush1.msra.mxu0 0.0
    %5113 = vmatprep.subr.mxu0 0.0
    %5114 = vmatpush1.msra.mxu0 0.0
    %5115 = vmatprep.subr.mxu0 0.0
    %5116 = vmatpush1.msra.mxu0 0.0
    %5117 = vmatprep.subr.mxu0 0.0
    %5118 = vmatpush1.msra.mxu0 0.0
    %5119 = vmatprep.subr.mxu0 0.0
    %5120 = vmatpush1.msra.mxu0 0.0
    %5121 = vmatprep.subr.mxu0 0.0
    %5122 = vmatpush1.msra.mxu0 0.0
    %5123 = vmatprep.subr.mxu0 0.0
    %5124 = vmatpush1.msra.mxu0 0.0
    %5125 = vmatprep.subr.mxu0 0.0
    %5126 = vmatpush1.msra.mxu0 0.0
    %5127 = vmatprep.subr.mxu0 0.0
    %5128 = vmatpush1.msra.mxu0 0.0
    %5129 = vmatprep.subr.mxu0 0.0
    %5130 = vmatpush1.msra.mxu0 0.0
    %5131 = vmatprep.subr.mxu0 0.0
    %5132 = vmatpush1.msra.mxu0 0.0
    %5133 = vmatprep.subr.mxu0 0.0
    %5134 = vmatpush1.msra.mxu0 0.0
    %5135 = vmatprep.subr.mxu0 0.0
    %5136 = vmatpush1.msra.mxu0 0.0
    %5137 = vmatprep.subr.mxu0 0.0
    %5138 = vmatpush1.msra.mxu0 0.0
    %5139 = vmatprep.subr.mxu0 0.0
    %5140 = vmatpush1.msra.mxu0 0.0
    %5141 = vmatprep.subr.mxu0 0.0
    %5142 = vmatpush1.msra.mxu0 0.0
    %5143 = vmatprep.subr.mxu0 0.0
    %5144 = vmatpush1.msra.mxu0 0.0
    %5145 = vmatprep.subr.mxu0 0.0
    %5146 = vmatpush1.msra.mxu0 0.0
    %5147 = vmatprep.mubr.f32.mxu0 0.0
    %5148 = vmatmul.mubr.f32.gmra.mrb[0].mxu0 %v4034
    %v5149 = vpop.f32.mrb[0].mxu0
    %v5150 = vadd.f32 0.0, %v5149
    %v5151 = vpop.f32.mrb[0].mxu0
    %5152 = vmatprep.mubr.f32.mxu0 0.0
    %5153 = vmatmul.mubr.f32.gmra.mrb[0].mxu0 %v4037
    %v5154 = vpop.f32.mrb[0].mxu0
    %v5155 = vadd.f32 0.0, %v5154
    %v5156 = vpop.f32.mrb[0].mxu0
    %5157 = vmatprep.mubr.f32.mxu0 0.0
    %5158 = vmatmul.mubr.f32.gmra.mrb[0].mxu0 %v4040
    %v5159 = vpop.f32.mrb[0].mxu0
    %v5160 = vadd.f32 0.0, %v5159
    %v5161 = vpop.f32.mrb[0].mxu0
    %5162 = vmatprep.mubr.f32.mxu0 0.0
    %5163 = vmatmul.mubr.f32.gmra.mrb[0].mxu0 %v4043
    %v5164 = vpop.f32.mrb[0].mxu0
    %v5165 = vadd.f32 0.0, %v5164
    %v5166 = vpop.f32.mrb[0].mxu0
    %5167 = vmatprep.mubr.f32.mxu0 0.0
    %5168 = vmatmul.mubr.f32.gmra.mrb[0].mxu0 %v4046
    %v5169 = vpop.f32.mrb[0].mxu0
    %v5170 = vadd.f32 0.0, %v5169
    %v5171 = vpop.f32.mrb[0].mxu0
    %5172 = vmatprep.mubr.f32.mxu0 0.0
    %5173 = vmatmul.mubr.f32.gmra.mrb[0].mxu0 %v4049
    %v5174 = vpop.f32.mrb[0].mxu0
    %v5175 = vadd.f32 0.0, %v5174
    %v5176 = vpop.f32.mrb[0].mxu0
    %5177 = vmatprep.mubr.f32.mxu0 0.0
    %5178 = vmatmul.mubr.f32.gmra.mrb[0].mxu0 %v4052
    %v5179 = vpop.f32.mrb[0].mxu0
    %v5180 = vadd.f32 0.0, %v5179
    %v5181 = vpop.f32.mrb[0].mxu0
    %5182 = vmatprep.mubr.f32.mxu0 0.0
    %5183 = vmatmul.mubr.f32.gmra.mrb[0].mxu0 %v4055
    %v5184 = vpop.f32.mrb[0].mxu0
    %v5185 = vadd.f32 0.0, %v5184
    %v5186 = vpop.f32.mrb[0].mxu0
    %5187 = vmatprep.mubr.f32.mxu0 0.0
    %5188 = vmatmul.mubr.f32.gmra.mrb[0].mxu0 %v4058
    %v5189 = vpop.f32.mrb[0].mxu0
    %v5190 = vadd.f32 0.0, %v5189
    %v5191 = vpop.f32.mrb[0].mxu0
    %5192 = vmatprep.mubr.f32.mxu0 0.0
    %5193 = vmatmul.mubr.f32.gmra.mrb[0].mxu0 %v4061
    %v5194 = vpop.f32.mrb[0].mxu0
    %v5195 = vadd.f32 0.0, %v5194
    %v5196 = vpop.f32.mrb[0].mxu0
    %5197 = vmatprep.mubr.f32.mxu0 0.0
    %5198 = vmatmul.mubr.f32.gmra.mrb[0].mxu0 %v4064
    %v5199 = vpop.f32.mrb[0].mxu0
    %v5200 = vadd.f32 0.0, %v5199
    %v5201 = vpop.f32.mrb[0].mxu0
    %5202 = vmatprep.mubr.f32.mxu0 0.0
    %5203 = vmatmul.mubr.f32.gmra.mrb[0].mxu0 %v4067
    %v5204 = vpop.f32.mrb[0].mxu0
    %v5205 = vadd.f32 0.0, %v5204
    %v5206 = vpop.f32.mrb[0].mxu0
    %5207 = vmatprep.mubr.f32.mxu0 0.0
    %5208 = vmatmul.mubr.f32.gmra.mrb[0].mxu0 %v4070
    %v5209 = vpop.f32.mrb[0].mxu0
    %v5210 = vadd.f32 0.0, %v5209
    %v5211 = vpop.f32.mrb[0].mxu0
    %5212 = vmatprep.mubr.f32.mxu0 0.0
    %5213 = vmatmul.mubr.f32.gmra.mrb[0].mxu0 %v4073
    %v5214 = vpop.f32.mrb[0].mxu0
    %v5215 = vadd.f32 0.0, %v5214
    %v5216 = vpop.f32.mrb[0].mxu0
    %5217 = vmatprep.mubr.f32.mxu0 0.0
    %5218 = vmatmul.mubr.f32.gmra.mrb[0].mxu0 %v4076
    %v5219 = vpop.f32.mrb[0].mxu0
    %v5220 = vadd.f32 0.0, %v5219
    %v5221 = vpop.f32.mrb[0].mxu0
    %5222 = vmatprep.mubr.f32.mxu0 0.0
    %5223 = vmatmul.mubr.f32.gmra.mrb[0].mxu0 %v4079
    %v5224 = vpop.f32.mrb[0].mxu0
    %v5225 = vadd.f32 0.0, %v5224
    %v5226 = vpop.f32.mrb[0].mxu0
    %5227 = vdwg.mxu0
    %vm5228 = vmand %vm4731, %vm4562
    %vm5229 = vmand %vm5228, %vm4564
    %v5230 = vadd.s32 %v4734, %v4561
    %v5231 = vsel %vm5229, %v5230, 4294967295
    %vm5232 = vcmp.eq.s32.totalorder %v339, %v5231
    %vm5233 = vcmp.eq.s32.totalorder %v340, %v5231
    %vm5234 = vcmp.eq.s32.totalorder %v341, %v5231
    %vm5235 = vcmp.eq.s32.totalorder %v342, %v5231
    %vm5236 = vcmp.eq.s32.totalorder %v343, %v5231
    %vm5237 = vcmp.eq.s32.totalorder %v344, %v5231
    %vm5238 = vcmp.eq.s32.totalorder %v345, %v5231
    %vm5239 = vcmp.eq.s32.totalorder %v346, %v5231
    %v5240 = vsel %vm5232, 1.0, 0.0
    %v5241 = vsel %vm5233, 1.0, 0.0
    %v5242 = vsel %vm5234, 1.0, 0.0
    %v5243 = vsel %vm5235, 1.0, 0.0
    %v5244 = vsel %vm5236, 1.0, 0.0
    %v5245 = vsel %vm5237, 1.0, 0.0
    %v5246 = vsel %vm5238, 1.0, 0.0
    %v5247 = vsel %vm5239, 1.0, 0.0
    %5248 = vmatprep.subr.mxu0 0.0
    %5249 = vmatpush1.msra.mxu0 %v5240
    %5250 = vmatprep.subr.mxu0 0.0
    %5251 = vmatpush1.msra.mxu0 %v5241
    %5252 = vmatprep.subr.mxu0 0.0
    %5253 = vmatpush1.msra.mxu0 %v5242
    %5254 = vmatprep.subr.mxu0 0.0
    %5255 = vmatpush1.msra.mxu0 %v5243
    %5256 = vmatprep.subr.mxu0 0.0
    %5257 = vmatpush1.msra.mxu0 %v5244
    %5258 = vmatprep.subr.mxu0 0.0
    %5259 = vmatpush1.msra.mxu0 %v5245
    %5260 = vmatprep.subr.mxu0 0.0
    %5261 = vmatpush1.msra.mxu0 %v5246
    %5262 = vmatprep.subr.mxu0 0.0
    %5263 = vmatpush1.msra.mxu0 %v5247
    %5264 = vmatprep.subr.mxu0 0.0
    %5265 = vmatpush1.msra.mxu0 0.0
    %5266 = vmatprep.subr.mxu0 0.0
    %5267 = vmatpush1.msra.mxu0 0.0
    %5268 = vmatprep.subr.mxu0 0.0
    %5269 = vmatpush1.msra.mxu0 0.0
    %5270 = vmatprep.subr.mxu0 0.0
    %5271 = vmatpush1.msra.mxu0 0.0
    %5272 = vmatprep.subr.mxu0 0.0
    %5273 = vmatpush1.msra.mxu0 0.0
    %5274 = vmatprep.subr.mxu0 0.0
    %5275 = vmatpush1.msra.mxu0 0.0
    %5276 = vmatprep.subr.mxu0 0.0
    %5277 = vmatpush1.msra.mxu0 0.0
    %5278 = vmatprep.subr.mxu0 0.0
    %5279 = vmatpush1.msra.mxu0 0.0
    %5280 = vmatprep.subr.mxu0 0.0
    %5281 = vmatpush1.msra.mxu0 0.0
    %5282 = vmatprep.subr.mxu0 0.0
    %5283 = vmatpush1.msra.mxu0 0.0
    %5284 = vmatprep.subr.mxu0 0.0
    %5285 = vmatpush1.msra.mxu0 0.0
    %5286 = vmatprep.subr.mxu0 0.0
    %5287 = vmatpush1.msra.mxu0 0.0
    %5288 = vmatprep.subr.mxu0 0.0
    %5289 = vmatpush1.msra.mxu0 0.0
    %5290 = vmatprep.subr.mxu0 0.0
    %5291 = vmatpush1.msra.mxu0 0.0
    %5292 = vmatprep.subr.mxu0 0.0
    %5293 = vmatpush1.msra.mxu0 0.0
    %5294 = vmatprep.subr.mxu0 0.0
    %5295 = vmatpush1.msra.mxu0 0.0
    %5296 = vmatprep.subr.mxu0 0.0
    %5297 = vmatpush1.msra.mxu0 0.0
    %5298 = vmatprep.subr.mxu0 0.0
    %5299 = vmatpush1.msra.mxu0 0.0
    %5300 = vmatprep.subr.mxu0 0.0
    %5301 = vmatpush1.msra.mxu0 0.0
    %5302 = vmatprep.subr.mxu0 0.0
    %5303 = vmatpush1.msra.mxu0 0.0
    %5304 = vmatprep.subr.mxu0 0.0
    %5305 = vmatpush1.msra.mxu0 0.0
    %5306 = vmatprep.subr.mxu0 0.0
    %5307 = vmatpush1.msra.mxu0 0.0
    %5308 = vmatprep.subr.mxu0 0.0
    %5309 = vmatpush1.msra.mxu0 0.0
    %5310 = vmatprep.subr.mxu0 0.0
    %5311 = vmatpush1.msra.mxu0 0.0
    %5312 = vmatprep.mubr.f32.mxu0 0.0
    %5313 = vmatmul.mubr.f32.gmra.mrb[0].mxu0 %v4034
    %v5314 = vpop.f32.mrb[0].mxu0
    %v5315 = vadd.f32 0.0, %v5314
    %v5316 = vpop.f32.mrb[0].mxu0
    %5317 = vmatprep.mubr.f32.mxu0 0.0
    %5318 = vmatmul.mubr.f32.gmra.mrb[0].mxu0 %v4037
    %v5319 = vpop.f32.mrb[0].mxu0
    %v5320 = vadd.f32 0.0, %v5319
    %v5321 = vpop.f32.mrb[0].mxu0
    %5322 = vmatprep.mubr.f32.mxu0 0.0
    %5323 = vmatmul.mubr.f32.gmra.mrb[0].mxu0 %v4040
    %v5324 = vpop.f32.mrb[0].mxu0
    %v5325 = vadd.f32 0.0, %v5324
    %v5326 = vpop.f32.mrb[0].mxu0
    %5327 = vmatprep.mubr.f32.mxu0 0.0
    %5328 = vmatmul.mubr.f32.gmra.mrb[0].mxu0 %v4043
    %v5329 = vpop.f32.mrb[0].mxu0
    %v5330 = vadd.f32 0.0, %v5329
    %v5331 = vpop.f32.mrb[0].mxu0
    %5332 = vmatprep.mubr.f32.mxu0 0.0
    %5333 = vmatmul.mubr.f32.gmra.mrb[0].mxu0 %v4046
    %v5334 = vpop.f32.mrb[0].mxu0
    %v5335 = vadd.f32 0.0, %v5334
    %v5336 = vpop.f32.mrb[0].mxu0
    %5337 = vmatprep.mubr.f32.mxu0 0.0
    %5338 = vmatmul.mubr.f32.gmra.mrb[0].mxu0 %v4049
    %v5339 = vpop.f32.mrb[0].mxu0
    %v5340 = vadd.f32 0.0, %v5339
    %v5341 = vpop.f32.mrb[0].mxu0
    %5342 = vmatprep.mubr.f32.mxu0 0.0
    %5343 = vmatmul.mubr.f32.gmra.mrb[0].mxu0 %v4052
    %v5344 = vpop.f32.mrb[0].mxu0
    %v5345 = vadd.f32 0.0, %v5344
    %v5346 = vpop.f32.mrb[0].mxu0
    %5347 = vmatprep.mubr.f32.mxu0 0.0
    %5348 = vmatmul.mubr.f32.gmra.mrb[0].mxu0 %v4055
    %v5349 = vpop.f32.mrb[0].mxu0
    %v5350 = vadd.f32 0.0, %v5349
    %v5351 = vpop.f32.mrb[0].mxu0
    %5352 = vmatprep.mubr.f32.mxu0 0.0
    %5353 = vmatmul.mubr.f32.gmra.mrb[0].mxu0 %v4058
    %v5354 = vpop.f32.mrb[0].mxu0
    %v5355 = vadd.f32 0.0, %v5354
    %v5356 = vpop.f32.mrb[0].mxu0
    %5357 = vmatprep.mubr.f32.mxu0 0.0
    %5358 = vmatmul.mubr.f32.gmra.mrb[0].mxu0 %v4061
    %v5359 = vpop.f32.mrb[0].mxu0
    %v5360 = vadd.f32 0.0, %v5359
    %v5361 = vpop.f32.mrb[0].mxu0
    %5362 = vmatprep.mubr.f32.mxu0 0.0
    %5363 = vmatmul.mubr.f32.gmra.mrb[0].mxu0 %v4064
    %v5364 = vpop.f32.mrb[0].mxu0
    %v5365 = vadd.f32 0.0, %v5364
    %v5366 = vpop.f32.mrb[0].mxu0
    %5367 = vmatprep.mubr.f32.mxu0 0.0
    %5368 = vmatmul.mubr.f32.gmra.mrb[0].mxu0 %v4067
    %v5369 = vpop.f32.mrb[0].mxu0
    %v5370 = vadd.f32 0.0, %v5369
    %v5371 = vpop.f32.mrb[0].mxu0
    %5372 = vmatprep.mubr.f32.mxu0 0.0
    %5373 = vmatmul.mubr.f32.gmra.mrb[0].mxu0 %v4070
    %v5374 = vpop.f32.mrb[0].mxu0
    %v5375 = vadd.f32 0.0, %v5374
    %v5376 = vpop.f32.mrb[0].mxu0
    %5377 = vmatprep.mubr.f32.mxu0 0.0
    %5378 = vmatmul.mubr.f32.gmra.mrb[0].mxu0 %v4073
    %v5379 = vpop.f32.mrb[0].mxu0
    %v5380 = vadd.f32 0.0, %v5379
    %v5381 = vpop.f32.mrb[0].mxu0
    %5382 = vmatprep.mubr.f32.mxu0 0.0
    %5383 = vmatmul.mubr.f32.gmra.mrb[0].mxu0 %v4076
    %v5384 = vpop.f32.mrb[0].mxu0
    %v5385 = vadd.f32 0.0, %v5384
    %v5386 = vpop.f32.mrb[0].mxu0
    %5387 = vmatprep.mubr.f32.mxu0 0.0
    %5388 = vmatmul.mubr.f32.gmra.mrb[0].mxu0 %v4079
    %v5389 = vpop.f32.mrb[0].mxu0
    %v5390 = vadd.f32 0.0, %v5389
    %v5391 = vpop.f32.mrb[0].mxu0
    %5392 = vdwg.mxu0
    %v5393 = vadd.s32 %v4003, 1
    %vm5394 = vcmp.ge.s32.totalorder %v5393, 0
    %vm5395 = vcmp.lt.s32.totalorder %v5393, 8
    %vm5396 = vmand %vm5394, %vm5395
    %vm5397 = vmand %vm5396, %vm4010
    %vm5398 = vmand %vm5397, %vm4012
    %v5399 = vshll.u32 %v5393, 3
    %v5400 = vadd.s32 %v5399, %v4006
    %v5401 = vsel %vm5398, %v5400, 4294967295
    %vm5402 = vcmp.eq.s32.totalorder %v339, %v5401
    %vm5403 = vcmp.eq.s32.totalorder %v340, %v5401
    %vm5404 = vcmp.eq.s32.totalorder %v341, %v5401
    %vm5405 = vcmp.eq.s32.totalorder %v342, %v5401
    %vm5406 = vcmp.eq.s32.totalorder %v343, %v5401
    %vm5407 = vcmp.eq.s32.totalorder %v344, %v5401
    %vm5408 = vcmp.eq.s32.totalorder %v345, %v5401
    %vm5409 = vcmp.eq.s32.totalorder %v346, %v5401
    %v5410 = vsel %vm5402, 1.0, 0.0
    %v5411 = vsel %vm5403, 1.0, 0.0
    %v5412 = vsel %vm5404, 1.0, 0.0
    %v5413 = vsel %vm5405, 1.0, 0.0
    %v5414 = vsel %vm5406, 1.0, 0.0
    %v5415 = vsel %vm5407, 1.0, 0.0
    %v5416 = vsel %vm5408, 1.0, 0.0
    %v5417 = vsel %vm5409, 1.0, 0.0
    %5418 = vmatprep.subr.mxu0 0.0
    %5419 = vmatpush1.msra.mxu0 %v5410
    %5420 = vmatprep.subr.mxu0 0.0
    %5421 = vmatpush1.msra.mxu0 %v5411
    %5422 = vmatprep.subr.mxu0 0.0
    %5423 = vmatpush1.msra.mxu0 %v5412
    %5424 = vmatprep.subr.mxu0 0.0
    %5425 = vmatpush1.msra.mxu0 %v5413
    %5426 = vmatprep.subr.mxu0 0.0
    %5427 = vmatpush1.msra.mxu0 %v5414
    %5428 = vmatprep.subr.mxu0 0.0
    %5429 = vmatpush1.msra.mxu0 %v5415
    %5430 = vmatprep.subr.mxu0 0.0
    %5431 = vmatpush1.msra.mxu0 %v5416
    %5432 = vmatprep.subr.mxu0 0.0
    %5433 = vmatpush1.msra.mxu0 %v5417
    %5434 = vmatprep.subr.mxu0 0.0
    %5435 = vmatpush1.msra.mxu0 0.0
    %5436 = vmatprep.subr.mxu0 0.0
    %5437 = vmatpush1.msra.mxu0 0.0
    %5438 = vmatprep.subr.mxu0 0.0
    %5439 = vmatpush1.msra.mxu0 0.0
    %5440 = vmatprep.subr.mxu0 0.0
    %5441 = vmatpush1.msra.mxu0 0.0
    %5442 = vmatprep.subr.mxu0 0.0
    %5443 = vmatpush1.msra.mxu0 0.0
    %5444 = vmatprep.subr.mxu0 0.0
    %5445 = vmatpush1.msra.mxu0 0.0
    %5446 = vmatprep.subr.mxu0 0.0
    %5447 = vmatpush1.msra.mxu0 0.0
    %5448 = vmatprep.subr.mxu0 0.0
    %5449 = vmatpush1.msra.mxu0 0.0
    %5450 = vmatprep.subr.mxu0 0.0
    %5451 = vmatpush1.msra.mxu0 0.0
    %5452 = vmatprep.subr.mxu0 0.0
    %5453 = vmatpush1.msra.mxu0 0.0
    %5454 = vmatprep.subr.mxu0 0.0
    %5455 = vmatpush1.msra.mxu0 0.0
    %5456 = vmatprep.subr.mxu0 0.0
    %5457 = vmatpush1.msra.mxu0 0.0
    %5458 = vmatprep.subr.mxu0 0.0
    %5459 = vmatpush1.msra.mxu0 0.0
    %5460 = vmatprep.subr.mxu0 0.0
    %5461 = vmatpush1.msra.mxu0 0.0
    %5462 = vmatprep.subr.mxu0 0.0
    %5463 = vmatpush1.msra.mxu0 0.0
    %5464 = vmatprep.subr.mxu0 0.0
    %5465 = vmatpush1.msra.mxu0 0.0
    %5466 = vmatprep.subr.mxu0 0.0
    %5467 = vmatpush1.msra.mxu0 0.0
    %5468 = vmatprep.subr.mxu0 0.0
    %5469 = vmatpush1.msra.mxu0 0.0
    %5470 = vmatprep.subr.mxu0 0.0
    %5471 = vmatpush1.msra.mxu0 0.0
    %5472 = vmatprep.subr.mxu0 0.0
    %5473 = vmatpush1.msra.mxu0 0.0
    %5474 = vmatprep.subr.mxu0 0.0
    %5475 = vmatpush1.msra.mxu0 0.0
    %5476 = vmatprep.subr.mxu0 0.0
    %5477 = vmatpush1.msra.mxu0 0.0
    %5478 = vmatprep.subr.mxu0 0.0
    %5479 = vmatpush1.msra.mxu0 0.0
    %5480 = vmatprep.subr.mxu0 0.0
    %5481 = vmatpush1.msra.mxu0 0.0
    %5482 = vmatprep.mubr.f32.mxu0 0.0
    %5483 = vmatmul.mubr.f32.gmra.mrb[0].mxu0 %v4034
    %v5484 = vpop.f32.mrb[0].mxu0
    %v5485 = vadd.f32 0.0, %v5484
    %v5486 = vpop.f32.mrb[0].mxu0
    %5487 = vmatprep.mubr.f32.mxu0 0.0
    %5488 = vmatmul.mubr.f32.gmra.mrb[0].mxu0 %v4037
    %v5489 = vpop.f32.mrb[0].mxu0
    %v5490 = vadd.f32 0.0, %v5489
    %v5491 = vpop.f32.mrb[0].mxu0
    %5492 = vmatprep.mubr.f32.mxu0 0.0
    %5493 = vmatmul.mubr.f32.gmra.mrb[0].mxu0 %v4040
    %v5494 = vpop.f32.mrb[0].mxu0
    %v5495 = vadd.f32 0.0, %v5494
    %v5496 = vpop.f32.mrb[0].mxu0
    %5497 = vmatprep.mubr.f32.mxu0 0.0
    %5498 = vmatmul.mubr.f32.gmra.mrb[0].mxu0 %v4043
    %v5499 = vpop.f32.mrb[0].mxu0
    %v5500 = vadd.f32 0.0, %v5499
    %v5501 = vpop.f32.mrb[0].mxu0
    %5502 = vmatprep.mubr.f32.mxu0 0.0
    %5503 = vmatmul.mubr.f32.gmra.mrb[0].mxu0 %v4046
    %v5504 = vpop.f32.mrb[0].mxu0
    %v5505 = vadd.f32 0.0, %v5504
    %v5506 = vpop.f32.mrb[0].mxu0
    %5507 = vmatprep.mubr.f32.mxu0 0.0
    %5508 = vmatmul.mubr.f32.gmra.mrb[0].mxu0 %v4049
    %v5509 = vpop.f32.mrb[0].mxu0
    %v5510 = vadd.f32 0.0, %v5509
    %v5511 = vpop.f32.mrb[0].mxu0
    %5512 = vmatprep.mubr.f32.mxu0 0.0
    %5513 = vmatmul.mubr.f32.gmra.mrb[0].mxu0 %v4052
    %v5514 = vpop.f32.mrb[0].mxu0
    %v5515 = vadd.f32 0.0, %v5514
    %v5516 = vpop.f32.mrb[0].mxu0
    %5517 = vmatprep.mubr.f32.mxu0 0.0
    %5518 = vmatmul.mubr.f32.gmra.mrb[0].mxu0 %v4055
    %v5519 = vpop.f32.mrb[0].mxu0
    %v5520 = vadd.f32 0.0, %v5519
    %v5521 = vpop.f32.mrb[0].mxu0
    %5522 = vmatprep.mubr.f32.mxu0 0.0
    %5523 = vmatmul.mubr.f32.gmra.mrb[0].mxu0 %v4058
    %v5524 = vpop.f32.mrb[0].mxu0
    %v5525 = vadd.f32 0.0, %v5524
    %v5526 = vpop.f32.mrb[0].mxu0
    %5527 = vmatprep.mubr.f32.mxu0 0.0
    %5528 = vmatmul.mubr.f32.gmra.mrb[0].mxu0 %v4061
    %v5529 = vpop.f32.mrb[0].mxu0
    %v5530 = vadd.f32 0.0, %v5529
    %v5531 = vpop.f32.mrb[0].mxu0
    %5532 = vmatprep.mubr.f32.mxu0 0.0
    %5533 = vmatmul.mubr.f32.gmra.mrb[0].mxu0 %v4064
    %v5534 = vpop.f32.mrb[0].mxu0
    %v5535 = vadd.f32 0.0, %v5534
    %v5536 = vpop.f32.mrb[0].mxu0
    %5537 = vmatprep.mubr.f32.mxu0 0.0
    %5538 = vmatmul.mubr.f32.gmra.mrb[0].mxu0 %v4067
    %v5539 = vpop.f32.mrb[0].mxu0
    %v5540 = vadd.f32 0.0, %v5539
    %v5541 = vpop.f32.mrb[0].mxu0
    %5542 = vmatprep.mubr.f32.mxu0 0.0
    %5543 = vmatmul.mubr.f32.gmra.mrb[0].mxu0 %v4070
    %v5544 = vpop.f32.mrb[0].mxu0
    %v5545 = vadd.f32 0.0, %v5544
    %v5546 = vpop.f32.mrb[0].mxu0
    %5547 = vmatprep.mubr.f32.mxu0 0.0
    %5548 = vmatmul.mubr.f32.gmra.mrb[0].mxu0 %v4073
    %v5549 = vpop.f32.mrb[0].mxu0
    %v5550 = vadd.f32 0.0, %v5549
    %v5551 = vpop.f32.mrb[0].mxu0
    %5552 = vmatprep.mubr.f32.mxu0 0.0
    %5553 = vmatmul.mubr.f32.gmra.mrb[0].mxu0 %v4076
    %v5554 = vpop.f32.mrb[0].mxu0
    %v5555 = vadd.f32 0.0, %v5554
    %v5556 = vpop.f32.mrb[0].mxu0
    %5557 = vmatprep.mubr.f32.mxu0 0.0
    %5558 = vmatmul.mubr.f32.gmra.mrb[0].mxu0 %v4079
    %v5559 = vpop.f32.mrb[0].mxu0
    %v5560 = vadd.f32 0.0, %v5559
    %v5561 = vpop.f32.mrb[0].mxu0
    %5562 = vdwg.mxu0
    %vm5563 = vmand %vm5396, %vm4226
    %vm5564 = vmand %vm5563, %vm4228
    %v5565 = vadd.s32 %v5399, %v4005
    %v5566 = vsel %vm5564, %v5565, 4294967295
    %vm5567 = vcmp.eq.s32.totalorder %v339, %v5566
    %vm5568 = vcmp.eq.s32.totalorder %v340, %v5566
    %vm5569 = vcmp.eq.s32.totalorder %v341, %v5566
    %vm5570 = vcmp.eq.s32.totalorder %v342, %v5566
    %vm5571 = vcmp.eq.s32.totalorder %v343, %v5566
    %vm5572 = vcmp.eq.s32.totalorder %v344, %v5566
    %vm5573 = vcmp.eq.s32.totalorder %v345, %v5566
    %vm5574 = vcmp.eq.s32.totalorder %v346, %v5566
    %v5575 = vsel %vm5567, 1.0, 0.0
    %v5576 = vsel %vm5568, 1.0, 0.0
    %v5577 = vsel %vm5569, 1.0, 0.0
    %v5578 = vsel %vm5570, 1.0, 0.0
    %v5579 = vsel %vm5571, 1.0, 0.0
    %v5580 = vsel %vm5572, 1.0, 0.0
    %v5581 = vsel %vm5573, 1.0, 0.0
    %v5582 = vsel %vm5574, 1.0, 0.0
    %5583 = vmatprep.subr.mxu0 0.0
    %5584 = vmatpush1.msra.mxu0 %v5575
    %5585 = vmatprep.subr.mxu0 0.0
    %5586 = vmatpush1.msra.mxu0 %v5576
    %5587 = vmatprep.subr.mxu0 0.0
    %5588 = vmatpush1.msra.mxu0 %v5577
    %5589 = vmatprep.subr.mxu0 0.0
    %5590 = vmatpush1.msra.mxu0 %v5578
    %5591 = vmatprep.subr.mxu0 0.0
    %5592 = vmatpush1.msra.mxu0 %v5579
    %5593 = vmatprep.subr.mxu0 0.0
    %5594 = vmatpush1.msra.mxu0 %v5580
    %5595 = vmatprep.subr.mxu0 0.0
    %5596 = vmatpush1.msra.mxu0 %v5581
    %5597 = vmatprep.subr.mxu0 0.0
    %5598 = vmatpush1.msra.mxu0 %v5582
    %5599 = vmatprep.subr.mxu0 0.0
    %5600 = vmatpush1.msra.mxu0 0.0
    %5601 = vmatprep.subr.mxu0 0.0
    %5602 = vmatpush1.msra.mxu0 0.0
    %5603 = vmatprep.subr.mxu0 0.0
    %5604 = vmatpush1.msra.mxu0 0.0
    %5605 = vmatprep.subr.mxu0 0.0
    %5606 = vmatpush1.msra.mxu0 0.0
    %5607 = vmatprep.subr.mxu0 0.0
    %5608 = vmatpush1.msra.mxu0 0.0
    %5609 = vmatprep.subr.mxu0 0.0
    %5610 = vmatpush1.msra.mxu0 0.0
    %5611 = vmatprep.subr.mxu0 0.0
    %5612 = vmatpush1.msra.mxu0 0.0
    %5613 = vmatprep.subr.mxu0 0.0
    %5614 = vmatpush1.msra.mxu0 0.0
    %5615 = vmatprep.subr.mxu0 0.0
    %5616 = vmatpush1.msra.mxu0 0.0
    %5617 = vmatprep.subr.mxu0 0.0
    %5618 = vmatpush1.msra.mxu0 0.0
    %5619 = vmatprep.subr.mxu0 0.0
    %5620 = vmatpush1.msra.mxu0 0.0
    %5621 = vmatprep.subr.mxu0 0.0
    %5622 = vmatpush1.msra.mxu0 0.0
    %5623 = vmatprep.subr.mxu0 0.0
    %5624 = vmatpush1.msra.mxu0 0.0
    %5625 = vmatprep.subr.mxu0 0.0
    %5626 = vmatpush1.msra.mxu0 0.0
    %5627 = vmatprep.subr.mxu0 0.0
    %5628 = vmatpush1.msra.mxu0 0.0
    %5629 = vmatprep.subr.mxu0 0.0
    %5630 = vmatpush1.msra.mxu0 0.0
    %5631 = vmatprep.subr.mxu0 0.0
    %5632 = vmatpush1.msra.mxu0 0.0
    %5633 = vmatprep.subr.mxu0 0.0
    %5634 = vmatpush1.msra.mxu0 0.0
    %5635 = vmatprep.subr.mxu0 0.0
    %5636 = vmatpush1.msra.mxu0 0.0
    %5637 = vmatprep.subr.mxu0 0.0
    %5638 = vmatpush1.msra.mxu0 0.0
    %5639 = vmatprep.subr.mxu0 0.0
    %5640 = vmatpush1.msra.mxu0 0.0
    %5641 = vmatprep.subr.mxu0 0.0
    %5642 = vmatpush1.msra.mxu0 0.0
    %5643 = vmatprep.subr.mxu0 0.0
    %5644 = vmatpush1.msra.mxu0 0.0
    %5645 = vmatprep.subr.mxu0 0.0
    %5646 = vmatpush1.msra.mxu0 0.0
    %5647 = vmatprep.mubr.f32.mxu0 0.0
    %5648 = vmatmul.mubr.f32.gmra.mrb[0].mxu0 %v4034
    %v5649 = vpop.f32.mrb[0].mxu0
    %v5650 = vadd.f32 0.0, %v5649
    %v5651 = vpop.f32.mrb[0].mxu0
    %5652 = vmatprep.mubr.f32.mxu0 0.0
    %5653 = vmatmul.mubr.f32.gmra.mrb[0].mxu0 %v4037
    %v5654 = vpop.f32.mrb[0].mxu0
    %v5655 = vadd.f32 0.0, %v5654
    %v5656 = vpop.f32.mrb[0].mxu0
    %5657 = vmatprep.mubr.f32.mxu0 0.0
    %5658 = vmatmul.mubr.f32.gmra.mrb[0].mxu0 %v4040
    %v5659 = vpop.f32.mrb[0].mxu0
    %v5660 = vadd.f32 0.0, %v5659
    %v5661 = vpop.f32.mrb[0].mxu0
    %5662 = vmatprep.mubr.f32.mxu0 0.0
    %5663 = vmatmul.mubr.f32.gmra.mrb[0].mxu0 %v4043
    %v5664 = vpop.f32.mrb[0].mxu0
    %v5665 = vadd.f32 0.0, %v5664
    %v5666 = vpop.f32.mrb[0].mxu0
    %5667 = vmatprep.mubr.f32.mxu0 0.0
    %5668 = vmatmul.mubr.f32.gmra.mrb[0].mxu0 %v4046
    %v5669 = vpop.f32.mrb[0].mxu0
    %v5670 = vadd.f32 0.0, %v5669
    %v5671 = vpop.f32.mrb[0].mxu0
    %5672 = vmatprep.mubr.f32.mxu0 0.0
    %5673 = vmatmul.mubr.f32.gmra.mrb[0].mxu0 %v4049
    %v5674 = vpop.f32.mrb[0].mxu0
    %v5675 = vadd.f32 0.0, %v5674
    %v5676 = vpop.f32.mrb[0].mxu0
    %5677 = vmatprep.mubr.f32.mxu0 0.0
    %5678 = vmatmul.mubr.f32.gmra.mrb[0].mxu0 %v4052
    %v5679 = vpop.f32.mrb[0].mxu0
    %v5680 = vadd.f32 0.0, %v5679
    %v5681 = vpop.f32.mrb[0].mxu0
    %5682 = vmatprep.mubr.f32.mxu0 0.0
    %5683 = vmatmul.mubr.f32.gmra.mrb[0].mxu0 %v4055
    %v5684 = vpop.f32.mrb[0].mxu0
    %v5685 = vadd.f32 0.0, %v5684
    %v5686 = vpop.f32.mrb[0].mxu0
    %5687 = vmatprep.mubr.f32.mxu0 0.0
    %5688 = vmatmul.mubr.f32.gmra.mrb[0].mxu0 %v4058
    %v5689 = vpop.f32.mrb[0].mxu0
    %v5690 = vadd.f32 0.0, %v5689
    %v5691 = vpop.f32.mrb[0].mxu0
    %5692 = vmatprep.mubr.f32.mxu0 0.0
    %5693 = vmatmul.mubr.f32.gmra.mrb[0].mxu0 %v4061
    %v5694 = vpop.f32.mrb[0].mxu0
    %v5695 = vadd.f32 0.0, %v5694
    %v5696 = vpop.f32.mrb[0].mxu0
    %5697 = vmatprep.mubr.f32.mxu0 0.0
    %5698 = vmatmul.mubr.f32.gmra.mrb[0].mxu0 %v4064
    %v5699 = vpop.f32.mrb[0].mxu0
    %v5700 = vadd.f32 0.0, %v5699
    %v5701 = vpop.f32.mrb[0].mxu0
    %5702 = vmatprep.mubr.f32.mxu0 0.0
    %5703 = vmatmul.mubr.f32.gmra.mrb[0].mxu0 %v4067
    %v5704 = vpop.f32.mrb[0].mxu0
    %v5705 = vadd.f32 0.0, %v5704
    %v5706 = vpop.f32.mrb[0].mxu0
    %5707 = vmatprep.mubr.f32.mxu0 0.0
    %5708 = vmatmul.mubr.f32.gmra.mrb[0].mxu0 %v4070
    %v5709 = vpop.f32.mrb[0].mxu0
    %v5710 = vadd.f32 0.0, %v5709
    %v5711 = vpop.f32.mrb[0].mxu0
    %5712 = vmatprep.mubr.f32.mxu0 0.0
    %5713 = vmatmul.mubr.f32.gmra.mrb[0].mxu0 %v4073
    %v5714 = vpop.f32.mrb[0].mxu0
    %v5715 = vadd.f32 0.0, %v5714
    %v5716 = vpop.f32.mrb[0].mxu0
    %5717 = vmatprep.mubr.f32.mxu0 0.0
    %5718 = vmatmul.mubr.f32.gmra.mrb[0].mxu0 %v4076
    %v5719 = vpop.f32.mrb[0].mxu0
    %v5720 = vadd.f32 0.0, %v5719
    %v5721 = vpop.f32.mrb[0].mxu0
    %5722 = vmatprep.mubr.f32.mxu0 0.0
    %5723 = vmatmul.mubr.f32.gmra.mrb[0].mxu0 %v4079
    %v5724 = vpop.f32.mrb[0].mxu0
    %v5725 = vadd.f32 0.0, %v5724
    %v5726 = vpop.f32.mrb[0].mxu0
    %5727 = vdwg.mxu0
    %vm5728 = vmand %vm5396, %vm4394
    %vm5729 = vmand %vm5728, %vm4396
    %v5730 = vadd.s32 %v5399, %v4393
    %v5731 = vsel %vm5729, %v5730, 4294967295
    %vm5732 = vcmp.eq.s32.totalorder %v339, %v5731
    %vm5733 = vcmp.eq.s32.totalorder %v340, %v5731
    %vm5734 = vcmp.eq.s32.totalorder %v341, %v5731
    %vm5735 = vcmp.eq.s32.totalorder %v342, %v5731
    %vm5736 = vcmp.eq.s32.totalorder %v343, %v5731
    %vm5737 = vcmp.eq.s32.totalorder %v344, %v5731
    %vm5738 = vcmp.eq.s32.totalorder %v345, %v5731
    %vm5739 = vcmp.eq.s32.totalorder %v346, %v5731
    %v5740 = vsel %vm5732, 1.0, 0.0
    %v5741 = vsel %vm5733, 1.0, 0.0
    %v5742 = vsel %vm5734, 1.0, 0.0
    %v5743 = vsel %vm5735, 1.0, 0.0
    %v5744 = vsel %vm5736, 1.0, 0.0
    %v5745 = vsel %vm5737, 1.0, 0.0
    %v5746 = vsel %vm5738, 1.0, 0.0
    %v5747 = vsel %vm5739, 1.0, 0.0
    %5748 = vmatprep.subr.mxu0 0.0
    %5749 = vmatpush1.msra.mxu0 %v5740
    %5750 = vmatprep.subr.mxu0 0.0
    %5751 = vmatpush1.msra.mxu0 %v5741
    %5752 = vmatprep.subr.mxu0 0.0
    %5753 = vmatpush1.msra.mxu0 %v5742
    %5754 = vmatprep.subr.mxu0 0.0
    %5755 = vmatpush1.msra.mxu0 %v5743
    %5756 = vmatprep.subr.mxu0 0.0
    %5757 = vmatpush1.msra.mxu0 %v5744
    %5758 = vmatprep.subr.mxu0 0.0
    %5759 = vmatpush1.msra.mxu0 %v5745
    %5760 = vmatprep.subr.mxu0 0.0
    %5761 = vmatpush1.msra.mxu0 %v5746
    %5762 = vmatprep.subr.mxu0 0.0
    %5763 = vmatpush1.msra.mxu0 %v5747
    %5764 = vmatprep.subr.mxu0 0.0
    %5765 = vmatpush1.msra.mxu0 0.0
    %5766 = vmatprep.subr.mxu0 0.0
    %5767 = vmatpush1.msra.mxu0 0.0
    %5768 = vmatprep.subr.mxu0 0.0
    %5769 = vmatpush1.msra.mxu0 0.0
    %5770 = vmatprep.subr.mxu0 0.0
    %5771 = vmatpush1.msra.mxu0 0.0
    %5772 = vmatprep.subr.mxu0 0.0
    %5773 = vmatpush1.msra.mxu0 0.0
    %5774 = vmatprep.subr.mxu0 0.0
    %5775 = vmatpush1.msra.mxu0 0.0
    %5776 = vmatprep.subr.mxu0 0.0
    %5777 = vmatpush1.msra.mxu0 0.0
    %5778 = vmatprep.subr.mxu0 0.0
    %5779 = vmatpush1.msra.mxu0 0.0
    %5780 = vmatprep.subr.mxu0 0.0
    %5781 = vmatpush1.msra.mxu0 0.0
    %5782 = vmatprep.subr.mxu0 0.0
    %5783 = vmatpush1.msra.mxu0 0.0
    %5784 = vmatprep.subr.mxu0 0.0
    %5785 = vmatpush1.msra.mxu0 0.0
    %5786 = vmatprep.subr.mxu0 0.0
    %5787 = vmatpush1.msra.mxu0 0.0
    %5788 = vmatprep.subr.mxu0 0.0
    %5789 = vmatpush1.msra.mxu0 0.0
    %5790 = vmatprep.subr.mxu0 0.0
    %5791 = vmatpush1.msra.mxu0 0.0
    %5792 = vmatprep.subr.mxu0 0.0
    %5793 = vmatpush1.msra.mxu0 0.0
    %5794 = vmatprep.subr.mxu0 0.0
    %5795 = vmatpush1.msra.mxu0 0.0
    %5796 = vmatprep.subr.mxu0 0.0
    %5797 = vmatpush1.msra.mxu0 0.0
    %5798 = vmatprep.subr.mxu0 0.0
    %5799 = vmatpush1.msra.mxu0 0.0
    %5800 = vmatprep.subr.mxu0 0.0
    %5801 = vmatpush1.msra.mxu0 0.0
    %5802 = vmatprep.subr.mxu0 0.0
    %5803 = vmatpush1.msra.mxu0 0.0
    %5804 = vmatprep.subr.mxu0 0.0
    %5805 = vmatpush1.msra.mxu0 0.0
    %5806 = vmatprep.subr.mxu0 0.0
    %5807 = vmatpush1.msra.mxu0 0.0
    %5808 = vmatprep.subr.mxu0 0.0
    %5809 = vmatpush1.msra.mxu0 0.0
    %5810 = vmatprep.subr.mxu0 0.0
    %5811 = vmatpush1.msra.mxu0 0.0
    %5812 = vmatprep.mubr.f32.mxu0 0.0
    %5813 = vmatmul.mubr.f32.gmra.mrb[0].mxu0 %v4034
    %v5814 = vpop.f32.mrb[0].mxu0
    %v5815 = vadd.f32 0.0, %v5814
    %v5816 = vpop.f32.mrb[0].mxu0
    %5817 = vmatprep.mubr.f32.mxu0 0.0
    %5818 = vmatmul.mubr.f32.gmra.mrb[0].mxu0 %v4037
    %v5819 = vpop.f32.mrb[0].mxu0
    %v5820 = vadd.f32 0.0, %v5819
    %v5821 = vpop.f32.mrb[0].mxu0
    %5822 = vmatprep.mubr.f32.mxu0 0.0
    %5823 = vmatmul.mubr.f32.gmra.mrb[0].mxu0 %v4040
    %v5824 = vpop.f32.mrb[0].mxu0
    %v5825 = vadd.f32 0.0, %v5824
    %v5826 = vpop.f32.mrb[0].mxu0
    %5827 = vmatprep.mubr.f32.mxu0 0.0
    %5828 = vmatmul.mubr.f32.gmra.mrb[0].mxu0 %v4043
    %v5829 = vpop.f32.mrb[0].mxu0
    %v5830 = vadd.f32 0.0, %v5829
    %v5831 = vpop.f32.mrb[0].mxu0
    %5832 = vmatprep.mubr.f32.mxu0 0.0
    %5833 = vmatmul.mubr.f32.gmra.mrb[0].mxu0 %v4046
    %v5834 = vpop.f32.mrb[0].mxu0
    %v5835 = vadd.f32 0.0, %v5834
    %v5836 = vpop.f32.mrb[0].mxu0
    %5837 = vmatprep.mubr.f32.mxu0 0.0
    %5838 = vmatmul.mubr.f32.gmra.mrb[0].mxu0 %v4049
    %v5839 = vpop.f32.mrb[0].mxu0
    %v5840 = vadd.f32 0.0, %v5839
    %v5841 = vpop.f32.mrb[0].mxu0
    %5842 = vmatprep.mubr.f32.mxu0 0.0
    %5843 = vmatmul.mubr.f32.gmra.mrb[0].mxu0 %v4052
    %v5844 = vpop.f32.mrb[0].mxu0
    %v5845 = vadd.f32 0.0, %v5844
    %v5846 = vpop.f32.mrb[0].mxu0
    %5847 = vmatprep.mubr.f32.mxu0 0.0
    %5848 = vmatmul.mubr.f32.gmra.mrb[0].mxu0 %v4055
    %v5849 = vpop.f32.mrb[0].mxu0
    %v5850 = vadd.f32 0.0, %v5849
    %v5851 = vpop.f32.mrb[0].mxu0
    %5852 = vmatprep.mubr.f32.mxu0 0.0
    %5853 = vmatmul.mubr.f32.gmra.mrb[0].mxu0 %v4058
    %v5854 = vpop.f32.mrb[0].mxu0
    %v5855 = vadd.f32 0.0, %v5854
    %v5856 = vpop.f32.mrb[0].mxu0
    %5857 = vmatprep.mubr.f32.mxu0 0.0
    %5858 = vmatmul.mubr.f32.gmra.mrb[0].mxu0 %v4061
    %v5859 = vpop.f32.mrb[0].mxu0
    %v5860 = vadd.f32 0.0, %v5859
    %v5861 = vpop.f32.mrb[0].mxu0
    %5862 = vmatprep.mubr.f32.mxu0 0.0
    %5863 = vmatmul.mubr.f32.gmra.mrb[0].mxu0 %v4064
    %v5864 = vpop.f32.mrb[0].mxu0
    %v5865 = vadd.f32 0.0, %v5864
    %v5866 = vpop.f32.mrb[0].mxu0
    %5867 = vmatprep.mubr.f32.mxu0 0.0
    %5868 = vmatmul.mubr.f32.gmra.mrb[0].mxu0 %v4067
    %v5869 = vpop.f32.mrb[0].mxu0
    %v5870 = vadd.f32 0.0, %v5869
    %v5871 = vpop.f32.mrb[0].mxu0
    %5872 = vmatprep.mubr.f32.mxu0 0.0
    %5873 = vmatmul.mubr.f32.gmra.mrb[0].mxu0 %v4070
    %v5874 = vpop.f32.mrb[0].mxu0
    %v5875 = vadd.f32 0.0, %v5874
    %v5876 = vpop.f32.mrb[0].mxu0
    %5877 = vmatprep.mubr.f32.mxu0 0.0
    %5878 = vmatmul.mubr.f32.gmra.mrb[0].mxu0 %v4073
    %v5879 = vpop.f32.mrb[0].mxu0
    %v5880 = vadd.f32 0.0, %v5879
    %v5881 = vpop.f32.mrb[0].mxu0
    %5882 = vmatprep.mubr.f32.mxu0 0.0
    %5883 = vmatmul.mubr.f32.gmra.mrb[0].mxu0 %v4076
    %v5884 = vpop.f32.mrb[0].mxu0
    %v5885 = vadd.f32 0.0, %v5884
    %v5886 = vpop.f32.mrb[0].mxu0
    %5887 = vmatprep.mubr.f32.mxu0 0.0
    %5888 = vmatmul.mubr.f32.gmra.mrb[0].mxu0 %v4079
    %v5889 = vpop.f32.mrb[0].mxu0
    %v5890 = vadd.f32 0.0, %v5889
    %v5891 = vpop.f32.mrb[0].mxu0
    %5892 = vdwg.mxu0
    %vm5893 = vmand %vm5396, %vm4562
    %vm5894 = vmand %vm5893, %vm4564
    %v5895 = vadd.s32 %v5399, %v4561
    %v5896 = vsel %vm5894, %v5895, 4294967295
    %vm5897 = vcmp.eq.s32.totalorder %v339, %v5896
    %vm5898 = vcmp.eq.s32.totalorder %v340, %v5896
    %vm5899 = vcmp.eq.s32.totalorder %v341, %v5896
    %vm5900 = vcmp.eq.s32.totalorder %v342, %v5896
    %vm5901 = vcmp.eq.s32.totalorder %v343, %v5896
    %vm5902 = vcmp.eq.s32.totalorder %v344, %v5896
    %vm5903 = vcmp.eq.s32.totalorder %v345, %v5896
    %vm5904 = vcmp.eq.s32.totalorder %v346, %v5896
    %v5905 = vsel %vm5897, 1.0, 0.0
    %v5906 = vsel %vm5898, 1.0, 0.0
    %v5907 = vsel %vm5899, 1.0, 0.0
    %v5908 = vsel %vm5900, 1.0, 0.0
    %v5909 = vsel %vm5901, 1.0, 0.0
    %v5910 = vsel %vm5902, 1.0, 0.0
    %v5911 = vsel %vm5903, 1.0, 0.0
    %v5912 = vsel %vm5904, 1.0, 0.0
    %5913 = vmatprep.subr.mxu0 0.0
    %5914 = vmatpush1.msra.mxu0 %v5905
    %5915 = vmatprep.subr.mxu0 0.0
    %5916 = vmatpush1.msra.mxu0 %v5906
    %5917 = vmatprep.subr.mxu0 0.0
    %5918 = vmatpush1.msra.mxu0 %v5907
    %5919 = vmatprep.subr.mxu0 0.0
    %5920 = vmatpush1.msra.mxu0 %v5908
    %5921 = vmatprep.subr.mxu0 0.0
    %5922 = vmatpush1.msra.mxu0 %v5909
    %5923 = vmatprep.subr.mxu0 0.0
    %5924 = vmatpush1.msra.mxu0 %v5910
    %5925 = vmatprep.subr.mxu0 0.0
    %5926 = vmatpush1.msra.mxu0 %v5911
    %5927 = vmatprep.subr.mxu0 0.0
    %5928 = vmatpush1.msra.mxu0 %v5912
    %5929 = vmatprep.subr.mxu0 0.0
    %5930 = vmatpush1.msra.mxu0 0.0
    %5931 = vmatprep.subr.mxu0 0.0
    %5932 = vmatpush1.msra.mxu0 0.0
    %5933 = vmatprep.subr.mxu0 0.0
    %5934 = vmatpush1.msra.mxu0 0.0
    %5935 = vmatprep.subr.mxu0 0.0
    %5936 = vmatpush1.msra.mxu0 0.0
    %5937 = vmatprep.subr.mxu0 0.0
    %5938 = vmatpush1.msra.mxu0 0.0
    %5939 = vmatprep.subr.mxu0 0.0
    %5940 = vmatpush1.msra.mxu0 0.0
    %5941 = vmatprep.subr.mxu0 0.0
    %5942 = vmatpush1.msra.mxu0 0.0
    %5943 = vmatprep.subr.mxu0 0.0
    %5944 = vmatpush1.msra.mxu0 0.0
    %5945 = vmatprep.subr.mxu0 0.0
    %5946 = vmatpush1.msra.mxu0 0.0
    %5947 = vmatprep.subr.mxu0 0.0
    %5948 = vmatpush1.msra.mxu0 0.0
    %5949 = vmatprep.subr.mxu0 0.0
    %5950 = vmatpush1.msra.mxu0 0.0
    %5951 = vmatprep.subr.mxu0 0.0
    %5952 = vmatpush1.msra.mxu0 0.0
    %5953 = vmatprep.subr.mxu0 0.0
    %5954 = vmatpush1.msra.mxu0 0.0
    %5955 = vmatprep.subr.mxu0 0.0
    %5956 = vmatpush1.msra.mxu0 0.0
    %5957 = vmatprep.subr.mxu0 0.0
    %5958 = vmatpush1.msra.mxu0 0.0
    %5959 = vmatprep.subr.mxu0 0.0
    %5960 = vmatpush1.msra.mxu0 0.0
    %5961 = vmatprep.subr.mxu0 0.0
    %5962 = vmatpush1.msra.mxu0 0.0
    %5963 = vmatprep.subr.mxu0 0.0
    %5964 = vmatpush1.msra.mxu0 0.0
    %5965 = vmatprep.subr.mxu0 0.0
    %5966 = vmatpush1.msra.mxu0 0.0
    %5967 = vmatprep.subr.mxu0 0.0
    %5968 = vmatpush1.msra.mxu0 0.0
    %5969 = vmatprep.subr.mxu0 0.0
    %5970 = vmatpush1.msra.mxu0 0.0
    %5971 = vmatprep.subr.mxu0 0.0
    %5972 = vmatpush1.msra.mxu0 0.0
    %5973 = vmatprep.subr.mxu0 0.0
    %5974 = vmatpush1.msra.mxu0 0.0
    %5975 = vmatprep.subr.mxu0 0.0
    %5976 = vmatpush1.msra.mxu0 0.0
    %5977 = vmatprep.mubr.f32.mxu0 0.0
    %5978 = vmatmul.mubr.f32.gmra.mrb[0].mxu0 %v4034
    %v5979 = vpop.f32.mrb[0].mxu0
    %v5980 = vadd.f32 0.0, %v5979
    %v5981 = vpop.f32.mrb[0].mxu0
    %5982 = vmatprep.mubr.f32.mxu0 0.0
    %5983 = vmatmul.mubr.f32.gmra.mrb[0].mxu0 %v4037
    %v5984 = vpop.f32.mrb[0].mxu0
    %v5985 = vadd.f32 0.0, %v5984
    %v5986 = vpop.f32.mrb[0].mxu0
    %5987 = vmatprep.mubr.f32.mxu0 0.0
    %5988 = vmatmul.mubr.f32.gmra.mrb[0].mxu0 %v4040
    %v5989 = vpop.f32.mrb[0].mxu0
    %v5990 = vadd.f32 0.0, %v5989
    %v5991 = vpop.f32.mrb[0].mxu0
    %5992 = vmatprep.mubr.f32.mxu0 0.0
    %5993 = vmatmul.mubr.f32.gmra.mrb[0].mxu0 %v4043
    %v5994 = vpop.f32.mrb[0].mxu0
    %v5995 = vadd.f32 0.0, %v5994
    %v5996 = vpop.f32.mrb[0].mxu0
    %5997 = vmatprep.mubr.f32.mxu0 0.0
    %5998 = vmatmul.mubr.f32.gmra.mrb[0].mxu0 %v4046
    %v5999 = vpop.f32.mrb[0].mxu0
    %v6000 = vadd.f32 0.0, %v5999
    %v6001 = vpop.f32.mrb[0].mxu0
    %6002 = vmatprep.mubr.f32.mxu0 0.0
    %6003 = vmatmul.mubr.f32.gmra.mrb[0].mxu0 %v4049
    %v6004 = vpop.f32.mrb[0].mxu0
    %v6005 = vadd.f32 0.0, %v6004
    %v6006 = vpop.f32.mrb[0].mxu0
    %6007 = vmatprep.mubr.f32.mxu0 0.0
    %6008 = vmatmul.mubr.f32.gmra.mrb[0].mxu0 %v4052
    %v6009 = vpop.f32.mrb[0].mxu0
    %v6010 = vadd.f32 0.0, %v6009
    %v6011 = vpop.f32.mrb[0].mxu0
    %6012 = vmatprep.mubr.f32.mxu0 0.0
    %6013 = vmatmul.mubr.f32.gmra.mrb[0].mxu0 %v4055
    %v6014 = vpop.f32.mrb[0].mxu0
    %v6015 = vadd.f32 0.0, %v6014
    %v6016 = vpop.f32.mrb[0].mxu0
    %6017 = vmatprep.mubr.f32.mxu0 0.0
    %6018 = vmatmul.mubr.f32.gmra.mrb[0].mxu0 %v4058
    %v6019 = vpop.f32.mrb[0].mxu0
    %v6020 = vadd.f32 0.0, %v6019
    %v6021 = vpop.f32.mrb[0].mxu0
    %6022 = vmatprep.mubr.f32.mxu0 0.0
    %6023 = vmatmul.mubr.f32.gmra.mrb[0].mxu0 %v4061
    %v6024 = vpop.f32.mrb[0].mxu0
    %v6025 = vadd.f32 0.0, %v6024
    %v6026 = vpop.f32.mrb[0].mxu0
    %6027 = vmatprep.mubr.f32.mxu0 0.0
    %6028 = vmatmul.mubr.f32.gmra.mrb[0].mxu0 %v4064
    %v6029 = vpop.f32.mrb[0].mxu0
    %v6030 = vadd.f32 0.0, %v6029
    %v6031 = vpop.f32.mrb[0].mxu0
    %6032 = vmatprep.mubr.f32.mxu0 0.0
    %6033 = vmatmul.mubr.f32.gmra.mrb[0].mxu0 %v4067
    %v6034 = vpop.f32.mrb[0].mxu0
    %v6035 = vadd.f32 0.0, %v6034
    %v6036 = vpop.f32.mrb[0].mxu0
    %6037 = vmatprep.mubr.f32.mxu0 0.0
    %6038 = vmatmul.mubr.f32.gmra.mrb[0].mxu0 %v4070
    %v6039 = vpop.f32.mrb[0].mxu0
    %v6040 = vadd.f32 0.0, %v6039
    %v6041 = vpop.f32.mrb[0].mxu0
    %6042 = vmatprep.mubr.f32.mxu0 0.0
    %6043 = vmatmul.mubr.f32.gmra.mrb[0].mxu0 %v4073
    %v6044 = vpop.f32.mrb[0].mxu0
    %v6045 = vadd.f32 0.0, %v6044
    %v6046 = vpop.f32.mrb[0].mxu0
    %6047 = vmatprep.mubr.f32.mxu0 0.0
    %6048 = vmatmul.mubr.f32.gmra.mrb[0].mxu0 %v4076
    %v6049 = vpop.f32.mrb[0].mxu0
    %v6050 = vadd.f32 0.0, %v6049
    %v6051 = vpop.f32.mrb[0].mxu0
    %6052 = vmatprep.mubr.f32.mxu0 0.0
    %6053 = vmatmul.mubr.f32.gmra.mrb[0].mxu0 %v4079
    %v6054 = vpop.f32.mrb[0].mxu0
    %v6055 = vadd.f32 0.0, %v6054
    %v6056 = vpop.f32.mrb[0].mxu0
    %6057 = vdwg.mxu0
    %v6058 = vadd.s32 %v4003, 2
    %vm6059 = vcmp.ge.s32.totalorder %v6058, 0
    %vm6060 = vcmp.lt.s32.totalorder %v6058, 8
    %vm6061 = vmand %vm6059, %vm6060
    %vm6062 = vmand %vm6061, %vm4010
    %vm6063 = vmand %vm6062, %vm4012
    %v6064 = vshll.u32 %v6058, 3
    %v6065 = vadd.s32 %v6064, %v4006
    %v6066 = vsel %vm6063, %v6065, 4294967295
    %vm6067 = vcmp.eq.s32.totalorder %v339, %v6066
    %vm6068 = vcmp.eq.s32.totalorder %v340, %v6066
    %vm6069 = vcmp.eq.s32.totalorder %v341, %v6066
    %vm6070 = vcmp.eq.s32.totalorder %v342, %v6066
    %vm6071 = vcmp.eq.s32.totalorder %v343, %v6066
    %vm6072 = vcmp.eq.s32.totalorder %v344, %v6066
    %vm6073 = vcmp.eq.s32.totalorder %v345, %v6066
    %vm6074 = vcmp.eq.s32.totalorder %v346, %v6066
    %v6075 = vsel %vm6067, 1.0, 0.0
    %v6076 = vsel %vm6068, 1.0, 0.0
    %v6077 = vsel %vm6069, 1.0, 0.0
    %v6078 = vsel %vm6070, 1.0, 0.0
    %v6079 = vsel %vm6071, 1.0, 0.0
    %v6080 = vsel %vm6072, 1.0, 0.0
    %v6081 = vsel %vm6073, 1.0, 0.0
    %v6082 = vsel %vm6074, 1.0, 0.0
    %6083 = vmatprep.subr.mxu0 0.0
    %6084 = vmatpush1.msra.mxu0 %v6075
    %6085 = vmatprep.subr.mxu0 0.0
    %6086 = vmatpush1.msra.mxu0 %v6076
    %6087 = vmatprep.subr.mxu0 0.0
    %6088 = vmatpush1.msra.mxu0 %v6077
    %6089 = vmatprep.subr.mxu0 0.0
    %6090 = vmatpush1.msra.mxu0 %v6078
    %6091 = vmatprep.subr.mxu0 0.0
    %6092 = vmatpush1.msra.mxu0 %v6079
    %6093 = vmatprep.subr.mxu0 0.0
    %6094 = vmatpush1.msra.mxu0 %v6080
    %6095 = vmatprep.subr.mxu0 0.0
    %6096 = vmatpush1.msra.mxu0 %v6081
    %6097 = vmatprep.subr.mxu0 0.0
    %6098 = vmatpush1.msra.mxu0 %v6082
    %6099 = vmatprep.subr.mxu0 0.0
    %6100 = vmatpush1.msra.mxu0 0.0
    %6101 = vmatprep.subr.mxu0 0.0
    %6102 = vmatpush1.msra.mxu0 0.0
    %6103 = vmatprep.subr.mxu0 0.0
    %6104 = vmatpush1.msra.mxu0 0.0
    %6105 = vmatprep.subr.mxu0 0.0
    %6106 = vmatpush1.msra.mxu0 0.0
    %6107 = vmatprep.subr.mxu0 0.0
    %6108 = vmatpush1.msra.mxu0 0.0
    %6109 = vmatprep.subr.mxu0 0.0
    %6110 = vmatpush1.msra.mxu0 0.0
    %6111 = vmatprep.subr.mxu0 0.0
    %6112 = vmatpush1.msra.mxu0 0.0
    %6113 = vmatprep.subr.mxu0 0.0
    %6114 = vmatpush1.msra.mxu0 0.0
    %6115 = vmatprep.subr.mxu0 0.0
    %6116 = vmatpush1.msra.mxu0 0.0
    %6117 = vmatprep.subr.mxu0 0.0
    %6118 = vmatpush1.msra.mxu0 0.0
    %6119 = vmatprep.subr.mxu0 0.0
    %6120 = vmatpush1.msra.mxu0 0.0
    %6121 = vmatprep.subr.mxu0 0.0
    %6122 = vmatpush1.msra.mxu0 0.0
    %6123 = vmatprep.subr.mxu0 0.0
    %6124 = vmatpush1.msra.mxu0 0.0
    %6125 = vmatprep.subr.mxu0 0.0
    %6126 = vmatpush1.msra.mxu0 0.0
    %6127 = vmatprep.subr.mxu0 0.0
    %6128 = vmatpush1.msra.mxu0 0.0
    %6129 = vmatprep.subr.mxu0 0.0
    %6130 = vmatpush1.msra.mxu0 0.0
    %6131 = vmatprep.subr.mxu0 0.0
    %6132 = vmatpush1.msra.mxu0 0.0
    %6133 = vmatprep.subr.mxu0 0.0
    %6134 = vmatpush1.msra.mxu0 0.0
    %6135 = vmatprep.subr.mxu0 0.0
    %6136 = vmatpush1.msra.mxu0 0.0
    %6137 = vmatprep.subr.mxu0 0.0
    %6138 = vmatpush1.msra.mxu0 0.0
    %6139 = vmatprep.subr.mxu0 0.0
    %6140 = vmatpush1.msra.mxu0 0.0
    %6141 = vmatprep.subr.mxu0 0.0
    %6142 = vmatpush1.msra.mxu0 0.0
    %6143 = vmatprep.subr.mxu0 0.0
    %6144 = vmatpush1.msra.mxu0 0.0
    %6145 = vmatprep.subr.mxu0 0.0
    %6146 = vmatpush1.msra.mxu0 0.0
    %6147 = vmatprep.mubr.f32.mxu0 0.0
    %6148 = vmatmul.mubr.f32.gmra.mrb[0].mxu0 %v4034
    %v6149 = vpop.f32.mrb[0].mxu0
    %v6150 = vadd.f32 0.0, %v6149
    %v6151 = vpop.f32.mrb[0].mxu0
    %6152 = vmatprep.mubr.f32.mxu0 0.0
    %6153 = vmatmul.mubr.f32.gmra.mrb[0].mxu0 %v4037
    %v6154 = vpop.f32.mrb[0].mxu0
    %v6155 = vadd.f32 0.0, %v6154
    %v6156 = vpop.f32.mrb[0].mxu0
    %6157 = vmatprep.mubr.f32.mxu0 0.0
    %6158 = vmatmul.mubr.f32.gmra.mrb[0].mxu0 %v4040
    %v6159 = vpop.f32.mrb[0].mxu0
    %v6160 = vadd.f32 0.0, %v6159
    %v6161 = vpop.f32.mrb[0].mxu0
    %6162 = vmatprep.mubr.f32.mxu0 0.0
    %6163 = vmatmul.mubr.f32.gmra.mrb[0].mxu0 %v4043
    %v6164 = vpop.f32.mrb[0].mxu0
    %v6165 = vadd.f32 0.0, %v6164
    %v6166 = vpop.f32.mrb[0].mxu0
    %6167 = vmatprep.mubr.f32.mxu0 0.0
    %6168 = vmatmul.mubr.f32.gmra.mrb[0].mxu0 %v4046
    %v6169 = vpop.f32.mrb[0].mxu0
    %v6170 = vadd.f32 0.0, %v6169
    %v6171 = vpop.f32.mrb[0].mxu0
    %6172 = vmatprep.mubr.f32.mxu0 0.0
    %6173 = vmatmul.mubr.f32.gmra.mrb[0].mxu0 %v4049
    %v6174 = vpop.f32.mrb[0].mxu0
    %v6175 = vadd.f32 0.0, %v6174
    %v6176 = vpop.f32.mrb[0].mxu0
    %6177 = vmatprep.mubr.f32.mxu0 0.0
    %6178 = vmatmul.mubr.f32.gmra.mrb[0].mxu0 %v4052
    %v6179 = vpop.f32.mrb[0].mxu0
    %v6180 = vadd.f32 0.0, %v6179
    %v6181 = vpop.f32.mrb[0].mxu0
    %6182 = vmatprep.mubr.f32.mxu0 0.0
    %6183 = vmatmul.mubr.f32.gmra.mrb[0].mxu0 %v4055
    %v6184 = vpop.f32.mrb[0].mxu0
    %v6185 = vadd.f32 0.0, %v6184
    %v6186 = vpop.f32.mrb[0].mxu0
    %6187 = vmatprep.mubr.f32.mxu0 0.0
    %6188 = vmatmul.mubr.f32.gmra.mrb[0].mxu0 %v4058
    %v6189 = vpop.f32.mrb[0].mxu0
    %v6190 = vadd.f32 0.0, %v6189
    %v6191 = vpop.f32.mrb[0].mxu0
    %6192 = vmatprep.mubr.f32.mxu0 0.0
    %6193 = vmatmul.mubr.f32.gmra.mrb[0].mxu0 %v4061
    %v6194 = vpop.f32.mrb[0].mxu0
    %v6195 = vadd.f32 0.0, %v6194
    %v6196 = vpop.f32.mrb[0].mxu0
    %6197 = vmatprep.mubr.f32.mxu0 0.0
    %6198 = vmatmul.mubr.f32.gmra.mrb[0].mxu0 %v4064
    %v6199 = vpop.f32.mrb[0].mxu0
    %v6200 = vadd.f32 0.0, %v6199
    %v6201 = vpop.f32.mrb[0].mxu0
    %6202 = vmatprep.mubr.f32.mxu0 0.0
    %6203 = vmatmul.mubr.f32.gmra.mrb[0].mxu0 %v4067
    %v6204 = vpop.f32.mrb[0].mxu0
    %v6205 = vadd.f32 0.0, %v6204
    %v6206 = vpop.f32.mrb[0].mxu0
    %6207 = vmatprep.mubr.f32.mxu0 0.0
    %6208 = vmatmul.mubr.f32.gmra.mrb[0].mxu0 %v4070
    %v6209 = vpop.f32.mrb[0].mxu0
    %v6210 = vadd.f32 0.0, %v6209
    %v6211 = vpop.f32.mrb[0].mxu0
    %6212 = vmatprep.mubr.f32.mxu0 0.0
    %6213 = vmatmul.mubr.f32.gmra.mrb[0].mxu0 %v4073
    %v6214 = vpop.f32.mrb[0].mxu0
    %v6215 = vadd.f32 0.0, %v6214
    %v6216 = vpop.f32.mrb[0].mxu0
    %6217 = vmatprep.mubr.f32.mxu0 0.0
    %6218 = vmatmul.mubr.f32.gmra.mrb[0].mxu0 %v4076
    %v6219 = vpop.f32.mrb[0].mxu0
    %v6220 = vadd.f32 0.0, %v6219
    %v6221 = vpop.f32.mrb[0].mxu0
    %6222 = vmatprep.mubr.f32.mxu0 0.0
    %6223 = vmatmul.mubr.f32.gmra.mrb[0].mxu0 %v4079
    %v6224 = vpop.f32.mrb[0].mxu0
    %v6225 = vadd.f32 0.0, %v6224
    %v6226 = vpop.f32.mrb[0].mxu0
    %6227 = vdwg.mxu0
    %vm6228 = vmand %vm6061, %vm4226
    %vm6229 = vmand %vm6228, %vm4228
    %v6230 = vadd.s32 %v6064, %v4005
    %v6231 = vsel %vm6229, %v6230, 4294967295
    %vm6232 = vcmp.eq.s32.totalorder %v339, %v6231
    %vm6233 = vcmp.eq.s32.totalorder %v340, %v6231
    %vm6234 = vcmp.eq.s32.totalorder %v341, %v6231
    %vm6235 = vcmp.eq.s32.totalorder %v342, %v6231
    %vm6236 = vcmp.eq.s32.totalorder %v343, %v6231
    %vm6237 = vcmp.eq.s32.totalorder %v344, %v6231
    %vm6238 = vcmp.eq.s32.totalorder %v345, %v6231
    %vm6239 = vcmp.eq.s32.totalorder %v346, %v6231
    %v6240 = vsel %vm6232, 1.0, 0.0
    %v6241 = vsel %vm6233, 1.0, 0.0
    %v6242 = vsel %vm6234, 1.0, 0.0
    %v6243 = vsel %vm6235, 1.0, 0.0
    %v6244 = vsel %vm6236, 1.0, 0.0
    %v6245 = vsel %vm6237, 1.0, 0.0
    %v6246 = vsel %vm6238, 1.0, 0.0
    %v6247 = vsel %vm6239, 1.0, 0.0
    %6248 = vmatprep.subr.mxu0 0.0
    %6249 = vmatpush1.msra.mxu0 %v6240
    %6250 = vmatprep.subr.mxu0 0.0
    %6251 = vmatpush1.msra.mxu0 %v6241
    %6252 = vmatprep.subr.mxu0 0.0
    %6253 = vmatpush1.msra.mxu0 %v6242
    %6254 = vmatprep.subr.mxu0 0.0
    %6255 = vmatpush1.msra.mxu0 %v6243
    %6256 = vmatprep.subr.mxu0 0.0
    %6257 = vmatpush1.msra.mxu0 %v6244
    %6258 = vmatprep.subr.mxu0 0.0
    %6259 = vmatpush1.msra.mxu0 %v6245
    %6260 = vmatprep.subr.mxu0 0.0
    %6261 = vmatpush1.msra.mxu0 %v6246
    %6262 = vmatprep.subr.mxu0 0.0
    %6263 = vmatpush1.msra.mxu0 %v6247
    %6264 = vmatprep.subr.mxu0 0.0
    %6265 = vmatpush1.msra.mxu0 0.0
    %6266 = vmatprep.subr.mxu0 0.0
    %6267 = vmatpush1.msra.mxu0 0.0
    %6268 = vmatprep.subr.mxu0 0.0
    %6269 = vmatpush1.msra.mxu0 0.0
    %6270 = vmatprep.subr.mxu0 0.0
    %6271 = vmatpush1.msra.mxu0 0.0
    %6272 = vmatprep.subr.mxu0 0.0
    %6273 = vmatpush1.msra.mxu0 0.0
    %6274 = vmatprep.subr.mxu0 0.0
    %6275 = vmatpush1.msra.mxu0 0.0
    %6276 = vmatprep.subr.mxu0 0.0
    %6277 = vmatpush1.msra.mxu0 0.0
    %6278 = vmatprep.subr.mxu0 0.0
    %6279 = vmatpush1.msra.mxu0 0.0
    %6280 = vmatprep.subr.mxu0 0.0
    %6281 = vmatpush1.msra.mxu0 0.0
    %6282 = vmatprep.subr.mxu0 0.0
    %6283 = vmatpush1.msra.mxu0 0.0
    %6284 = vmatprep.subr.mxu0 0.0
    %6285 = vmatpush1.msra.mxu0 0.0
    %6286 = vmatprep.subr.mxu0 0.0
    %6287 = vmatpush1.msra.mxu0 0.0
    %6288 = vmatprep.subr.mxu0 0.0
    %6289 = vmatpush1.msra.mxu0 0.0
    %6290 = vmatprep.subr.mxu0 0.0
    %6291 = vmatpush1.msra.mxu0 0.0
    %6292 = vmatprep.subr.mxu0 0.0
    %6293 = vmatpush1.msra.mxu0 0.0
    %6294 = vmatprep.subr.mxu0 0.0
    %6295 = vmatpush1.msra.mxu0 0.0
    %6296 = vmatprep.subr.mxu0 0.0
    %6297 = vmatpush1.msra.mxu0 0.0
    %6298 = vmatprep.subr.mxu0 0.0
    %6299 = vmatpush1.msra.mxu0 0.0
    %6300 = vmatprep.subr.mxu0 0.0
    %6301 = vmatpush1.msra.mxu0 0.0
    %6302 = vmatprep.subr.mxu0 0.0
    %6303 = vmatpush1.msra.mxu0 0.0
    %6304 = vmatprep.subr.mxu0 0.0
    %6305 = vmatpush1.msra.mxu0 0.0
    %6306 = vmatprep.subr.mxu0 0.0
    %6307 = vmatpush1.msra.mxu0 0.0
    %6308 = vmatprep.subr.mxu0 0.0
    %6309 = vmatpush1.msra.mxu0 0.0
    %6310 = vmatprep.subr.mxu0 0.0
    %6311 = vmatpush1.msra.mxu0 0.0
    %6312 = vmatprep.mubr.f32.mxu0 0.0
    %6313 = vmatmul.mubr.f32.gmra.mrb[0].mxu0 %v4034
    %v6314 = vpop.f32.mrb[0].mxu0
    %v6315 = vadd.f32 0.0, %v6314
    %v6316 = vpop.f32.mrb[0].mxu0
    %6317 = vmatprep.mubr.f32.mxu0 0.0
    %6318 = vmatmul.mubr.f32.gmra.mrb[0].mxu0 %v4037
    %v6319 = vpop.f32.mrb[0].mxu0
    %v6320 = vadd.f32 0.0, %v6319
    %v6321 = vpop.f32.mrb[0].mxu0
    %6322 = vmatprep.mubr.f32.mxu0 0.0
    %6323 = vmatmul.mubr.f32.gmra.mrb[0].mxu0 %v4040
    %v6324 = vpop.f32.mrb[0].mxu0
    %v6325 = vadd.f32 0.0, %v6324
    %v6326 = vpop.f32.mrb[0].mxu0
    %6327 = vmatprep.mubr.f32.mxu0 0.0
    %6328 = vmatmul.mubr.f32.gmra.mrb[0].mxu0 %v4043
    %v6329 = vpop.f32.mrb[0].mxu0
    %v6330 = vadd.f32 0.0, %v6329
    %v6331 = vpop.f32.mrb[0].mxu0
    %6332 = vmatprep.mubr.f32.mxu0 0.0
    %6333 = vmatmul.mubr.f32.gmra.mrb[0].mxu0 %v4046
    %v6334 = vpop.f32.mrb[0].mxu0
    %v6335 = vadd.f32 0.0, %v6334
    %v6336 = vpop.f32.mrb[0].mxu0
    %6337 = vmatprep.mubr.f32.mxu0 0.0
    %6338 = vmatmul.mubr.f32.gmra.mrb[0].mxu0 %v4049
    %v6339 = vpop.f32.mrb[0].mxu0
    %v6340 = vadd.f32 0.0, %v6339
    %v6341 = vpop.f32.mrb[0].mxu0
    %6342 = vmatprep.mubr.f32.mxu0 0.0
    %6343 = vmatmul.mubr.f32.gmra.mrb[0].mxu0 %v4052
    %v6344 = vpop.f32.mrb[0].mxu0
    %v6345 = vadd.f32 0.0, %v6344
    %v6346 = vpop.f32.mrb[0].mxu0
    %6347 = vmatprep.mubr.f32.mxu0 0.0
    %6348 = vmatmul.mubr.f32.gmra.mrb[0].mxu0 %v4055
    %v6349 = vpop.f32.mrb[0].mxu0
    %v6350 = vadd.f32 0.0, %v6349
    %v6351 = vpop.f32.mrb[0].mxu0
    %6352 = vmatprep.mubr.f32.mxu0 0.0
    %6353 = vmatmul.mubr.f32.gmra.mrb[0].mxu0 %v4058
    %v6354 = vpop.f32.mrb[0].mxu0
    %v6355 = vadd.f32 0.0, %v6354
    %v6356 = vpop.f32.mrb[0].mxu0
    %6357 = vmatprep.mubr.f32.mxu0 0.0
    %6358 = vmatmul.mubr.f32.gmra.mrb[0].mxu0 %v4061
    %v6359 = vpop.f32.mrb[0].mxu0
    %v6360 = vadd.f32 0.0, %v6359
    %v6361 = vpop.f32.mrb[0].mxu0
    %6362 = vmatprep.mubr.f32.mxu0 0.0
    %6363 = vmatmul.mubr.f32.gmra.mrb[0].mxu0 %v4064
    %v6364 = vpop.f32.mrb[0].mxu0
    %v6365 = vadd.f32 0.0, %v6364
    %v6366 = vpop.f32.mrb[0].mxu0
    %6367 = vmatprep.mubr.f32.mxu0 0.0
    %6368 = vmatmul.mubr.f32.gmra.mrb[0].mxu0 %v4067
    %v6369 = vpop.f32.mrb[0].mxu0
    %v6370 = vadd.f32 0.0, %v6369
    %v6371 = vpop.f32.mrb[0].mxu0
    %6372 = vmatprep.mubr.f32.mxu0 0.0
    %6373 = vmatmul.mubr.f32.gmra.mrb[0].mxu0 %v4070
    %v6374 = vpop.f32.mrb[0].mxu0
    %v6375 = vadd.f32 0.0, %v6374
    %v6376 = vpop.f32.mrb[0].mxu0
    %6377 = vmatprep.mubr.f32.mxu0 0.0
    %6378 = vmatmul.mubr.f32.gmra.mrb[0].mxu0 %v4073
    %v6379 = vpop.f32.mrb[0].mxu0
    %v6380 = vadd.f32 0.0, %v6379
    %v6381 = vpop.f32.mrb[0].mxu0
    %6382 = vmatprep.mubr.f32.mxu0 0.0
    %6383 = vmatmul.mubr.f32.gmra.mrb[0].mxu0 %v4076
    %v6384 = vpop.f32.mrb[0].mxu0
    %v6385 = vadd.f32 0.0, %v6384
    %v6386 = vpop.f32.mrb[0].mxu0
    %6387 = vmatprep.mubr.f32.mxu0 0.0
    %6388 = vmatmul.mubr.f32.gmra.mrb[0].mxu0 %v4079
    %v6389 = vpop.f32.mrb[0].mxu0
    %v6390 = vadd.f32 0.0, %v6389
    %v6391 = vpop.f32.mrb[0].mxu0
    %6392 = vdwg.mxu0
    %vm6393 = vmand %vm6061, %vm4394
    %vm6394 = vmand %vm6393, %vm4396
    %v6395 = vadd.s32 %v6064, %v4393
    %v6396 = vsel %vm6394, %v6395, 4294967295
    %vm6397 = vcmp.eq.s32.totalorder %v339, %v6396
    %vm6398 = vcmp.eq.s32.totalorder %v340, %v6396
    %vm6399 = vcmp.eq.s32.totalorder %v341, %v6396
    %vm6400 = vcmp.eq.s32.totalorder %v342, %v6396
    %vm6401 = vcmp.eq.s32.totalorder %v343, %v6396
    %vm6402 = vcmp.eq.s32.totalorder %v344, %v6396
    %vm6403 = vcmp.eq.s32.totalorder %v345, %v6396
    %vm6404 = vcmp.eq.s32.totalorder %v346, %v6396
    %v6405 = vsel %vm6397, 1.0, 0.0
    %v6406 = vsel %vm6398, 1.0, 0.0
    %v6407 = vsel %vm6399, 1.0, 0.0
    %v6408 = vsel %vm6400, 1.0, 0.0
    %v6409 = vsel %vm6401, 1.0, 0.0
    %v6410 = vsel %vm6402, 1.0, 0.0
    %v6411 = vsel %vm6403, 1.0, 0.0
    %v6412 = vsel %vm6404, 1.0, 0.0
    %6413 = vmatprep.subr.mxu0 0.0
    %6414 = vmatpush1.msra.mxu0 %v6405
    %6415 = vmatprep.subr.mxu0 0.0
    %6416 = vmatpush1.msra.mxu0 %v6406
    %6417 = vmatprep.subr.mxu0 0.0
    %6418 = vmatpush1.msra.mxu0 %v6407
    %6419 = vmatprep.subr.mxu0 0.0
    %6420 = vmatpush1.msra.mxu0 %v6408
    %6421 = vmatprep.subr.mxu0 0.0
    %6422 = vmatpush1.msra.mxu0 %v6409
    %6423 = vmatprep.subr.mxu0 0.0
    %6424 = vmatpush1.msra.mxu0 %v6410
    %6425 = vmatprep.subr.mxu0 0.0
    %6426 = vmatpush1.msra.mxu0 %v6411
    %6427 = vmatprep.subr.mxu0 0.0
    %6428 = vmatpush1.msra.mxu0 %v6412
    %6429 = vmatprep.subr.mxu0 0.0
    %6430 = vmatpush1.msra.mxu0 0.0
    %6431 = vmatprep.subr.mxu0 0.0
    %6432 = vmatpush1.msra.mxu0 0.0
    %6433 = vmatprep.subr.mxu0 0.0
    %6434 = vmatpush1.msra.mxu0 0.0
    %6435 = vmatprep.subr.mxu0 0.0
    %6436 = vmatpush1.msra.mxu0 0.0
    %6437 = vmatprep.subr.mxu0 0.0
    %6438 = vmatpush1.msra.mxu0 0.0
    %6439 = vmatprep.subr.mxu0 0.0
    %6440 = vmatpush1.msra.mxu0 0.0
    %6441 = vmatprep.subr.mxu0 0.0
    %6442 = vmatpush1.msra.mxu0 0.0
    %6443 = vmatprep.subr.mxu0 0.0
    %6444 = vmatpush1.msra.mxu0 0.0
    %6445 = vmatprep.subr.mxu0 0.0
    %6446 = vmatpush1.msra.mxu0 0.0
    %6447 = vmatprep.subr.mxu0 0.0
    %6448 = vmatpush1.msra.mxu0 0.0
    %6449 = vmatprep.subr.mxu0 0.0
    %6450 = vmatpush1.msra.mxu0 0.0
    %6451 = vmatprep.subr.mxu0 0.0
    %6452 = vmatpush1.msra.mxu0 0.0
    %6453 = vmatprep.subr.mxu0 0.0
    %6454 = vmatpush1.msra.mxu0 0.0
    %6455 = vmatprep.subr.mxu0 0.0
    %6456 = vmatpush1.msra.mxu0 0.0
    %6457 = vmatprep.subr.mxu0 0.0
    %6458 = vmatpush1.msra.mxu0 0.0
    %6459 = vmatprep.subr.mxu0 0.0
    %6460 = vmatpush1.msra.mxu0 0.0
    %6461 = vmatprep.subr.mxu0 0.0
    %6462 = vmatpush1.msra.mxu0 0.0
    %6463 = vmatprep.subr.mxu0 0.0
    %6464 = vmatpush1.msra.mxu0 0.0
    %6465 = vmatprep.subr.mxu0 0.0
    %6466 = vmatpush1.msra.mxu0 0.0
    %6467 = vmatprep.subr.mxu0 0.0
    %6468 = vmatpush1.msra.mxu0 0.0
    %6469 = vmatprep.subr.mxu0 0.0
    %6470 = vmatpush1.msra.mxu0 0.0
    %6471 = vmatprep.subr.mxu0 0.0
    %6472 = vmatpush1.msra.mxu0 0.0
    %6473 = vmatprep.subr.mxu0 0.0
    %6474 = vmatpush1.msra.mxu0 0.0
    %6475 = vmatprep.subr.mxu0 0.0
    %6476 = vmatpush1.msra.mxu0 0.0
    %6477 = vmatprep.mubr.f32.mxu0 0.0
    %6478 = vmatmul.mubr.f32.gmra.mrb[0].mxu0 %v4034
    %v6479 = vpop.f32.mrb[0].mxu0
    %v6480 = vadd.f32 0.0, %v6479
    %v6481 = vpop.f32.mrb[0].mxu0
    %6482 = vmatprep.mubr.f32.mxu0 0.0
    %6483 = vmatmul.mubr.f32.gmra.mrb[0].mxu0 %v4037
    %v6484 = vpop.f32.mrb[0].mxu0
    %v6485 = vadd.f32 0.0, %v6484
    %v6486 = vpop.f32.mrb[0].mxu0
    %6487 = vmatprep.mubr.f32.mxu0 0.0
    %6488 = vmatmul.mubr.f32.gmra.mrb[0].mxu0 %v4040
    %v6489 = vpop.f32.mrb[0].mxu0
    %v6490 = vadd.f32 0.0, %v6489
    %v6491 = vpop.f32.mrb[0].mxu0
    %6492 = vmatprep.mubr.f32.mxu0 0.0
    %6493 = vmatmul.mubr.f32.gmra.mrb[0].mxu0 %v4043
    %v6494 = vpop.f32.mrb[0].mxu0
    %v6495 = vadd.f32 0.0, %v6494
    %v6496 = vpop.f32.mrb[0].mxu0
    %6497 = vmatprep.mubr.f32.mxu0 0.0
    %6498 = vmatmul.mubr.f32.gmra.mrb[0].mxu0 %v4046
    %v6499 = vpop.f32.mrb[0].mxu0
    %v6500 = vadd.f32 0.0, %v6499
    %v6501 = vpop.f32.mrb[0].mxu0
    %6502 = vmatprep.mubr.f32.mxu0 0.0
    %6503 = vmatmul.mubr.f32.gmra.mrb[0].mxu0 %v4049
    %v6504 = vpop.f32.mrb[0].mxu0
    %v6505 = vadd.f32 0.0, %v6504
    %v6506 = vpop.f32.mrb[0].mxu0
    %6507 = vmatprep.mubr.f32.mxu0 0.0
    %6508 = vmatmul.mubr.f32.gmra.mrb[0].mxu0 %v4052
    %v6509 = vpop.f32.mrb[0].mxu0
    %v6510 = vadd.f32 0.0, %v6509
    %v6511 = vpop.f32.mrb[0].mxu0
    %6512 = vmatprep.mubr.f32.mxu0 0.0
    %6513 = vmatmul.mubr.f32.gmra.mrb[0].mxu0 %v4055
    %v6514 = vpop.f32.mrb[0].mxu0
    %v6515 = vadd.f32 0.0, %v6514
    %v6516 = vpop.f32.mrb[0].mxu0
    %6517 = vmatprep.mubr.f32.mxu0 0.0
    %6518 = vmatmul.mubr.f32.gmra.mrb[0].mxu0 %v4058
    %v6519 = vpop.f32.mrb[0].mxu0
    %v6520 = vadd.f32 0.0, %v6519
    %v6521 = vpop.f32.mrb[0].mxu0
    %6522 = vmatprep.mubr.f32.mxu0 0.0
    %6523 = vmatmul.mubr.f32.gmra.mrb[0].mxu0 %v4061
    %v6524 = vpop.f32.mrb[0].mxu0
    %v6525 = vadd.f32 0.0, %v6524
    %v6526 = vpop.f32.mrb[0].mxu0
    %6527 = vmatprep.mubr.f32.mxu0 0.0
    %6528 = vmatmul.mubr.f32.gmra.mrb[0].mxu0 %v4064
    %v6529 = vpop.f32.mrb[0].mxu0
    %v6530 = vadd.f32 0.0, %v6529
    %v6531 = vpop.f32.mrb[0].mxu0
    %6532 = vmatprep.mubr.f32.mxu0 0.0
    %6533 = vmatmul.mubr.f32.gmra.mrb[0].mxu0 %v4067
    %v6534 = vpop.f32.mrb[0].mxu0
    %v6535 = vadd.f32 0.0, %v6534
    %v6536 = vpop.f32.mrb[0].mxu0
    %6537 = vmatprep.mubr.f32.mxu0 0.0
    %6538 = vmatmul.mubr.f32.gmra.mrb[0].mxu0 %v4070
    %v6539 = vpop.f32.mrb[0].mxu0
    %v6540 = vadd.f32 0.0, %v6539
    %v6541 = vpop.f32.mrb[0].mxu0
    %6542 = vmatprep.mubr.f32.mxu0 0.0
    %6543 = vmatmul.mubr.f32.gmra.mrb[0].mxu0 %v4073
    %v6544 = vpop.f32.mrb[0].mxu0
    %v6545 = vadd.f32 0.0, %v6544
    %v6546 = vpop.f32.mrb[0].mxu0
    %6547 = vmatprep.mubr.f32.mxu0 0.0
    %6548 = vmatmul.mubr.f32.gmra.mrb[0].mxu0 %v4076
    %v6549 = vpop.f32.mrb[0].mxu0
    %v6550 = vadd.f32 0.0, %v6549
    %v6551 = vpop.f32.mrb[0].mxu0
    %6552 = vmatprep.mubr.f32.mxu0 0.0
    %6553 = vmatmul.mubr.f32.gmra.mrb[0].mxu0 %v4079
    %v6554 = vpop.f32.mrb[0].mxu0
    %v6555 = vadd.f32 0.0, %v6554
    %v6556 = vpop.f32.mrb[0].mxu0
    %6557 = vdwg.mxu0
    %vm6558 = vmand %vm6061, %vm4562
    %vm6559 = vmand %vm6558, %vm4564
    %v6560 = vadd.s32 %v6064, %v4561
    %v6561 = vsel %vm6559, %v6560, 4294967295
    %vm6562 = vcmp.eq.s32.totalorder %v339, %v6561
    %vm6563 = vcmp.eq.s32.totalorder %v340, %v6561
    %vm6564 = vcmp.eq.s32.totalorder %v341, %v6561
    %vm6565 = vcmp.eq.s32.totalorder %v342, %v6561
    %vm6566 = vcmp.eq.s32.totalorder %v343, %v6561
    %vm6567 = vcmp.eq.s32.totalorder %v344, %v6561
    %vm6568 = vcmp.eq.s32.totalorder %v345, %v6561
    %vm6569 = vcmp.eq.s32.totalorder %v346, %v6561
    %v6570 = vsel %vm6562, 1.0, 0.0
    %v6571 = vsel %vm6563, 1.0, 0.0
    %v6572 = vsel %vm6564, 1.0, 0.0
    %v6573 = vsel %vm6565, 1.0, 0.0
    %v6574 = vsel %vm6566, 1.0, 0.0
    %v6575 = vsel %vm6567, 1.0, 0.0
    %v6576 = vsel %vm6568, 1.0, 0.0
    %v6577 = vsel %vm6569, 1.0, 0.0
    %6578 = vmatprep.subr.mxu0 0.0
    %6579 = vmatpush1.msra.mxu0 %v6570
    %6580 = vmatprep.subr.mxu0 0.0
    %6581 = vmatpush1.msra.mxu0 %v6571
    %6582 = vmatprep.subr.mxu0 0.0
    %6583 = vmatpush1.msra.mxu0 %v6572
    %6584 = vmatprep.subr.mxu0 0.0
    %6585 = vmatpush1.msra.mxu0 %v6573
    %6586 = vmatprep.subr.mxu0 0.0
    %6587 = vmatpush1.msra.mxu0 %v6574
    %6588 = vmatprep.subr.mxu0 0.0
    %6589 = vmatpush1.msra.mxu0 %v6575
    %6590 = vmatprep.subr.mxu0 0.0
    %6591 = vmatpush1.msra.mxu0 %v6576
    %6592 = vmatprep.subr.mxu0 0.0
    %6593 = vmatpush1.msra.mxu0 %v6577
    %6594 = vmatprep.subr.mxu0 0.0
    %6595 = vmatpush1.msra.mxu0 0.0
    %6596 = vmatprep.subr.mxu0 0.0
    %6597 = vmatpush1.msra.mxu0 0.0
    %6598 = vmatprep.subr.mxu0 0.0
    %6599 = vmatpush1.msra.mxu0 0.0
    %6600 = vmatprep.subr.mxu0 0.0
    %6601 = vmatpush1.msra.mxu0 0.0
    %6602 = vmatprep.subr.mxu0 0.0
    %6603 = vmatpush1.msra.mxu0 0.0
    %6604 = vmatprep.subr.mxu0 0.0
    %6605 = vmatpush1.msra.mxu0 0.0
    %6606 = vmatprep.subr.mxu0 0.0
    %6607 = vmatpush1.msra.mxu0 0.0
    %6608 = vmatprep.subr.mxu0 0.0
    %6609 = vmatpush1.msra.mxu0 0.0
    %6610 = vmatprep.subr.mxu0 0.0
    %6611 = vmatpush1.msra.mxu0 0.0
    %6612 = vmatprep.subr.mxu0 0.0
    %6613 = vmatpush1.msra.mxu0 0.0
    %6614 = vmatprep.subr.mxu0 0.0
    %6615 = vmatpush1.msra.mxu0 0.0
    %6616 = vmatprep.subr.mxu0 0.0
    %6617 = vmatpush1.msra.mxu0 0.0
    %6618 = vmatprep.subr.mxu0 0.0
    %6619 = vmatpush1.msra.mxu0 0.0
    %6620 = vmatprep.subr.mxu0 0.0
    %6621 = vmatpush1.msra.mxu0 0.0
    %6622 = vmatprep.subr.mxu0 0.0
    %6623 = vmatpush1.msra.mxu0 0.0
    %6624 = vmatprep.subr.mxu0 0.0
    %6625 = vmatpush1.msra.mxu0 0.0
    %6626 = vmatprep.subr.mxu0 0.0
    %6627 = vmatpush1.msra.mxu0 0.0
    %6628 = vmatprep.subr.mxu0 0.0
    %6629 = vmatpush1.msra.mxu0 0.0
    %6630 = vmatprep.subr.mxu0 0.0
    %6631 = vmatpush1.msra.mxu0 0.0
    %6632 = vmatprep.subr.mxu0 0.0
    %6633 = vmatpush1.msra.mxu0 0.0
    %6634 = vmatprep.subr.mxu0 0.0
    %6635 = vmatpush1.msra.mxu0 0.0
    %6636 = vmatprep.subr.mxu0 0.0
    %6637 = vmatpush1.msra.mxu0 0.0
    %6638 = vmatprep.subr.mxu0 0.0
    %6639 = vmatpush1.msra.mxu0 0.0
    %6640 = vmatprep.subr.mxu0 0.0
    %6641 = vmatpush1.msra.mxu0 0.0
    %6642 = vmatprep.mubr.f32.mxu0 0.0
    %6643 = vmatmul.mubr.f32.gmra.mrb[0].mxu0 %v4034
    %v6644 = vpop.f32.mrb[0].mxu0
    %v6645 = vadd.f32 0.0, %v6644
    %v6646 = vpop.f32.mrb[0].mxu0
    %6647 = vmatprep.mubr.f32.mxu0 0.0
    %6648 = vmatmul.mubr.f32.gmra.mrb[0].mxu0 %v4037
    %v6649 = vpop.f32.mrb[0].mxu0
    %v6650 = vadd.f32 0.0, %v6649
    %v6651 = vpop.f32.mrb[0].mxu0
    %6652 = vmatprep.mubr.f32.mxu0 0.0
    %6653 = vmatmul.mubr.f32.gmra.mrb[0].mxu0 %v4040
    %v6654 = vpop.f32.mrb[0].mxu0
    %v6655 = vadd.f32 0.0, %v6654
    %v6656 = vpop.f32.mrb[0].mxu0
    %6657 = vmatprep.mubr.f32.mxu0 0.0
    %6658 = vmatmul.mubr.f32.gmra.mrb[0].mxu0 %v4043
    %v6659 = vpop.f32.mrb[0].mxu0
    %v6660 = vadd.f32 0.0, %v6659
    %v6661 = vpop.f32.mrb[0].mxu0
    %6662 = vmatprep.mubr.f32.mxu0 0.0
    %6663 = vmatmul.mubr.f32.gmra.mrb[0].mxu0 %v4046
    %v6664 = vpop.f32.mrb[0].mxu0
    %v6665 = vadd.f32 0.0, %v6664
    %v6666 = vpop.f32.mrb[0].mxu0
    %6667 = vmatprep.mubr.f32.mxu0 0.0
    %6668 = vmatmul.mubr.f32.gmra.mrb[0].mxu0 %v4049
    %v6669 = vpop.f32.mrb[0].mxu0
    %v6670 = vadd.f32 0.0, %v6669
    %v6671 = vpop.f32.mrb[0].mxu0
    %6672 = vmatprep.mubr.f32.mxu0 0.0
    %6673 = vmatmul.mubr.f32.gmra.mrb[0].mxu0 %v4052
    %v6674 = vpop.f32.mrb[0].mxu0
    %v6675 = vadd.f32 0.0, %v6674
    %v6676 = vpop.f32.mrb[0].mxu0
    %6677 = vmatprep.mubr.f32.mxu0 0.0
    %6678 = vmatmul.mubr.f32.gmra.mrb[0].mxu0 %v4055
    %v6679 = vpop.f32.mrb[0].mxu0
    %v6680 = vadd.f32 0.0, %v6679
    %v6681 = vpop.f32.mrb[0].mxu0
    %6682 = vmatprep.mubr.f32.mxu0 0.0
    %6683 = vmatmul.mubr.f32.gmra.mrb[0].mxu0 %v4058
    %v6684 = vpop.f32.mrb[0].mxu0
    %v6685 = vadd.f32 0.0, %v6684
    %v6686 = vpop.f32.mrb[0].mxu0
    %6687 = vmatprep.mubr.f32.mxu0 0.0
    %6688 = vmatmul.mubr.f32.gmra.mrb[0].mxu0 %v4061
    %v6689 = vpop.f32.mrb[0].mxu0
    %v6690 = vadd.f32 0.0, %v6689
    %v6691 = vpop.f32.mrb[0].mxu0
    %6692 = vmatprep.mubr.f32.mxu0 0.0
    %6693 = vmatmul.mubr.f32.gmra.mrb[0].mxu0 %v4064
    %v6694 = vpop.f32.mrb[0].mxu0
    %v6695 = vadd.f32 0.0, %v6694
    %v6696 = vpop.f32.mrb[0].mxu0
    %6697 = vmatprep.mubr.f32.mxu0 0.0
    %6698 = vmatmul.mubr.f32.gmra.mrb[0].mxu0 %v4067
    %v6699 = vpop.f32.mrb[0].mxu0
    %v6700 = vadd.f32 0.0, %v6699
    %v6701 = vpop.f32.mrb[0].mxu0
    %6702 = vmatprep.mubr.f32.mxu0 0.0
    %6703 = vmatmul.mubr.f32.gmra.mrb[0].mxu0 %v4070
    %v6704 = vpop.f32.mrb[0].mxu0
    %v6705 = vadd.f32 0.0, %v6704
    %v6706 = vpop.f32.mrb[0].mxu0
    %6707 = vmatprep.mubr.f32.mxu0 0.0
    %6708 = vmatmul.mubr.f32.gmra.mrb[0].mxu0 %v4073
    %v6709 = vpop.f32.mrb[0].mxu0
    %v6710 = vadd.f32 0.0, %v6709
    %v6711 = vpop.f32.mrb[0].mxu0
    %6712 = vmatprep.mubr.f32.mxu0 0.0
    %6713 = vmatmul.mubr.f32.gmra.mrb[0].mxu0 %v4076
    %v6714 = vpop.f32.mrb[0].mxu0
    %v6715 = vadd.f32 0.0, %v6714
    %v6716 = vpop.f32.mrb[0].mxu0
    %6717 = vmatprep.mubr.f32.mxu0 0.0
    %6718 = vmatmul.mubr.f32.gmra.mrb[0].mxu0 %v4079
    %v6719 = vpop.f32.mrb[0].mxu0
    %v6720 = vadd.f32 0.0, %v6719
    %v6721 = vpop.f32.mrb[0].mxu0
    %6722 = vdwg.mxu0
    %v6723 = vld [vmem:[%s3] sm:$0xff]
    %v6724 = vld [vmem:[%s3 + $0x8] sm:$0xff]
    %v6725 = vld [vmem:[%s3 + $0x10] sm:$0xff]
    %v6726 = vld [vmem:[%s3 + $0x18] sm:$0xff]
    %v6727 = vld [vmem:[%s3 + $0x20] sm:$0xff]
    %v6728 = vld [vmem:[%s3 + $0x28] sm:$0xff]
    %v6729 = vld [vmem:[%s3 + $0x30] sm:$0xff]
    %v6730 = vld [vmem:[%s3 + $0x38] sm:$0xff]
    %v6731 = vld [vmem:[%s3 + $0x40] sm:$0xff]
    %v6732 = vld [vmem:[%s3 + $0x48] sm:$0xff]
    %v6733 = vld [vmem:[%s3 + $0x50] sm:$0xff]
    %v6734 = vld [vmem:[%s3 + $0x58] sm:$0xff]
    %v6735 = vld [vmem:[%s3 + $0x60] sm:$0xff]
    %v6736 = vld [vmem:[%s3 + $0x68] sm:$0xff]
    %v6737 = vld [vmem:[%s3 + $0x70] sm:$0xff]
    %v6738 = vld [vmem:[%s3 + $0x78] sm:$0xff]
    %v6739 = vld [vmem:[%s3 + $0x80] sm:$0xff]
    %v6740 = vld [vmem:[%s3 + $0x88] sm:$0xff]
    %v6741 = vld [vmem:[%s3 + $0x90] sm:$0xff]
    %v6742 = vld [vmem:[%s3 + $0x98] sm:$0xff]
    %v6743 = vld [vmem:[%s3 + $0xa0] sm:$0xff]
    %v6744 = vld [vmem:[%s3 + $0xa8] sm:$0xff]
    %v6745 = vld [vmem:[%s3 + $0xb0] sm:$0xff]
    %v6746 = vld [vmem:[%s3 + $0xb8] sm:$0xff]
    %v6747 = vld [vmem:[%s3 + $0xc0] sm:$0xff]
    %v6748 = vld [vmem:[%s3 + $0xc8] sm:$0xff]
    %v6749 = vld [vmem:[%s3 + $0xd0] sm:$0xff]
    %v6750 = vld [vmem:[%s3 + $0xd8] sm:$0xff]
    %v6751 = vld [vmem:[%s3 + $0xe0] sm:$0xff]
    %v6752 = vld [vmem:[%s3 + $0xe8] sm:$0xff]
    %v6753 = vld [vmem:[%s3 + $0xf0] sm:$0xff]
    %v6754 = vld [vmem:[%s3 + $0xf8] sm:$0xff]
    %v6755 = vld [vmem:[%s3 + $0x100] sm:$0xff]
    %v6756 = vld [vmem:[%s3 + $0x108] sm:$0xff]
    %v6757 = vld [vmem:[%s3 + $0x110] sm:$0xff]
    %v6758 = vld [vmem:[%s3 + $0x118] sm:$0xff]
    %v6759 = vld [vmem:[%s3 + $0x120] sm:$0xff]
    %v6760 = vld [vmem:[%s3 + $0x128] sm:$0xff]
    %v6761 = vld [vmem:[%s3 + $0x130] sm:$0xff]
    %v6762 = vld [vmem:[%s3 + $0x138] sm:$0xff]
    %v6763 = vld [vmem:[%s3 + $0x140] sm:$0xff]
    %v6764 = vld [vmem:[%s3 + $0x148] sm:$0xff]
    %v6765 = vld [vmem:[%s3 + $0x150] sm:$0xff]
    %v6766 = vld [vmem:[%s3 + $0x158] sm:$0xff]
    %v6767 = vld [vmem:[%s3 + $0x160] sm:$0xff]
    %v6768 = vld [vmem:[%s3 + $0x168] sm:$0xff]
    %v6769 = vld [vmem:[%s3 + $0x170] sm:$0xff]
    %v6770 = vld [vmem:[%s3 + $0x178] sm:$0xff]
    %v6771 = vld [vmem:[%s3 + $0x180] sm:$0xff]
    %v6772 = vld [vmem:[%s3 + $0x188] sm:$0xff]
    %v6773 = vld [vmem:[%s3 + $0x190] sm:$0xff]
    %v6774 = vld [vmem:[%s3 + $0x198] sm:$0xff]
    %v6775 = vld [vmem:[%s3 + $0x1a0] sm:$0xff]
    %v6776 = vld [vmem:[%s3 + $0x1a8] sm:$0xff]
    %v6777 = vld [vmem:[%s3 + $0x1b0] sm:$0xff]
    %v6778 = vld [vmem:[%s3 + $0x1b8] sm:$0xff]
    %v6779 = vld [vmem:[%s3 + $0x1c0] sm:$0xff]
    %v6780 = vld [vmem:[%s3 + $0x1c8] sm:$0xff]
    %v6781 = vld [vmem:[%s3 + $0x1d0] sm:$0xff]
    %v6782 = vld [vmem:[%s3 + $0x1d8] sm:$0xff]
    %v6783 = vld [vmem:[%s3 + $0x1e0] sm:$0xff]
    %v6784 = vld [vmem:[%s3 + $0x1e8] sm:$0xff]
    %v6785 = vld [vmem:[%s3 + $0x1f0] sm:$0xff]
    %v6786 = vld [vmem:[%s3 + $0x1f8] sm:$0xff]
    %v6787 = vld [vmem:[%s3 + $0x200] sm:$0xff]
    %v6788 = vld [vmem:[%s3 + $0x208] sm:$0xff]
    %v6789 = vld [vmem:[%s3 + $0x210] sm:$0xff]
    %v6790 = vld [vmem:[%s3 + $0x218] sm:$0xff]
    %v6791 = vld [vmem:[%s3 + $0x220] sm:$0xff]
    %v6792 = vld [vmem:[%s3 + $0x228] sm:$0xff]
    %v6793 = vld [vmem:[%s3 + $0x230] sm:$0xff]
    %v6794 = vld [vmem:[%s3 + $0x238] sm:$0xff]
    %v6795 = vld [vmem:[%s3 + $0x240] sm:$0xff]
    %v6796 = vld [vmem:[%s3 + $0x248] sm:$0xff]
    %v6797 = vld [vmem:[%s3 + $0x250] sm:$0xff]
    %v6798 = vld [vmem:[%s3 + $0x258] sm:$0xff]
    %v6799 = vld [vmem:[%s3 + $0x260] sm:$0xff]
    %v6800 = vld [vmem:[%s3 + $0x268] sm:$0xff]
    %v6801 = vld [vmem:[%s3 + $0x270] sm:$0xff]
    %v6802 = vld [vmem:[%s3 + $0x278] sm:$0xff]
    %v6803 = vld [vmem:[%s3 + $0x280] sm:$0xff]
    %v6804 = vld [vmem:[%s3 + $0x288] sm:$0xff]
    %v6805 = vld [vmem:[%s3 + $0x290] sm:$0xff]
    %v6806 = vld [vmem:[%s3 + $0x298] sm:$0xff]
    %v6807 = vld [vmem:[%s3 + $0x2a0] sm:$0xff]
    %v6808 = vld [vmem:[%s3 + $0x2a8] sm:$0xff]
    %v6809 = vld [vmem:[%s3 + $0x2b0] sm:$0xff]
    %v6810 = vld [vmem:[%s3 + $0x2b8] sm:$0xff]
    %v6811 = vld [vmem:[%s3 + $0x2c0] sm:$0xff]
    %v6812 = vld [vmem:[%s3 + $0x2c8] sm:$0xff]
    %v6813 = vld [vmem:[%s3 + $0x2d0] sm:$0xff]
    %v6814 = vld [vmem:[%s3 + $0x2d8] sm:$0xff]
    %v6815 = vld [vmem:[%s3 + $0x2e0] sm:$0xff]
    %v6816 = vld [vmem:[%s3 + $0x2e8] sm:$0xff]
    %v6817 = vld [vmem:[%s3 + $0x2f0] sm:$0xff]
    %v6818 = vld [vmem:[%s3 + $0x2f8] sm:$0xff]
    %v6819 = vld [vmem:[%s3 + $0x300] sm:$0xff]
    %v6820 = vld [vmem:[%s3 + $0x308] sm:$0xff]
    %v6821 = vld [vmem:[%s3 + $0x310] sm:$0xff]
    %v6822 = vld [vmem:[%s3 + $0x318] sm:$0xff]
    %v6823 = vld [vmem:[%s3 + $0x320] sm:$0xff]
    %v6824 = vld [vmem:[%s3 + $0x328] sm:$0xff]
    %v6825 = vld [vmem:[%s3 + $0x330] sm:$0xff]
    %v6826 = vld [vmem:[%s3 + $0x338] sm:$0xff]
    %v6827 = vld [vmem:[%s3 + $0x340] sm:$0xff]
    %v6828 = vld [vmem:[%s3 + $0x348] sm:$0xff]
    %v6829 = vld [vmem:[%s3 + $0x350] sm:$0xff]
    %v6830 = vld [vmem:[%s3 + $0x358] sm:$0xff]
    %v6831 = vld [vmem:[%s3 + $0x360] sm:$0xff]
    %v6832 = vld [vmem:[%s3 + $0x368] sm:$0xff]
    %v6833 = vld [vmem:[%s3 + $0x370] sm:$0xff]
    %v6834 = vld [vmem:[%s3 + $0x378] sm:$0xff]
    %v6835 = vld [vmem:[%s3 + $0x380] sm:$0xff]
    %v6836 = vld [vmem:[%s3 + $0x388] sm:$0xff]
    %v6837 = vld [vmem:[%s3 + $0x390] sm:$0xff]
    %v6838 = vld [vmem:[%s3 + $0x398] sm:$0xff]
    %v6839 = vld [vmem:[%s3 + $0x3a0] sm:$0xff]
    %v6840 = vld [vmem:[%s3 + $0x3a8] sm:$0xff]
    %v6841 = vld [vmem:[%s3 + $0x3b0] sm:$0xff]
    %v6842 = vld [vmem:[%s3 + $0x3b8] sm:$0xff]
    %v6843 = vld [vmem:[%s3 + $0x3c0] sm:$0xff]
    %v6844 = vld [vmem:[%s3 + $0x3c8] sm:$0xff]
    %v6845 = vld [vmem:[%s3 + $0x3d0] sm:$0xff]
    %v6846 = vld [vmem:[%s3 + $0x3d8] sm:$0xff]
    %v6847 = vld [vmem:[%s3 + $0x3e0] sm:$0xff]
    %v6848 = vld [vmem:[%s3 + $0x3e8] sm:$0xff]
    %v6849 = vld [vmem:[%s3 + $0x3f0] sm:$0xff]
    %v6850 = vld [vmem:[%s3 + $0x3f8] sm:$0xff]
    %6851 = vmatprep.subr.mxu0 0.0
    %6852 = vmatpush1.msra.mxu0 %v4148
    %6853 = vmatprep.subr.mxu0 0.0
    %6854 = vmatpush1.msra.mxu0 %v4153
    %6855 = vmatprep.subr.mxu0 0.0
    %6856 = vmatpush1.msra.mxu0 %v4158
    %6857 = vmatprep.subr.mxu0 0.0
    %6858 = vmatpush1.msra.mxu0 %v4163
    %6859 = vmatprep.subr.mxu0 0.0
    %6860 = vmatpush1.msra.mxu0 %v4168
    %6861 = vmatprep.subr.mxu0 0.0
    %6862 = vmatpush1.msra.mxu0 %v4173
    %6863 = vmatprep.subr.mxu0 0.0
    %6864 = vmatpush1.msra.mxu0 %v4178
    %6865 = vmatprep.subr.mxu0 0.0
    %6866 = vmatpush1.msra.mxu0 %v4183
    %6867 = vmatprep.subr.mxu0 0.0
    %6868 = vmatpush1.msra.mxu0 %v4315
    %6869 = vmatprep.subr.mxu0 0.0
    %6870 = vmatpush1.msra.mxu0 %v4320
    %6871 = vmatprep.subr.mxu0 0.0
    %6872 = vmatpush1.msra.mxu0 %v4325
    %6873 = vmatprep.subr.mxu0 0.0
    %6874 = vmatpush1.msra.mxu0 %v4330
    %6875 = vmatprep.subr.mxu0 0.0
    %6876 = vmatpush1.msra.mxu0 %v4335
    %6877 = vmatprep.subr.mxu0 0.0
    %6878 = vmatpush1.msra.mxu0 %v4340
    %6879 = vmatprep.subr.mxu0 0.0
    %6880 = vmatpush1.msra.mxu0 %v4345
    %6881 = vmatprep.subr.mxu0 0.0
    %6882 = vmatpush1.msra.mxu0 %v4350
    %6883 = vmatprep.subr.mxu0 0.0
    %6884 = vmatpush1.msra.mxu0 %v4483
    %6885 = vmatprep.subr.mxu0 0.0
    %6886 = vmatpush1.msra.mxu0 %v4488
    %6887 = vmatprep.subr.mxu0 0.0
    %6888 = vmatpush1.msra.mxu0 %v4493
    %6889 = vmatprep.subr.mxu0 0.0
    %6890 = vmatpush1.msra.mxu0 %v4498
    %6891 = vmatprep.subr.mxu0 0.0
    %6892 = vmatpush1.msra.mxu0 %v4503
    %6893 = vmatprep.subr.mxu0 0.0
    %6894 = vmatpush1.msra.mxu0 %v4508
    %6895 = vmatprep.subr.mxu0 0.0
    %6896 = vmatpush1.msra.mxu0 %v4513
    %6897 = vmatprep.subr.mxu0 0.0
    %6898 = vmatpush1.msra.mxu0 %v4518
    %6899 = vmatprep.subr.mxu0 0.0
    %6900 = vmatpush1.msra.mxu0 %v4651
    %6901 = vmatprep.subr.mxu0 0.0
    %6902 = vmatpush1.msra.mxu0 %v4656
    %6903 = vmatprep.subr.mxu0 0.0
    %6904 = vmatpush1.msra.mxu0 %v4661
    %6905 = vmatprep.subr.mxu0 0.0
    %6906 = vmatpush1.msra.mxu0 %v4666
    %6907 = vmatprep.subr.mxu0 0.0
    %6908 = vmatpush1.msra.mxu0 %v4671
    %6909 = vmatprep.subr.mxu0 0.0
    %6910 = vmatpush1.msra.mxu0 %v4676
    %6911 = vmatprep.subr.mxu0 0.0
    %6912 = vmatpush1.msra.mxu0 %v4681
    %6913 = vmatprep.subr.mxu0 0.0
    %6914 = vmatpush1.msra.mxu0 %v4686
    %6915 = vmatprep.mubr.f32.mxu0 %v6724
    %6916 = vmatmul.mubr.f32.gmra.mrb[0].mxu0 %v6723
    %v6917 = vpop.f32.mrb[0].mxu0
    %v6918 = vadd.f32 0.0, %v6917
    %v6919 = vpop.f32.mrb[0].mxu0
    %6920 = vmatprep.mubr.f32.mxu0 %v6732
    %6921 = vmatmul.mubr.f32.gmra.mrb[0].mxu0 %v6731
    %v6922 = vpop.f32.mrb[0].mxu0
    %v6923 = vadd.f32 0.0, %v6922
    %v6924 = vpop.f32.mrb[0].mxu0
    %6925 = vmatprep.mubr.f32.mxu0 %v6740
    %6926 = vmatmul.mubr.f32.gmra.mrb[0].mxu0 %v6739
    %v6927 = vpop.f32.mrb[0].mxu0
    %v6928 = vadd.f32 0.0, %v6927
    %v6929 = vpop.f32.mrb[0].mxu0
    %6930 = vmatprep.mubr.f32.mxu0 %v6748
    %6931 = vmatmul.mubr.f32.gmra.mrb[0].mxu0 %v6747
    %v6932 = vpop.f32.mrb[0].mxu0
    %v6933 = vadd.f32 0.0, %v6932
    %v6934 = vpop.f32.mrb[0].mxu0
    %6935 = vmatprep.mubr.f32.mxu0 %v6756
    %6936 = vmatmul.mubr.f32.gmra.mrb[0].mxu0 %v6755
    %v6937 = vpop.f32.mrb[0].mxu0
    %v6938 = vadd.f32 0.0, %v6937
    %v6939 = vpop.f32.mrb[0].mxu0
    %6940 = vmatprep.mubr.f32.mxu0 %v6764
    %6941 = vmatmul.mubr.f32.gmra.mrb[0].mxu0 %v6763
    %v6942 = vpop.f32.mrb[0].mxu0
    %v6943 = vadd.f32 0.0, %v6942
    %v6944 = vpop.f32.mrb[0].mxu0
    %6945 = vmatprep.mubr.f32.mxu0 %v6772
    %6946 = vmatmul.mubr.f32.gmra.mrb[0].mxu0 %v6771
    %v6947 = vpop.f32.mrb[0].mxu0
    %v6948 = vadd.f32 0.0, %v6947
    %v6949 = vpop.f32.mrb[0].mxu0
    %6950 = vmatprep.mubr.f32.mxu0 %v6780
    %6951 = vmatmul.mubr.f32.gmra.mrb[0].mxu0 %v6779
    %v6952 = vpop.f32.mrb[0].mxu0
    %v6953 = vadd.f32 0.0, %v6952
    %v6954 = vpop.f32.mrb[0].mxu0
    %6955 = vmatprep.mubr.f32.mxu0 %v6788
    %6956 = vmatmul.mubr.f32.gmra.mrb[0].mxu0 %v6787
    %v6957 = vpop.f32.mrb[0].mxu0
    %v6958 = vadd.f32 0.0, %v6957
    %v6959 = vpop.f32.mrb[0].mxu0
    %6960 = vmatprep.mubr.f32.mxu0 %v6796
    %6961 = vmatmul.mubr.f32.gmra.mrb[0].mxu0 %v6795
    %v6962 = vpop.f32.mrb[0].mxu0
    %v6963 = vadd.f32 0.0, %v6962
    %v6964 = vpop.f32.mrb[0].mxu0
    %6965 = vmatprep.mubr.f32.mxu0 %v6804
    %6966 = vmatmul.mubr.f32.gmra.mrb[0].mxu0 %v6803
    %v6967 = vpop.f32.mrb[0].mxu0
    %v6968 = vadd.f32 0.0, %v6967
    %v6969 = vpop.f32.mrb[0].mxu0
    %6970 = vmatprep.mubr.f32.mxu0 %v6812
    %6971 = vmatmul.mubr.f32.gmra.mrb[0].mxu0 %v6811
    %v6972 = vpop.f32.mrb[0].mxu0
    %v6973 = vadd.f32 0.0, %v6972
    %v6974 = vpop.f32.mrb[0].mxu0
    %6975 = vmatprep.mubr.f32.mxu0 %v6820
    %6976 = vmatmul.mubr.f32.gmra.mrb[0].mxu0 %v6819
    %v6977 = vpop.f32.mrb[0].mxu0
    %v6978 = vadd.f32 0.0, %v6977
    %v6979 = vpop.f32.mrb[0].mxu0
    %6980 = vmatprep.mubr.f32.mxu0 %v6828
    %6981 = vmatmul.mubr.f32.gmra.mrb[0].mxu0 %v6827
    %v6982 = vpop.f32.mrb[0].mxu0
    %v6983 = vadd.f32 0.0, %v6982
    %v6984 = vpop.f32.mrb[0].mxu0
    %6985 = vmatprep.mubr.f32.mxu0 %v6836
    %6986 = vmatmul.mubr.f32.gmra.mrb[0].mxu0 %v6835
    %v6987 = vpop.f32.mrb[0].mxu0
    %v6988 = vadd.f32 0.0, %v6987
    %v6989 = vpop.f32.mrb[0].mxu0
    %6990 = vmatprep.mubr.f32.mxu0 %v6844
    %6991 = vmatmul.mubr.f32.gmra.mrb[0].mxu0 %v6843
    %v6992 = vpop.f32.mrb[0].mxu0
    %v6993 = vadd.f32 0.0, %v6992
    %v6994 = vpop.f32.mrb[0].mxu0
    %6995 = vdwg.mxu0
    %6996 = vmatprep.subr.mxu0 0.0
    %6997 = vmatpush1.msra.mxu0 %v4820
    %6998 = vmatprep.subr.mxu0 0.0
    %6999 = vmatpush1.msra.mxu0 %v4825
    %7000 = vmatprep.subr.mxu0 0.0
    %7001 = vmatpush1.msra.mxu0 %v4830
    %7002 = vmatprep.subr.mxu0 0.0
    %7003 = vmatpush1.msra.mxu0 %v4835
    %7004 = vmatprep.subr.mxu0 0.0
    %7005 = vmatpush1.msra.mxu0 %v4840
    %7006 = vmatprep.subr.mxu0 0.0
    %7007 = vmatpush1.msra.mxu0 %v4845
    %7008 = vmatprep.subr.mxu0 0.0
    %7009 = vmatpush1.msra.mxu0 %v4850
    %7010 = vmatprep.subr.mxu0 0.0
    %7011 = vmatpush1.msra.mxu0 %v4855
    %7012 = vmatprep.subr.mxu0 0.0
    %7013 = vmatpush1.msra.mxu0 %v4985
    %7014 = vmatprep.subr.mxu0 0.0
    %7015 = vmatpush1.msra.mxu0 %v4990
    %7016 = vmatprep.subr.mxu0 0.0
    %7017 = vmatpush1.msra.mxu0 %v4995
    %7018 = vmatprep.subr.mxu0 0.0
    %7019 = vmatpush1.msra.mxu0 %v5000
    %7020 = vmatprep.subr.mxu0 0.0
    %7021 = vmatpush1.msra.mxu0 %v5005
    %7022 = vmatprep.subr.mxu0 0.0
    %7023 = vmatpush1.msra.mxu0 %v5010
    %7024 = vmatprep.subr.mxu0 0.0
    %7025 = vmatpush1.msra.mxu0 %v5015
    %7026 = vmatprep.subr.mxu0 0.0
    %7027 = vmatpush1.msra.mxu0 %v5020
    %7028 = vmatprep.subr.mxu0 0.0
    %7029 = vmatpush1.msra.mxu0 %v5150
    %7030 = vmatprep.subr.mxu0 0.0
    %7031 = vmatpush1.msra.mxu0 %v5155
    %7032 = vmatprep.subr.mxu0 0.0
    %7033 = vmatpush1.msra.mxu0 %v5160
    %7034 = vmatprep.subr.mxu0 0.0
    %7035 = vmatpush1.msra.mxu0 %v5165
    %7036 = vmatprep.subr.mxu0 0.0
    %7037 = vmatpush1.msra.mxu0 %v5170
    %7038 = vmatprep.subr.mxu0 0.0
    %7039 = vmatpush1.msra.mxu0 %v5175
    %7040 = vmatprep.subr.mxu0 0.0
    %7041 = vmatpush1.msra.mxu0 %v5180
    %7042 = vmatprep.subr.mxu0 0.0
    %7043 = vmatpush1.msra.mxu0 %v5185
    %7044 = vmatprep.subr.mxu0 0.0
    %7045 = vmatpush1.msra.mxu0 %v5315
    %7046 = vmatprep.subr.mxu0 0.0
    %7047 = vmatpush1.msra.mxu0 %v5320
    %7048 = vmatprep.subr.mxu0 0.0
    %7049 = vmatpush1.msra.mxu0 %v5325
    %7050 = vmatprep.subr.mxu0 0.0
    %7051 = vmatpush1.msra.mxu0 %v5330
    %7052 = vmatprep.subr.mxu0 0.0
    %7053 = vmatpush1.msra.mxu0 %v5335
    %7054 = vmatprep.subr.mxu0 0.0
    %7055 = vmatpush1.msra.mxu0 %v5340
    %7056 = vmatprep.subr.mxu0 0.0
    %7057 = vmatpush1.msra.mxu0 %v5345
    %7058 = vmatprep.subr.mxu0 0.0
    %7059 = vmatpush1.msra.mxu0 %v5350
    %7060 = vmatprep.mubr.f32.mxu0 %v6726
    %7061 = vmatmul.mubr.f32.gmra.mrb[0].mxu0 %v6725
    %v7062 = vpop.f32.mrb[0].mxu0
    %v7063 = vadd.f32 %v6918, %v7062
    %v7064 = vpop.f32.mrb[0].mxu0
    %7065 = vmatprep.mubr.f32.mxu0 %v6734
    %7066 = vmatmul.mubr.f32.gmra.mrb[0].mxu0 %v6733
    %v7067 = vpop.f32.mrb[0].mxu0
    %v7068 = vadd.f32 %v6923, %v7067
    %v7069 = vpop.f32.mrb[0].mxu0
    %7070 = vmatprep.mubr.f32.mxu0 %v6742
    %7071 = vmatmul.mubr.f32.gmra.mrb[0].mxu0 %v6741
    %v7072 = vpop.f32.mrb[0].mxu0
    %v7073 = vadd.f32 %v6928, %v7072
    %v7074 = vpop.f32.mrb[0].mxu0
    %7075 = vmatprep.mubr.f32.mxu0 %v6750
    %7076 = vmatmul.mubr.f32.gmra.mrb[0].mxu0 %v6749
    %v7077 = vpop.f32.mrb[0].mxu0
    %v7078 = vadd.f32 %v6933, %v7077
    %v7079 = vpop.f32.mrb[0].mxu0
    %7080 = vmatprep.mubr.f32.mxu0 %v6758
    %7081 = vmatmul.mubr.f32.gmra.mrb[0].mxu0 %v6757
    %v7082 = vpop.f32.mrb[0].mxu0
    %v7083 = vadd.f32 %v6938, %v7082
    %v7084 = vpop.f32.mrb[0].mxu0
    %7085 = vmatprep.mubr.f32.mxu0 %v6766
    %7086 = vmatmul.mubr.f32.gmra.mrb[0].mxu0 %v6765
    %v7087 = vpop.f32.mrb[0].mxu0
    %v7088 = vadd.f32 %v6943, %v7087
    %v7089 = vpop.f32.mrb[0].mxu0
    %7090 = vmatprep.mubr.f32.mxu0 %v6774
    %7091 = vmatmul.mubr.f32.gmra.mrb[0].mxu0 %v6773
    %v7092 = vpop.f32.mrb[0].mxu0
    %v7093 = vadd.f32 %v6948, %v7092
    %v7094 = vpop.f32.mrb[0].mxu0
    %7095 = vmatprep.mubr.f32.mxu0 %v6782
    %7096 = vmatmul.mubr.f32.gmra.mrb[0].mxu0 %v6781
    %v7097 = vpop.f32.mrb[0].mxu0
    %v7098 = vadd.f32 %v6953, %v7097
    %v7099 = vpop.f32.mrb[0].mxu0
    %7100 = vmatprep.mubr.f32.mxu0 %v6790
    %7101 = vmatmul.mubr.f32.gmra.mrb[0].mxu0 %v6789
    %v7102 = vpop.f32.mrb[0].mxu0
    %v7103 = vadd.f32 %v6958, %v7102
    %v7104 = vpop.f32.mrb[0].mxu0
    %7105 = vmatprep.mubr.f32.mxu0 %v6798
    %7106 = vmatmul.mubr.f32.gmra.mrb[0].mxu0 %v6797
    %v7107 = vpop.f32.mrb[0].mxu0
    %v7108 = vadd.f32 %v6963, %v7107
    %v7109 = vpop.f32.mrb[0].mxu0
    %7110 = vmatprep.mubr.f32.mxu0 %v6806
    %7111 = vmatmul.mubr.f32.gmra.mrb[0].mxu0 %v6805
    %v7112 = vpop.f32.mrb[0].mxu0
    %v7113 = vadd.f32 %v6968, %v7112
    %v7114 = vpop.f32.mrb[0].mxu0
    %7115 = vmatprep.mubr.f32.mxu0 %v6814
    %7116 = vmatmul.mubr.f32.gmra.mrb[0].mxu0 %v6813
    %v7117 = vpop.f32.mrb[0].mxu0
    %v7118 = vadd.f32 %v6973, %v7117
    %v7119 = vpop.f32.mrb[0].mxu0
    %7120 = vmatprep.mubr.f32.mxu0 %v6822
    %7121 = vmatmul.mubr.f32.gmra.mrb[0].mxu0 %v6821
    %v7122 = vpop.f32.mrb[0].mxu0
    %v7123 = vadd.f32 %v6978, %v7122
    %v7124 = vpop.f32.mrb[0].mxu0
    %7125 = vmatprep.mubr.f32.mxu0 %v6830
    %7126 = vmatmul.mubr.f32.gmra.mrb[0].mxu0 %v6829
    %v7127 = vpop.f32.mrb[0].mxu0
    %v7128 = vadd.f32 %v6983, %v7127
    %v7129 = vpop.f32.mrb[0].mxu0
    %7130 = vmatprep.mubr.f32.mxu0 %v6838
    %7131 = vmatmul.mubr.f32.gmra.mrb[0].mxu0 %v6837
    %v7132 = vpop.f32.mrb[0].mxu0
    %v7133 = vadd.f32 %v6988, %v7132
    %v7134 = vpop.f32.mrb[0].mxu0
    %7135 = vmatprep.mubr.f32.mxu0 %v6846
    %7136 = vmatmul.mubr.f32.gmra.mrb[0].mxu0 %v6845
    %v7137 = vpop.f32.mrb[0].mxu0
    %v7138 = vadd.f32 %v6993, %v7137
    %v7139 = vpop.f32.mrb[0].mxu0
    %7140 = vdwg.mxu0
    %7141 = vmatprep.subr.mxu0 0.0
    %7142 = vmatpush1.msra.mxu0 %v5485
    %7143 = vmatprep.subr.mxu0 0.0
    %7144 = vmatpush1.msra.mxu0 %v5490
    %7145 = vmatprep.subr.mxu0 0.0
    %7146 = vmatpush1.msra.mxu0 %v5495
    %7147 = vmatprep.subr.mxu0 0.0
    %7148 = vmatpush1.msra.mxu0 %v5500
    %7149 = vmatprep.subr.mxu0 0.0
    %7150 = vmatpush1.msra.mxu0 %v5505
    %7151 = vmatprep.subr.mxu0 0.0
    %7152 = vmatpush1.msra.mxu0 %v5510
    %7153 = vmatprep.subr.mxu0 0.0
    %7154 = vmatpush1.msra.mxu0 %v5515
    %7155 = vmatprep.subr.mxu0 0.0
    %7156 = vmatpush1.msra.mxu0 %v5520
    %7157 = vmatprep.subr.mxu0 0.0
    %7158 = vmatpush1.msra.mxu0 %v5650
    %7159 = vmatprep.subr.mxu0 0.0
    %7160 = vmatpush1.msra.mxu0 %v5655
    %7161 = vmatprep.subr.mxu0 0.0
    %7162 = vmatpush1.msra.mxu0 %v5660
    %7163 = vmatprep.subr.mxu0 0.0
    %7164 = vmatpush1.msra.mxu0 %v5665
    %7165 = vmatprep.subr.mxu0 0.0
    %7166 = vmatpush1.msra.mxu0 %v5670
    %7167 = vmatprep.subr.mxu0 0.0
    %7168 = vmatpush1.msra.mxu0 %v5675
    %7169 = vmatprep.subr.mxu0 0.0
    %7170 = vmatpush1.msra.mxu0 %v5680
    %7171 = vmatprep.subr.mxu0 0.0
    %7172 = vmatpush1.msra.mxu0 %v5685
    %7173 = vmatprep.subr.mxu0 0.0
    %7174 = vmatpush1.msra.mxu0 %v5815
    %7175 = vmatprep.subr.mxu0 0.0
    %7176 = vmatpush1.msra.mxu0 %v5820
    %7177 = vmatprep.subr.mxu0 0.0
    %7178 = vmatpush1.msra.mxu0 %v5825
    %7179 = vmatprep.subr.mxu0 0.0
    %7180 = vmatpush1.msra.mxu0 %v5830
    %7181 = vmatprep.subr.mxu0 0.0
    %7182 = vmatpush1.msra.mxu0 %v5835
    %7183 = vmatprep.subr.mxu0 0.0
    %7184 = vmatpush1.msra.mxu0 %v5840
    %7185 = vmatprep.subr.mxu0 0.0
    %7186 = vmatpush1.msra.mxu0 %v5845
    %7187 = vmatprep.subr.mxu0 0.0
    %7188 = vmatpush1.msra.mxu0 %v5850
    %7189 = vmatprep.subr.mxu0 0.0
    %7190 = vmatpush1.msra.mxu0 %v5980
    %7191 = vmatprep.subr.mxu0 0.0
    %7192 = vmatpush1.msra.mxu0 %v5985
    %7193 = vmatprep.subr.mxu0 0.0
    %7194 = vmatpush1.msra.mxu0 %v5990
    %7195 = vmatprep.subr.mxu0 0.0
    %7196 = vmatpush1.msra.mxu0 %v5995
    %7197 = vmatprep.subr.mxu0 0.0
    %7198 = vmatpush1.msra.mxu0 %v6000
    %7199 = vmatprep.subr.mxu0 0.0
    %7200 = vmatpush1.msra.mxu0 %v6005
    %7201 = vmatprep.subr.mxu0 0.0
    %7202 = vmatpush1.msra.mxu0 %v6010
    %7203 = vmatprep.subr.mxu0 0.0
    %7204 = vmatpush1.msra.mxu0 %v6015
    %7205 = vmatprep.mubr.f32.mxu0 %v6728
    %7206 = vmatmul.mubr.f32.gmra.mrb[0].mxu0 %v6727
    %v7207 = vpop.f32.mrb[0].mxu0
    %v7208 = vadd.f32 %v7063, %v7207
    %v7209 = vpop.f32.mrb[0].mxu0
    %7210 = vmatprep.mubr.f32.mxu0 %v6736
    %7211 = vmatmul.mubr.f32.gmra.mrb[0].mxu0 %v6735
    %v7212 = vpop.f32.mrb[0].mxu0
    %v7213 = vadd.f32 %v7068, %v7212
    %v7214 = vpop.f32.mrb[0].mxu0
    %7215 = vmatprep.mubr.f32.mxu0 %v6744
    %7216 = vmatmul.mubr.f32.gmra.mrb[0].mxu0 %v6743
    %v7217 = vpop.f32.mrb[0].mxu0
    %v7218 = vadd.f32 %v7073, %v7217
    %v7219 = vpop.f32.mrb[0].mxu0
    %7220 = vmatprep.mubr.f32.mxu0 %v6752
    %7221 = vmatmul.mubr.f32.gmra.mrb[0].mxu0 %v6751
    %v7222 = vpop.f32.mrb[0].mxu0
    %v7223 = vadd.f32 %v7078, %v7222
    %v7224 = vpop.f32.mrb[0].mxu0
    %7225 = vmatprep.mubr.f32.mxu0 %v6760
    %7226 = vmatmul.mubr.f32.gmra.mrb[0].mxu0 %v6759
    %v7227 = vpop.f32.mrb[0].mxu0
    %v7228 = vadd.f32 %v7083, %v7227
    %v7229 = vpop.f32.mrb[0].mxu0
    %7230 = vmatprep.mubr.f32.mxu0 %v6768
    %7231 = vmatmul.mubr.f32.gmra.mrb[0].mxu0 %v6767
    %v7232 = vpop.f32.mrb[0].mxu0
    %v7233 = vadd.f32 %v7088, %v7232
    %v7234 = vpop.f32.mrb[0].mxu0
    %7235 = vmatprep.mubr.f32.mxu0 %v6776
    %7236 = vmatmul.mubr.f32.gmra.mrb[0].mxu0 %v6775
    %v7237 = vpop.f32.mrb[0].mxu0
    %v7238 = vadd.f32 %v7093, %v7237
    %v7239 = vpop.f32.mrb[0].mxu0
    %7240 = vmatprep.mubr.f32.mxu0 %v6784
    %7241 = vmatmul.mubr.f32.gmra.mrb[0].mxu0 %v6783
    %v7242 = vpop.f32.mrb[0].mxu0
    %v7243 = vadd.f32 %v7098, %v7242
    %v7244 = vpop.f32.mrb[0].mxu0
    %7245 = vmatprep.mubr.f32.mxu0 %v6792
    %7246 = vmatmul.mubr.f32.gmra.mrb[0].mxu0 %v6791
    %v7247 = vpop.f32.mrb[0].mxu0
    %v7248 = vadd.f32 %v7103, %v7247
    %v7249 = vpop.f32.mrb[0].mxu0
    %7250 = vmatprep.mubr.f32.mxu0 %v6800
    %7251 = vmatmul.mubr.f32.gmra.mrb[0].mxu0 %v6799
    %v7252 = vpop.f32.mrb[0].mxu0
    %v7253 = vadd.f32 %v7108, %v7252
    %v7254 = vpop.f32.mrb[0].mxu0
    %7255 = vmatprep.mubr.f32.mxu0 %v6808
    %7256 = vmatmul.mubr.f32.gmra.mrb[0].mxu0 %v6807
    %v7257 = vpop.f32.mrb[0].mxu0
    %v7258 = vadd.f32 %v7113, %v7257
    %v7259 = vpop.f32.mrb[0].mxu0
    %7260 = vmatprep.mubr.f32.mxu0 %v6816
    %7261 = vmatmul.mubr.f32.gmra.mrb[0].mxu0 %v6815
    %v7262 = vpop.f32.mrb[0].mxu0
    %v7263 = vadd.f32 %v7118, %v7262
    %v7264 = vpop.f32.mrb[0].mxu0
    %7265 = vmatprep.mubr.f32.mxu0 %v6824
    %7266 = vmatmul.mubr.f32.gmra.mrb[0].mxu0 %v6823
    %v7267 = vpop.f32.mrb[0].mxu0
    %v7268 = vadd.f32 %v7123, %v7267
    %v7269 = vpop.f32.mrb[0].mxu0
    %7270 = vmatprep.mubr.f32.mxu0 %v6832
    %7271 = vmatmul.mubr.f32.gmra.mrb[0].mxu0 %v6831
    %v7272 = vpop.f32.mrb[0].mxu0
    %v7273 = vadd.f32 %v7128, %v7272
    %v7274 = vpop.f32.mrb[0].mxu0
    %7275 = vmatprep.mubr.f32.mxu0 %v6840
    %7276 = vmatmul.mubr.f32.gmra.mrb[0].mxu0 %v6839
    %v7277 = vpop.f32.mrb[0].mxu0
    %v7278 = vadd.f32 %v7133, %v7277
    %v7279 = vpop.f32.mrb[0].mxu0
    %7280 = vmatprep.mubr.f32.mxu0 %v6848
    %7281 = vmatmul.mubr.f32.gmra.mrb[0].mxu0 %v6847
    %v7282 = vpop.f32.mrb[0].mxu0
    %v7283 = vadd.f32 %v7138, %v7282
    %v7284 = vpop.f32.mrb[0].mxu0
    %7285 = vdwg.mxu0
    %7286 = vmatprep.subr.mxu0 0.0
    %7287 = vmatpush1.msra.mxu0 %v6150
    %7288 = vmatprep.subr.mxu0 0.0
    %7289 = vmatpush1.msra.mxu0 %v6155
    %7290 = vmatprep.subr.mxu0 0.0
    %7291 = vmatpush1.msra.mxu0 %v6160
    %7292 = vmatprep.subr.mxu0 0.0
    %7293 = vmatpush1.msra.mxu0 %v6165
    %7294 = vmatprep.subr.mxu0 0.0
    %7295 = vmatpush1.msra.mxu0 %v6170
    %7296 = vmatprep.subr.mxu0 0.0
    %7297 = vmatpush1.msra.mxu0 %v6175
    %7298 = vmatprep.subr.mxu0 0.0
    %7299 = vmatpush1.msra.mxu0 %v6180
    %7300 = vmatprep.subr.mxu0 0.0
    %7301 = vmatpush1.msra.mxu0 %v6185
    %7302 = vmatprep.subr.mxu0 0.0
    %7303 = vmatpush1.msra.mxu0 %v6315
    %7304 = vmatprep.subr.mxu0 0.0
    %7305 = vmatpush1.msra.mxu0 %v6320
    %7306 = vmatprep.subr.mxu0 0.0
    %7307 = vmatpush1.msra.mxu0 %v6325
    %7308 = vmatprep.subr.mxu0 0.0
    %7309 = vmatpush1.msra.mxu0 %v6330
    %7310 = vmatprep.subr.mxu0 0.0
    %7311 = vmatpush1.msra.mxu0 %v6335
    %7312 = vmatprep.subr.mxu0 0.0
    %7313 = vmatpush1.msra.mxu0 %v6340
    %7314 = vmatprep.subr.mxu0 0.0
    %7315 = vmatpush1.msra.mxu0 %v6345
    %7316 = vmatprep.subr.mxu0 0.0
    %7317 = vmatpush1.msra.mxu0 %v6350
    %7318 = vmatprep.subr.mxu0 0.0
    %7319 = vmatpush1.msra.mxu0 %v6480
    %7320 = vmatprep.subr.mxu0 0.0
    %7321 = vmatpush1.msra.mxu0 %v6485
    %7322 = vmatprep.subr.mxu0 0.0
    %7323 = vmatpush1.msra.mxu0 %v6490
    %7324 = vmatprep.subr.mxu0 0.0
    %7325 = vmatpush1.msra.mxu0 %v6495
    %7326 = vmatprep.subr.mxu0 0.0
    %7327 = vmatpush1.msra.mxu0 %v6500
    %7328 = vmatprep.subr.mxu0 0.0
    %7329 = vmatpush1.msra.mxu0 %v6505
    %7330 = vmatprep.subr.mxu0 0.0
    %7331 = vmatpush1.msra.mxu0 %v6510
    %7332 = vmatprep.subr.mxu0 0.0
    %7333 = vmatpush1.msra.mxu0 %v6515
    %7334 = vmatprep.subr.mxu0 0.0
    %7335 = vmatpush1.msra.mxu0 %v6645
    %7336 = vmatprep.subr.mxu0 0.0
    %7337 = vmatpush1.msra.mxu0 %v6650
    %7338 = vmatprep.subr.mxu0 0.0
    %7339 = vmatpush1.msra.mxu0 %v6655
    %7340 = vmatprep.subr.mxu0 0.0
    %7341 = vmatpush1.msra.mxu0 %v6660
    %7342 = vmatprep.subr.mxu0 0.0
    %7343 = vmatpush1.msra.mxu0 %v6665
    %7344 = vmatprep.subr.mxu0 0.0
    %7345 = vmatpush1.msra.mxu0 %v6670
    %7346 = vmatprep.subr.mxu0 0.0
    %7347 = vmatpush1.msra.mxu0 %v6675
    %7348 = vmatprep.subr.mxu0 0.0
    %7349 = vmatpush1.msra.mxu0 %v6680
    %7350 = vmatprep.mubr.f32.mxu0 %v6730
    %7351 = vmatmul.mubr.f32.gmra.mrb[0].mxu0 %v6729
    %v7352 = vpop.f32.mrb[0].mxu0
    %v7353 = vadd.f32 %v7208, %v7352
    %v7354 = vpop.f32.mrb[0].mxu0
    %7355 = vmatprep.mubr.f32.mxu0 %v6738
    %7356 = vmatmul.mubr.f32.gmra.mrb[0].mxu0 %v6737
    %v7357 = vpop.f32.mrb[0].mxu0
    %v7358 = vadd.f32 %v7213, %v7357
    %v7359 = vpop.f32.mrb[0].mxu0
    %7360 = vmatprep.mubr.f32.mxu0 %v6746
    %7361 = vmatmul.mubr.f32.gmra.mrb[0].mxu0 %v6745
    %v7362 = vpop.f32.mrb[0].mxu0
    %v7363 = vadd.f32 %v7218, %v7362
    %v7364 = vpop.f32.mrb[0].mxu0
    %7365 = vmatprep.mubr.f32.mxu0 %v6754
    %7366 = vmatmul.mubr.f32.gmra.mrb[0].mxu0 %v6753
    %v7367 = vpop.f32.mrb[0].mxu0
    %v7368 = vadd.f32 %v7223, %v7367
    %v7369 = vpop.f32.mrb[0].mxu0
    %7370 = vmatprep.mubr.f32.mxu0 %v6762
    %7371 = vmatmul.mubr.f32.gmra.mrb[0].mxu0 %v6761
    %v7372 = vpop.f32.mrb[0].mxu0
    %v7373 = vadd.f32 %v7228, %v7372
    %v7374 = vpop.f32.mrb[0].mxu0
    %7375 = vmatprep.mubr.f32.mxu0 %v6770
    %7376 = vmatmul.mubr.f32.gmra.mrb[0].mxu0 %v6769
    %v7377 = vpop.f32.mrb[0].mxu0
    %v7378 = vadd.f32 %v7233, %v7377
    %v7379 = vpop.f32.mrb[0].mxu0
    %7380 = vmatprep.mubr.f32.mxu0 %v6778
    %7381 = vmatmul.mubr.f32.gmra.mrb[0].mxu0 %v6777
    %v7382 = vpop.f32.mrb[0].mxu0
    %v7383 = vadd.f32 %v7238, %v7382
    %v7384 = vpop.f32.mrb[0].mxu0
    %7385 = vmatprep.mubr.f32.mxu0 %v6786
    %7386 = vmatmul.mubr.f32.gmra.mrb[0].mxu0 %v6785
    %v7387 = vpop.f32.mrb[0].mxu0
    %v7388 = vadd.f32 %v7243, %v7387
    %v7389 = vpop.f32.mrb[0].mxu0
    %7390 = vmatprep.mubr.f32.mxu0 %v6794
    %7391 = vmatmul.mubr.f32.gmra.mrb[0].mxu0 %v6793
    %v7392 = vpop.f32.mrb[0].mxu0
    %v7393 = vadd.f32 %v7248, %v7392
    %v7394 = vpop.f32.mrb[0].mxu0
    %7395 = vmatprep.mubr.f32.mxu0 %v6802
    %7396 = vmatmul.mubr.f32.gmra.mrb[0].mxu0 %v6801
    %v7397 = vpop.f32.mrb[0].mxu0
    %v7398 = vadd.f32 %v7253, %v7397
    %v7399 = vpop.f32.mrb[0].mxu0
    %7400 = vmatprep.mubr.f32.mxu0 %v6810
    %7401 = vmatmul.mubr.f32.gmra.mrb[0].mxu0 %v6809
    %v7402 = vpop.f32.mrb[0].mxu0
    %v7403 = vadd.f32 %v7258, %v7402
    %v7404 = vpop.f32.mrb[0].mxu0
    %7405 = vmatprep.mubr.f32.mxu0 %v6818
    %7406 = vmatmul.mubr.f32.gmra.mrb[0].mxu0 %v6817
    %v7407 = vpop.f32.mrb[0].mxu0
    %v7408 = vadd.f32 %v7263, %v7407
    %v7409 = vpop.f32.mrb[0].mxu0
    %7410 = vmatprep.mubr.f32.mxu0 %v6826
    %7411 = vmatmul.mubr.f32.gmra.mrb[0].mxu0 %v6825
    %v7412 = vpop.f32.mrb[0].mxu0
    %v7413 = vadd.f32 %v7268, %v7412
    %v7414 = vpop.f32.mrb[0].mxu0
    %7415 = vmatprep.mubr.f32.mxu0 %v6834
    %7416 = vmatmul.mubr.f32.gmra.mrb[0].mxu0 %v6833
    %v7417 = vpop.f32.mrb[0].mxu0
    %v7418 = vadd.f32 %v7273, %v7417
    %v7419 = vpop.f32.mrb[0].mxu0
    %7420 = vmatprep.mubr.f32.mxu0 %v6842
    %7421 = vmatmul.mubr.f32.gmra.mrb[0].mxu0 %v6841
    %v7422 = vpop.f32.mrb[0].mxu0
    %v7423 = vadd.f32 %v7278, %v7422
    %v7424 = vpop.f32.mrb[0].mxu0
    %7425 = vmatprep.mubr.f32.mxu0 %v6850
    %7426 = vmatmul.mubr.f32.gmra.mrb[0].mxu0 %v6849
    %v7427 = vpop.f32.mrb[0].mxu0
    %v7428 = vadd.f32 %v7283, %v7427
    %v7429 = vpop.f32.mrb[0].mxu0
    %7430 = vdwg.mxu0
    %7431 = vmatprep.subr.mxu0 0.0
    %7432 = vmatpush1.msra.mxu0 %v4188
    %7433 = vmatprep.subr.mxu0 0.0
    %7434 = vmatpush1.msra.mxu0 %v4193
    %7435 = vmatprep.subr.mxu0 0.0
    %7436 = vmatpush1.msra.mxu0 %v4198
    %7437 = vmatprep.subr.mxu0 0.0
    %7438 = vmatpush1.msra.mxu0 %v4203
    %7439 = vmatprep.subr.mxu0 0.0
    %7440 = vmatpush1.msra.mxu0 %v4208
    %7441 = vmatprep.subr.mxu0 0.0
    %7442 = vmatpush1.msra.mxu0 %v4213
    %7443 = vmatprep.subr.mxu0 0.0
    %7444 = vmatpush1.msra.mxu0 %v4218
    %7445 = vmatprep.subr.mxu0 0.0
    %7446 = vmatpush1.msra.mxu0 %v4223
    %7447 = vmatprep.subr.mxu0 0.0
    %7448 = vmatpush1.msra.mxu0 %v4355
    %7449 = vmatprep.subr.mxu0 0.0
    %7450 = vmatpush1.msra.mxu0 %v4360
    %7451 = vmatprep.subr.mxu0 0.0
    %7452 = vmatpush1.msra.mxu0 %v4365
    %7453 = vmatprep.subr.mxu0 0.0
    %7454 = vmatpush1.msra.mxu0 %v4370
    %7455 = vmatprep.subr.mxu0 0.0
    %7456 = vmatpush1.msra.mxu0 %v4375
    %7457 = vmatprep.subr.mxu0 0.0
    %7458 = vmatpush1.msra.mxu0 %v4380
    %7459 = vmatprep.subr.mxu0 0.0
    %7460 = vmatpush1.msra.mxu0 %v4385
    %7461 = vmatprep.subr.mxu0 0.0
    %7462 = vmatpush1.msra.mxu0 %v4390
    %7463 = vmatprep.subr.mxu0 0.0
    %7464 = vmatpush1.msra.mxu0 %v4523
    %7465 = vmatprep.subr.mxu0 0.0
    %7466 = vmatpush1.msra.mxu0 %v4528
    %7467 = vmatprep.subr.mxu0 0.0
    %7468 = vmatpush1.msra.mxu0 %v4533
    %7469 = vmatprep.subr.mxu0 0.0
    %7470 = vmatpush1.msra.mxu0 %v4538
    %7471 = vmatprep.subr.mxu0 0.0
    %7472 = vmatpush1.msra.mxu0 %v4543
    %7473 = vmatprep.subr.mxu0 0.0
    %7474 = vmatpush1.msra.mxu0 %v4548
    %7475 = vmatprep.subr.mxu0 0.0
    %7476 = vmatpush1.msra.mxu0 %v4553
    %7477 = vmatprep.subr.mxu0 0.0
    %7478 = vmatpush1.msra.mxu0 %v4558
    %7479 = vmatprep.subr.mxu0 0.0
    %7480 = vmatpush1.msra.mxu0 %v4691
    %7481 = vmatprep.subr.mxu0 0.0
    %7482 = vmatpush1.msra.mxu0 %v4696
    %7483 = vmatprep.subr.mxu0 0.0
    %7484 = vmatpush1.msra.mxu0 %v4701
    %7485 = vmatprep.subr.mxu0 0.0
    %7486 = vmatpush1.msra.mxu0 %v4706
    %7487 = vmatprep.subr.mxu0 0.0
    %7488 = vmatpush1.msra.mxu0 %v4711
    %7489 = vmatprep.subr.mxu0 0.0
    %7490 = vmatpush1.msra.mxu0 %v4716
    %7491 = vmatprep.subr.mxu0 0.0
    %7492 = vmatpush1.msra.mxu0 %v4721
    %7493 = vmatprep.subr.mxu0 0.0
    %7494 = vmatpush1.msra.mxu0 %v4726
    %7495 = vmatprep.mubr.f32.mxu0 %v6724
    %7496 = vmatmul.mubr.f32.gmra.mrb[0].mxu0 %v6723
    %v7497 = vpop.f32.mrb[0].mxu0
    %v7498 = vadd.f32 0.0, %v7497
    %v7499 = vpop.f32.mrb[0].mxu0
    %7500 = vmatprep.mubr.f32.mxu0 %v6732
    %7501 = vmatmul.mubr.f32.gmra.mrb[0].mxu0 %v6731
    %v7502 = vpop.f32.mrb[0].mxu0
    %v7503 = vadd.f32 0.0, %v7502
    %v7504 = vpop.f32.mrb[0].mxu0
    %7505 = vmatprep.mubr.f32.mxu0 %v6740
    %7506 = vmatmul.mubr.f32.gmra.mrb[0].mxu0 %v6739
    %v7507 = vpop.f32.mrb[0].mxu0
    %v7508 = vadd.f32 0.0, %v7507
    %v7509 = vpop.f32.mrb[0].mxu0
    %7510 = vmatprep.mubr.f32.mxu0 %v6748
    %7511 = vmatmul.mubr.f32.gmra.mrb[0].mxu0 %v6747
    %v7512 = vpop.f32.mrb[0].mxu0
    %v7513 = vadd.f32 0.0, %v7512
    %v7514 = vpop.f32.mrb[0].mxu0
    %7515 = vmatprep.mubr.f32.mxu0 %v6756
    %7516 = vmatmul.mubr.f32.gmra.mrb[0].mxu0 %v6755
    %v7517 = vpop.f32.mrb[0].mxu0
    %v7518 = vadd.f32 0.0, %v7517
    %v7519 = vpop.f32.mrb[0].mxu0
    %7520 = vmatprep.mubr.f32.mxu0 %v6764
    %7521 = vmatmul.mubr.f32.gmra.mrb[0].mxu0 %v6763
    %v7522 = vpop.f32.mrb[0].mxu0
    %v7523 = vadd.f32 0.0, %v7522
    %v7524 = vpop.f32.mrb[0].mxu0
    %7525 = vmatprep.mubr.f32.mxu0 %v6772
    %7526 = vmatmul.mubr.f32.gmra.mrb[0].mxu0 %v6771
    %v7527 = vpop.f32.mrb[0].mxu0
    %v7528 = vadd.f32 0.0, %v7527
    %v7529 = vpop.f32.mrb[0].mxu0
    %7530 = vmatprep.mubr.f32.mxu0 %v6780
    %7531 = vmatmul.mubr.f32.gmra.mrb[0].mxu0 %v6779
    %v7532 = vpop.f32.mrb[0].mxu0
    %v7533 = vadd.f32 0.0, %v7532
    %v7534 = vpop.f32.mrb[0].mxu0
    %7535 = vmatprep.mubr.f32.mxu0 %v6788
    %7536 = vmatmul.mubr.f32.gmra.mrb[0].mxu0 %v6787
    %v7537 = vpop.f32.mrb[0].mxu0
    %v7538 = vadd.f32 0.0, %v7537
    %v7539 = vpop.f32.mrb[0].mxu0
    %7540 = vmatprep.mubr.f32.mxu0 %v6796
    %7541 = vmatmul.mubr.f32.gmra.mrb[0].mxu0 %v6795
    %v7542 = vpop.f32.mrb[0].mxu0
    %v7543 = vadd.f32 0.0, %v7542
    %v7544 = vpop.f32.mrb[0].mxu0
    %7545 = vmatprep.mubr.f32.mxu0 %v6804
    %7546 = vmatmul.mubr.f32.gmra.mrb[0].mxu0 %v6803
    %v7547 = vpop.f32.mrb[0].mxu0
    %v7548 = vadd.f32 0.0, %v7547
    %v7549 = vpop.f32.mrb[0].mxu0
    %7550 = vmatprep.mubr.f32.mxu0 %v6812
    %7551 = vmatmul.mubr.f32.gmra.mrb[0].mxu0 %v6811
    %v7552 = vpop.f32.mrb[0].mxu0
    %v7553 = vadd.f32 0.0, %v7552
    %v7554 = vpop.f32.mrb[0].mxu0
    %7555 = vmatprep.mubr.f32.mxu0 %v6820
    %7556 = vmatmul.mubr.f32.gmra.mrb[0].mxu0 %v6819
    %v7557 = vpop.f32.mrb[0].mxu0
    %v7558 = vadd.f32 0.0, %v7557
    %v7559 = vpop.f32.mrb[0].mxu0
    %7560 = vmatprep.mubr.f32.mxu0 %v6828
    %7561 = vmatmul.mubr.f32.gmra.mrb[0].mxu0 %v6827
    %v7562 = vpop.f32.mrb[0].mxu0
    %v7563 = vadd.f32 0.0, %v7562
    %v7564 = vpop.f32.mrb[0].mxu0
    %7565 = vmatprep.mubr.f32.mxu0 %v6836
    %7566 = vmatmul.mubr.f32.gmra.mrb[0].mxu0 %v6835
    %v7567 = vpop.f32.mrb[0].mxu0
    %v7568 = vadd.f32 0.0, %v7567
    %v7569 = vpop.f32.mrb[0].mxu0
    %7570 = vmatprep.mubr.f32.mxu0 %v6844
    %7571 = vmatmul.mubr.f32.gmra.mrb[0].mxu0 %v6843
    %v7572 = vpop.f32.mrb[0].mxu0
    %v7573 = vadd.f32 0.0, %v7572
    %v7574 = vpop.f32.mrb[0].mxu0
    %7575 = vdwg.mxu0
    %7576 = vmatprep.subr.mxu0 0.0
    %7577 = vmatpush1.msra.mxu0 %v4860
    %7578 = vmatprep.subr.mxu0 0.0
    %7579 = vmatpush1.msra.mxu0 %v4865
    %7580 = vmatprep.subr.mxu0 0.0
    %7581 = vmatpush1.msra.mxu0 %v4870
    %7582 = vmatprep.subr.mxu0 0.0
    %7583 = vmatpush1.msra.mxu0 %v4875
    %7584 = vmatprep.subr.mxu0 0.0
    %7585 = vmatpush1.msra.mxu0 %v4880
    %7586 = vmatprep.subr.mxu0 0.0
    %7587 = vmatpush1.msra.mxu0 %v4885
    %7588 = vmatprep.subr.mxu0 0.0
    %7589 = vmatpush1.msra.mxu0 %v4890
    %7590 = vmatprep.subr.mxu0 0.0
    %7591 = vmatpush1.msra.mxu0 %v4895
    %7592 = vmatprep.subr.mxu0 0.0
    %7593 = vmatpush1.msra.mxu0 %v5025
    %7594 = vmatprep.subr.mxu0 0.0
    %7595 = vmatpush1.msra.mxu0 %v5030
    %7596 = vmatprep.subr.mxu0 0.0
    %7597 = vmatpush1.msra.mxu0 %v5035
    %7598 = vmatprep.subr.mxu0 0.0
    %7599 = vmatpush1.msra.mxu0 %v5040
    %7600 = vmatprep.subr.mxu0 0.0
    %7601 = vmatpush1.msra.mxu0 %v5045
    %7602 = vmatprep.subr.mxu0 0.0
    %7603 = vmatpush1.msra.mxu0 %v5050
    %7604 = vmatprep.subr.mxu0 0.0
    %7605 = vmatpush1.msra.mxu0 %v5055
    %7606 = vmatprep.subr.mxu0 0.0
    %7607 = vmatpush1.msra.mxu0 %v5060
    %7608 = vmatprep.subr.mxu0 0.0
    %7609 = vmatpush1.msra.mxu0 %v5190
    %7610 = vmatprep.subr.mxu0 0.0
    %7611 = vmatpush1.msra.mxu0 %v5195
    %7612 = vmatprep.subr.mxu0 0.0
    %7613 = vmatpush1.msra.mxu0 %v5200
    %7614 = vmatprep.subr.mxu0 0.0
    %7615 = vmatpush1.msra.mxu0 %v5205
    %7616 = vmatprep.subr.mxu0 0.0
    %7617 = vmatpush1.msra.mxu0 %v5210
    %7618 = vmatprep.subr.mxu0 0.0
    %7619 = vmatpush1.msra.mxu0 %v5215
    %7620 = vmatprep.subr.mxu0 0.0
    %7621 = vmatpush1.msra.mxu0 %v5220
    %7622 = vmatprep.subr.mxu0 0.0
    %7623 = vmatpush1.msra.mxu0 %v5225
    %7624 = vmatprep.subr.mxu0 0.0
    %7625 = vmatpush1.msra.mxu0 %v5355
    %7626 = vmatprep.subr.mxu0 0.0
    %7627 = vmatpush1.msra.mxu0 %v5360
    %7628 = vmatprep.subr.mxu0 0.0
    %7629 = vmatpush1.msra.mxu0 %v5365
    %7630 = vmatprep.subr.mxu0 0.0
    %7631 = vmatpush1.msra.mxu0 %v5370
    %7632 = vmatprep.subr.mxu0 0.0
    %7633 = vmatpush1.msra.mxu0 %v5375
    %7634 = vmatprep.subr.mxu0 0.0
    %7635 = vmatpush1.msra.mxu0 %v5380
    %7636 = vmatprep.subr.mxu0 0.0
    %7637 = vmatpush1.msra.mxu0 %v5385
    %7638 = vmatprep.subr.mxu0 0.0
    %7639 = vmatpush1.msra.mxu0 %v5390
    %7640 = vmatprep.mubr.f32.mxu0 %v6726
    %7641 = vmatmul.mubr.f32.gmra.mrb[0].mxu0 %v6725
    %v7642 = vpop.f32.mrb[0].mxu0
    %v7643 = vadd.f32 %v7498, %v7642
    %v7644 = vpop.f32.mrb[0].mxu0
    %7645 = vmatprep.mubr.f32.mxu0 %v6734
    %7646 = vmatmul.mubr.f32.gmra.mrb[0].mxu0 %v6733
    %v7647 = vpop.f32.mrb[0].mxu0
    %v7648 = vadd.f32 %v7503, %v7647
    %v7649 = vpop.f32.mrb[0].mxu0
    %7650 = vmatprep.mubr.f32.mxu0 %v6742
    %7651 = vmatmul.mubr.f32.gmra.mrb[0].mxu0 %v6741
    %v7652 = vpop.f32.mrb[0].mxu0
    %v7653 = vadd.f32 %v7508, %v7652
    %v7654 = vpop.f32.mrb[0].mxu0
    %7655 = vmatprep.mubr.f32.mxu0 %v6750
    %7656 = vmatmul.mubr.f32.gmra.mrb[0].mxu0 %v6749
    %v7657 = vpop.f32.mrb[0].mxu0
    %v7658 = vadd.f32 %v7513, %v7657
    %v7659 = vpop.f32.mrb[0].mxu0
    %7660 = vmatprep.mubr.f32.mxu0 %v6758
    %7661 = vmatmul.mubr.f32.gmra.mrb[0].mxu0 %v6757
    %v7662 = vpop.f32.mrb[0].mxu0
    %v7663 = vadd.f32 %v7518, %v7662
    %v7664 = vpop.f32.mrb[0].mxu0
    %7665 = vmatprep.mubr.f32.mxu0 %v6766
    %7666 = vmatmul.mubr.f32.gmra.mrb[0].mxu0 %v6765
    %v7667 = vpop.f32.mrb[0].mxu0
    %v7668 = vadd.f32 %v7523, %v7667
    %v7669 = vpop.f32.mrb[0].mxu0
    %7670 = vmatprep.mubr.f32.mxu0 %v6774
    %7671 = vmatmul.mubr.f32.gmra.mrb[0].mxu0 %v6773
    %v7672 = vpop.f32.mrb[0].mxu0
    %v7673 = vadd.f32 %v7528, %v7672
    %v7674 = vpop.f32.mrb[0].mxu0
    %7675 = vmatprep.mubr.f32.mxu0 %v6782
    %7676 = vmatmul.mubr.f32.gmra.mrb[0].mxu0 %v6781
    %v7677 = vpop.f32.mrb[0].mxu0
    %v7678 = vadd.f32 %v7533, %v7677
    %v7679 = vpop.f32.mrb[0].mxu0
    %7680 = vmatprep.mubr.f32.mxu0 %v6790
    %7681 = vmatmul.mubr.f32.gmra.mrb[0].mxu0 %v6789
    %v7682 = vpop.f32.mrb[0].mxu0
    %v7683 = vadd.f32 %v7538, %v7682
    %v7684 = vpop.f32.mrb[0].mxu0
    %7685 = vmatprep.mubr.f32.mxu0 %v6798
    %7686 = vmatmul.mubr.f32.gmra.mrb[0].mxu0 %v6797
    %v7687 = vpop.f32.mrb[0].mxu0
    %v7688 = vadd.f32 %v7543, %v7687
    %v7689 = vpop.f32.mrb[0].mxu0
    %7690 = vmatprep.mubr.f32.mxu0 %v6806
    %7691 = vmatmul.mubr.f32.gmra.mrb[0].mxu0 %v6805
    %v7692 = vpop.f32.mrb[0].mxu0
    %v7693 = vadd.f32 %v7548, %v7692
    %v7694 = vpop.f32.mrb[0].mxu0
    %7695 = vmatprep.mubr.f32.mxu0 %v6814
    %7696 = vmatmul.mubr.f32.gmra.mrb[0].mxu0 %v6813
    %v7697 = vpop.f32.mrb[0].mxu0
    %v7698 = vadd.f32 %v7553, %v7697
    %v7699 = vpop.f32.mrb[0].mxu0
    %7700 = vmatprep.mubr.f32.mxu0 %v6822
    %7701 = vmatmul.mubr.f32.gmra.mrb[0].mxu0 %v6821
    %v7702 = vpop.f32.mrb[0].mxu0
    %v7703 = vadd.f32 %v7558, %v7702
    %v7704 = vpop.f32.mrb[0].mxu0
    %7705 = vmatprep.mubr.f32.mxu0 %v6830
    %7706 = vmatmul.mubr.f32.gmra.mrb[0].mxu0 %v6829
    %v7707 = vpop.f32.mrb[0].mxu0
    %v7708 = vadd.f32 %v7563, %v7707
    %v7709 = vpop.f32.mrb[0].mxu0
    %7710 = vmatprep.mubr.f32.mxu0 %v6838
    %7711 = vmatmul.mubr.f32.gmra.mrb[0].mxu0 %v6837
    %v7712 = vpop.f32.mrb[0].mxu0
    %v7713 = vadd.f32 %v7568, %v7712
    %v7714 = vpop.f32.mrb[0].mxu0
    %7715 = vmatprep.mubr.f32.mxu0 %v6846
    %7716 = vmatmul.mubr.f32.gmra.mrb[0].mxu0 %v6845
    %v7717 = vpop.f32.mrb[0].mxu0
    %v7718 = vadd.f32 %v7573, %v7717
    %v7719 = vpop.f32.mrb[0].mxu0
    %7720 = vdwg.mxu0
    %7721 = vmatprep.subr.mxu0 0.0
    %7722 = vmatpush1.msra.mxu0 %v5525
    %7723 = vmatprep.subr.mxu0 0.0
    %7724 = vmatpush1.msra.mxu0 %v5530
    %7725 = vmatprep.subr.mxu0 0.0
    %7726 = vmatpush1.msra.mxu0 %v5535
    %7727 = vmatprep.subr.mxu0 0.0
    %7728 = vmatpush1.msra.mxu0 %v5540
    %7729 = vmatprep.subr.mxu0 0.0
    %7730 = vmatpush1.msra.mxu0 %v5545
    %7731 = vmatprep.subr.mxu0 0.0
    %7732 = vmatpush1.msra.mxu0 %v5550
    %7733 = vmatprep.subr.mxu0 0.0
    %7734 = vmatpush1.msra.mxu0 %v5555
    %7735 = vmatprep.subr.mxu0 0.0
    %7736 = vmatpush1.msra.mxu0 %v5560
    %7737 = vmatprep.subr.mxu0 0.0
    %7738 = vmatpush1.msra.mxu0 %v5690
    %7739 = vmatprep.subr.mxu0 0.0
    %7740 = vmatpush1.msra.mxu0 %v5695
    %7741 = vmatprep.subr.mxu0 0.0
    %7742 = vmatpush1.msra.mxu0 %v5700
    %7743 = vmatprep.subr.mxu0 0.0
    %7744 = vmatpush1.msra.mxu0 %v5705
    %7745 = vmatprep.subr.mxu0 0.0
    %7746 = vmatpush1.msra.mxu0 %v5710
    %7747 = vmatprep.subr.mxu0 0.0
    %7748 = vmatpush1.msra.mxu0 %v5715
    %7749 = vmatprep.subr.mxu0 0.0
    %7750 = vmatpush1.msra.mxu0 %v5720
    %7751 = vmatprep.subr.mxu0 0.0
    %7752 = vmatpush1.msra.mxu0 %v5725
    %7753 = vmatprep.subr.mxu0 0.0
    %7754 = vmatpush1.msra.mxu0 %v5855
    %7755 = vmatprep.subr.mxu0 0.0
    %7756 = vmatpush1.msra.mxu0 %v5860
    %7757 = vmatprep.subr.mxu0 0.0
    %7758 = vmatpush1.msra.mxu0 %v5865
    %7759 = vmatprep.subr.mxu0 0.0
    %7760 = vmatpush1.msra.mxu0 %v5870
    %7761 = vmatprep.subr.mxu0 0.0
    %7762 = vmatpush1.msra.mxu0 %v5875
    %7763 = vmatprep.subr.mxu0 0.0
    %7764 = vmatpush1.msra.mxu0 %v5880
    %7765 = vmatprep.subr.mxu0 0.0
    %7766 = vmatpush1.msra.mxu0 %v5885
    %7767 = vmatprep.subr.mxu0 0.0
    %7768 = vmatpush1.msra.mxu0 %v5890
    %7769 = vmatprep.subr.mxu0 0.0
    %7770 = vmatpush1.msra.mxu0 %v6020
    %7771 = vmatprep.subr.mxu0 0.0
    %7772 = vmatpush1.msra.mxu0 %v6025
    %7773 = vmatprep.subr.mxu0 0.0
    %7774 = vmatpush1.msra.mxu0 %v6030
    %7775 = vmatprep.subr.mxu0 0.0
    %7776 = vmatpush1.msra.mxu0 %v6035
    %7777 = vmatprep.subr.mxu0 0.0
    %7778 = vmatpush1.msra.mxu0 %v6040
    %7779 = vmatprep.subr.mxu0 0.0
    %7780 = vmatpush1.msra.mxu0 %v6045
    %7781 = vmatprep.subr.mxu0 0.0
    %7782 = vmatpush1.msra.mxu0 %v6050
    %7783 = vmatprep.subr.mxu0 0.0
    %7784 = vmatpush1.msra.mxu0 %v6055
    %7785 = vmatprep.mubr.f32.mxu0 %v6728
    %7786 = vmatmul.mubr.f32.gmra.mrb[0].mxu0 %v6727
    %v7787 = vpop.f32.mrb[0].mxu0
    %v7788 = vadd.f32 %v7643, %v7787
    %v7789 = vpop.f32.mrb[0].mxu0
    %7790 = vmatprep.mubr.f32.mxu0 %v6736
    %7791 = vmatmul.mubr.f32.gmra.mrb[0].mxu0 %v6735
    %v7792 = vpop.f32.mrb[0].mxu0
    %v7793 = vadd.f32 %v7648, %v7792
    %v7794 = vpop.f32.mrb[0].mxu0
    %7795 = vmatprep.mubr.f32.mxu0 %v6744
    %7796 = vmatmul.mubr.f32.gmra.mrb[0].mxu0 %v6743
    %v7797 = vpop.f32.mrb[0].mxu0
    %v7798 = vadd.f32 %v7653, %v7797
    %v7799 = vpop.f32.mrb[0].mxu0
    %7800 = vmatprep.mubr.f32.mxu0 %v6752
    %7801 = vmatmul.mubr.f32.gmra.mrb[0].mxu0 %v6751
    %v7802 = vpop.f32.mrb[0].mxu0
    %v7803 = vadd.f32 %v7658, %v7802
    %v7804 = vpop.f32.mrb[0].mxu0
    %7805 = vmatprep.mubr.f32.mxu0 %v6760
    %7806 = vmatmul.mubr.f32.gmra.mrb[0].mxu0 %v6759
    %v7807 = vpop.f32.mrb[0].mxu0
    %v7808 = vadd.f32 %v7663, %v7807
    %v7809 = vpop.f32.mrb[0].mxu0
    %7810 = vmatprep.mubr.f32.mxu0 %v6768
    %7811 = vmatmul.mubr.f32.gmra.mrb[0].mxu0 %v6767
    %v7812 = vpop.f32.mrb[0].mxu0
    %v7813 = vadd.f32 %v7668, %v7812
    %v7814 = vpop.f32.mrb[0].mxu0
    %7815 = vmatprep.mubr.f32.mxu0 %v6776
    %7816 = vmatmul.mubr.f32.gmra.mrb[0].mxu0 %v6775
    %v7817 = vpop.f32.mrb[0].mxu0
    %v7818 = vadd.f32 %v7673, %v7817
    %v7819 = vpop.f32.mrb[0].mxu0
    %7820 = vmatprep.mubr.f32.mxu0 %v6784
    %7821 = vmatmul.mubr.f32.gmra.mrb[0].mxu0 %v6783
    %v7822 = vpop.f32.mrb[0].mxu0
    %v7823 = vadd.f32 %v7678, %v7822
    %v7824 = vpop.f32.mrb[0].mxu0
    %7825 = vmatprep.mubr.f32.mxu0 %v6792
    %7826 = vmatmul.mubr.f32.gmra.mrb[0].mxu0 %v6791
    %v7827 = vpop.f32.mrb[0].mxu0
    %v7828 = vadd.f32 %v7683, %v7827
    %v7829 = vpop.f32.mrb[0].mxu0
    %7830 = vmatprep.mubr.f32.mxu0 %v6800
    %7831 = vmatmul.mubr.f32.gmra.mrb[0].mxu0 %v6799
    %v7832 = vpop.f32.mrb[0].mxu0
    %v7833 = vadd.f32 %v7688, %v7832
    %v7834 = vpop.f32.mrb[0].mxu0
    %7835 = vmatprep.mubr.f32.mxu0 %v6808
    %7836 = vmatmul.mubr.f32.gmra.mrb[0].mxu0 %v6807
    %v7837 = vpop.f32.mrb[0].mxu0
    %v7838 = vadd.f32 %v7693, %v7837
    %v7839 = vpop.f32.mrb[0].mxu0
    %7840 = vmatprep.mubr.f32.mxu0 %v6816
    %7841 = vmatmul.mubr.f32.gmra.mrb[0].mxu0 %v6815
    %v7842 = vpop.f32.mrb[0].mxu0
    %v7843 = vadd.f32 %v7698, %v7842
    %v7844 = vpop.f32.mrb[0].mxu0
    %7845 = vmatprep.mubr.f32.mxu0 %v6824
    %7846 = vmatmul.mubr.f32.gmra.mrb[0].mxu0 %v6823
    %v7847 = vpop.f32.mrb[0].mxu0
    %v7848 = vadd.f32 %v7703, %v7847
    %v7849 = vpop.f32.mrb[0].mxu0
    %7850 = vmatprep.mubr.f32.mxu0 %v6832
    %7851 = vmatmul.mubr.f32.gmra.mrb[0].mxu0 %v6831
    %v7852 = vpop.f32.mrb[0].mxu0
    %v7853 = vadd.f32 %v7708, %v7852
    %v7854 = vpop.f32.mrb[0].mxu0
    %7855 = vmatprep.mubr.f32.mxu0 %v6840
    %7856 = vmatmul.mubr.f32.gmra.mrb[0].mxu0 %v6839
    %v7857 = vpop.f32.mrb[0].mxu0
    %v7858 = vadd.f32 %v7713, %v7857
    %v7859 = vpop.f32.mrb[0].mxu0
    %7860 = vmatprep.mubr.f32.mxu0 %v6848
    %7861 = vmatmul.mubr.f32.gmra.mrb[0].mxu0 %v6847
    %v7862 = vpop.f32.mrb[0].mxu0
    %v7863 = vadd.f32 %v7718, %v7862
    %v7864 = vpop.f32.mrb[0].mxu0
    %7865 = vdwg.mxu0
    %7866 = vmatprep.subr.mxu0 0.0
    %7867 = vmatpush1.msra.mxu0 %v6190
    %7868 = vmatprep.subr.mxu0 0.0
    %7869 = vmatpush1.msra.mxu0 %v6195
    %7870 = vmatprep.subr.mxu0 0.0
    %7871 = vmatpush1.msra.mxu0 %v6200
    %7872 = vmatprep.subr.mxu0 0.0
    %7873 = vmatpush1.msra.mxu0 %v6205
    %7874 = vmatprep.subr.mxu0 0.0
    %7875 = vmatpush1.msra.mxu0 %v6210
    %7876 = vmatprep.subr.mxu0 0.0
    %7877 = vmatpush1.msra.mxu0 %v6215
    %7878 = vmatprep.subr.mxu0 0.0
    %7879 = vmatpush1.msra.mxu0 %v6220
    %7880 = vmatprep.subr.mxu0 0.0
    %7881 = vmatpush1.msra.mxu0 %v6225
    %7882 = vmatprep.subr.mxu0 0.0
    %7883 = vmatpush1.msra.mxu0 %v6355
    %7884 = vmatprep.subr.mxu0 0.0
    %7885 = vmatpush1.msra.mxu0 %v6360
    %7886 = vmatprep.subr.mxu0 0.0
    %7887 = vmatpush1.msra.mxu0 %v6365
    %7888 = vmatprep.subr.mxu0 0.0
    %7889 = vmatpush1.msra.mxu0 %v6370
    %7890 = vmatprep.subr.mxu0 0.0
    %7891 = vmatpush1.msra.mxu0 %v6375
    %7892 = vmatprep.subr.mxu0 0.0
    %7893 = vmatpush1.msra.mxu0 %v6380
    %7894 = vmatprep.subr.mxu0 0.0
    %7895 = vmatpush1.msra.mxu0 %v6385
    %7896 = vmatprep.subr.mxu0 0.0
    %7897 = vmatpush1.msra.mxu0 %v6390
    %7898 = vmatprep.subr.mxu0 0.0
    %7899 = vmatpush1.msra.mxu0 %v6520
    %7900 = vmatprep.subr.mxu0 0.0
    %7901 = vmatpush1.msra.mxu0 %v6525
    %7902 = vmatprep.subr.mxu0 0.0
    %7903 = vmatpush1.msra.mxu0 %v6530
    %7904 = vmatprep.subr.mxu0 0.0
    %7905 = vmatpush1.msra.mxu0 %v6535
    %7906 = vmatprep.subr.mxu0 0.0
    %7907 = vmatpush1.msra.mxu0 %v6540
    %7908 = vmatprep.subr.mxu0 0.0
    %7909 = vmatpush1.msra.mxu0 %v6545
    %7910 = vmatprep.subr.mxu0 0.0
    %7911 = vmatpush1.msra.mxu0 %v6550
    %7912 = vmatprep.subr.mxu0 0.0
    %7913 = vmatpush1.msra.mxu0 %v6555
    %7914 = vmatprep.subr.mxu0 0.0
    %7915 = vmatpush1.msra.mxu0 %v6685
    %7916 = vmatprep.subr.mxu0 0.0
    %7917 = vmatpush1.msra.mxu0 %v6690
    %7918 = vmatprep.subr.mxu0 0.0
    %7919 = vmatpush1.msra.mxu0 %v6695
    %7920 = vmatprep.subr.mxu0 0.0
    %7921 = vmatpush1.msra.mxu0 %v6700
    %7922 = vmatprep.subr.mxu0 0.0
    %7923 = vmatpush1.msra.mxu0 %v6705
    %7924 = vmatprep.subr.mxu0 0.0
    %7925 = vmatpush1.msra.mxu0 %v6710
    %7926 = vmatprep.subr.mxu0 0.0
    %7927 = vmatpush1.msra.mxu0 %v6715
    %7928 = vmatprep.subr.mxu0 0.0
    %7929 = vmatpush1.msra.mxu0 %v6720
    %7930 = vmatprep.mubr.f32.mxu0 %v6730
    %7931 = vmatmul.mubr.f32.gmra.mrb[0].mxu0 %v6729
    %v7932 = vpop.f32.mrb[0].mxu0
    %v7933 = vadd.f32 %v7788, %v7932
    %v7934 = vpop.f32.mrb[0].mxu0
    %7935 = vmatprep.mubr.f32.mxu0 %v6738
    %7936 = vmatmul.mubr.f32.gmra.mrb[0].mxu0 %v6737
    %v7937 = vpop.f32.mrb[0].mxu0
    %v7938 = vadd.f32 %v7793, %v7937
    %v7939 = vpop.f32.mrb[0].mxu0
    %7940 = vmatprep.mubr.f32.mxu0 %v6746
    %7941 = vmatmul.mubr.f32.gmra.mrb[0].mxu0 %v6745
    %v7942 = vpop.f32.mrb[0].mxu0
    %v7943 = vadd.f32 %v7798, %v7942
    %v7944 = vpop.f32.mrb[0].mxu0
    %7945 = vmatprep.mubr.f32.mxu0 %v6754
    %7946 = vmatmul.mubr.f32.gmra.mrb[0].mxu0 %v6753
    %v7947 = vpop.f32.mrb[0].mxu0
    %v7948 = vadd.f32 %v7803, %v7947
    %v7949 = vpop.f32.mrb[0].mxu0
    %7950 = vmatprep.mubr.f32.mxu0 %v6762
    %7951 = vmatmul.mubr.f32.gmra.mrb[0].mxu0 %v6761
    %v7952 = vpop.f32.mrb[0].mxu0
    %v7953 = vadd.f32 %v7808, %v7952
    %v7954 = vpop.f32.mrb[0].mxu0
    %7955 = vmatprep.mubr.f32.mxu0 %v6770
    %7956 = vmatmul.mubr.f32.gmra.mrb[0].mxu0 %v6769
    %v7957 = vpop.f32.mrb[0].mxu0
    %v7958 = vadd.f32 %v7813, %v7957
    %v7959 = vpop.f32.mrb[0].mxu0
    %7960 = vmatprep.mubr.f32.mxu0 %v6778
    %7961 = vmatmul.mubr.f32.gmra.mrb[0].mxu0 %v6777
    %v7962 = vpop.f32.mrb[0].mxu0
    %v7963 = vadd.f32 %v7818, %v7962
    %v7964 = vpop.f32.mrb[0].mxu0
    %7965 = vmatprep.mubr.f32.mxu0 %v6786
    %7966 = vmatmul.mubr.f32.gmra.mrb[0].mxu0 %v6785
    %v7967 = vpop.f32.mrb[0].mxu0
    %v7968 = vadd.f32 %v7823, %v7967
    %v7969 = vpop.f32.mrb[0].mxu0
    %7970 = vmatprep.mubr.f32.mxu0 %v6794
    %7971 = vmatmul.mubr.f32.gmra.mrb[0].mxu0 %v6793
    %v7972 = vpop.f32.mrb[0].mxu0
    %v7973 = vadd.f32 %v7828, %v7972
    %v7974 = vpop.f32.mrb[0].mxu0
    %7975 = vmatprep.mubr.f32.mxu0 %v6802
    %7976 = vmatmul.mubr.f32.gmra.mrb[0].mxu0 %v6801
    %v7977 = vpop.f32.mrb[0].mxu0
    %v7978 = vadd.f32 %v7833, %v7977
    %v7979 = vpop.f32.mrb[0].mxu0
    %7980 = vmatprep.mubr.f32.mxu0 %v6810
    %7981 = vmatmul.mubr.f32.gmra.mrb[0].mxu0 %v6809
    %v7982 = vpop.f32.mrb[0].mxu0
    %v7983 = vadd.f32 %v7838, %v7982
    %v7984 = vpop.f32.mrb[0].mxu0
    %7985 = vmatprep.mubr.f32.mxu0 %v6818
    %7986 = vmatmul.mubr.f32.gmra.mrb[0].mxu0 %v6817
    %v7987 = vpop.f32.mrb[0].mxu0
    %v7988 = vadd.f32 %v7843, %v7987
    %v7989 = vpop.f32.mrb[0].mxu0
    %7990 = vmatprep.mubr.f32.mxu0 %v6826
    %7991 = vmatmul.mubr.f32.gmra.mrb[0].mxu0 %v6825
    %v7992 = vpop.f32.mrb[0].mxu0
    %v7993 = vadd.f32 %v7848, %v7992
    %v7994 = vpop.f32.mrb[0].mxu0
    %7995 = vmatprep.mubr.f32.mxu0 %v6834
    %7996 = vmatmul.mubr.f32.gmra.mrb[0].mxu0 %v6833
    %v7997 = vpop.f32.mrb[0].mxu0
    %v7998 = vadd.f32 %v7853, %v7997
    %v7999 = vpop.f32.mrb[0].mxu0
    %8000 = vmatprep.mubr.f32.mxu0 %v6842
    %8001 = vmatmul.mubr.f32.gmra.mrb[0].mxu0 %v6841
    %v8002 = vpop.f32.mrb[0].mxu0
    %v8003 = vadd.f32 %v7858, %v8002
    %v8004 = vpop.f32.mrb[0].mxu0
    %8005 = vmatprep.mubr.f32.mxu0 %v6850
    %8006 = vmatmul.mubr.f32.gmra.mrb[0].mxu0 %v6849
    %v8007 = vpop.f32.mrb[0].mxu0
    %v8008 = vadd.f32 %v7863, %v8007
    %v8009 = vpop.f32.mrb[0].mxu0
    %8010 = vdwg.mxu0
    %vm8011 = vcmask 130048
    %v8012 = vsel %vm8011, %v7353, 0.0
    %8013 = vadd.xlane.f32.xlu0 %v8012
    %v8014 = vpop.xlane.xlu0 %8013
    %v8015 = vsel %vm8011, %v7358, 0.0
    %8016 = vadd.xlane.f32.xlu0 %v8015
    %v8017 = vpop.xlane.xlu0 %8016
    %v8018 = vsel %vm8011, %v7363, 0.0
    %8019 = vadd.xlane.f32.xlu0 %v8018
    %v8020 = vpop.xlane.xlu0 %8019
    %v8021 = vsel %vm8011, %v7368, 0.0
    %8022 = vadd.xlane.f32.xlu0 %v8021
    %v8023 = vpop.xlane.xlu0 %8022
    %v8024 = vsel %vm8011, %v7373, 0.0
    %8025 = vadd.xlane.f32.xlu0 %v8024
    %v8026 = vpop.xlane.xlu0 %8025
    %v8027 = vsel %vm8011, %v7378, 0.0
    %8028 = vadd.xlane.f32.xlu0 %v8027
    %v8029 = vpop.xlane.xlu0 %8028
    %v8030 = vsel %vm8011, %v7383, 0.0
    %8031 = vadd.xlane.f32.xlu0 %v8030
    %v8032 = vpop.xlane.xlu0 %8031
    %v8033 = vsel %vm8011, %v7388, 0.0
    %8034 = vadd.xlane.f32.xlu0 %v8033
    %v8035 = vpop.xlane.xlu0 %8034
    %v8036 = vsel %vm8011, %v7393, 0.0
    %8037 = vadd.xlane.f32.xlu0 %v8036
    %v8038 = vpop.xlane.xlu0 %8037
    %v8039 = vsel %vm8011, %v7398, 0.0
    %8040 = vadd.xlane.f32.xlu0 %v8039
    %v8041 = vpop.xlane.xlu0 %8040
    %v8042 = vsel %vm8011, %v7403, 0.0
    %8043 = vadd.xlane.f32.xlu0 %v8042
    %v8044 = vpop.xlane.xlu0 %8043
    %v8045 = vsel %vm8011, %v7408, 0.0
    %8046 = vadd.xlane.f32.xlu0 %v8045
    %v8047 = vpop.xlane.xlu0 %8046
    %v8048 = vsel %vm8011, %v7413, 0.0
    %8049 = vadd.xlane.f32.xlu0 %v8048
    %v8050 = vpop.xlane.xlu0 %8049
    %v8051 = vsel %vm8011, %v7418, 0.0
    %8052 = vadd.xlane.f32.xlu0 %v8051
    %v8053 = vpop.xlane.xlu0 %8052
    %v8054 = vsel %vm8011, %v7423, 0.0
    %8055 = vadd.xlane.f32.xlu0 %v8054
    %v8056 = vpop.xlane.xlu0 %8055
    %v8057 = vsel %vm8011, %v7428, 0.0
    %8058 = vadd.xlane.f32.xlu0 %v8057
    %v8059 = vpop.xlane.xlu0 %8058
    %v8060 = vadd.f32 %v8014, 0.0
    %v8061 = vadd.f32 %v8017, 0.0
    %v8062 = vadd.f32 %v8020, 0.0
    %v8063 = vadd.f32 %v8023, 0.0
    %v8064 = vadd.f32 %v8026, 0.0
    %v8065 = vadd.f32 %v8029, 0.0
    %v8066 = vadd.f32 %v8032, 0.0
    %v8067 = vadd.f32 %v8035, 0.0
    %v8068 = vadd.f32 %v8038, 0.0
    %v8069 = vadd.f32 %v8041, 0.0
    %v8070 = vadd.f32 %v8044, 0.0
    %v8071 = vadd.f32 %v8047, 0.0
    %v8072 = vadd.f32 %v8050, 0.0
    %v8073 = vadd.f32 %v8053, 0.0
    %v8074 = vadd.f32 %v8056, 0.0
    %v8075 = vadd.f32 %v8059, 0.0
    %v8076 = vsel %vm8011, %v7933, 0.0
    %8077 = vadd.xlane.f32.xlu0 %v8076
    %v8078 = vpop.xlane.xlu0 %8077
    %v8079 = vsel %vm8011, %v7938, 0.0
    %8080 = vadd.xlane.f32.xlu0 %v8079
    %v8081 = vpop.xlane.xlu0 %8080
    %v8082 = vsel %vm8011, %v7943, 0.0
    %8083 = vadd.xlane.f32.xlu0 %v8082
    %v8084 = vpop.xlane.xlu0 %8083
    %v8085 = vsel %vm8011, %v7948, 0.0
    %8086 = vadd.xlane.f32.xlu0 %v8085
    %v8087 = vpop.xlane.xlu0 %8086
    %v8088 = vsel %vm8011, %v7953, 0.0
    %8089 = vadd.xlane.f32.xlu0 %v8088
    %v8090 = vpop.xlane.xlu0 %8089
    %v8091 = vsel %vm8011, %v7958, 0.0
    %8092 = vadd.xlane.f32.xlu0 %v8091
    %v8093 = vpop.xlane.xlu0 %8092
    %v8094 = vsel %vm8011, %v7963, 0.0
    %8095 = vadd.xlane.f32.xlu0 %v8094
    %v8096 = vpop.xlane.xlu0 %8095
    %v8097 = vsel %vm8011, %v7968, 0.0
    %8098 = vadd.xlane.f32.xlu0 %v8097
    %v8099 = vpop.xlane.xlu0 %8098
    %v8100 = vsel %vm8011, %v7973, 0.0
    %8101 = vadd.xlane.f32.xlu0 %v8100
    %v8102 = vpop.xlane.xlu0 %8101
    %v8103 = vsel %vm8011, %v7978, 0.0
    %8104 = vadd.xlane.f32.xlu0 %v8103
    %v8105 = vpop.xlane.xlu0 %8104
    %v8106 = vsel %vm8011, %v7983, 0.0
    %8107 = vadd.xlane.f32.xlu0 %v8106
    %v8108 = vpop.xlane.xlu0 %8107
    %v8109 = vsel %vm8011, %v7988, 0.0
    %8110 = vadd.xlane.f32.xlu0 %v8109
    %v8111 = vpop.xlane.xlu0 %8110
    %v8112 = vsel %vm8011, %v7993, 0.0
    %8113 = vadd.xlane.f32.xlu0 %v8112
    %v8114 = vpop.xlane.xlu0 %8113
    %v8115 = vsel %vm8011, %v7998, 0.0
    %8116 = vadd.xlane.f32.xlu0 %v8115
    %v8117 = vpop.xlane.xlu0 %8116
    %v8118 = vsel %vm8011, %v8003, 0.0
    %8119 = vadd.xlane.f32.xlu0 %v8118
    %v8120 = vpop.xlane.xlu0 %8119
    %v8121 = vsel %vm8011, %v8008, 0.0
    %8122 = vadd.xlane.f32.xlu0 %v8121
    %v8123 = vpop.xlane.xlu0 %8122
    %v8124 = vadd.f32 %v8060, %v8078
    %v8125 = vadd.f32 %v8061, %v8081
    %v8126 = vadd.f32 %v8062, %v8084
    %v8127 = vadd.f32 %v8063, %v8087
    %v8128 = vadd.f32 %v8064, %v8090
    %v8129 = vadd.f32 %v8065, %v8093
    %v8130 = vadd.f32 %v8066, %v8096
    %v8131 = vadd.f32 %v8067, %v8099
    %v8132 = vadd.f32 %v8068, %v8102
    %v8133 = vadd.f32 %v8069, %v8105
    %v8134 = vadd.f32 %v8070, %v8108
    %v8135 = vadd.f32 %v8071, %v8111
    %v8136 = vadd.f32 %v8072, %v8114
    %v8137 = vadd.f32 %v8073, %v8117
    %v8138 = vadd.f32 %v8074, %v8120
    %v8139 = vadd.f32 %v8075, %v8123
    %v8140 = vrcp.pop 32.0
    %v8141 = vmul.f32 %v8124, %v8140
    %v8142 = vmul.f32 %v8125, %v8140
    %v8143 = vmul.f32 %v8126, %v8140
    %v8144 = vmul.f32 %v8127, %v8140
    %v8145 = vmul.f32 %v8128, %v8140
    %v8146 = vmul.f32 %v8129, %v8140
    %v8147 = vmul.f32 %v8130, %v8140
    %v8148 = vmul.f32 %v8131, %v8140
    %v8149 = vmul.f32 %v8132, %v8140
    %v8150 = vmul.f32 %v8133, %v8140
    %v8151 = vmul.f32 %v8134, %v8140
    %v8152 = vmul.f32 %v8135, %v8140
    %v8153 = vmul.f32 %v8136, %v8140
    %v8154 = vmul.f32 %v8137, %v8140
    %v8155 = vmul.f32 %v8138, %v8140
    %v8156 = vmul.f32 %v8139, %v8140
    %v8157 = vsub.f32 %v7353, %v8141
    %v8158 = vsub.f32 %v7358, %v8142
    %v8159 = vsub.f32 %v7363, %v8143
    %v8160 = vsub.f32 %v7368, %v8144
    %v8161 = vsub.f32 %v7373, %v8145
    %v8162 = vsub.f32 %v7378, %v8146
    %v8163 = vsub.f32 %v7383, %v8147
    %v8164 = vsub.f32 %v7388, %v8148
    %v8165 = vsub.f32 %v7393, %v8149
    %v8166 = vsub.f32 %v7398, %v8150
    %v8167 = vsub.f32 %v7403, %v8151
    %v8168 = vsub.f32 %v7408, %v8152
    %v8169 = vsub.f32 %v7413, %v8153
    %v8170 = vsub.f32 %v7418, %v8154
    %v8171 = vsub.f32 %v7423, %v8155
    %v8172 = vsub.f32 %v7428, %v8156
    %v8173 = vmul.f32 %v8157, %v8157
    %v8174 = vmul.f32 %v8158, %v8158
    %v8175 = vmul.f32 %v8159, %v8159
    %v8176 = vmul.f32 %v8160, %v8160
    %v8177 = vmul.f32 %v8161, %v8161
    %v8178 = vmul.f32 %v8162, %v8162
    %v8179 = vmul.f32 %v8163, %v8163
    %v8180 = vmul.f32 %v8164, %v8164
    %v8181 = vmul.f32 %v8165, %v8165
    %v8182 = vmul.f32 %v8166, %v8166
    %v8183 = vmul.f32 %v8167, %v8167
    %v8184 = vmul.f32 %v8168, %v8168
    %v8185 = vmul.f32 %v8169, %v8169
    %v8186 = vmul.f32 %v8170, %v8170
    %v8187 = vmul.f32 %v8171, %v8171
    %v8188 = vmul.f32 %v8172, %v8172
    %v8189 = vsel %vm8011, %v8173, 0.0
    %8190 = vadd.xlane.f32.xlu0 %v8189
    %v8191 = vpop.xlane.xlu0 %8190
    %v8192 = vsel %vm8011, %v8174, 0.0
    %8193 = vadd.xlane.f32.xlu0 %v8192
    %v8194 = vpop.xlane.xlu0 %8193
    %v8195 = vsel %vm8011, %v8175, 0.0
    %8196 = vadd.xlane.f32.xlu0 %v8195
    %v8197 = vpop.xlane.xlu0 %8196
    %v8198 = vsel %vm8011, %v8176, 0.0
    %8199 = vadd.xlane.f32.xlu0 %v8198
    %v8200 = vpop.xlane.xlu0 %8199
    %v8201 = vsel %vm8011, %v8177, 0.0
    %8202 = vadd.xlane.f32.xlu0 %v8201
    %v8203 = vpop.xlane.xlu0 %8202
    %v8204 = vsel %vm8011, %v8178, 0.0
    %8205 = vadd.xlane.f32.xlu0 %v8204
    %v8206 = vpop.xlane.xlu0 %8205
    %v8207 = vsel %vm8011, %v8179, 0.0
    %8208 = vadd.xlane.f32.xlu0 %v8207
    %v8209 = vpop.xlane.xlu0 %8208
    %v8210 = vsel %vm8011, %v8180, 0.0
    %8211 = vadd.xlane.f32.xlu0 %v8210
    %v8212 = vpop.xlane.xlu0 %8211
    %v8213 = vsel %vm8011, %v8181, 0.0
    %8214 = vadd.xlane.f32.xlu0 %v8213
    %v8215 = vpop.xlane.xlu0 %8214
    %v8216 = vsel %vm8011, %v8182, 0.0
    %8217 = vadd.xlane.f32.xlu0 %v8216
    %v8218 = vpop.xlane.xlu0 %8217
    %v8219 = vsel %vm8011, %v8183, 0.0
    %8220 = vadd.xlane.f32.xlu0 %v8219
    %v8221 = vpop.xlane.xlu0 %8220
    %v8222 = vsel %vm8011, %v8184, 0.0
    %8223 = vadd.xlane.f32.xlu0 %v8222
    %v8224 = vpop.xlane.xlu0 %8223
    %v8225 = vsel %vm8011, %v8185, 0.0
    %8226 = vadd.xlane.f32.xlu0 %v8225
    %v8227 = vpop.xlane.xlu0 %8226
    %v8228 = vsel %vm8011, %v8186, 0.0
    %8229 = vadd.xlane.f32.xlu0 %v8228
    %v8230 = vpop.xlane.xlu0 %8229
    %v8231 = vsel %vm8011, %v8187, 0.0
    %8232 = vadd.xlane.f32.xlu0 %v8231
    %v8233 = vpop.xlane.xlu0 %8232
    %v8234 = vsel %vm8011, %v8188, 0.0
    %8235 = vadd.xlane.f32.xlu0 %v8234
    %v8236 = vpop.xlane.xlu0 %8235
    %v8237 = vadd.f32 %v8191, 0.0
    %v8238 = vadd.f32 %v8194, 0.0
    %v8239 = vadd.f32 %v8197, 0.0
    %v8240 = vadd.f32 %v8200, 0.0
    %v8241 = vadd.f32 %v8203, 0.0
    %v8242 = vadd.f32 %v8206, 0.0
    %v8243 = vadd.f32 %v8209, 0.0
    %v8244 = vadd.f32 %v8212, 0.0
    %v8245 = vadd.f32 %v8215, 0.0
    %v8246 = vadd.f32 %v8218, 0.0
    %v8247 = vadd.f32 %v8221, 0.0
    %v8248 = vadd.f32 %v8224, 0.0
    %v8249 = vadd.f32 %v8227, 0.0
    %v8250 = vadd.f32 %v8230, 0.0
    %v8251 = vadd.f32 %v8233, 0.0
    %v8252 = vadd.f32 %v8236, 0.0
    %v8253 = vsub.f32 %v7933, %v8141
    %v8254 = vsub.f32 %v7938, %v8142
    %v8255 = vsub.f32 %v7943, %v8143
    %v8256 = vsub.f32 %v7948, %v8144
    %v8257 = vsub.f32 %v7953, %v8145
    %v8258 = vsub.f32 %v7958, %v8146
    %v8259 = vsub.f32 %v7963, %v8147
    %v8260 = vsub.f32 %v7968, %v8148
    %v8261 = vsub.f32 %v7973, %v8149
    %v8262 = vsub.f32 %v7978, %v8150
    %v8263 = vsub.f32 %v7983, %v8151
    %v8264 = vsub.f32 %v7988, %v8152
    %v8265 = vsub.f32 %v7993, %v8153
    %v8266 = vsub.f32 %v7998, %v8154
    %v8267 = vsub.f32 %v8003, %v8155
    %v8268 = vsub.f32 %v8008, %v8156
    %v8269 = vmul.f32 %v8253, %v8253
    %v8270 = vmul.f32 %v8254, %v8254
    %v8271 = vmul.f32 %v8255, %v8255
    %v8272 = vmul.f32 %v8256, %v8256
    %v8273 = vmul.f32 %v8257, %v8257
    %v8274 = vmul.f32 %v8258, %v8258
    %v8275 = vmul.f32 %v8259, %v8259
    %v8276 = vmul.f32 %v8260, %v8260
    %v8277 = vmul.f32 %v8261, %v8261
    %v8278 = vmul.f32 %v8262, %v8262
    %v8279 = vmul.f32 %v8263, %v8263
    %v8280 = vmul.f32 %v8264, %v8264
    %v8281 = vmul.f32 %v8265, %v8265
    %v8282 = vmul.f32 %v8266, %v8266
    %v8283 = vmul.f32 %v8267, %v8267
    %v8284 = vmul.f32 %v8268, %v8268
    %v8285 = vsel %vm8011, %v8269, 0.0
    %8286 = vadd.xlane.f32.xlu0 %v8285
    %v8287 = vpop.xlane.xlu0 %8286
    %v8288 = vsel %vm8011, %v8270, 0.0
    %8289 = vadd.xlane.f32.xlu0 %v8288
    %v8290 = vpop.xlane.xlu0 %8289
    %v8291 = vsel %vm8011, %v8271, 0.0
    %8292 = vadd.xlane.f32.xlu0 %v8291
    %v8293 = vpop.xlane.xlu0 %8292
    %v8294 = vsel %vm8011, %v8272, 0.0
    %8295 = vadd.xlane.f32.xlu0 %v8294
    %v8296 = vpop.xlane.xlu0 %8295
    %v8297 = vsel %vm8011, %v8273, 0.0
    %8298 = vadd.xlane.f32.xlu0 %v8297
    %v8299 = vpop.xlane.xlu0 %8298
    %v8300 = vsel %vm8011, %v8274, 0.0
    %8301 = vadd.xlane.f32.xlu0 %v8300
    %v8302 = vpop.xlane.xlu0 %8301
    %v8303 = vsel %vm8011, %v8275, 0.0
    %8304 = vadd.xlane.f32.xlu0 %v8303
    %v8305 = vpop.xlane.xlu0 %8304
    %v8306 = vsel %vm8011, %v8276, 0.0
    %8307 = vadd.xlane.f32.xlu0 %v8306
    %v8308 = vpop.xlane.xlu0 %8307
    %v8309 = vsel %vm8011, %v8277, 0.0
    %8310 = vadd.xlane.f32.xlu0 %v8309
    %v8311 = vpop.xlane.xlu0 %8310
    %v8312 = vsel %vm8011, %v8278, 0.0
    %8313 = vadd.xlane.f32.xlu0 %v8312
    %v8314 = vpop.xlane.xlu0 %8313
    %v8315 = vsel %vm8011, %v8279, 0.0
    %8316 = vadd.xlane.f32.xlu0 %v8315
    %v8317 = vpop.xlane.xlu0 %8316
    %v8318 = vsel %vm8011, %v8280, 0.0
    %8319 = vadd.xlane.f32.xlu0 %v8318
    %v8320 = vpop.xlane.xlu0 %8319
    %v8321 = vsel %vm8011, %v8281, 0.0
    %8322 = vadd.xlane.f32.xlu0 %v8321
    %v8323 = vpop.xlane.xlu0 %8322
    %v8324 = vsel %vm8011, %v8282, 0.0
    %8325 = vadd.xlane.f32.xlu0 %v8324
    %v8326 = vpop.xlane.xlu0 %8325
    %v8327 = vsel %vm8011, %v8283, 0.0
    %8328 = vadd.xlane.f32.xlu0 %v8327
    %v8329 = vpop.xlane.xlu0 %8328
    %v8330 = vsel %vm8011, %v8284, 0.0
    %8331 = vadd.xlane.f32.xlu0 %v8330
    %v8332 = vpop.xlane.xlu0 %8331
    %v8333 = vadd.f32 %v8237, %v8287
    %v8334 = vadd.f32 %v8238, %v8290
    %v8335 = vadd.f32 %v8239, %v8293
    %v8336 = vadd.f32 %v8240, %v8296
    %v8337 = vadd.f32 %v8241, %v8299
    %v8338 = vadd.f32 %v8242, %v8302
    %v8339 = vadd.f32 %v8243, %v8305
    %v8340 = vadd.f32 %v8244, %v8308
    %v8341 = vadd.f32 %v8245, %v8311
    %v8342 = vadd.f32 %v8246, %v8314
    %v8343 = vadd.f32 %v8247, %v8317
    %v8344 = vadd.f32 %v8248, %v8320
    %v8345 = vadd.f32 %v8249, %v8323
    %v8346 = vadd.f32 %v8250, %v8326
    %v8347 = vadd.f32 %v8251, %v8329
    %v8348 = vadd.f32 %v8252, %v8332
    %v8349 = vmul.f32 %v8333, %v8140
    %v8350 = vmul.f32 %v8334, %v8140
    %v8351 = vmul.f32 %v8335, %v8140
    %v8352 = vmul.f32 %v8336, %v8140
    %v8353 = vmul.f32 %v8337, %v8140
    %v8354 = vmul.f32 %v8338, %v8140
    %v8355 = vmul.f32 %v8339, %v8140
    %v8356 = vmul.f32 %v8340, %v8140
    %v8357 = vmul.f32 %v8341, %v8140
    %v8358 = vmul.f32 %v8342, %v8140
    %v8359 = vmul.f32 %v8343, %v8140
    %v8360 = vmul.f32 %v8344, %v8140
    %v8361 = vmul.f32 %v8345, %v8140
    %v8362 = vmul.f32 %v8346, %v8140
    %v8363 = vmul.f32 %v8347, %v8140
    %v8364 = vmul.f32 %v8348, %v8140
    %v8365 = vadd.f32 %v8349, 1e-05
    %v8366 = vadd.f32 %v8350, 1e-05
    %v8367 = vadd.f32 %v8351, 1e-05
    %v8368 = vadd.f32 %v8352, 1e-05
    %v8369 = vadd.f32 %v8353, 1e-05
    %v8370 = vadd.f32 %v8354, 1e-05
    %v8371 = vadd.f32 %v8355, 1e-05
    %v8372 = vadd.f32 %v8356, 1e-05
    %v8373 = vadd.f32 %v8357, 1e-05
    %v8374 = vadd.f32 %v8358, 1e-05
    %v8375 = vadd.f32 %v8359, 1e-05
    %v8376 = vadd.f32 %v8360, 1e-05
    %v8377 = vadd.f32 %v8361, 1e-05
    %v8378 = vadd.f32 %v8362, 1e-05
    %v8379 = vadd.f32 %v8363, 1e-05
    %v8380 = vadd.f32 %v8364, 1e-05
    %v8381 = vrsqrt.pop %v8365
    %v8382 = vrsqrt.pop %v8366
    %v8383 = vrsqrt.pop %v8367
    %v8384 = vrsqrt.pop %v8368
    %v8385 = vrsqrt.pop %v8369
    %v8386 = vrsqrt.pop %v8370
    %v8387 = vrsqrt.pop %v8371
    %v8388 = vrsqrt.pop %v8372
    %v8389 = vrsqrt.pop %v8373
    %v8390 = vrsqrt.pop %v8374
    %v8391 = vrsqrt.pop %v8375
    %v8392 = vrsqrt.pop %v8376
    %v8393 = vrsqrt.pop %v8377
    %v8394 = vrsqrt.pop %v8378
    %v8395 = vrsqrt.pop %v8379
    %v8396 = vrsqrt.pop %v8380
    %v8397 = vld [vmem:[%s6] sm:$0xff]
    %v8398 = vld [vmem:[%s6 + $0x8] sm:$0xff]
    %v8399 = vld [vmem:[%s6 + $0x10] sm:$0xff]
    %v8400 = vld [vmem:[%s6 + $0x18] sm:$0xff]
    %v8401 = vld [vmem:[%s6 + $0x20] sm:$0xff]
    %v8402 = vld [vmem:[%s6 + $0x28] sm:$0xff]
    %v8403 = vld [vmem:[%s6 + $0x30] sm:$0xff]
    %v8404 = vld [vmem:[%s6 + $0x38] sm:$0xff]
    %v8405 = vld [vmem:[%s6 + $0x40] sm:$0xff]
    %v8406 = vld [vmem:[%s6 + $0x48] sm:$0xff]
    %v8407 = vld [vmem:[%s6 + $0x50] sm:$0xff]
    %v8408 = vld [vmem:[%s6 + $0x58] sm:$0xff]
    %v8409 = vld [vmem:[%s6 + $0x60] sm:$0xff]
    %v8410 = vld [vmem:[%s6 + $0x68] sm:$0xff]
    %v8411 = vld [vmem:[%s6 + $0x70] sm:$0xff]
    %v8412 = vld [vmem:[%s6 + $0x78] sm:$0xff]
    %v8413 = vmul.f32 %v8381, %v8397
    %v8414 = vmul.f32 %v8382, %v8398
    %v8415 = vmul.f32 %v8383, %v8399
    %v8416 = vmul.f32 %v8384, %v8400
    %v8417 = vmul.f32 %v8385, %v8401
    %v8418 = vmul.f32 %v8386, %v8402
    %v8419 = vmul.f32 %v8387, %v8403
    %v8420 = vmul.f32 %v8388, %v8404
    %v8421 = vmul.f32 %v8389, %v8405
    %v8422 = vmul.f32 %v8390, %v8406
    %v8423 = vmul.f32 %v8391, %v8407
    %v8424 = vmul.f32 %v8392, %v8408
    %v8425 = vmul.f32 %v8393, %v8409
    %v8426 = vmul.f32 %v8394, %v8410
    %v8427 = vmul.f32 %v8395, %v8411
    %v8428 = vmul.f32 %v8396, %v8412
    %v8429 = vld [vmem:[%s7] sm:$0xff]
    %v8430 = vld [vmem:[%s7 + $0x8] sm:$0xff]
    %v8431 = vld [vmem:[%s7 + $0x10] sm:$0xff]
    %v8432 = vld [vmem:[%s7 + $0x18] sm:$0xff]
    %v8433 = vld [vmem:[%s7 + $0x20] sm:$0xff]
    %v8434 = vld [vmem:[%s7 + $0x28] sm:$0xff]
    %v8435 = vld [vmem:[%s7 + $0x30] sm:$0xff]
    %v8436 = vld [vmem:[%s7 + $0x38] sm:$0xff]
    %v8437 = vld [vmem:[%s7 + $0x40] sm:$0xff]
    %v8438 = vld [vmem:[%s7 + $0x48] sm:$0xff]
    %v8439 = vld [vmem:[%s7 + $0x50] sm:$0xff]
    %v8440 = vld [vmem:[%s7 + $0x58] sm:$0xff]
    %v8441 = vld [vmem:[%s7 + $0x60] sm:$0xff]
    %v8442 = vld [vmem:[%s7 + $0x68] sm:$0xff]
    %v8443 = vld [vmem:[%s7 + $0x70] sm:$0xff]
    %v8444 = vld [vmem:[%s7 + $0x78] sm:$0xff]
    %8446 = vset.pattern.permute.xlu0 0
    %8447 = vperm.xlu0 %8446, %v8413
    %v8448 = vpop.permute.xlu0 %8447
    %8451 = vset.pattern.permute.xlu0 0
    %8452 = vperm.xlu0 %8451, %v8414
    %v8453 = vpop.permute.xlu0 %8452
    %8456 = vset.pattern.permute.xlu0 0
    %8457 = vperm.xlu0 %8456, %v8415
    %v8458 = vpop.permute.xlu0 %8457
    %8461 = vset.pattern.permute.xlu0 0
    %8462 = vperm.xlu0 %8461, %v8416
    %v8463 = vpop.permute.xlu0 %8462
    %8466 = vset.pattern.permute.xlu0 0
    %8467 = vperm.xlu0 %8466, %v8417
    %v8468 = vpop.permute.xlu0 %8467
    %8471 = vset.pattern.permute.xlu0 0
    %8472 = vperm.xlu0 %8471, %v8418
    %v8473 = vpop.permute.xlu0 %8472
    %8476 = vset.pattern.permute.xlu0 0
    %8477 = vperm.xlu0 %8476, %v8419
    %v8478 = vpop.permute.xlu0 %8477
    %8481 = vset.pattern.permute.xlu0 0
    %8482 = vperm.xlu0 %8481, %v8420
    %v8483 = vpop.permute.xlu0 %8482
    %8486 = vset.pattern.permute.xlu0 0
    %8487 = vperm.xlu0 %8486, %v8421
    %v8488 = vpop.permute.xlu0 %8487
    %8491 = vset.pattern.permute.xlu0 0
    %8492 = vperm.xlu0 %8491, %v8422
    %v8493 = vpop.permute.xlu0 %8492
    %8496 = vset.pattern.permute.xlu0 0
    %8497 = vperm.xlu0 %8496, %v8423
    %v8498 = vpop.permute.xlu0 %8497
    %8501 = vset.pattern.permute.xlu0 0
    %8502 = vperm.xlu0 %8501, %v8424
    %v8503 = vpop.permute.xlu0 %8502
    %8506 = vset.pattern.permute.xlu0 0
    %8507 = vperm.xlu0 %8506, %v8425
    %v8508 = vpop.permute.xlu0 %8507
    %8511 = vset.pattern.permute.xlu0 0
    %8512 = vperm.xlu0 %8511, %v8426
    %v8513 = vpop.permute.xlu0 %8512
    %8516 = vset.pattern.permute.xlu0 0
    %8517 = vperm.xlu0 %8516, %v8427
    %v8518 = vpop.permute.xlu0 %8517
    %8521 = vset.pattern.permute.xlu0 0
    %8522 = vperm.xlu0 %8521, %v8428
    %v8523 = vpop.permute.xlu0 %8522
    %v8525 = vmul.f32 %v8157, %v8448
    %v8526 = vmul.f32 %v8158, %v8453
    %v8527 = vmul.f32 %v8159, %v8458
    %v8528 = vmul.f32 %v8160, %v8463
    %v8529 = vmul.f32 %v8161, %v8468
    %v8530 = vmul.f32 %v8162, %v8473
    %v8531 = vmul.f32 %v8163, %v8478
    %v8532 = vmul.f32 %v8164, %v8483
    %v8533 = vmul.f32 %v8165, %v8488
    %v8534 = vmul.f32 %v8166, %v8493
    %v8535 = vmul.f32 %v8167, %v8498
    %v8536 = vmul.f32 %v8168, %v8503
    %v8537 = vmul.f32 %v8169, %v8508
    %v8538 = vmul.f32 %v8170, %v8513
    %v8539 = vmul.f32 %v8171, %v8518
    %v8540 = vmul.f32 %v8172, %v8523
    %8542 = vset.pattern.permute.xlu0 0
    %8543 = vperm.xlu0 %8542, %v8429
    %v8544 = vpop.permute.xlu0 %8543
    %8547 = vset.pattern.permute.xlu0 0
    %8548 = vperm.xlu0 %8547, %v8430
    %v8549 = vpop.permute.xlu0 %8548
    %8552 = vset.pattern.permute.xlu0 0
    %8553 = vperm.xlu0 %8552, %v8431
    %v8554 = vpop.permute.xlu0 %8553
    %8557 = vset.pattern.permute.xlu0 0
    %8558 = vperm.xlu0 %8557, %v8432
    %v8559 = vpop.permute.xlu0 %8558
    %8562 = vset.pattern.permute.xlu0 0
    %8563 = vperm.xlu0 %8562, %v8433
    %v8564 = vpop.permute.xlu0 %8563
    %8567 = vset.pattern.permute.xlu0 0
    %8568 = vperm.xlu0 %8567, %v8434
    %v8569 = vpop.permute.xlu0 %8568
    %8572 = vset.pattern.permute.xlu0 0
    %8573 = vperm.xlu0 %8572, %v8435
    %v8574 = vpop.permute.xlu0 %8573
    %8577 = vset.pattern.permute.xlu0 0
    %8578 = vperm.xlu0 %8577, %v8436
    %v8579 = vpop.permute.xlu0 %8578
    %8582 = vset.pattern.permute.xlu0 0
    %8583 = vperm.xlu0 %8582, %v8437
    %v8584 = vpop.permute.xlu0 %8583
    %8587 = vset.pattern.permute.xlu0 0
    %8588 = vperm.xlu0 %8587, %v8438
    %v8589 = vpop.permute.xlu0 %8588
    %8592 = vset.pattern.permute.xlu0 0
    %8593 = vperm.xlu0 %8592, %v8439
    %v8594 = vpop.permute.xlu0 %8593
    %8597 = vset.pattern.permute.xlu0 0
    %8598 = vperm.xlu0 %8597, %v8440
    %v8599 = vpop.permute.xlu0 %8598
    %8602 = vset.pattern.permute.xlu0 0
    %8603 = vperm.xlu0 %8602, %v8441
    %v8604 = vpop.permute.xlu0 %8603
    %8607 = vset.pattern.permute.xlu0 0
    %8608 = vperm.xlu0 %8607, %v8442
    %v8609 = vpop.permute.xlu0 %8608
    %8612 = vset.pattern.permute.xlu0 0
    %8613 = vperm.xlu0 %8612, %v8443
    %v8614 = vpop.permute.xlu0 %8613
    %8617 = vset.pattern.permute.xlu0 0
    %8618 = vperm.xlu0 %8617, %v8444
    %v8619 = vpop.permute.xlu0 %8618
    %v8621 = vadd.f32 %v8525, %v8544
    %v8622 = vadd.f32 %v8526, %v8549
    %v8623 = vadd.f32 %v8527, %v8554
    %v8624 = vadd.f32 %v8528, %v8559
    %v8625 = vadd.f32 %v8529, %v8564
    %v8626 = vadd.f32 %v8530, %v8569
    %v8627 = vadd.f32 %v8531, %v8574
    %v8628 = vadd.f32 %v8532, %v8579
    %v8629 = vadd.f32 %v8533, %v8584
    %v8630 = vadd.f32 %v8534, %v8589
    %v8631 = vadd.f32 %v8535, %v8594
    %v8632 = vadd.f32 %v8536, %v8599
    %v8633 = vadd.f32 %v8537, %v8604
    %v8634 = vadd.f32 %v8538, %v8609
    %v8635 = vadd.f32 %v8539, %v8614
    %v8636 = vadd.f32 %v8540, %v8619
    %vm8637 = vcmp.gt.f32.partialorder %v8621, 0.0
    %vm8638 = vcmp.gt.f32.partialorder %v8622, 0.0
    %vm8639 = vcmp.gt.f32.partialorder %v8623, 0.0
    %vm8640 = vcmp.gt.f32.partialorder %v8624, 0.0
    %vm8641 = vcmp.gt.f32.partialorder %v8625, 0.0
    %vm8642 = vcmp.gt.f32.partialorder %v8626, 0.0
    %vm8643 = vcmp.gt.f32.partialorder %v8627, 0.0
    %vm8644 = vcmp.gt.f32.partialorder %v8628, 0.0
    %vm8645 = vcmp.gt.f32.partialorder %v8629, 0.0
    %vm8646 = vcmp.gt.f32.partialorder %v8630, 0.0
    %vm8647 = vcmp.gt.f32.partialorder %v8631, 0.0
    %vm8648 = vcmp.gt.f32.partialorder %v8632, 0.0
    %vm8649 = vcmp.gt.f32.partialorder %v8633, 0.0
    %vm8650 = vcmp.gt.f32.partialorder %v8634, 0.0
    %vm8651 = vcmp.gt.f32.partialorder %v8635, 0.0
    %vm8652 = vcmp.gt.f32.partialorder %v8636, 0.0
    %v8653 = vmul.f32 %v8621, 0.2
    %v8654 = vmul.f32 %v8622, 0.2
    %v8655 = vmul.f32 %v8623, 0.2
    %v8656 = vmul.f32 %v8624, 0.2
    %v8657 = vmul.f32 %v8625, 0.2
    %v8658 = vmul.f32 %v8626, 0.2
    %v8659 = vmul.f32 %v8627, 0.2
    %v8660 = vmul.f32 %v8628, 0.2
    %v8661 = vmul.f32 %v8629, 0.2
    %v8662 = vmul.f32 %v8630, 0.2
    %v8663 = vmul.f32 %v8631, 0.2
    %v8664 = vmul.f32 %v8632, 0.2
    %v8665 = vmul.f32 %v8633, 0.2
    %v8666 = vmul.f32 %v8634, 0.2
    %v8667 = vmul.f32 %v8635, 0.2
    %v8668 = vmul.f32 %v8636, 0.2
    %v8669 = vsel %vm8637, %v8621, %v8653
    %v8670 = vsel %vm8638, %v8622, %v8654
    %v8671 = vsel %vm8639, %v8623, %v8655
    %v8672 = vsel %vm8640, %v8624, %v8656
    %v8673 = vsel %vm8641, %v8625, %v8657
    %v8674 = vsel %vm8642, %v8626, %v8658
    %v8675 = vsel %vm8643, %v8627, %v8659
    %v8676 = vsel %vm8644, %v8628, %v8660
    %v8677 = vsel %vm8645, %v8629, %v8661
    %v8678 = vsel %vm8646, %v8630, %v8662
    %v8679 = vsel %vm8647, %v8631, %v8663
    %v8680 = vsel %vm8648, %v8632, %v8664
    %v8681 = vsel %vm8649, %v8633, %v8665
    %v8682 = vsel %vm8650, %v8634, %v8666
    %v8683 = vsel %vm8651, %v8635, %v8667
    %v8684 = vsel %vm8652, %v8636, %v8668
    %v8685 = vmul.f32 %v8253, %v8448
    %v8686 = vmul.f32 %v8254, %v8453
    %v8687 = vmul.f32 %v8255, %v8458
    %v8688 = vmul.f32 %v8256, %v8463
    %v8689 = vmul.f32 %v8257, %v8468
    %v8690 = vmul.f32 %v8258, %v8473
    %v8691 = vmul.f32 %v8259, %v8478
    %v8692 = vmul.f32 %v8260, %v8483
    %v8693 = vmul.f32 %v8261, %v8488
    %v8694 = vmul.f32 %v8262, %v8493
    %v8695 = vmul.f32 %v8263, %v8498
    %v8696 = vmul.f32 %v8264, %v8503
    %v8697 = vmul.f32 %v8265, %v8508
    %v8698 = vmul.f32 %v8266, %v8513
    %v8699 = vmul.f32 %v8267, %v8518
    %v8700 = vmul.f32 %v8268, %v8523
    %v8701 = vadd.f32 %v8685, %v8544
    %v8702 = vadd.f32 %v8686, %v8549
    %v8703 = vadd.f32 %v8687, %v8554
    %v8704 = vadd.f32 %v8688, %v8559
    %v8705 = vadd.f32 %v8689, %v8564
    %v8706 = vadd.f32 %v8690, %v8569
    %v8707 = vadd.f32 %v8691, %v8574
    %v8708 = vadd.f32 %v8692, %v8579
    %v8709 = vadd.f32 %v8693, %v8584
    %v8710 = vadd.f32 %v8694, %v8589
    %v8711 = vadd.f32 %v8695, %v8594
    %v8712 = vadd.f32 %v8696, %v8599
    %v8713 = vadd.f32 %v8697, %v8604
    %v8714 = vadd.f32 %v8698, %v8609
    %v8715 = vadd.f32 %v8699, %v8614
    %v8716 = vadd.f32 %v8700, %v8619
    %vm8717 = vcmp.gt.f32.partialorder %v8701, 0.0
    %vm8718 = vcmp.gt.f32.partialorder %v8702, 0.0
    %vm8719 = vcmp.gt.f32.partialorder %v8703, 0.0
    %vm8720 = vcmp.gt.f32.partialorder %v8704, 0.0
    %vm8721 = vcmp.gt.f32.partialorder %v8705, 0.0
    %vm8722 = vcmp.gt.f32.partialorder %v8706, 0.0
    %vm8723 = vcmp.gt.f32.partialorder %v8707, 0.0
    %vm8724 = vcmp.gt.f32.partialorder %v8708, 0.0
    %vm8725 = vcmp.gt.f32.partialorder %v8709, 0.0
    %vm8726 = vcmp.gt.f32.partialorder %v8710, 0.0
    %vm8727 = vcmp.gt.f32.partialorder %v8711, 0.0
    %vm8728 = vcmp.gt.f32.partialorder %v8712, 0.0
    %vm8729 = vcmp.gt.f32.partialorder %v8713, 0.0
    %vm8730 = vcmp.gt.f32.partialorder %v8714, 0.0
    %vm8731 = vcmp.gt.f32.partialorder %v8715, 0.0
    %vm8732 = vcmp.gt.f32.partialorder %v8716, 0.0
    %v8733 = vmul.f32 %v8701, 0.2
    %v8734 = vmul.f32 %v8702, 0.2
    %v8735 = vmul.f32 %v8703, 0.2
    %v8736 = vmul.f32 %v8704, 0.2
    %v8737 = vmul.f32 %v8705, 0.2
    %v8738 = vmul.f32 %v8706, 0.2
    %v8739 = vmul.f32 %v8707, 0.2
    %v8740 = vmul.f32 %v8708, 0.2
    %v8741 = vmul.f32 %v8709, 0.2
    %v8742 = vmul.f32 %v8710, 0.2
    %v8743 = vmul.f32 %v8711, 0.2
    %v8744 = vmul.f32 %v8712, 0.2
    %v8745 = vmul.f32 %v8713, 0.2
    %v8746 = vmul.f32 %v8714, 0.2
    %v8747 = vmul.f32 %v8715, 0.2
    %v8748 = vmul.f32 %v8716, 0.2
    %v8749 = vsel %vm8717, %v8701, %v8733
    %v8750 = vsel %vm8718, %v8702, %v8734
    %v8751 = vsel %vm8719, %v8703, %v8735
    %v8752 = vsel %vm8720, %v8704, %v8736
    %v8753 = vsel %vm8721, %v8705, %v8737
    %v8754 = vsel %vm8722, %v8706, %v8738
    %v8755 = vsel %vm8723, %v8707, %v8739
    %v8756 = vsel %vm8724, %v8708, %v8740
    %v8757 = vsel %vm8725, %v8709, %v8741
    %v8758 = vsel %vm8726, %v8710, %v8742
    %v8759 = vsel %vm8727, %v8711, %v8743
    %v8760 = vsel %vm8728, %v8712, %v8744
    %v8761 = vsel %vm8729, %v8713, %v8745
    %v8762 = vsel %vm8730, %v8714, %v8746
    %v8763 = vsel %vm8731, %v8715, %v8747
    %v8764 = vsel %vm8732, %v8716, %v8748
    %8765 = vst.msk [vmem:[#allocation3] sm:$0xff] %vm8011, %v8669
    %8766 = vst.msk [vmem:[#allocation3 + $0x8] sm:$0xff] %vm8011, %v8670
    %8767 = vst.msk [vmem:[#allocation3 + $0x10] sm:$0xff] %vm8011, %v8671
    %8768 = vst.msk [vmem:[#allocation3 + $0x18] sm:$0xff] %vm8011, %v8672
    %8769 = vst.msk [vmem:[#allocation3 + $0x20] sm:$0xff] %vm8011, %v8673
    %8770 = vst.msk [vmem:[#allocation3 + $0x28] sm:$0xff] %vm8011, %v8674
    %8771 = vst.msk [vmem:[#allocation3 + $0x30] sm:$0xff] %vm8011, %v8675
    %8772 = vst.msk [vmem:[#allocation3 + $0x38] sm:$0xff] %vm8011, %v8676
    %8773 = vst.msk [vmem:[#allocation3 + $0x40] sm:$0xff] %vm8011, %v8677
    %8774 = vst.msk [vmem:[#allocation3 + $0x48] sm:$0xff] %vm8011, %v8678
    %8775 = vst.msk [vmem:[#allocation3 + $0x50] sm:$0xff] %vm8011, %v8679
    %8776 = vst.msk [vmem:[#allocation3 + $0x58] sm:$0xff] %vm8011, %v8680
    %8777 = vst.msk [vmem:[#allocation3 + $0x60] sm:$0xff] %vm8011, %v8681
    %8778 = vst.msk [vmem:[#allocation3 + $0x68] sm:$0xff] %vm8011, %v8682
    %8779 = vst.msk [vmem:[#allocation3 + $0x70] sm:$0xff] %vm8011, %v8683
    %8780 = vst.msk [vmem:[#allocation3 + $0x78] sm:$0xff] %vm8011, %v8684
    %8781 = vst.msk [vmem:[#allocation3 + $0x80] sm:$0xff] %vm8011, %v8749
    %8782 = vst.msk [vmem:[#allocation3 + $0x88] sm:$0xff] %vm8011, %v8750
    %8783 = vst.msk [vmem:[#allocation3 + $0x90] sm:$0xff] %vm8011, %v8751
    %8784 = vst.msk [vmem:[#allocation3 + $0x98] sm:$0xff] %vm8011, %v8752
    %8785 = vst.msk [vmem:[#allocation3 + $0xa0] sm:$0xff] %vm8011, %v8753
    %8786 = vst.msk [vmem:[#allocation3 + $0xa8] sm:$0xff] %vm8011, %v8754
    %8787 = vst.msk [vmem:[#allocation3 + $0xb0] sm:$0xff] %vm8011, %v8755
    %8788 = vst.msk [vmem:[#allocation3 + $0xb8] sm:$0xff] %vm8011, %v8756
    %8789 = vst.msk [vmem:[#allocation3 + $0xc0] sm:$0xff] %vm8011, %v8757
    %8790 = vst.msk [vmem:[#allocation3 + $0xc8] sm:$0xff] %vm8011, %v8758
    %8791 = vst.msk [vmem:[#allocation3 + $0xd0] sm:$0xff] %vm8011, %v8759
    %8792 = vst.msk [vmem:[#allocation3 + $0xd8] sm:$0xff] %vm8011, %v8760
    %8793 = vst.msk [vmem:[#allocation3 + $0xe0] sm:$0xff] %vm8011, %v8761
    %8794 = vst.msk [vmem:[#allocation3 + $0xe8] sm:$0xff] %vm8011, %v8762
    %8795 = vst.msk [vmem:[#allocation3 + $0xf0] sm:$0xff] %vm8011, %v8763
    %8796 = vst.msk [vmem:[#allocation3 + $0xf8] sm:$0xff] %vm8011, %v8764
    %v8797 = vld [vmem:[%s8] sm:$0xff]
    %v8798 = vld [vmem:[%s8 + $0x8] sm:$0xff]
    %v8799 = vld [vmem:[%s8 + $0x10] sm:$0xff]
    %v8800 = vld [vmem:[%s8 + $0x18] sm:$0xff]
    %v8801 = vld [vmem:[%s8 + $0x20] sm:$0xff]
    %v8802 = vld [vmem:[%s8 + $0x28] sm:$0xff]
    %v8803 = vld [vmem:[%s8 + $0x30] sm:$0xff]
    %v8804 = vld [vmem:[%s8 + $0x38] sm:$0xff]
    %v8805 = vld [vmem:[%s8 + $0x40] sm:$0xff]
    %v8806 = vld [vmem:[%s8 + $0x48] sm:$0xff]
    %v8807 = vld [vmem:[%s8 + $0x50] sm:$0xff]
    %v8808 = vld [vmem:[%s8 + $0x58] sm:$0xff]
    %v8809 = vld [vmem:[%s8 + $0x60] sm:$0xff]
    %v8810 = vld [vmem:[%s8 + $0x68] sm:$0xff]
    %v8811 = vld [vmem:[%s8 + $0x70] sm:$0xff]
    %v8812 = vld [vmem:[%s8 + $0x78] sm:$0xff]
    %v8813 = vmul.f32 %v8669, %v8797
    %v8814 = vmul.f32 %v8670, %v8798
    %v8815 = vmul.f32 %v8671, %v8799
    %v8816 = vmul.f32 %v8672, %v8800
    %v8817 = vmul.f32 %v8673, %v8801
    %v8818 = vmul.f32 %v8674, %v8802
    %v8819 = vmul.f32 %v8675, %v8803
    %v8820 = vmul.f32 %v8676, %v8804
    %v8821 = vmul.f32 %v8677, %v8805
    %v8822 = vmul.f32 %v8678, %v8806
    %v8823 = vmul.f32 %v8679, %v8807
    %v8824 = vmul.f32 %v8680, %v8808
    %v8825 = vmul.f32 %v8681, %v8809
    %v8826 = vmul.f32 %v8682, %v8810
    %v8827 = vmul.f32 %v8683, %v8811
    %v8828 = vmul.f32 %v8684, %v8812
    %v8829 = vmul.f32 %v8749, %v8797
    %v8830 = vmul.f32 %v8750, %v8798
    %v8831 = vmul.f32 %v8751, %v8799
    %v8832 = vmul.f32 %v8752, %v8800
    %v8833 = vmul.f32 %v8753, %v8801
    %v8834 = vmul.f32 %v8754, %v8802
    %v8835 = vmul.f32 %v8755, %v8803
    %v8836 = vmul.f32 %v8756, %v8804
    %v8837 = vmul.f32 %v8757, %v8805
    %v8838 = vmul.f32 %v8758, %v8806
    %v8839 = vmul.f32 %v8759, %v8807
    %v8840 = vmul.f32 %v8760, %v8808
    %v8841 = vmul.f32 %v8761, %v8809
    %v8842 = vmul.f32 %v8762, %v8810
    %v8843 = vmul.f32 %v8763, %v8811
    %v8844 = vmul.f32 %v8764, %v8812
    %v8845 = vadd.s32 %v335, 128
    %v8846 = vshra.s32 %v335, 7
    %v8847 = vshra.s32 %v8845, 7
    %vm8848 = vcmp.eq.s32.totalorder %v8846, %v339
    %vm8849 = vcmp.eq.s32.totalorder %v8847, %v339
    %v8850 = vsel %vm8848, 1.0, 0.0
    %v8851 = vsel %vm8849, 1.0, 0.0
    %8852 = vmatprep.subr.mxu0 0.0
    %8853 = vmatpush1.msra.mxu0 %v8813
    %8854 = vmatprep.subr.mxu0 0.0
    %8855 = vmatpush1.msra.mxu0 %v8814
    %8856 = vmatprep.subr.mxu0 0.0
    %8857 = vmatpush1.msra.mxu0 %v8815
    %8858 = vmatprep.subr.mxu0 0.0
    %8859 = vmatpush1.msra.mxu0 %v8816
    %8860 = vmatprep.subr.mxu0 0.0
    %8861 = vmatpush1.msra.mxu0 %v8817
    %8862 = vmatprep.subr.mxu0 0.0
    %8863 = vmatpush1.msra.mxu0 %v8818
    %8864 = vmatprep.subr.mxu0 0.0
    %8865 = vmatpush1.msra.mxu0 %v8819
    %8866 = vmatprep.subr.mxu0 0.0
    %8867 = vmatpush1.msra.mxu0 %v8820
    %8868 = vmatprep.subr.mxu0 0.0
    %8869 = vmatpush1.msra.mxu0 %v8821
    %8870 = vmatprep.subr.mxu0 0.0
    %8871 = vmatpush1.msra.mxu0 %v8822
    %8872 = vmatprep.subr.mxu0 0.0
    %8873 = vmatpush1.msra.mxu0 %v8823
    %8874 = vmatprep.subr.mxu0 0.0
    %8875 = vmatpush1.msra.mxu0 %v8824
    %8876 = vmatprep.subr.mxu0 0.0
    %8877 = vmatpush1.msra.mxu0 %v8825
    %8878 = vmatprep.subr.mxu0 0.0
    %8879 = vmatpush1.msra.mxu0 %v8826
    %8880 = vmatprep.subr.mxu0 0.0
    %8881 = vmatpush1.msra.mxu0 %v8827
    %8882 = vmatprep.subr.mxu0 0.0
    %8883 = vmatpush1.msra.mxu0 %v8828
    %8884 = vmatprep.subr.mxu0 0.0
    %8885 = vmatpush1.msra.mxu0 %v8829
    %8886 = vmatprep.subr.mxu0 0.0
    %8887 = vmatpush1.msra.mxu0 %v8830
    %8888 = vmatprep.subr.mxu0 0.0
    %8889 = vmatpush1.msra.mxu0 %v8831
    %8890 = vmatprep.subr.mxu0 0.0
    %8891 = vmatpush1.msra.mxu0 %v8832
    %8892 = vmatprep.subr.mxu0 0.0
    %8893 = vmatpush1.msra.mxu0 %v8833
    %8894 = vmatprep.subr.mxu0 0.0
    %8895 = vmatpush1.msra.mxu0 %v8834
    %8896 = vmatprep.subr.mxu0 0.0
    %8897 = vmatpush1.msra.mxu0 %v8835
    %8898 = vmatprep.subr.mxu0 0.0
    %8899 = vmatpush1.msra.mxu0 %v8836
    %8900 = vmatprep.subr.mxu0 0.0
    %8901 = vmatpush1.msra.mxu0 %v8837
    %8902 = vmatprep.subr.mxu0 0.0
    %8903 = vmatpush1.msra.mxu0 %v8838
    %8904 = vmatprep.subr.mxu0 0.0
    %8905 = vmatpush1.msra.mxu0 %v8839
    %8906 = vmatprep.subr.mxu0 0.0
    %8907 = vmatpush1.msra.mxu0 %v8840
    %8908 = vmatprep.subr.mxu0 0.0
    %8909 = vmatpush1.msra.mxu0 %v8841
    %8910 = vmatprep.subr.mxu0 0.0
    %8911 = vmatpush1.msra.mxu0 %v8842
    %8912 = vmatprep.subr.mxu0 0.0
    %8913 = vmatpush1.msra.mxu0 %v8843
    %8914 = vmatprep.subr.mxu0 0.0
    %8915 = vmatpush1.msra.mxu0 %v8844
    %8916 = vmatprep.mubr.f32.mxu0 %v8851
    %8917 = vmatmul.mubr.f32.gmra.mrb[0].mxu0 %v8850
    %v8918 = vpop.f32.mrb[0].mxu0
    %v8919 = vadd.f32 0.0, %v8918
    %v8920 = vpop.f32.mrb[0].mxu0
    %8921 = vdwg.mxu0
    %vm8922 = vcmask 123904
    %v8923 = vsel %vm8922, %v8919, 0.0
    %8924 = vadd.xlane.f32.xlu0 %v8923
    %v8925 = vpop.xlane.xlu0 %8924
    %v8926 = vld [vmem:[#allocation2] sm:$0x1]
    %v8928 = vlaneseq
    %v8929 = vshrl.u32 %v8928, 7
    %v8930 = vsub.s32 0, %v8929
    %v8931 = vrot.slane %v8926, %v8930
    %v8933 = vadd.f32 %v8925, %v8931
    %v8934 = vsub.f32 0.0, %v8933
    %v8935 = vmul.f32 %v8934, 1.442695
    %v8936 = vpow.pop %v8935
    %v8937 = vadd.f32 %v8936, 1.0
    %v8938 = vrcp.pop %v8937
    %v8939 = vmul.f32 1.0, %v8938
    %vm8940 = vcmask 1024
    %8941 = vst.msk [vmem:[%s10] sm:$0x3] %vm8940, %v8939
    // Predicated region
    $region42: #{discriminator_forward.1} parent=1 // pred_check
      _
    $region43: #{discriminator_forward.1} parent=1 // pred_check_branch
      %8943 = sbr.rel (0) target = $region45
    $region44: #{discriminator_forward.1} parent=1 // pred_region
      _
    $region45: #{discriminator_forward.1} parent=1 // pred_fallthru
      _
    // Predicated region
    $region46: #{discriminator_forward.1} parent=1 // pred_check
      _
    $region47: #{discriminator_forward.1} parent=1 // pred_check_branch
      %8945 = sbr.rel (0) target = $region49
    $region48: #{discriminator_forward.1} parent=1 // pred_region
      %s8947 = ssub.s32 4096, 4096
      %8948 = vsyncadd [#allocation4], %s8947
      %s8949 = sshll.u32 [#allocation3], 4
      %s8950 = int_to_ptr.vmem [resolvable:$true] %s8949
      %8955 = dma.vmem_to_hbm [thread:$0]  %s8950, 4096, %s11, [#allocation4], 128, 128, 8
    $region49: #{discriminator_forward.1} parent=1 // pred_fallthru
      _
    // Predicated region
    $region50: #{discriminator_forward.1} parent=1 // pred_check
      _
    $region51: #{discriminator_forward.1} parent=1 // pred_check_branch
      %8957 = sbr.rel (0) target = $region53
    $region52: #{discriminator_forward.1} parent=1 // pred_region
      _
    $region53: #{discriminator_forward.1} parent=1 // pred_fallthru
      _
    // Predicated region
    $region54: #{discriminator_forward.1} parent=1 // pred_check
      _
    $region55: #{discriminator_forward.1} parent=1 // pred_check_branch
      %8959 = sbr.rel (0) target = $region57
    $region56: #{discriminator_forward.1} parent=1 // pred_region
      %8960 = dma.done [#allocation4], 4096
    $region57: #{discriminator_forward.1} parent=1 // pred_fallthru
      _
    %8961 = vsyncpa [#allocation4], 1

</llo_original>
